<compile_context>
chip_gen: v7x
topology: tpu7x:2x2x1
jax: 0.10.0
libtpu: 0.0.40
codegen_flags: <defaults>
</compile_context>

<pallas_src>
import functools
import math

import jax
import jax.numpy as jnp
from jax.experimental import pallas as pl
from jax.experimental.pallas import tpu as pltpu

BN_EPS = 1e-5
LRELU_SLOPE = 0.2


# ----------------------------------------------------------------- utilities
def _round_up(x, m):
    return ((x + m - 1) // m) * m


def _pad_rows_tile(m, pref=256, base=16):
    """(padded_rows, row_tile) with padded_rows % row_tile == 0 (tile mult. of 16)."""
    if m >= pref:
        return _round_up(m, pref), pref
    p = _round_up(m, base)
    return p, p


# --------------------------- fused matmul + scale/shift + BN-stats epilogue
def _mm_scale_shift_stats_kernel(a_ref, b_ref, scale_ref, shift_ref,
                                 o_ref, sum_ref, sq_ref):
    i = pl.program_id(1)                       # M-block index ("arbitrary", innermost)
    res = jnp.dot(a_ref[...], b_ref[...], preferred_element_type=jnp.float32)
    res = res * scale_ref[...] + shift_ref[...]
    o_ref[...] = res.astype(o_ref.dtype)

    s = jnp.sum(res, axis=0, keepdims=True)
    q = jnp.sum(res * res, axis=0, keepdims=True)

    @pl.when(i == 0)
    def _():
        sum_ref[...] = s
        sq_ref[...] = q

    @pl.when(i > 0)
    def _():
        sum_ref[...] += s
        sq_ref[...] += q


def fused_matmul(a, layer, out_dtype):
    """(a @ W) * col_scale + col_shift, plus fused per-column sum / sum-of-squares.

    a: [M, K] (cast to bf16).  `layer` holds the pre-padded bf16 weight matrix
    [K_pad, N_pad] and f32 [1, N_pad] per-column scale/shift (prepared once).
    Stats are valid for BN consumers because their shift == 0, so zero-padded
    rows of `a` contribute exactly 0 to the sums.
    """
    M, K = a.shape
    K_pad, N_pad = layer["b"].shape
    assert K <= K_pad
    M_pad, tm = _pad_rows_tile(M)
    tn = 128    # >=2 blocks on the "parallel" axis whenever N_pad >= 256 (v7x)

    a_p = jnp.pad(a.astype(jnp.bfloat16), ((0, M_pad - M), (0, K_pad - K)))

    out, sums, sqs = pl.pallas_call(
        _mm_scale_shift_stats_kernel,
        out_shape=(
            jax.ShapeDtypeStruct((M_pad, N_pad), out_dtype),
            jax.ShapeDtypeStruct((1, N_pad), jnp.float32),
            jax.ShapeDtypeStruct((1, N_pad), jnp.float32),
        ),
        grid=(N_pad // tn, M_pad // tm),       # j (parallel) outer, i (arbitrary) inner
        in_specs=[
            pl.BlockSpec((tm, K_pad), lambda j, i: (i, 0)),
            pl.BlockSpec((K_pad, tn), lambda j, i: (0, j)),
            pl.BlockSpec((1, tn), lambda j, i: (0, j)),
            pl.BlockSpec((1, tn), lambda j, i: (0, j)),
        ],
        out_specs=(
            pl.BlockSpec((tm, tn), lambda j, i: (i, j)),
            pl.BlockSpec((1, tn), lambda j, i: (0, j)),
            pl.BlockSpec((1, tn), lambda j, i: (0, j)),
        ),
        compiler_params=pltpu.CompilerParams(
            dimension_semantics=("parallel", "arbitrary")),
    )(a_p, layer["b"], layer["scale"], layer["shift"])
    return out, sums, sqs


# ------------------------------- fused per-(sample, channel) affine + lrelu
def _affine_lrelu_kernel(x_ref, scale_ref, shift_ref, o_ref, *, slope):
    y = x_ref[...].astype(jnp.float32) * scale_ref[...] + shift_ref[...]
    o_ref[...] = jnp.where(y >= 0, y, y * slope).astype(o_ref.dtype)


def affine_lrelu(x, scale, shift, slope=LRELU_SLOPE):
    """x: [N, P, C_pad] bf16; scale/shift: [N, C_pad] f32; returns bf16."""
    Nb, P, C_pad = x.shape
    tp = 512 if P % 512 == 0 else P
    scale3 = scale.reshape(Nb, 1, C_pad).astype(jnp.float32)
    shift3 = shift.reshape(Nb, 1, C_pad).astype(jnp.float32)
    return pl.pallas_call(
        functools.partial(_affine_lrelu_kernel, slope=slope),
        out_shape=jax.ShapeDtypeStruct((Nb, P, C_pad), jnp.bfloat16),
        grid=(Nb, P // tp),
        in_specs=[
            pl.BlockSpec((1, tp, C_pad), lambda n, p: (n, p, 0)),
            pl.BlockSpec((1, 1, C_pad), lambda n, p: (n, 0, 0)),
            pl.BlockSpec((1, 1, C_pad), lambda n, p: (n, 0, 0)),
        ],
        out_specs=pl.BlockSpec((1, tp, C_pad), lambda n, p: (n, p, 0)),
        compiler_params=pltpu.CompilerParams(
            dimension_semantics=("parallel", "parallel")),
    )(x, scale3, shift3)


# ---------------------------------------- final cout=1 conv: per-row VPU dot
def _rowdot_bias_kernel(x_ref, w_ref, b_ref, o_ref):
    x = x_ref[...].astype(jnp.float32)
    s = jnp.sum(x * w_ref[...], axis=1, keepdims=True)        # [M_pad, 1]
    o_ref[...] = s + b_ref[...]                                # broadcast to [M_pad, 128]


def final_conv_rowdot(patches, w_row, bias_row):
    """Spectral-normed cout=1 conv: avoids padding the output dim to 128 for the MXU."""
    M, K = patches.shape
    M_pad = _round_up(max(M, 8), 8)
    K_pad = _round_up(K, 128)
    x_p = jnp.pad(patches.astype(jnp.bfloat16), ((0, M_pad - M), (0, K_pad - K)))
    w_p = jnp.pad(w_row, ((0, 0), (0, K_pad - K)))
    out = pl.pallas_call(
        _rowdot_bias_kernel,
        out_shape=jax.ShapeDtypeStruct((M_pad, 128), jnp.float32),
        grid=(1,),
        in_specs=[
            pl.BlockSpec((M_pad, K_pad), lambda i: (0, 0)),
            pl.BlockSpec((1, K_pad), lambda i: (0, 0)),
            pl.BlockSpec((1, 128), lambda i: (0, 0)),
        ],
        out_specs=pl.BlockSpec((M_pad, 128), lambda i: (0, 0)),
    )(x_p, w_p, bias_row)
    return out[:M, :1]


# ------------------------------------------------------------- conv helpers
def _im2col(x_nhwc, kh, kw, stride, pad):
    N, H, W, C = x_nhwc.shape
    Ho = (H + 2 * pad - kh) // stride + 1
    Wo = (W + 2 * pad - kw) // stride + 1
    xp = jnp.pad(x_nhwc, ((0, 0), (pad, pad), (pad, pad), (0, 0)))
    taps = []
    for dy in range(kh):
        for dx in range(kw):
            taps.append(jax.lax.slice(
                xp, (0, dy, dx, 0),
                (N, dy + stride * (Ho - 1) + 1, dx + stride * (Wo - 1) + 1, C),
                (1, stride, stride, 1)))
    patches = jnp.stack(taps, axis=3)               # [N, Ho, Wo, kh*kw, C]
    return patches.reshape(N * Ho * Wo, kh * kw * C), (N, Ho, Wo)


def _conv_weight_matrix(w_oihw):
    cout, cin, kh, kw = w_oihw.shape
    # row index = (dy*kw + dx)*cin + ci  -- matches the im2col column layout
    return jnp.transpose(w_oihw, (2, 3, 1, 0)).reshape(kh * kw * cin, cout)


def _spectral_sigma(w_oihw, u, n_iter=1, eps=1e-12):
    cout = w_oihw.shape[0]
    w2d = w_oihw.reshape(cout, -1)

    def _l2n(v):
        return v / (jnp.linalg.norm(v) + eps)

    v = None
    for _ in range(n_iter):
        v = _l2n(w2d.T @ u)
        u = _l2n(w2d @ v)
    return jnp.dot(u, w2d @ v)


# -------------------------------------------------------- one-time weight prep
def _prep_matmul_weights(w_mat, col_scale, col_shift):
    """Pad / cast a [K, Nc] GEMM weight (and its epilogue scale/shift) once."""
    K, Nc = w_mat.shape
    K_pad = _round_up(K, 128)
    N_pad = _round_up(Nc, 128)
    return dict(
        b=jnp.pad(w_mat.astype(jnp.float32),
                  ((0, K_pad - K), (0, N_pad - Nc))).astype(jnp.bfloat16),
        scale=jnp.pad(col_scale.astype(jnp.float32), (0, N_pad - Nc))[None, :],
        shift=jnp.pad(col_shift.astype(jnp.float32), (0, N_pad - Nc))[None, :],
        n=Nc)


def prepare_discriminator(params):
    """Precompute padded bf16 GEMM weights; fold spectral-norm 1/sigma and
    EqualLR sqrt(2/fan_in) into per-column epilogue scales."""
    prep = {}

    lin_w, lin_b = params["lin_w"], params["lin_b"]
    out_dim, in_dim = lin_w.shape
    c_lin = math.sqrt(2.0 / in_dim)             # EqualLR fan_in = in_dim
    prep["lin"] = _prep_matmul_weights(
        lin_w.T, jnp.full((out_dim,), c_lin, jnp.float32), lin_b)

    for i in (1, 2, 3, 4):
        w, u = params[f"w{i}"], params[f"u{i}"]
        cout = w.shape[0]
        inv_sigma = 1.0 / _spectral_sigma(w, u)
        layer = _prep_matmul_weights(
            _conv_weight_matrix(w),
            jnp.full((cout,), 1.0, jnp.float32) * inv_sigma,
            jnp.zeros((cout,), jnp.float32))
        layer.update(bn_g=params[f"bn{i}_g"].astype(jnp.float32),
                     bn_b=params[f"bn{i}_b"].astype(jnp.float32),
                     kh=4, kw=4, stride=2, padding=1)
        prep[f"conv{i}"] = layer

    w5, u5 = params["w5"], params["u5"]
    inv_s5 = 1.0 / _spectral_sigma(w5, u5)
    w5_row = (_conv_weight_matrix(w5).reshape(-1) * inv_s5).astype(jnp.float32)[None, :]
    b5_row = jnp.broadcast_to(params["b5"].astype(jnp.float32).reshape(1, 1), (1, 128))
    prep["out"] = dict(w=w5_row, b=b5_row, kh=4, kw=4, stride=1, padding=1)
    return prep


# ------------------------------------------------------------ layer wrappers
def conv_bn_lrelu(x_nhwc, layer, style_gamma=None, style_beta=None):
    """Conv_BN_Dis (and Conv_CBN_Dis when style_gamma/beta are given)."""
    patches, (N, Ho, Wo) = _im2col(
        x_nhwc, layer["kh"], layer["kw"], layer["stride"], layer["padding"])
    out_pad, sums, sqs = fused_matmul(patches, layer, out_dtype=jnp.bfloat16)

    M = N * Ho * Wo
    cout = layer["n"]
    C_pad = out_pad.shape[1]

    # training-mode batch statistics over (N, H, W); padded rows contribute 0
    # because the conv epilogue shift is 0 (no conv bias before BN).
    mean = sums[0] / M
    var = jnp.maximum(sqs[0] / M - mean * mean, 0.0)     # clamp cancellation
    inv_std = jax.lax.rsqrt(var + BN_EPS)

    g = jnp.pad(layer["bn_g"], (0, C_pad - cout))        # padded gamma/beta = 0 ->
    b = jnp.pad(layer["bn_b"], (0, C_pad - cout))        # padded columns stay 0
    ch_scale = g * inv_std
    ch_shift = b - mean * ch_scale

    if style_gamma is not None:       # ConditionalBatchNorm: gamma_s * BN(x) + beta_s
        sg = jnp.pad(style_gamma, ((0, 0), (0, C_pad - cout)))
        sb = jnp.pad(style_beta, ((0, 0), (0, C_pad - cout)))
        scale = sg * ch_scale[None, :]
        shift = sg * ch_shift[None, :] + sb
    else:
        scale = jnp.broadcast_to(ch_scale[None, :], (N, C_pad))
        shift = jnp.broadcast_to(ch_shift[None, :], (N, C_pad))

    act = affine_lrelu(out_pad[:M].reshape(N, Ho * Wo, C_pad), scale, shift)
    return act[..., :cout].reshape(N, Ho, Wo, cout)


# ------------------------------------------------------- full discriminator
def discriminator_forward(prep, x_nchw, style):
    N = x_nchw.shape[0]
    x = jnp.transpose(x_nchw, (0, 2, 3, 1)).astype(jnp.bfloat16)       # NHWC, bf16

    # EqualLinear(512, 64): equal-lr scale + bias folded into the matmul epilogue.
    lin = prep["lin"]
    st_pad, _, _ = fused_matmul(style, lin, out_dtype=jnp.float32)
    st = st_pad[:N, :lin["n"]]
    c1 = lin["n"] // 2
    style_gamma, style_beta = st[:, :c1], st[:, c1:]

    h = conv_bn_lrelu(x, prep["conv1"], style_gamma, style_beta)
    h = conv_bn_lrelu(h, prep["conv2"])
    h = conv_bn_lrelu(h, prep["conv3"])
    h = conv_bn_lrelu(h, prep["conv4"])

    fin = prep["out"]
    patches, (Nb, Ho, Wo) = _im2col(h, fin["kh"], fin["kw"], fin["stride"], fin["padding"])
    y = final_conv_rowdot(patches, fin["w"], fin["b"])
    return jnp.transpose(y.reshape(Nb, Ho, Wo, 1), (0, 3, 1, 2))        # NCHW


# ------------------------------------------------------------------- params
def init_params(key):
    ks = jax.random.split(key, 16)

    def convw(k, cout, cin, ksz):
        fan_in = cin * ksz * ksz
        return jax.random.normal(k, (cout, cin, ksz, ksz), jnp.float32) / math.sqrt(fan_in)

    def uvec(k, cout):
        u = jax.random.normal(k, (cout,), jnp.float32)
        return u / (jnp.linalg.norm(u) + 1e-12)

    p = {}
    p["w1"], p["u1"] = convw(ks[0], 32, 1, 4), uvec(ks[1], 32)
    p["w2"], p["u2"] = convw(ks[2], 64, 32, 4), uvec(ks[3], 64)
    p["w3"], p["u3"] = convw(ks[4], 128, 64, 4), uvec(ks[5], 128)
    p["w4"], p["u4"] = convw(ks[6], 256, 128, 4), uvec(ks[7], 256)
    p["w5"], p["u5"] = convw(ks[8], 1, 256, 4), uvec(ks[9], 1)
    p["b5"] = jax.random.normal(ks[10], (1,), jnp.float32) * 0.1
    for i, c in zip(range(1, 5), (32, 64, 128, 256)):
        p[f"bn{i}_g"] = jnp.ones((c,), jnp.float32)
        p[f"bn{i}_b"] = jnp.zeros((c,), jnp.float32)
    # EqualLinear(512, 2*32): weight ~ N(0,1); bias[:32]=1, bias[32:]=0
    p["lin_w"] = jax.random.normal(ks[11], (64, 512), jnp.float32)
    p["lin_b"] = jnp.concatenate([jnp.ones((32,), jnp.float32),
                                  jnp.zeros((32,), jnp.float32)])
    return p


# ---------------------------------------------------------- plain-JAX check
def _ref_conv(x, w, stride, pad):
    return jax.lax.conv_general_dilated(
        x, w, (stride, stride), ((pad, pad), (pad, pad)),
        dimension_numbers=("NCHW", "OIHW", "NCHW"))


def _ref_bn(x, gamma, beta):
    mean = jnp.mean(x, axis=(0, 2, 3), keepdims=True)
    var = jnp.var(x, axis=(0, 2, 3), keepdims=True)
    xn = (x - mean) * jax.lax.rsqrt(var + BN_EPS)
    return xn * gamma.reshape(1, -1, 1, 1) + beta.reshape(1, -1, 1, 1)


def _lrelu(x):
    return jnp.where(x >= 0, x, LRELU_SLOPE * x)


def reference_forward(params, x, style):
    def sn(w, u):
        return w / _spectral_sigma(w, u)

    c_lin = math.sqrt(2.0 / params["lin_w"].shape[1])
    st = style @ (params["lin_w"] * c_lin).T + params["lin_b"]
    g = st[:, :32].reshape(-1, 32, 1, 1)
    b = st[:, 32:].reshape(-1, 32, 1, 1)

    h = _ref_conv(x, sn(params["w1"], params["u1"]), 2, 1)
    h = _lrelu(g * _ref_bn(h, params["bn1_g"], params["bn1_b"]) + b)
    h = _lrelu(_ref_bn(_ref_conv(h, sn(params["w2"], params["u2"]), 2, 1),
                       params["bn2_g"], params["bn2_b"]))
    h = _lrelu(_ref_bn(_ref_conv(h, sn(params["w3"], params["u3"]), 2, 1),
                       params["bn3_g"], params["bn3_b"]))
    h = _lrelu(_ref_bn(_ref_conv(h, sn(params["w4"], params["u4"]), 2, 1),
                       params["bn4_g"], params["bn4_b"]))
    out = _ref_conv(h, sn(params["w5"], params["u5"]), 1, 1)
    return out + params["b5"].reshape(1, -1, 1, 1)


# --------------------------------------------------------------------- main
if __name__ == "__main__":
    key = jax.random.PRNGKey(0)
    kp, kx, ks = jax.random.split(key, 3)
    params = init_params(kp)

    # 32x32 keeps every stride-2 stage valid and the final 4x4/s1/p1 conv at 1x1.
    N, H, W = 2, 32, 32
    x = jax.random.normal(kx, (N, 1, H, W), jnp.float32)
    style = jax.random.normal(ks, (N, 512), jnp.float32)

    prep = prepare_discriminator(params)                 # one-time weight prep
    fwd = jax.jit(lambda xx, ss: discriminator_forward(prep, xx, ss))
    out = jax.block_until_ready(fwd(x, style))
    assert out.shape == (N, 1, 1, 1), out.shape

    ref = jax.block_until_ready(reference_forward(params, x, style))
    # bf16 MXU operands / activations vs f32 reference -> tolerance ~1e-1.
    assert jnp.allclose(out.astype(jnp.float32), ref, rtol=1e-1, atol=1e-1), \
        float(jnp.max(jnp.abs(out.astype(jnp.float32) - ref)))

    print("KERNEL_OK")
</pallas_src>

<mosaic_0001>
module attributes {stable_mosaic.version = 11 : i64} {
  func.func @_mm_scale_shift_stats_kernel(%arg0: i32, %arg1: i32, %arg2: memref<256x128xbf16, #tpu.memory_space<vmem>>, %arg3: memref<128x128xbf16, #tpu.memory_space<vmem>>, %arg4: memref<1x128xf32, #tpu.memory_space<vmem>>, %arg5: memref<1x128xf32, #tpu.memory_space<vmem>>, %arg6: memref<256x128xbf16, #tpu.memory_space<vmem>>, %arg7: memref<1x128xf32, #tpu.memory_space<vmem>>, %arg8: memref<1x128xf32, #tpu.memory_space<vmem>>) attributes {dimension_semantics = [#tpu.dimension_semantics<parallel>, #tpu.dimension_semantics<arbitrary>], iteration_bounds = array<i64: 1, 2>, scalar_prefetch = 0 : i64, scratch_operands = 0 : i64, tpu.core_type = #tpu.core_type<tc>, window_params = [{transform_indices = @transform_0, window_bounds = array<i64: 256, 128>}, {transform_indices = @transform_1, window_bounds = array<i64: 128, 128>}, {transform_indices = @transform_2, window_bounds = array<i64: 1, 128>}, {transform_indices = @transform_3, window_bounds = array<i64: 1, 128>}, {transform_indices = @transform_4, window_bounds = array<i64: 256, 128>}, {transform_indices = @transform_5, window_bounds = array<i64: 1, 128>}, {transform_indices = @transform_6, window_bounds = array<i64: 1, 128>}]} {
    %c0 = arith.constant 0 : index
    %c0_0 = arith.constant 0 : index
    %0 = vector.load %arg2[%c0, %c0_0] : memref<256x128xbf16, #tpu.memory_space<vmem>>, vector<256x128xbf16>
    %c0_1 = arith.constant 0 : index
    %c0_2 = arith.constant 0 : index
    %1 = vector.load %arg3[%c0_1, %c0_2] : memref<128x128xbf16, #tpu.memory_space<vmem>>, vector<128x128xbf16>
    %cst = arith.constant dense<0.000000e+00> : vector<256x128xf32>
    %2 = tpu.matmul %0, %1, %cst {dimension_numbers = #tpu.dot_dimension_numbers<[1], [0], [0], [1], [0, 0, 1, 1], [], []>} : vector<256x128xbf16>, vector<128x128xbf16>, vector<256x128xf32> -> vector<256x128xf32>
    %c0_3 = arith.constant 0 : index
    %c0_4 = arith.constant 0 : index
    %3 = vector.load %arg4[%c0_3, %c0_4] : memref<1x128xf32, #tpu.memory_space<vmem>>, vector<1x128xf32>
    %4 = vector.broadcast %3 : vector<1x128xf32> to vector<256x128xf32>
    %5 = arith.mulf %2, %4 : vector<256x128xf32>
    %c0_5 = arith.constant 0 : index
    %c0_6 = arith.constant 0 : index
    %6 = vector.load %arg5[%c0_5, %c0_6] : memref<1x128xf32, #tpu.memory_space<vmem>>, vector<1x128xf32>
    %7 = vector.broadcast %6 : vector<1x128xf32> to vector<256x128xf32>
    %8 = arith.addf %5, %7 : vector<256x128xf32>
    %9 = arith.truncf %8 : vector<256x128xf32> to vector<256x128xbf16>
    %c0_7 = arith.constant 0 : index
    %c0_8 = arith.constant 0 : index
    %10 = vector.load %arg6[%c0_7, %c0_8] : memref<256x128xbf16, #tpu.memory_space<vmem>>, vector<256x128xbf16>
    tpu.vector_store %arg6[%c0_7, %c0_8], %9 {strides = array<i32>} : memref<256x128xbf16, #tpu.memory_space<vmem>>, vector<256x128xbf16>,
    %cst_9 = arith.constant dense<0.000000e+00> : vector<128xf32>
    %11 = vector.multi_reduction <add>, %8, %cst_9 [0] : vector<256x128xf32> to vector<128xf32>
    %12 = vector.shape_cast %11 : vector<128xf32> to vector<1x128xf32>
    %13 = arith.mulf %8, %8 : vector<256x128xf32>
    %cst_10 = arith.constant dense<0.000000e+00> : vector<128xf32>
    %14 = vector.multi_reduction <add>, %13, %cst_10 [0] : vector<256x128xf32> to vector<128xf32>
    %15 = vector.shape_cast %14 : vector<128xf32> to vector<1x128xf32>
    %c0_i32 = arith.constant 0 : i32
    %16 = arith.cmpi eq, %arg1, %c0_i32 : i32
    %17 = arith.extui %16 : i1 to i32
    %c0_i32_11 = arith.constant 0 : i32
    %18 = arith.cmpi ne, %17, %c0_i32_11 : i32
    scf.if %18 {
      %c0_14 = arith.constant 0 : index
      %c0_15 = arith.constant 0 : index
      %22 = vector.load %arg7[%c0_14, %c0_15] : memref<1x128xf32, #tpu.memory_space<vmem>>, vector<1x128xf32>
      tpu.vector_store %arg7[%c0_14, %c0_15], %12 {strides = array<i32>} : memref<1x128xf32, #tpu.memory_space<vmem>>, vector<1x128xf32>,
      %c0_16 = arith.constant 0 : index
      %c0_17 = arith.constant 0 : index
      %23 = vector.load %arg8[%c0_16, %c0_17] : memref<1x128xf32, #tpu.memory_space<vmem>>, vector<1x128xf32>
      tpu.vector_store %arg8[%c0_16, %c0_17], %15 {strides = array<i32>} : memref<1x128xf32, #tpu.memory_space<vmem>>, vector<1x128xf32>,
    } else {
    }
    %c0_i32_12 = arith.constant 0 : i32
    %19 = arith.cmpi sgt, %arg1, %c0_i32_12 : i32
    %20 = arith.extui %19 : i1 to i32
    %c0_i32_13 = arith.constant 0 : i32
    %21 = arith.cmpi ne, %20, %c0_i32_13 : i32
    scf.if %21 {
      %c0_14 = arith.constant 0 : index
      %c0_15 = arith.constant 0 : index
      %22 = vector.load %arg7[%c0_14, %c0_15] : memref<1x128xf32, #tpu.memory_space<vmem>>, vector<1x128xf32>
      %23 = arith.addf %22, %12 : vector<1x128xf32>
      %c0_16 = arith.constant 0 : index
      %c0_17 = arith.constant 0 : index
      %24 = vector.load %arg7[%c0_16, %c0_17] : memref<1x128xf32, #tpu.memory_space<vmem>>, vector<1x128xf32>
      tpu.vector_store %arg7[%c0_16, %c0_17], %23 {strides = array<i32>} : memref<1x128xf32, #tpu.memory_space<vmem>>, vector<1x128xf32>,
      %c0_18 = arith.constant 0 : index
      %c0_19 = arith.constant 0 : index
      %25 = vector.load %arg8[%c0_18, %c0_19] : memref<1x128xf32, #tpu.memory_space<vmem>>, vector<1x128xf32>
      %26 = arith.addf %25, %15 : vector<1x128xf32>
      %c0_20 = arith.constant 0 : index
      %c0_21 = arith.constant 0 : index
      %27 = vector.load %arg8[%c0_20, %c0_21] : memref<1x128xf32, #tpu.memory_space<vmem>>, vector<1x128xf32>
      tpu.vector_store %arg8[%c0_20, %c0_21], %26 {strides = array<i32>} : memref<1x128xf32, #tpu.memory_space<vmem>>, vector<1x128xf32>,
    } else {
    }
    return
  }
  func.func @transform_0(%arg0: i32, %arg1: i32) -> (i32, i32) {
    %c0_i32 = arith.constant 0 : i32
    %c0_i32_0 = arith.constant 0 : i32
    return %arg1, %c0_i32 : i32, i32
  }
  func.func @transform_1(%arg0: i32, %arg1: i32) -> (i32, i32) {
    %c0_i32 = arith.constant 0 : i32
    %c0_i32_0 = arith.constant 0 : i32
    return %c0_i32, %arg0 : i32, i32
  }
  func.func @transform_2(%arg0: i32, %arg1: i32) -> (i32, i32) {
    %c0_i32 = arith.constant 0 : i32
    %c0_i32_0 = arith.constant 0 : i32
    return %c0_i32, %arg0 : i32, i32
  }
  func.func @transform_3(%arg0: i32, %arg1: i32) -> (i32, i32) {
    %c0_i32 = arith.constant 0 : i32
    %c0_i32_0 = arith.constant 0 : i32
    return %c0_i32, %arg0 : i32, i32
  }
  func.func @transform_4(%arg0: i32, %arg1: i32) -> (i32, i32) {
    %c0_i32 = arith.constant 0 : i32
    return %arg1, %arg0 : i32, i32
  }
  func.func @transform_5(%arg0: i32, %arg1: i32) -> (i32, i32) {
    %c0_i32 = arith.constant 0 : i32
    %c0_i32_0 = arith.constant 0 : i32
    return %c0_i32, %arg0 : i32, i32
  }
  func.func @transform_6(%arg0: i32, %arg1: i32) -> (i32, i32) {
    %c0_i32 = arith.constant 0 : i32
    %c0_i32_0 = arith.constant 0 : i32
    return %c0_i32, %arg0 : i32, i32
  }
}

module attributes {stable_mosaic.version = 11 : i64} {
  func.func @_mm_scale_shift_stats_kernel(%arg0: i32, %arg1: i32, %arg2: memref<16x512xbf16, #tpu.memory_space<vmem>>, %arg3: memref<512x128xbf16, #tpu.memory_space<vmem>>, %arg4: memref<1x128xf32, #tpu.memory_space<vmem>>, %arg5: memref<1x128xf32, #tpu.memory_space<vmem>>, %arg6: memref<16x128xf32, #tpu.memory_space<vmem>>, %arg7: memref<1x128xf32, #tpu.memory_space<vmem>>, %arg8: memref<1x128xf32, #tpu.memory_space<vmem>>) attributes {dimension_semantics = [#tpu.dimension_semantics<parallel>, #tpu.dimension_semantics<arbitrary>], iteration_bounds = array<i64: 1, 1>, scalar_prefetch = 0 : i64, scratch_operands = 0 : i64, tpu.core_type = #tpu.core_type<tc>, window_params = [{transform_indices = @transform_0, window_bounds = array<i64: 16, 512>}, {transform_indices = @transform_1, window_bounds = array<i64: 512, 128>}, {transform_indices = @transform_2, window_bounds = array<i64: 1, 128>}, {transform_indices = @transform_3, window_bounds = array<i64: 1, 128>}, {transform_indices = @transform_4, window_bounds = array<i64: 16, 128>}, {transform_indices = @transform_5, window_bounds = array<i64: 1, 128>}, {transform_indices = @transform_6, window_bounds = array<i64: 1, 128>}]} {
    %c0 = arith.constant 0 : index
    %c0_0 = arith.constant 0 : index
    %0 = vector.load %arg2[%c0, %c0_0] : memref<16x512xbf16, #tpu.memory_space<vmem>>, vector<16x512xbf16>
    %c0_1 = arith.constant 0 : index
    %c0_2 = arith.constant 0 : index
    %1 = vector.load %arg3[%c0_1, %c0_2] : memref<512x128xbf16, #tpu.memory_space<vmem>>, vector<512x128xbf16>
    %cst = arith.constant dense<0.000000e+00> : vector<16x128xf32>
    %2 = tpu.matmul %0, %1, %cst {dimension_numbers = #tpu.dot_dimension_numbers<[1], [0], [0], [1], [0, 0, 1, 1], [], []>} : vector<16x512xbf16>, vector<512x128xbf16>, vector<16x128xf32> -> vector<16x128xf32>
    %c0_3 = arith.constant 0 : index
    %c0_4 = arith.constant 0 : index
    %3 = vector.load %arg4[%c0_3, %c0_4] : memref<1x128xf32, #tpu.memory_space<vmem>>, vector<1x128xf32>
    %4 = vector.broadcast %3 : vector<1x128xf32> to vector<16x128xf32>
    %5 = arith.mulf %2, %4 : vector<16x128xf32>
    %c0_5 = arith.constant 0 : index
    %c0_6 = arith.constant 0 : index
    %6 = vector.load %arg5[%c0_5, %c0_6] : memref<1x128xf32, #tpu.memory_space<vmem>>, vector<1x128xf32>
    %7 = vector.broadcast %6 : vector<1x128xf32> to vector<16x128xf32>
    %8 = arith.addf %5, %7 : vector<16x128xf32>
    %c0_7 = arith.constant 0 : index
    %c0_8 = arith.constant 0 : index
    %9 = vector.load %arg6[%c0_7, %c0_8] : memref<16x128xf32, #tpu.memory_space<vmem>>, vector<16x128xf32>
    tpu.vector_store %arg6[%c0_7, %c0_8], %8 {strides = array<i32>} : memref<16x128xf32, #tpu.memory_space<vmem>>, vector<16x128xf32>,
    %cst_9 = arith.constant dense<0.000000e+00> : vector<128xf32>
    %10 = vector.multi_reduction <add>, %8, %cst_9 [0] : vector<16x128xf32> to vector<128xf32>
    %11 = vector.shape_cast %10 : vector<128xf32> to vector<1x128xf32>
    %12 = arith.mulf %8, %8 : vector<16x128xf32>
    %cst_10 = arith.constant dense<0.000000e+00> : vector<128xf32>
    %13 = vector.multi_reduction <add>, %12, %cst_10 [0] : vector<16x128xf32> to vector<128xf32>
    %14 = vector.shape_cast %13 : vector<128xf32> to vector<1x128xf32>
    %c0_i32 = arith.constant 0 : i32
    %15 = arith.cmpi eq, %arg1, %c0_i32 : i32
    %16 = arith.extui %15 : i1 to i32
    %c0_i32_11 = arith.constant 0 : i32
    %17 = arith.cmpi ne, %16, %c0_i32_11 : i32
    scf.if %17 {
      %c0_14 = arith.constant 0 : index
      %c0_15 = arith.constant 0 : index
      %21 = vector.load %arg7[%c0_14, %c0_15] : memref<1x128xf32, #tpu.memory_space<vmem>>, vector<1x128xf32>
      tpu.vector_store %arg7[%c0_14, %c0_15], %11 {strides = array<i32>} : memref<1x128xf32, #tpu.memory_space<vmem>>, vector<1x128xf32>,
      %c0_16 = arith.constant 0 : index
      %c0_17 = arith.constant 0 : index
      %22 = vector.load %arg8[%c0_16, %c0_17] : memref<1x128xf32, #tpu.memory_space<vmem>>, vector<1x128xf32>
      tpu.vector_store %arg8[%c0_16, %c0_17], %14 {strides = array<i32>} : memref<1x128xf32, #tpu.memory_space<vmem>>, vector<1x128xf32>,
    } else {
    }
    %c0_i32_12 = arith.constant 0 : i32
    %18 = arith.cmpi sgt, %arg1, %c0_i32_12 : i32
    %19 = arith.extui %18 : i1 to i32
    %c0_i32_13 = arith.constant 0 : i32
    %20 = arith.cmpi ne, %19, %c0_i32_13 : i32
    scf.if %20 {
      %c0_14 = arith.constant 0 : index
      %c0_15 = arith.constant 0 : index
      %21 = vector.load %arg7[%c0_14, %c0_15] : memref<1x128xf32, #tpu.memory_space<vmem>>, vector<1x128xf32>
      %22 = arith.addf %21, %11 : vector<1x128xf32>
      %c0_16 = arith.constant 0 : index
      %c0_17 = arith.constant 0 : index
      %23 = vector.load %arg7[%c0_16, %c0_17] : memref<1x128xf32, #tpu.memory_space<vmem>>, vector<1x128xf32>
      tpu.vector_store %arg7[%c0_16, %c0_17], %22 {strides = array<i32>} : memref<1x128xf32, #tpu.memory_space<vmem>>, vector<1x128xf32>,
      %c0_18 = arith.constant 0 : index
      %c0_19 = arith.constant 0 : index
      %24 = vector.load %arg8[%c0_18, %c0_19] : memref<1x128xf32, #tpu.memory_space<vmem>>, vector<1x128xf32>
      %25 = arith.addf %24, %14 : vector<1x128xf32>
      %c0_20 = arith.constant 0 : index
      %c0_21 = arith.constant 0 : index
      %26 = vector.load %arg8[%c0_20, %c0_21] : memref<1x128xf32, #tpu.memory_space<vmem>>, vector<1x128xf32>
      tpu.vector_store %arg8[%c0_20, %c0_21], %25 {strides = array<i32>} : memref<1x128xf32, #tpu.memory_space<vmem>>, vector<1x128xf32>,
    } else {
    }
    return
  }
  func.func @transform_0(%arg0: i32, %arg1: i32) -> (i32, i32) {
    %c0_i32 = arith.constant 0 : i32
    %c0_i32_0 = arith.constant 0 : i32
    return %arg1, %c0_i32 : i32, i32
  }
  func.func @transform_1(%arg0: i32, %arg1: i32) -> (i32, i32) {
    %c0_i32 = arith.constant 0 : i32
    %c0_i32_0 = arith.constant 0 : i32
    return %c0_i32, %arg0 : i32, i32
  }
  func.func @transform_2(%arg0: i32, %arg1: i32) -> (i32, i32) {
    %c0_i32 = arith.constant 0 : i32
    %c0_i32_0 = arith.constant 0 : i32
    return %c0_i32, %arg0 : i32, i32
  }
  func.func @transform_3(%arg0: i32, %arg1: i32) -> (i32, i32) {
    %c0_i32 = arith.constant 0 : i32
    %c0_i32_0 = arith.constant 0 : i32
    return %c0_i32, %arg0 : i32, i32
  }
  func.func @transform_4(%arg0: i32, %arg1: i32) -> (i32, i32) {
    %c0_i32 = arith.constant 0 : i32
    return %arg1, %arg0 : i32, i32
  }
  func.func @transform_5(%arg0: i32, %arg1: i32) -> (i32, i32) {
    %c0_i32 = arith.constant 0 : i32
    %c0_i32_0 = arith.constant 0 : i32
    return %c0_i32, %arg0 : i32, i32
  }
  func.func @transform_6(%arg0: i32, %arg1: i32) -> (i32, i32) {
    %c0_i32 = arith.constant 0 : i32
    %c0_i32_0 = arith.constant 0 : i32
    return %c0_i32, %arg0 : i32, i32
  }
}

module attributes {stable_mosaic.version = 11 : i64} {
  func.func @_affine_lrelu_kernel(%arg0: i32, %arg1: i32, %arg2: memref<1x256x128xbf16, #tpu.memory_space<vmem>>, %arg3: memref<1x1x128xf32, #tpu.memory_space<vmem>>, %arg4: memref<1x1x128xf32, #tpu.memory_space<vmem>>, %arg5: memref<1x256x128xbf16, #tpu.memory_space<vmem>>) attributes {dimension_semantics = [#tpu.dimension_semantics<parallel>, #tpu.dimension_semantics<parallel>], iteration_bounds = array<i64: 2, 1>, scalar_prefetch = 0 : i64, scratch_operands = 0 : i64, tpu.core_type = #tpu.core_type<tc>, window_params = [{transform_indices = @transform_0, window_bounds = array<i64: 1, 256, 128>}, {transform_indices = @transform_1, window_bounds = array<i64: 1, 1, 128>}, {transform_indices = @transform_2, window_bounds = array<i64: 1, 1, 128>}, {transform_indices = @transform_3, window_bounds = array<i64: 1, 256, 128>}]} {
    %c0 = arith.constant 0 : index
    %c0_0 = arith.constant 0 : index
    %c0_1 = arith.constant 0 : index
    %0 = vector.load %arg2[%c0, %c0_0, %c0_1] : memref<1x256x128xbf16, #tpu.memory_space<vmem>>, vector<1x256x128xbf16>
    %1 = arith.extf %0 : vector<1x256x128xbf16> to vector<1x256x128xf32>
    %c0_2 = arith.constant 0 : index
    %c0_3 = arith.constant 0 : index
    %c0_4 = arith.constant 0 : index
    %2 = vector.load %arg3[%c0_2, %c0_3, %c0_4] : memref<1x1x128xf32, #tpu.memory_space<vmem>>, vector<1x1x128xf32>
    %3 = vector.broadcast %2 : vector<1x1x128xf32> to vector<1x256x128xf32>
    %4 = arith.mulf %1, %3 : vector<1x256x128xf32>
    %c0_5 = arith.constant 0 : index
    %c0_6 = arith.constant 0 : index
    %c0_7 = arith.constant 0 : index
    %5 = vector.load %arg4[%c0_5, %c0_6, %c0_7] : memref<1x1x128xf32, #tpu.memory_space<vmem>>, vector<1x1x128xf32>
    %6 = vector.broadcast %5 : vector<1x1x128xf32> to vector<1x256x128xf32>
    %7 = arith.addf %4, %6 : vector<1x256x128xf32>
    %cst = arith.constant 0.000000e+00 : f32
    %8 = vector.broadcast %cst : f32 to vector<1x256x128xf32>
    %9 = arith.cmpf oge, %7, %8 : vector<1x256x128xf32>
    %cst_8 = arith.constant 2.000000e-01 : f32
    %10 = vector.broadcast %cst_8 : f32 to vector<1x256x128xf32>
    %11 = arith.mulf %7, %10 : vector<1x256x128xf32>
    %12 = arith.select %9, %7, %11 : vector<1x256x128xi1>, vector<1x256x128xf32>
    %13 = arith.truncf %12 : vector<1x256x128xf32> to vector<1x256x128xbf16>
    %c0_9 = arith.constant 0 : index
    %c0_10 = arith.constant 0 : index
    %c0_11 = arith.constant 0 : index
    %14 = vector.load %arg5[%c0_9, %c0_10, %c0_11] : memref<1x256x128xbf16, #tpu.memory_space<vmem>>, vector<1x256x128xbf16>
    tpu.vector_store %arg5[%c0_9, %c0_10, %c0_11], %13 {strides = array<i32>} : memref<1x256x128xbf16, #tpu.memory_space<vmem>>, vector<1x256x128xbf16>,
    return
  }
  func.func @transform_0(%arg0: i32, %arg1: i32) -> (i32, i32, i32) {
    %c0_i32 = arith.constant 0 : i32
    %c0_i32_0 = arith.constant 0 : i32
    return %arg0, %arg1, %c0_i32 : i32, i32, i32
  }
  func.func @transform_1(%arg0: i32, %arg1: i32) -> (i32, i32, i32) {
    %c0_i32 = arith.constant 0 : i32
    %c0_i32_0 = arith.constant 0 : i32
    %c0_i32_1 = arith.constant 0 : i32
    return %arg0, %c0_i32, %c0_i32_0 : i32, i32, i32
  }
  func.func @transform_2(%arg0: i32, %arg1: i32) -> (i32, i32, i32) {
    %c0_i32 = arith.constant 0 : i32
    %c0_i32_0 = arith.constant 0 : i32
    %c0_i32_1 = arith.constant 0 : i32
    return %arg0, %c0_i32, %c0_i32_0 : i32, i32, i32
  }
  func.func @transform_3(%arg0: i32, %arg1: i32) -> (i32, i32, i32) {
    %c0_i32 = arith.constant 0 : i32
    %c0_i32_0 = arith.constant 0 : i32
    return %arg0, %arg1, %c0_i32 : i32, i32, i32
  }
}

module attributes {stable_mosaic.version = 11 : i64} {
  func.func @_mm_scale_shift_stats_kernel(%arg0: i32, %arg1: i32, %arg2: memref<128x512xbf16, #tpu.memory_space<vmem>>, %arg3: memref<512x128xbf16, #tpu.memory_space<vmem>>, %arg4: memref<1x128xf32, #tpu.memory_space<vmem>>, %arg5: memref<1x128xf32, #tpu.memory_space<vmem>>, %arg6: memref<128x128xbf16, #tpu.memory_space<vmem>>, %arg7: memref<1x128xf32, #tpu.memory_space<vmem>>, %arg8: memref<1x128xf32, #tpu.memory_space<vmem>>) attributes {dimension_semantics = [#tpu.dimension_semantics<parallel>, #tpu.dimension_semantics<arbitrary>], iteration_bounds = array<i64: 1, 1>, scalar_prefetch = 0 : i64, scratch_operands = 0 : i64, tpu.core_type = #tpu.core_type<tc>, window_params = [{transform_indices = @transform_0, window_bounds = array<i64: 128, 512>}, {transform_indices = @transform_1, window_bounds = array<i64: 512, 128>}, {transform_indices = @transform_2, window_bounds = array<i64: 1, 128>}, {transform_indices = @transform_3, window_bounds = array<i64: 1, 128>}, {transform_indices = @transform_4, window_bounds = array<i64: 128, 128>}, {transform_indices = @transform_5, window_bounds = array<i64: 1, 128>}, {transform_indices = @transform_6, window_bounds = array<i64: 1, 128>}]} {
    %c0 = arith.constant 0 : index
    %c0_0 = arith.constant 0 : index
    %0 = vector.load %arg2[%c0, %c0_0] : memref<128x512xbf16, #tpu.memory_space<vmem>>, vector<128x512xbf16>
    %c0_1 = arith.constant 0 : index
    %c0_2 = arith.constant 0 : index
    %1 = vector.load %arg3[%c0_1, %c0_2] : memref<512x128xbf16, #tpu.memory_space<vmem>>, vector<512x128xbf16>
    %cst = arith.constant dense<0.000000e+00> : vector<128x128xf32>
    %2 = tpu.matmul %0, %1, %cst {dimension_numbers = #tpu.dot_dimension_numbers<[1], [0], [0], [1], [0, 0, 1, 1], [], []>} : vector<128x512xbf16>, vector<512x128xbf16>, vector<128x128xf32> -> vector<128x128xf32>
    %c0_3 = arith.constant 0 : index
    %c0_4 = arith.constant 0 : index
    %3 = vector.load %arg4[%c0_3, %c0_4] : memref<1x128xf32, #tpu.memory_space<vmem>>, vector<1x128xf32>
    %4 = vector.broadcast %3 : vector<1x128xf32> to vector<128x128xf32>
    %5 = arith.mulf %2, %4 : vector<128x128xf32>
    %c0_5 = arith.constant 0 : index
    %c0_6 = arith.constant 0 : index
    %6 = vector.load %arg5[%c0_5, %c0_6] : memref<1x128xf32, #tpu.memory_space<vmem>>, vector<1x128xf32>
    %7 = vector.broadcast %6 : vector<1x128xf32> to vector<128x128xf32>
    %8 = arith.addf %5, %7 : vector<128x128xf32>
    %9 = arith.truncf %8 : vector<128x128xf32> to vector<128x128xbf16>
    %c0_7 = arith.constant 0 : index
    %c0_8 = arith.constant 0 : index
    %10 = vector.load %arg6[%c0_7, %c0_8] : memref<128x128xbf16, #tpu.memory_space<vmem>>, vector<128x128xbf16>
    tpu.vector_store %arg6[%c0_7, %c0_8], %9 {strides = array<i32>} : memref<128x128xbf16, #tpu.memory_space<vmem>>, vector<128x128xbf16>,
    %cst_9 = arith.constant dense<0.000000e+00> : vector<128xf32>
    %11 = vector.multi_reduction <add>, %8, %cst_9 [0] : vector<128x128xf32> to vector<128xf32>
    %12 = vector.shape_cast %11 : vector<128xf32> to vector<1x128xf32>
    %13 = arith.mulf %8, %8 : vector<128x128xf32>
    %cst_10 = arith.constant dense<0.000000e+00> : vector<128xf32>
    %14 = vector.multi_reduction <add>, %13, %cst_10 [0] : vector<128x128xf32> to vector<128xf32>
    %15 = vector.shape_cast %14 : vector<128xf32> to vector<1x128xf32>
    %c0_i32 = arith.constant 0 : i32
    %16 = arith.cmpi eq, %arg1, %c0_i32 : i32
    %17 = arith.extui %16 : i1 to i32
    %c0_i32_11 = arith.constant 0 : i32
    %18 = arith.cmpi ne, %17, %c0_i32_11 : i32
    scf.if %18 {
      %c0_14 = arith.constant 0 : index
      %c0_15 = arith.constant 0 : index
      %22 = vector.load %arg7[%c0_14, %c0_15] : memref<1x128xf32, #tpu.memory_space<vmem>>, vector<1x128xf32>
      tpu.vector_store %arg7[%c0_14, %c0_15], %12 {strides = array<i32>} : memref<1x128xf32, #tpu.memory_space<vmem>>, vector<1x128xf32>,
      %c0_16 = arith.constant 0 : index
      %c0_17 = arith.constant 0 : index
      %23 = vector.load %arg8[%c0_16, %c0_17] : memref<1x128xf32, #tpu.memory_space<vmem>>, vector<1x128xf32>
      tpu.vector_store %arg8[%c0_16, %c0_17], %15 {strides = array<i32>} : memref<1x128xf32, #tpu.memory_space<vmem>>, vector<1x128xf32>,
    } else {
    }
    %c0_i32_12 = arith.constant 0 : i32
    %19 = arith.cmpi sgt, %arg1, %c0_i32_12 : i32
    %20 = arith.extui %19 : i1 to i32
    %c0_i32_13 = arith.constant 0 : i32
    %21 = arith.cmpi ne, %20, %c0_i32_13 : i32
    scf.if %21 {
      %c0_14 = arith.constant 0 : index
      %c0_15 = arith.constant 0 : index
      %22 = vector.load %arg7[%c0_14, %c0_15] : memref<1x128xf32, #tpu.memory_space<vmem>>, vector<1x128xf32>
      %23 = arith.addf %22, %12 : vector<1x128xf32>
      %c0_16 = arith.constant 0 : index
      %c0_17 = arith.constant 0 : index
      %24 = vector.load %arg7[%c0_16, %c0_17] : memref<1x128xf32, #tpu.memory_space<vmem>>, vector<1x128xf32>
      tpu.vector_store %arg7[%c0_16, %c0_17], %23 {strides = array<i32>} : memref<1x128xf32, #tpu.memory_space<vmem>>, vector<1x128xf32>,
      %c0_18 = arith.constant 0 : index
      %c0_19 = arith.constant 0 : index
      %25 = vector.load %arg8[%c0_18, %c0_19] : memref<1x128xf32, #tpu.memory_space<vmem>>, vector<1x128xf32>
      %26 = arith.addf %25, %15 : vector<1x128xf32>
      %c0_20 = arith.constant 0 : index
      %c0_21 = arith.constant 0 : index
      %27 = vector.load %arg8[%c0_20, %c0_21] : memref<1x128xf32, #tpu.memory_space<vmem>>, vector<1x128xf32>
      tpu.vector_store %arg8[%c0_20, %c0_21], %26 {strides = array<i32>} : memref<1x128xf32, #tpu.memory_space<vmem>>, vector<1x128xf32>,
    } else {
    }
    return
  }
  func.func @transform_0(%arg0: i32, %arg1: i32) -> (i32, i32) {
    %c0_i32 = arith.constant 0 : i32
    %c0_i32_0 = arith.constant 0 : i32
    return %arg1, %c0_i32 : i32, i32
  }
  func.func @transform_1(%arg0: i32, %arg1: i32) -> (i32, i32) {
    %c0_i32 = arith.constant 0 : i32
    %c0_i32_0 = arith.constant 0 : i32
    return %c0_i32, %arg0 : i32, i32
  }
  func.func @transform_2(%arg0: i32, %arg1: i32) -> (i32, i32) {
    %c0_i32 = arith.constant 0 : i32
    %c0_i32_0 = arith.constant 0 : i32
    return %c0_i32, %arg0 : i32, i32
  }
  func.func @transform_3(%arg0: i32, %arg1: i32) -> (i32, i32) {
    %c0_i32 = arith.constant 0 : i32
    %c0_i32_0 = arith.constant 0 : i32
    return %c0_i32, %arg0 : i32, i32
  }
  func.func @transform_4(%arg0: i32, %arg1: i32) -> (i32, i32) {
    %c0_i32 = arith.constant 0 : i32
    return %arg1, %arg0 : i32, i32
  }
  func.func @transform_5(%arg0: i32, %arg1: i32) -> (i32, i32) {
    %c0_i32 = arith.constant 0 : i32
    %c0_i32_0 = arith.constant 0 : i32
    return %c0_i32, %arg0 : i32, i32
  }
  func.func @transform_6(%arg0: i32, %arg1: i32) -> (i32, i32) {
    %c0_i32 = arith.constant 0 : i32
    %c0_i32_0 = arith.constant 0 : i32
    return %c0_i32, %arg0 : i32, i32
  }
}

module attributes {stable_mosaic.version = 11 : i64} {
  func.func @_affine_lrelu_kernel(%arg0: i32, %arg1: i32, %arg2: memref<1x64x128xbf16, #tpu.memory_space<vmem>>, %arg3: memref<1x1x128xf32, #tpu.memory_space<vmem>>, %arg4: memref<1x1x128xf32, #tpu.memory_space<vmem>>, %arg5: memref<1x64x128xbf16, #tpu.memory_space<vmem>>) attributes {dimension_semantics = [#tpu.dimension_semantics<parallel>, #tpu.dimension_semantics<parallel>], iteration_bounds = array<i64: 2, 1>, scalar_prefetch = 0 : i64, scratch_operands = 0 : i64, tpu.core_type = #tpu.core_type<tc>, window_params = [{transform_indices = @transform_0, window_bounds = array<i64: 1, 64, 128>}, {transform_indices = @transform_1, window_bounds = array<i64: 1, 1, 128>}, {transform_indices = @transform_2, window_bounds = array<i64: 1, 1, 128>}, {transform_indices = @transform_3, window_bounds = array<i64: 1, 64, 128>}]} {
    %c0 = arith.constant 0 : index
    %c0_0 = arith.constant 0 : index
    %c0_1 = arith.constant 0 : index
    %0 = vector.load %arg2[%c0, %c0_0, %c0_1] : memref<1x64x128xbf16, #tpu.memory_space<vmem>>, vector<1x64x128xbf16>
    %1 = arith.extf %0 : vector<1x64x128xbf16> to vector<1x64x128xf32>
    %c0_2 = arith.constant 0 : index
    %c0_3 = arith.constant 0 : index
    %c0_4 = arith.constant 0 : index
    %2 = vector.load %arg3[%c0_2, %c0_3, %c0_4] : memref<1x1x128xf32, #tpu.memory_space<vmem>>, vector<1x1x128xf32>
    %3 = vector.broadcast %2 : vector<1x1x128xf32> to vector<1x64x128xf32>
    %4 = arith.mulf %1, %3 : vector<1x64x128xf32>
    %c0_5 = arith.constant 0 : index
    %c0_6 = arith.constant 0 : index
    %c0_7 = arith.constant 0 : index
    %5 = vector.load %arg4[%c0_5, %c0_6, %c0_7] : memref<1x1x128xf32, #tpu.memory_space<vmem>>, vector<1x1x128xf32>
    %6 = vector.broadcast %5 : vector<1x1x128xf32> to vector<1x64x128xf32>
    %7 = arith.addf %4, %6 : vector<1x64x128xf32>
    %cst = arith.constant 0.000000e+00 : f32
    %8 = vector.broadcast %cst : f32 to vector<1x64x128xf32>
    %9 = arith.cmpf oge, %7, %8 : vector<1x64x128xf32>
    %cst_8 = arith.constant 2.000000e-01 : f32
    %10 = vector.broadcast %cst_8 : f32 to vector<1x64x128xf32>
    %11 = arith.mulf %7, %10 : vector<1x64x128xf32>
    %12 = arith.select %9, %7, %11 : vector<1x64x128xi1>, vector<1x64x128xf32>
    %13 = arith.truncf %12 : vector<1x64x128xf32> to vector<1x64x128xbf16>
    %c0_9 = arith.constant 0 : index
    %c0_10 = arith.constant 0 : index
    %c0_11 = arith.constant 0 : index
    %14 = vector.load %arg5[%c0_9, %c0_10, %c0_11] : memref<1x64x128xbf16, #tpu.memory_space<vmem>>, vector<1x64x128xbf16>
    tpu.vector_store %arg5[%c0_9, %c0_10, %c0_11], %13 {strides = array<i32>} : memref<1x64x128xbf16, #tpu.memory_space<vmem>>, vector<1x64x128xbf16>,
    return
  }
  func.func @transform_0(%arg0: i32, %arg1: i32) -> (i32, i32, i32) {
    %c0_i32 = arith.constant 0 : i32
    %c0_i32_0 = arith.constant 0 : i32
    return %arg0, %arg1, %c0_i32 : i32, i32, i32
  }
  func.func @transform_1(%arg0: i32, %arg1: i32) -> (i32, i32, i32) {
    %c0_i32 = arith.constant 0 : i32
    %c0_i32_0 = arith.constant 0 : i32
    %c0_i32_1 = arith.constant 0 : i32
    return %arg0, %c0_i32, %c0_i32_0 : i32, i32, i32
  }
  func.func @transform_2(%arg0: i32, %arg1: i32) -> (i32, i32, i32) {
    %c0_i32 = arith.constant 0 : i32
    %c0_i32_0 = arith.constant 0 : i32
    %c0_i32_1 = arith.constant 0 : i32
    return %arg0, %c0_i32, %c0_i32_0 : i32, i32, i32
  }
  func.func @transform_3(%arg0: i32, %arg1: i32) -> (i32, i32, i32) {
    %c0_i32 = arith.constant 0 : i32
    %c0_i32_0 = arith.constant 0 : i32
    return %arg0, %arg1, %c0_i32 : i32, i32, i32
  }
}

module attributes {stable_mosaic.version = 11 : i64} {
  func.func @_mm_scale_shift_stats_kernel(%arg0: i32, %arg1: i32, %arg2: memref<32x1024xbf16, #tpu.memory_space<vmem>>, %arg3: memref<1024x128xbf16, #tpu.memory_space<vmem>>, %arg4: memref<1x128xf32, #tpu.memory_space<vmem>>, %arg5: memref<1x128xf32, #tpu.memory_space<vmem>>, %arg6: memref<32x128xbf16, #tpu.memory_space<vmem>>, %arg7: memref<1x128xf32, #tpu.memory_space<vmem>>, %arg8: memref<1x128xf32, #tpu.memory_space<vmem>>) attributes {dimension_semantics = [#tpu.dimension_semantics<parallel>, #tpu.dimension_semantics<arbitrary>], iteration_bounds = array<i64: 1, 1>, scalar_prefetch = 0 : i64, scratch_operands = 0 : i64, tpu.core_type = #tpu.core_type<tc>, window_params = [{transform_indices = @transform_0, window_bounds = array<i64: 32, 1024>}, {transform_indices = @transform_1, window_bounds = array<i64: 1024, 128>}, {transform_indices = @transform_2, window_bounds = array<i64: 1, 128>}, {transform_indices = @transform_3, window_bounds = array<i64: 1, 128>}, {transform_indices = @transform_4, window_bounds = array<i64: 32, 128>}, {transform_indices = @transform_5, window_bounds = array<i64: 1, 128>}, {transform_indices = @transform_6, window_bounds = array<i64: 1, 128>}]} {
    %c0 = arith.constant 0 : index
    %c0_0 = arith.constant 0 : index
    %0 = vector.load %arg2[%c0, %c0_0] : memref<32x1024xbf16, #tpu.memory_space<vmem>>, vector<32x1024xbf16>
    %c0_1 = arith.constant 0 : index
    %c0_2 = arith.constant 0 : index
    %1 = vector.load %arg3[%c0_1, %c0_2] : memref<1024x128xbf16, #tpu.memory_space<vmem>>, vector<1024x128xbf16>
    %cst = arith.constant dense<0.000000e+00> : vector<32x128xf32>
    %2 = tpu.matmul %0, %1, %cst {dimension_numbers = #tpu.dot_dimension_numbers<[1], [0], [0], [1], [0, 0, 1, 1], [], []>} : vector<32x1024xbf16>, vector<1024x128xbf16>, vector<32x128xf32> -> vector<32x128xf32>
    %c0_3 = arith.constant 0 : index
    %c0_4 = arith.constant 0 : index
    %3 = vector.load %arg4[%c0_3, %c0_4] : memref<1x128xf32, #tpu.memory_space<vmem>>, vector<1x128xf32>
    %4 = vector.broadcast %3 : vector<1x128xf32> to vector<32x128xf32>
    %5 = arith.mulf %2, %4 : vector<32x128xf32>
    %c0_5 = arith.constant 0 : index
    %c0_6 = arith.constant 0 : index
    %6 = vector.load %arg5[%c0_5, %c0_6] : memref<1x128xf32, #tpu.memory_space<vmem>>, vector<1x128xf32>
    %7 = vector.broadcast %6 : vector<1x128xf32> to vector<32x128xf32>
    %8 = arith.addf %5, %7 : vector<32x128xf32>
    %9 = arith.truncf %8 : vector<32x128xf32> to vector<32x128xbf16>
    %c0_7 = arith.constant 0 : index
    %c0_8 = arith.constant 0 : index
    %10 = vector.load %arg6[%c0_7, %c0_8] : memref<32x128xbf16, #tpu.memory_space<vmem>>, vector<32x128xbf16>
    tpu.vector_store %arg6[%c0_7, %c0_8], %9 {strides = array<i32>} : memref<32x128xbf16, #tpu.memory_space<vmem>>, vector<32x128xbf16>,
    %cst_9 = arith.constant dense<0.000000e+00> : vector<128xf32>
    %11 = vector.multi_reduction <add>, %8, %cst_9 [0] : vector<32x128xf32> to vector<128xf32>
    %12 = vector.shape_cast %11 : vector<128xf32> to vector<1x128xf32>
    %13 = arith.mulf %8, %8 : vector<32x128xf32>
    %cst_10 = arith.constant dense<0.000000e+00> : vector<128xf32>
    %14 = vector.multi_reduction <add>, %13, %cst_10 [0] : vector<32x128xf32> to vector<128xf32>
    %15 = vector.shape_cast %14 : vector<128xf32> to vector<1x128xf32>
    %c0_i32 = arith.constant 0 : i32
    %16 = arith.cmpi eq, %arg1, %c0_i32 : i32
    %17 = arith.extui %16 : i1 to i32
    %c0_i32_11 = arith.constant 0 : i32
    %18 = arith.cmpi ne, %17, %c0_i32_11 : i32
    scf.if %18 {
      %c0_14 = arith.constant 0 : index
      %c0_15 = arith.constant 0 : index
      %22 = vector.load %arg7[%c0_14, %c0_15] : memref<1x128xf32, #tpu.memory_space<vmem>>, vector<1x128xf32>
      tpu.vector_store %arg7[%c0_14, %c0_15], %12 {strides = array<i32>} : memref<1x128xf32, #tpu.memory_space<vmem>>, vector<1x128xf32>,
      %c0_16 = arith.constant 0 : index
      %c0_17 = arith.constant 0 : index
      %23 = vector.load %arg8[%c0_16, %c0_17] : memref<1x128xf32, #tpu.memory_space<vmem>>, vector<1x128xf32>
      tpu.vector_store %arg8[%c0_16, %c0_17], %15 {strides = array<i32>} : memref<1x128xf32, #tpu.memory_space<vmem>>, vector<1x128xf32>,
    } else {
    }
    %c0_i32_12 = arith.constant 0 : i32
    %19 = arith.cmpi sgt, %arg1, %c0_i32_12 : i32
    %20 = arith.extui %19 : i1 to i32
    %c0_i32_13 = arith.constant 0 : i32
    %21 = arith.cmpi ne, %20, %c0_i32_13 : i32
    scf.if %21 {
      %c0_14 = arith.constant 0 : index
      %c0_15 = arith.constant 0 : index
      %22 = vector.load %arg7[%c0_14, %c0_15] : memref<1x128xf32, #tpu.memory_space<vmem>>, vector<1x128xf32>
      %23 = arith.addf %22, %12 : vector<1x128xf32>
      %c0_16 = arith.constant 0 : index
      %c0_17 = arith.constant 0 : index
      %24 = vector.load %arg7[%c0_16, %c0_17] : memref<1x128xf32, #tpu.memory_space<vmem>>, vector<1x128xf32>
      tpu.vector_store %arg7[%c0_16, %c0_17], %23 {strides = array<i32>} : memref<1x128xf32, #tpu.memory_space<vmem>>, vector<1x128xf32>,
      %c0_18 = arith.constant 0 : index
      %c0_19 = arith.constant 0 : index
      %25 = vector.load %arg8[%c0_18, %c0_19] : memref<1x128xf32, #tpu.memory_space<vmem>>, vector<1x128xf32>
      %26 = arith.addf %25, %15 : vector<1x128xf32>
      %c0_20 = arith.constant 0 : index
      %c0_21 = arith.constant 0 : index
      %27 = vector.load %arg8[%c0_20, %c0_21] : memref<1x128xf32, #tpu.memory_space<vmem>>, vector<1x128xf32>
      tpu.vector_store %arg8[%c0_20, %c0_21], %26 {strides = array<i32>} : memref<1x128xf32, #tpu.memory_space<vmem>>, vector<1x128xf32>,
    } else {
    }
    return
  }
  func.func @transform_0(%arg0: i32, %arg1: i32) -> (i32, i32) {
    %c0_i32 = arith.constant 0 : i32
    %c0_i32_0 = arith.constant 0 : i32
    return %arg1, %c0_i32 : i32, i32
  }
  func.func @transform_1(%arg0: i32, %arg1: i32) -> (i32, i32) {
    %c0_i32 = arith.constant 0 : i32
    %c0_i32_0 = arith.constant 0 : i32
    return %c0_i32, %arg0 : i32, i32
  }
  func.func @transform_2(%arg0: i32, %arg1: i32) -> (i32, i32) {
    %c0_i32 = arith.constant 0 : i32
    %c0_i32_0 = arith.constant 0 : i32
    return %c0_i32, %arg0 : i32, i32
  }
  func.func @transform_3(%arg0: i32, %arg1: i32) -> (i32, i32) {
    %c0_i32 = arith.constant 0 : i32
    %c0_i32_0 = arith.constant 0 : i32
    return %c0_i32, %arg0 : i32, i32
  }
  func.func @transform_4(%arg0: i32, %arg1: i32) -> (i32, i32) {
    %c0_i32 = arith.constant 0 : i32
    return %arg1, %arg0 : i32, i32
  }
  func.func @transform_5(%arg0: i32, %arg1: i32) -> (i32, i32) {
    %c0_i32 = arith.constant 0 : i32
    %c0_i32_0 = arith.constant 0 : i32
    return %c0_i32, %arg0 : i32, i32
  }
  func.func @transform_6(%arg0: i32, %arg1: i32) -> (i32, i32) {
    %c0_i32 = arith.constant 0 : i32
    %c0_i32_0 = arith.constant 0 : i32
    return %c0_i32, %arg0 : i32, i32
  }
}

module attributes {stable_mosaic.version = 11 : i64} {
  func.func @_affine_lrelu_kernel(%arg0: i32, %arg1: i32, %arg2: memref<1x16x128xbf16, #tpu.memory_space<vmem>>, %arg3: memref<1x1x128xf32, #tpu.memory_space<vmem>>, %arg4: memref<1x1x128xf32, #tpu.memory_space<vmem>>, %arg5: memref<1x16x128xbf16, #tpu.memory_space<vmem>>) attributes {dimension_semantics = [#tpu.dimension_semantics<parallel>, #tpu.dimension_semantics<parallel>], iteration_bounds = array<i64: 2, 1>, scalar_prefetch = 0 : i64, scratch_operands = 0 : i64, tpu.core_type = #tpu.core_type<tc>, window_params = [{transform_indices = @transform_0, window_bounds = array<i64: 1, 16, 128>}, {transform_indices = @transform_1, window_bounds = array<i64: 1, 1, 128>}, {transform_indices = @transform_2, window_bounds = array<i64: 1, 1, 128>}, {transform_indices = @transform_3, window_bounds = array<i64: 1, 16, 128>}]} {
    %c0 = arith.constant 0 : index
    %c0_0 = arith.constant 0 : index
    %c0_1 = arith.constant 0 : index
    %0 = vector.load %arg2[%c0, %c0_0, %c0_1] : memref<1x16x128xbf16, #tpu.memory_space<vmem>>, vector<1x16x128xbf16>
    %1 = arith.extf %0 : vector<1x16x128xbf16> to vector<1x16x128xf32>
    %c0_2 = arith.constant 0 : index
    %c0_3 = arith.constant 0 : index
    %c0_4 = arith.constant 0 : index
    %2 = vector.load %arg3[%c0_2, %c0_3, %c0_4] : memref<1x1x128xf32, #tpu.memory_space<vmem>>, vector<1x1x128xf32>
    %3 = vector.broadcast %2 : vector<1x1x128xf32> to vector<1x16x128xf32>
    %4 = arith.mulf %1, %3 : vector<1x16x128xf32>
    %c0_5 = arith.constant 0 : index
    %c0_6 = arith.constant 0 : index
    %c0_7 = arith.constant 0 : index
    %5 = vector.load %arg4[%c0_5, %c0_6, %c0_7] : memref<1x1x128xf32, #tpu.memory_space<vmem>>, vector<1x1x128xf32>
    %6 = vector.broadcast %5 : vector<1x1x128xf32> to vector<1x16x128xf32>
    %7 = arith.addf %4, %6 : vector<1x16x128xf32>
    %cst = arith.constant 0.000000e+00 : f32
    %8 = vector.broadcast %cst : f32 to vector<1x16x128xf32>
    %9 = arith.cmpf oge, %7, %8 : vector<1x16x128xf32>
    %cst_8 = arith.constant 2.000000e-01 : f32
    %10 = vector.broadcast %cst_8 : f32 to vector<1x16x128xf32>
    %11 = arith.mulf %7, %10 : vector<1x16x128xf32>
    %12 = arith.select %9, %7, %11 : vector<1x16x128xi1>, vector<1x16x128xf32>
    %13 = arith.truncf %12 : vector<1x16x128xf32> to vector<1x16x128xbf16>
    %c0_9 = arith.constant 0 : index
    %c0_10 = arith.constant 0 : index
    %c0_11 = arith.constant 0 : index
    %14 = vector.load %arg5[%c0_9, %c0_10, %c0_11] : memref<1x16x128xbf16, #tpu.memory_space<vmem>>, vector<1x16x128xbf16>
    tpu.vector_store %arg5[%c0_9, %c0_10, %c0_11], %13 {strides = array<i32>} : memref<1x16x128xbf16, #tpu.memory_space<vmem>>, vector<1x16x128xbf16>,
    return
  }
  func.func @transform_0(%arg0: i32, %arg1: i32) -> (i32, i32, i32) {
    %c0_i32 = arith.constant 0 : i32
    %c0_i32_0 = arith.constant 0 : i32
    return %arg0, %arg1, %c0_i32 : i32, i32, i32
  }
  func.func @transform_1(%arg0: i32, %arg1: i32) -> (i32, i32, i32) {
    %c0_i32 = arith.constant 0 : i32
    %c0_i32_0 = arith.constant 0 : i32
    %c0_i32_1 = arith.constant 0 : i32
    return %arg0, %c0_i32, %c0_i32_0 : i32, i32, i32
  }
  func.func @transform_2(%arg0: i32, %arg1: i32) -> (i32, i32, i32) {
    %c0_i32 = arith.constant 0 : i32
    %c0_i32_0 = arith.constant 0 : i32
    %c0_i32_1 = arith.constant 0 : i32
    return %arg0, %c0_i32, %c0_i32_0 : i32, i32, i32
  }
  func.func @transform_3(%arg0: i32, %arg1: i32) -> (i32, i32, i32) {
    %c0_i32 = arith.constant 0 : i32
    %c0_i32_0 = arith.constant 0 : i32
    return %arg0, %arg1, %c0_i32 : i32, i32, i32
  }
}

module attributes {stable_mosaic.version = 11 : i64} {
  func.func @_mm_scale_shift_stats_kernel(%arg0: i32, %arg1: i32, %arg2: memref<16x2048xbf16, #tpu.memory_space<vmem>>, %arg3: memref<2048x128xbf16, #tpu.memory_space<vmem>>, %arg4: memref<1x128xf32, #tpu.memory_space<vmem>>, %arg5: memref<1x128xf32, #tpu.memory_space<vmem>>, %arg6: memref<16x128xbf16, #tpu.memory_space<vmem>>, %arg7: memref<1x128xf32, #tpu.memory_space<vmem>>, %arg8: memref<1x128xf32, #tpu.memory_space<vmem>>) attributes {dimension_semantics = [#tpu.dimension_semantics<parallel>, #tpu.dimension_semantics<arbitrary>], iteration_bounds = array<i64: 2, 1>, scalar_prefetch = 0 : i64, scratch_operands = 0 : i64, tpu.core_type = #tpu.core_type<tc>, window_params = [{transform_indices = @transform_0, window_bounds = array<i64: 16, 2048>}, {transform_indices = @transform_1, window_bounds = array<i64: 2048, 128>}, {transform_indices = @transform_2, window_bounds = array<i64: 1, 128>}, {transform_indices = @transform_3, window_bounds = array<i64: 1, 128>}, {transform_indices = @transform_4, window_bounds = array<i64: 16, 128>}, {transform_indices = @transform_5, window_bounds = array<i64: 1, 128>}, {transform_indices = @transform_6, window_bounds = array<i64: 1, 128>}]} {
    %c0 = arith.constant 0 : index
    %c0_0 = arith.constant 0 : index
    %0 = vector.load %arg2[%c0, %c0_0] : memref<16x2048xbf16, #tpu.memory_space<vmem>>, vector<16x2048xbf16>
    %c0_1 = arith.constant 0 : index
    %c0_2 = arith.constant 0 : index
    %1 = vector.load %arg3[%c0_1, %c0_2] : memref<2048x128xbf16, #tpu.memory_space<vmem>>, vector<2048x128xbf16>
    %cst = arith.constant dense<0.000000e+00> : vector<16x128xf32>
    %2 = tpu.matmul %0, %1, %cst {dimension_numbers = #tpu.dot_dimension_numbers<[1], [0], [0], [1], [0, 0, 1, 1], [], []>} : vector<16x2048xbf16>, vector<2048x128xbf16>, vector<16x128xf32> -> vector<16x128xf32>
    %c0_3 = arith.constant 0 : index
    %c0_4 = arith.constant 0 : index
    %3 = vector.load %arg4[%c0_3, %c0_4] : memref<1x128xf32, #tpu.memory_space<vmem>>, vector<1x128xf32>
    %4 = vector.broadcast %3 : vector<1x128xf32> to vector<16x128xf32>
    %5 = arith.mulf %2, %4 : vector<16x128xf32>
    %c0_5 = arith.constant 0 : index
    %c0_6 = arith.constant 0 : index
    %6 = vector.load %arg5[%c0_5, %c0_6] : memref<1x128xf32, #tpu.memory_space<vmem>>, vector<1x128xf32>
    %7 = vector.broadcast %6 : vector<1x128xf32> to vector<16x128xf32>
    %8 = arith.addf %5, %7 : vector<16x128xf32>
    %9 = arith.truncf %8 : vector<16x128xf32> to vector<16x128xbf16>
    %c0_7 = arith.constant 0 : index
    %c0_8 = arith.constant 0 : index
    %10 = vector.load %arg6[%c0_7, %c0_8] : memref<16x128xbf16, #tpu.memory_space<vmem>>, vector<16x128xbf16>
    tpu.vector_store %arg6[%c0_7, %c0_8], %9 {strides = array<i32>} : memref<16x128xbf16, #tpu.memory_space<vmem>>, vector<16x128xbf16>,
    %cst_9 = arith.constant dense<0.000000e+00> : vector<128xf32>
    %11 = vector.multi_reduction <add>, %8, %cst_9 [0] : vector<16x128xf32> to vector<128xf32>
    %12 = vector.shape_cast %11 : vector<128xf32> to vector<1x128xf32>
    %13 = arith.mulf %8, %8 : vector<16x128xf32>
    %cst_10 = arith.constant dense<0.000000e+00> : vector<128xf32>
    %14 = vector.multi_reduction <add>, %13, %cst_10 [0] : vector<16x128xf32> to vector<128xf32>
    %15 = vector.shape_cast %14 : vector<128xf32> to vector<1x128xf32>
    %c0_i32 = arith.constant 0 : i32
    %16 = arith.cmpi eq, %arg1, %c0_i32 : i32
    %17 = arith.extui %16 : i1 to i32
    %c0_i32_11 = arith.constant 0 : i32
    %18 = arith.cmpi ne, %17, %c0_i32_11 : i32
    scf.if %18 {
      %c0_14 = arith.constant 0 : index
      %c0_15 = arith.constant 0 : index
      %22 = vector.load %arg7[%c0_14, %c0_15] : memref<1x128xf32, #tpu.memory_space<vmem>>, vector<1x128xf32>
      tpu.vector_store %arg7[%c0_14, %c0_15], %12 {strides = array<i32>} : memref<1x128xf32, #tpu.memory_space<vmem>>, vector<1x128xf32>,
      %c0_16 = arith.constant 0 : index
      %c0_17 = arith.constant 0 : index
      %23 = vector.load %arg8[%c0_16, %c0_17] : memref<1x128xf32, #tpu.memory_space<vmem>>, vector<1x128xf32>
      tpu.vector_store %arg8[%c0_16, %c0_17], %15 {strides = array<i32>} : memref<1x128xf32, #tpu.memory_space<vmem>>, vector<1x128xf32>,
    } else {
    }
    %c0_i32_12 = arith.constant 0 : i32
    %19 = arith.cmpi sgt, %arg1, %c0_i32_12 : i32
    %20 = arith.extui %19 : i1 to i32
    %c0_i32_13 = arith.constant 0 : i32
    %21 = arith.cmpi ne, %20, %c0_i32_13 : i32
    scf.if %21 {
      %c0_14 = arith.constant 0 : index
      %c0_15 = arith.constant 0 : index
      %22 = vector.load %arg7[%c0_14, %c0_15] : memref<1x128xf32, #tpu.memory_space<vmem>>, vector<1x128xf32>
      %23 = arith.addf %22, %12 : vector<1x128xf32>
      %c0_16 = arith.constant 0 : index
      %c0_17 = arith.constant 0 : index
      %24 = vector.load %arg7[%c0_16, %c0_17] : memref<1x128xf32, #tpu.memory_space<vmem>>, vector<1x128xf32>
      tpu.vector_store %arg7[%c0_16, %c0_17], %23 {strides = array<i32>} : memref<1x128xf32, #tpu.memory_space<vmem>>, vector<1x128xf32>,
      %c0_18 = arith.constant 0 : index
      %c0_19 = arith.constant 0 : index
      %25 = vector.load %arg8[%c0_18, %c0_19] : memref<1x128xf32, #tpu.memory_space<vmem>>, vector<1x128xf32>
      %26 = arith.addf %25, %15 : vector<1x128xf32>
      %c0_20 = arith.constant 0 : index
      %c0_21 = arith.constant 0 : index
      %27 = vector.load %arg8[%c0_20, %c0_21] : memref<1x128xf32, #tpu.memory_space<vmem>>, vector<1x128xf32>
      tpu.vector_store %arg8[%c0_20, %c0_21], %26 {strides = array<i32>} : memref<1x128xf32, #tpu.memory_space<vmem>>, vector<1x128xf32>,
    } else {
    }
    return
  }
  func.func @transform_0(%arg0: i32, %arg1: i32) -> (i32, i32) {
    %c0_i32 = arith.constant 0 : i32
    %c0_i32_0 = arith.constant 0 : i32
    return %arg1, %c0_i32 : i32, i32
  }
  func.func @transform_1(%arg0: i32, %arg1: i32) -> (i32, i32) {
    %c0_i32 = arith.constant 0 : i32
    %c0_i32_0 = arith.constant 0 : i32
    return %c0_i32, %arg0 : i32, i32
  }
  func.func @transform_2(%arg0: i32, %arg1: i32) -> (i32, i32) {
    %c0_i32 = arith.constant 0 : i32
    %c0_i32_0 = arith.constant 0 : i32
    return %c0_i32, %arg0 : i32, i32
  }
  func.func @transform_3(%arg0: i32, %arg1: i32) -> (i32, i32) {
    %c0_i32 = arith.constant 0 : i32
    %c0_i32_0 = arith.constant 0 : i32
    return %c0_i32, %arg0 : i32, i32
  }
  func.func @transform_4(%arg0: i32, %arg1: i32) -> (i32, i32) {
    %c0_i32 = arith.constant 0 : i32
    return %arg1, %arg0 : i32, i32
  }
  func.func @transform_5(%arg0: i32, %arg1: i32) -> (i32, i32) {
    %c0_i32 = arith.constant 0 : i32
    %c0_i32_0 = arith.constant 0 : i32
    return %c0_i32, %arg0 : i32, i32
  }
  func.func @transform_6(%arg0: i32, %arg1: i32) -> (i32, i32) {
    %c0_i32 = arith.constant 0 : i32
    %c0_i32_0 = arith.constant 0 : i32
    return %c0_i32, %arg0 : i32, i32
  }
}

module attributes {stable_mosaic.version = 11 : i64} {
  func.func @_affine_lrelu_kernel(%arg0: i32, %arg1: i32, %arg2: memref<1x4x256xbf16, #tpu.memory_space<vmem>>, %arg3: memref<1x1x256xf32, #tpu.memory_space<vmem>>, %arg4: memref<1x1x256xf32, #tpu.memory_space<vmem>>, %arg5: memref<1x4x256xbf16, #tpu.memory_space<vmem>>) attributes {dimension_semantics = [#tpu.dimension_semantics<parallel>, #tpu.dimension_semantics<parallel>], iteration_bounds = array<i64: 2, 1>, scalar_prefetch = 0 : i64, scratch_operands = 0 : i64, tpu.core_type = #tpu.core_type<tc>, window_params = [{transform_indices = @transform_0, window_bounds = array<i64: 1, 4, 256>}, {transform_indices = @transform_1, window_bounds = array<i64: 1, 1, 256>}, {transform_indices = @transform_2, window_bounds = array<i64: 1, 1, 256>}, {transform_indices = @transform_3, window_bounds = array<i64: 1, 4, 256>}]} {
    %c0 = arith.constant 0 : index
    %c0_0 = arith.constant 0 : index
    %c0_1 = arith.constant 0 : index
    %0 = vector.load %arg2[%c0, %c0_0, %c0_1] : memref<1x4x256xbf16, #tpu.memory_space<vmem>>, vector<1x4x256xbf16>
    %1 = arith.extf %0 : vector<1x4x256xbf16> to vector<1x4x256xf32>
    %c0_2 = arith.constant 0 : index
    %c0_3 = arith.constant 0 : index
    %c0_4 = arith.constant 0 : index
    %2 = vector.load %arg3[%c0_2, %c0_3, %c0_4] : memref<1x1x256xf32, #tpu.memory_space<vmem>>, vector<1x1x256xf32>
    %3 = vector.broadcast %2 : vector<1x1x256xf32> to vector<1x4x256xf32>
    %4 = arith.mulf %1, %3 : vector<1x4x256xf32>
    %c0_5 = arith.constant 0 : index
    %c0_6 = arith.constant 0 : index
    %c0_7 = arith.constant 0 : index
    %5 = vector.load %arg4[%c0_5, %c0_6, %c0_7] : memref<1x1x256xf32, #tpu.memory_space<vmem>>, vector<1x1x256xf32>
    %6 = vector.broadcast %5 : vector<1x1x256xf32> to vector<1x4x256xf32>
    %7 = arith.addf %4, %6 : vector<1x4x256xf32>
    %cst = arith.constant 0.000000e+00 : f32
    %8 = vector.broadcast %cst : f32 to vector<1x4x256xf32>
    %9 = arith.cmpf oge, %7, %8 : vector<1x4x256xf32>
    %cst_8 = arith.constant 2.000000e-01 : f32
    %10 = vector.broadcast %cst_8 : f32 to vector<1x4x256xf32>
    %11 = arith.mulf %7, %10 : vector<1x4x256xf32>
    %12 = arith.select %9, %7, %11 : vector<1x4x256xi1>, vector<1x4x256xf32>
    %13 = arith.truncf %12 : vector<1x4x256xf32> to vector<1x4x256xbf16>
    %c0_9 = arith.constant 0 : index
    %c0_10 = arith.constant 0 : index
    %c0_11 = arith.constant 0 : index
    %14 = vector.load %arg5[%c0_9, %c0_10, %c0_11] : memref<1x4x256xbf16, #tpu.memory_space<vmem>>, vector<1x4x256xbf16>
    tpu.vector_store %arg5[%c0_9, %c0_10, %c0_11], %13 {strides = array<i32>} : memref<1x4x256xbf16, #tpu.memory_space<vmem>>, vector<1x4x256xbf16>,
    return
  }
  func.func @transform_0(%arg0: i32, %arg1: i32) -> (i32, i32, i32) {
    %c0_i32 = arith.constant 0 : i32
    %c0_i32_0 = arith.constant 0 : i32
    return %arg0, %arg1, %c0_i32 : i32, i32, i32
  }
  func.func @transform_1(%arg0: i32, %arg1: i32) -> (i32, i32, i32) {
    %c0_i32 = arith.constant 0 : i32
    %c0_i32_0 = arith.constant 0 : i32
    %c0_i32_1 = arith.constant 0 : i32
    return %arg0, %c0_i32, %c0_i32_0 : i32, i32, i32
  }
  func.func @transform_2(%arg0: i32, %arg1: i32) -> (i32, i32, i32) {
    %c0_i32 = arith.constant 0 : i32
    %c0_i32_0 = arith.constant 0 : i32
    %c0_i32_1 = arith.constant 0 : i32
    return %arg0, %c0_i32, %c0_i32_0 : i32, i32, i32
  }
  func.func @transform_3(%arg0: i32, %arg1: i32) -> (i32, i32, i32) {
    %c0_i32 = arith.constant 0 : i32
    %c0_i32_0 = arith.constant 0 : i32
    return %arg0, %arg1, %c0_i32 : i32, i32, i32
  }
}

module attributes {stable_mosaic.version = 11 : i64} {
  func.func @_rowdot_bias_kernel(%arg0: i32, %arg1: memref<8x4096xbf16, #tpu.memory_space<vmem>>, %arg2: memref<1x4096xf32, #tpu.memory_space<vmem>>, %arg3: memref<1x128xf32, #tpu.memory_space<vmem>>, %arg4: memref<8x128xf32, #tpu.memory_space<vmem>>) attributes {dimension_semantics = [#tpu.dimension_semantics<arbitrary>], iteration_bounds = array<i64: 1>, scalar_prefetch = 0 : i64, scratch_operands = 0 : i64, tpu.core_type = #tpu.core_type<tc>, window_params = [{pipeline_mode = #tpu.pipeline_mode<synchronous>, transform_indices = @transform_0, window_bounds = array<i64: 8, 4096>}, {pipeline_mode = #tpu.pipeline_mode<synchronous>, transform_indices = @transform_1, window_bounds = array<i64: 1, 4096>}, {pipeline_mode = #tpu.pipeline_mode<synchronous>, transform_indices = @transform_2, window_bounds = array<i64: 1, 128>}, {pipeline_mode = #tpu.pipeline_mode<synchronous>, transform_indices = @transform_3, window_bounds = array<i64: 8, 128>}]} {
    %c0 = arith.constant 0 : index
    %c0_0 = arith.constant 0 : index
    %0 = vector.load %arg1[%c0, %c0_0] : memref<8x4096xbf16, #tpu.memory_space<vmem>>, vector<8x4096xbf16>
    %1 = arith.extf %0 : vector<8x4096xbf16> to vector<8x4096xf32>
    %c0_1 = arith.constant 0 : index
    %c0_2 = arith.constant 0 : index
    %2 = vector.load %arg2[%c0_1, %c0_2] : memref<1x4096xf32, #tpu.memory_space<vmem>>, vector<1x4096xf32>
    %3 = vector.broadcast %2 : vector<1x4096xf32> to vector<8x4096xf32>
    %4 = arith.mulf %1, %3 : vector<8x4096xf32>
    %cst = arith.constant dense<0.000000e+00> : vector<8xf32>
    %5 = vector.multi_reduction <add>, %4, %cst [1] : vector<8x4096xf32> to vector<8xf32>
    %6 = vector.shape_cast %5 : vector<8xf32> to vector<8x1xf32>
    %c0_3 = arith.constant 0 : index
    %c0_4 = arith.constant 0 : index
    %7 = vector.load %arg3[%c0_3, %c0_4] : memref<1x128xf32, #tpu.memory_space<vmem>>, vector<1x128xf32>
    %8 = vector.broadcast %6 : vector<8x1xf32> to vector<8x128xf32>
    %9 = vector.broadcast %7 : vector<1x128xf32> to vector<8x128xf32>
    %10 = arith.addf %8, %9 : vector<8x128xf32>
    %c0_5 = arith.constant 0 : index
    %c0_6 = arith.constant 0 : index
    %11 = vector.load %arg4[%c0_5, %c0_6] : memref<8x128xf32, #tpu.memory_space<vmem>>, vector<8x128xf32>
    tpu.vector_store %arg4[%c0_5, %c0_6], %10 {strides = array<i32>} : memref<8x128xf32, #tpu.memory_space<vmem>>, vector<8x128xf32>,
    return
  }
  func.func @transform_0(%arg0: i32) -> (i32, i32) {
    %c0_i32 = arith.constant 0 : i32
    %c0_i32_0 = arith.constant 0 : i32
    %c0_i32_1 = arith.constant 0 : i32
    return %c0_i32, %c0_i32_0 : i32, i32
  }
  func.func @transform_1(%arg0: i32) -> (i32, i32) {
    %c0_i32 = arith.constant 0 : i32
    %c0_i32_0 = arith.constant 0 : i32
    %c0_i32_1 = arith.constant 0 : i32
    return %c0_i32, %c0_i32_0 : i32, i32
  }
  func.func @transform_2(%arg0: i32) -> (i32, i32) {
    %c0_i32 = arith.constant 0 : i32
    %c0_i32_0 = arith.constant 0 : i32
    %c0_i32_1 = arith.constant 0 : i32
    return %c0_i32, %c0_i32_0 : i32, i32
  }
  func.func @transform_3(%arg0: i32) -> (i32, i32) {
    %c0_i32 = arith.constant 0 : i32
    %c0_i32_0 = arith.constant 0 : i32
    %c0_i32_1 = arith.constant 0 : i32
    return %c0_i32, %c0_i32_0 : i32, i32
  }
}

</mosaic_0001>

<llo_original>
// kernel: _lambda_.12
$region0: #{_lambda_.12}
  #allocation0 [shape = 'u32[]', space=smem, size = 0x4, offset = 0x4, fixed_abs, tag = 'smem constant byte address 0x4 - core index']
  #allocation1 [shape = 'u32[144,128]{1,0:T(1,128)}', space=vmem, size = 0x12000, scoped, tag = 'internal scratch']
  %s0 = inlined_call_operand.vmem [shape: bf16[2,256,128], index: 0, kind: input, shape index: {}]
  %s1 = inlined_call_operand.vmem [shape: f32[2,1,128], index: 1, kind: input, shape index: {}]
  %s2 = inlined_call_operand.vmem [shape: f32[2,1,128], index: 2, kind: input, shape index: {}]
  %s3 = inlined_call_operand.vmem [shape: bf16[2,256,128], index: 3, kind: output, shape index: {}]
  %s4 = sld [smem:[#allocation0]]
  $region45: #{_lambda_.12} parent=0
    _
  %s6 = ssub.s32 1, %s4
  %s7 = scalar_select 0, %s6, %s4
  loop: start=0, step=1, limit=4
  $region2: #{_lambda_.12} parent=0 // loop_pre_header
    _
  $region3: #{_lambda_.12} parent=0 // loop_header
    %s9 = sphi 0, %s13
    %p10 = scmp.ge.s32.totalorder %s9, 4
    %s16 = sphi 0, %s28
    %s17 = sphi 0, %s24
    %s18 = sphi 0, %s16
    %s19 = sphi 0, %s17
    %s20 = sphi 0, %s18
    %s21 = sphi 0, %s19
    %s33 = sphi 0, %s35
    %s36 = sphi 0, %s33
    %s37 = sphi 0, %s36
    %s53 = sphi 0, %s37
    %s59 = sphi 0, %s61
    %s62 = sphi 0, %s59
    %s63 = sphi 0, %s62
    %s79 = sphi 0, %s63
    %s85 = sphi 0, %s87
    %s88 = sphi 0, %s85
    %s89 = sphi 0, %s88
    %s105 = sphi 0, %s89
    %s113 = sphi 0, %s115
    %s116 = sphi 0, %s113
    %s117 = sphi 0, %s116
    %s133 = sphi 0, %s117
  $region4: #{_lambda_.12} parent=0 // loop_header_branch
    %12 = sbr.rel (%p10) target = $region8
  $region5: #{_lambda_.12} parent=0 // loop_body
    %s14 = ssub.s32 %s9, 1
    %s15 = ssub.s32 %s9, 2
    %s22 = sadd.s32 1, %s17
    %p23 = scmp.ge.s32.totalorder %s22, 1
    %s24 = scalar_select %p23, 0, %s22
    %s25 = sadd.s32 1, %s16
    %s26 = scalar_select %p23, %s25, %s16
    %p27 = scmp.ge.s32.totalorder %s26, 2
    %s28 = scalar_select %p27, 0, %s26
    %s29 = ssub.s32 %s16, %s28
    %s30 = ssub.s32 %s17, %s24
    %s31 = sor.u32 %s29, %s30
    %p32 = scmp.eq.s32.totalorder %s31, 0
    %s34 = sadd.s32 %s33, 1
    %s35 = scalar_select %p32, %s33, %s34
    %p38 = pneg %p32
    %p39 = scmp.eq.s32.totalorder %s9, 1
    %p40 = por %p38, %p39
    %p41 = scmp.ne.s32.totalorder %s33, %s36
    %p42 = scmp.eq.s32.totalorder %s9, 0
    %p43 = por %p41, %p42
    %p44 = scmp.ne.s32.totalorder %s33, %s36
    %p45 = scmp.eq.s32.totalorder %s14, 1
    %p46 = por %p44, %p45
    %p47 = scmp.ne.s32.totalorder %s36, %s37
    %p48 = scmp.eq.s32.totalorder %s14, 0
    %p49 = por %p47, %p48
    %p50 = scmp.ne.s32.totalorder %s36, %s37
    %p51 = scmp.eq.s32.totalorder %s15, 1
    %p52 = por %p50, %p51
    %p54 = scmp.ne.s32.totalorder %s37, %s53
    %p55 = scmp.eq.s32.totalorder %s15, 0
    %p56 = por %p54, %p55
    %s57 = ssub.s32 %s16, %s28
    %p58 = scmp.eq.s32.totalorder %s57, 0
    %s60 = sadd.s32 %s59, 1
    %s61 = scalar_select %p58, %s59, %s60
    %p64 = pneg %p58
    %p65 = scmp.eq.s32.totalorder %s9, 1
    %p66 = por %p64, %p65
    %p67 = scmp.ne.s32.totalorder %s59, %s62
    %p68 = scmp.eq.s32.totalorder %s9, 0
    %p69 = por %p67, %p68
    %p70 = scmp.ne.s32.totalorder %s59, %s62
    %p71 = scmp.eq.s32.totalorder %s14, 1
    %p72 = por %p70, %p71
    %p73 = scmp.ne.s32.totalorder %s62, %s63
    %p74 = scmp.eq.s32.totalorder %s14, 0
    %p75 = por %p73, %p74
    %p76 = scmp.ne.s32.totalorder %s62, %s63
    %p77 = scmp.eq.s32.totalorder %s15, 1
    %p78 = por %p76, %p77
    %p80 = scmp.ne.s32.totalorder %s63, %s79
    %p81 = scmp.eq.s32.totalorder %s15, 0
    %p82 = por %p80, %p81
    %s83 = ssub.s32 %s16, %s28
    %p84 = scmp.eq.s32.totalorder %s83, 0
    %s86 = sadd.s32 %s85, 1
    %s87 = scalar_select %p84, %s85, %s86
    %p90 = pneg %p84
    %p91 = scmp.eq.s32.totalorder %s9, 1
    %p92 = por %p90, %p91
    %p93 = scmp.ne.s32.totalorder %s85, %s88
    %p94 = scmp.eq.s32.totalorder %s9, 0
    %p95 = por %p93, %p94
    %p96 = scmp.ne.s32.totalorder %s85, %s88
    %p97 = scmp.eq.s32.totalorder %s14, 1
    %p98 = por %p96, %p97
    %p99 = scmp.ne.s32.totalorder %s88, %s89
    %p100 = scmp.eq.s32.totalorder %s14, 0
    %p101 = por %p99, %p100
    %p102 = scmp.ne.s32.totalorder %s88, %s89
    %p103 = scmp.eq.s32.totalorder %s15, 1
    %p104 = por %p102, %p103
    %p106 = scmp.ne.s32.totalorder %s89, %s105
    %p107 = scmp.eq.s32.totalorder %s15, 0
    %p108 = por %p106, %p107
    %s109 = ssub.s32 %s16, %s28
    %s110 = ssub.s32 %s17, %s24
    %s111 = sor.u32 %s109, %s110
    %p112 = scmp.eq.s32.totalorder %s111, 0
    %s114 = sadd.s32 %s113, 1
    %s115 = scalar_select %p112, %s113, %s114
    %p118 = pneg %p112
    %p119 = scmp.eq.s32.totalorder %s9, 1
    %p120 = por %p118, %p119
    %p121 = scmp.ne.s32.totalorder %s113, %s116
    %p122 = scmp.eq.s32.totalorder %s9, 0
    %p123 = por %p121, %p122
    %p124 = scmp.ne.s32.totalorder %s113, %s116
    %p125 = scmp.eq.s32.totalorder %s14, 1
    %p126 = por %p124, %p125
    %p127 = scmp.ne.s32.totalorder %s116, %s117
    %p128 = scmp.eq.s32.totalorder %s14, 0
    %p129 = por %p127, %p128
    %p130 = scmp.ne.s32.totalorder %s116, %s117
    %p131 = scmp.eq.s32.totalorder %s15, 1
    %p132 = por %p130, %p131
    %p134 = scmp.ne.s32.totalorder %s117, %s133
    %p135 = scmp.eq.s32.totalorder %s15, 0
    %p136 = por %p134, %p135
    %p137 = scmp.le.s32.totalorder 1, %s9
    %p138 = scmp.lt.s32.totalorder %s9, 3
    %p139 = pnand %p137, %p138
    %p140 = pneg %p139
    // Predicated region
    $region9: #{_lambda_.12} parent=5 // pred_check
      _
    $region10: #{_lambda_.12} parent=5 // pred_check_branch
      %142 = sbr.rel (%p139) target = $region12
    $region11: #{_lambda_.12} parent=5 // pred_region
      %s143 = ssub.s32 %s9, 1
    $region12: #{_lambda_.12} parent=5 // pred_fallthru
      _
    %p144 = scmp.lt.s32.totalorder %s9, 2
    // Predicated region
    $region13: #{_lambda_.12} parent=5 // pred_check
      %p145 = pneg %p144
    $region14: #{_lambda_.12} parent=5 // pred_check_branch
      %147 = sbr.rel (%p145) target = $region16
    $region15: #{_lambda_.12} parent=5 // pred_region
      // Predicated region
      $region17: #{_lambda_.12} parent=15 // pred_check
        %p148 = pneg %p43
      $region18: #{_lambda_.12} parent=15 // pred_check_branch
        %150 = sbr.rel (%p148) target = $region20
      $region19: #{_lambda_.12} parent=15 // pred_region
        %s151 = smul.u32 32, %s17
        %p152 = scmp.lt.s32.totalorder %s16, 1
        %s153 = scalar_select %p152, %s16, 1
        %p154 = scmp.lt.s32.totalorder %s151, 31
        %s155 = scalar_select %p154, %s151, 31
        %s156 = smul.addr %s153, 32
        %s157 = sadd.s32 %s155, %s156
        %s158 = smul.addr %s157, 4
        %s159 = scalar_lea.vmem %s0, %s158
        %s160 = smul.u32 32, %s17
      $region20: #{_lambda_.12} parent=15 // pred_fallthru
        _
      // Predicated region
      $region21: #{_lambda_.12} parent=15 // pred_check
        %p161 = pneg %p69
      $region22: #{_lambda_.12} parent=15 // pred_check_branch
        %163 = sbr.rel (%p161) target = $region24
      $region23: #{_lambda_.12} parent=15 // pred_region
        %p164 = scmp.lt.s32.totalorder %s16, 1
        %s165 = scalar_select %p164, %s16, 1
        %s166 = scalar_lea.vmem %s1, %s165
      $region24: #{_lambda_.12} parent=15 // pred_fallthru
        _
      // Predicated region
      $region25: #{_lambda_.12} parent=15 // pred_check
        %p167 = pneg %p95
      $region26: #{_lambda_.12} parent=15 // pred_check_branch
        %169 = sbr.rel (%p167) target = $region28
      $region27: #{_lambda_.12} parent=15 // pred_region
        %p170 = scmp.lt.s32.totalorder %s16, 1
        %s171 = scalar_select %p170, %s16, 1
        %s172 = scalar_lea.vmem %s2, %s171
      $region28: #{_lambda_.12} parent=15 // pred_fallthru
        _
    $region16: #{_lambda_.12} parent=5 // pred_fallthru
      _
    %p173 = scmp.le.s32.totalorder 1, %s9
    %p174 = scmp.lt.s32.totalorder %s9, 3
    %p175 = pnand %p173, %p174
    %p176 = pneg %p175
    // Predicated region
    $region29: #{_lambda_.12} parent=5 // pred_check
      _
    $region30: #{_lambda_.12} parent=5 // pred_check_branch
      %178 = sbr.rel (%p175) target = $region32
    $region31: #{_lambda_.12} parent=5 // pred_region
      %s179 = ssub.s32 %s9, 1
      %s180 = smul.u32 32, %s19
      %p181 = scmp.lt.s32.totalorder %s18, 1
      %s182 = scalar_select %p181, %s18, 1
      %p183 = scmp.lt.s32.totalorder %s180, 31
      %s184 = scalar_select %p183, %s180, 31
      %s185 = smul.addr %s182, 32
      %s186 = sadd.s32 %s184, %s185
      %s187 = smul.addr %s186, 4
      %s188 = scalar_lea.vmem %s0, %s187
      %p189 = pneg %p49
      %p190 = pneg %p46
      %p191 = scmp.lt.s32.totalorder %s18, 1
      %s192 = scalar_select %p191, %s18, 1
      %s193 = scalar_lea.vmem %s1, %s192
      %p194 = pneg %p75
      %p195 = pneg %p72
      %p196 = scmp.lt.s32.totalorder %s18, 1
      %s197 = scalar_select %p196, %s18, 1
      %s198 = scalar_lea.vmem %s2, %s197
      %p199 = pneg %p101
      %p200 = pneg %p98
      %p201 = pneg %p129
      %p202 = pneg %p126
      %s203 = smul.u32 32, %s19
      %p204 = scmp.lt.s32.totalorder %s18, 1
      %s205 = scalar_select %p204, %s18, 1
      %p206 = scmp.lt.s32.totalorder %s203, 31
      %s207 = scalar_select %p206, %s203, 31
      %s208 = smul.addr %s205, 32
      %s209 = sadd.s32 %s207, %s208
      %s210 = smul.addr %s209, 4
      %s211 = scalar_lea.vmem %s3, %s210
      %s212 = smul.u32 32, %s19
      %p213 = scmp.lt.s32.totalorder %s18, 1
      %s214 = scalar_select %p213, %s18, 1
      %p215 = scmp.lt.s32.totalorder %s212, 31
      %s216 = scalar_select %p215, %s212, 31
      %s217 = smul.addr %s214, 32
      %s218 = sadd.s32 %s216, %s217
      %s219 = smul.addr %s218, 4
      %s220 = scalar_lea.vmem %s0, %s219
      %s221 = smul.u32 32, %s19
      %p222 = scmp.lt.s32.totalorder %s18, 1
      %s223 = scalar_select %p222, %s18, 1
      %s224 = scalar_lea.vmem %s1, %s223
      %p225 = scmp.lt.s32.totalorder %s18, 1
      %s226 = scalar_select %p225, %s18, 1
      %s227 = scalar_lea.vmem %s2, %s226
      %s228 = smul.u32 32, %s19
      %p229 = scmp.lt.s32.totalorder %s18, 1
      %s230 = scalar_select %p229, %s18, 1
      %p231 = scmp.lt.s32.totalorder %s228, 31
      %s232 = scalar_select %p231, %s228, 31
      %s233 = smul.addr %s230, 32
      %s234 = sadd.s32 %s232, %s233
      %s235 = smul.addr %s234, 4
      %s236 = scalar_lea.vmem %s3, %s235
      %s237 = smul.u32 32, %s19
      %v238 = vld [vmem:[%s220] sm:$0xf]
      %v239 = vld [vmem:[%s220 + $0x4] sm:$0xf]
      %v240 = vld [vmem:[%s220 + $0x8] sm:$0xf]
      %v241 = vld [vmem:[%s220 + $0xc] sm:$0xf]
      %v242 = vld [vmem:[%s220 + $0x10] sm:$0xf]
      %v243 = vld [vmem:[%s220 + $0x14] sm:$0xf]
      %v244 = vld [vmem:[%s220 + $0x18] sm:$0xf]
      %v245 = vld [vmem:[%s220 + $0x1c] sm:$0xf]
      %v246 = vld [vmem:[%s220 + $0x20] sm:$0xf]
      %v247 = vld [vmem:[%s220 + $0x24] sm:$0xf]
      %v248 = vld [vmem:[%s220 + $0x28] sm:$0xf]
      %v249 = vld [vmem:[%s220 + $0x2c] sm:$0xf]
      %v250 = vld [vmem:[%s220 + $0x30] sm:$0xf]
      %v251 = vld [vmem:[%s220 + $0x34] sm:$0xf]
      %v252 = vld [vmem:[%s220 + $0x38] sm:$0xf]
      %v253 = vld [vmem:[%s220 + $0x3c] sm:$0xf]
      %v254 = vld [vmem:[%s220 + $0x40] sm:$0xf]
      %v255 = vld [vmem:[%s220 + $0x44] sm:$0xf]
      %v256 = vld [vmem:[%s220 + $0x48] sm:$0xf]
      %v257 = vld [vmem:[%s220 + $0x4c] sm:$0xf]
      %v258 = vld [vmem:[%s220 + $0x50] sm:$0xf]
      %v259 = vld [vmem:[%s220 + $0x54] sm:$0xf]
      %v260 = vld [vmem:[%s220 + $0x58] sm:$0xf]
      %v261 = vld [vmem:[%s220 + $0x5c] sm:$0xf]
      %v262 = vld [vmem:[%s220 + $0x60] sm:$0xf]
      %v263 = vld [vmem:[%s220 + $0x64] sm:$0xf]
      %v264 = vld [vmem:[%s220 + $0x68] sm:$0xf]
      %v265 = vld [vmem:[%s220 + $0x6c] sm:$0xf]
      %v266 = vld [vmem:[%s220 + $0x70] sm:$0xf]
      %v267 = vld [vmem:[%s220 + $0x74] sm:$0xf]
      %v268 = vld [vmem:[%s220 + $0x78] sm:$0xf]
      %v269 = vld [vmem:[%s220 + $0x7c] sm:$0xf]
      %v270 = vunpack.c.l.bf16 %v238
      %v271 = vunpack.c.l.bf16 %v239
      %v272 = vunpack.c.l.bf16 %v240
      %v273 = vunpack.c.l.bf16 %v241
      %v274 = vunpack.c.l.bf16 %v242
      %v275 = vunpack.c.l.bf16 %v243
      %v276 = vunpack.c.l.bf16 %v244
      %v277 = vunpack.c.l.bf16 %v245
      %v278 = vunpack.c.l.bf16 %v246
      %v279 = vunpack.c.l.bf16 %v247
      %v280 = vunpack.c.l.bf16 %v248
      %v281 = vunpack.c.l.bf16 %v249
      %v282 = vunpack.c.l.bf16 %v250
      %v283 = vunpack.c.l.bf16 %v251
      %v284 = vunpack.c.l.bf16 %v252
      %v285 = vunpack.c.l.bf16 %v253
      %v286 = vunpack.c.l.bf16 %v254
      %v287 = vunpack.c.l.bf16 %v255
      %v288 = vunpack.c.l.bf16 %v256
      %v289 = vunpack.c.l.bf16 %v257
      %v290 = vunpack.c.l.bf16 %v258
      %v291 = vunpack.c.l.bf16 %v259
      %v292 = vunpack.c.l.bf16 %v260
      %v293 = vunpack.c.l.bf16 %v261
      %v294 = vunpack.c.l.bf16 %v262
      %v295 = vunpack.c.l.bf16 %v263
      %v296 = vunpack.c.l.bf16 %v264
      %v297 = vunpack.c.l.bf16 %v265
      %v298 = vunpack.c.l.bf16 %v266
      %v299 = vunpack.c.l.bf16 %v267
      %v300 = vunpack.c.l.bf16 %v268
      %v301 = vunpack.c.l.bf16 %v269
      %v302 = vld [vmem:[%s224] sm:$0x1]
      %v304 = vlaneseq
      %v305 = vshrl.u32 %v304, 7
      %v306 = vsub.s32 0, %v305
      %v307 = vrot.slane %v302, %v306
      %v309 = vmul.f32 %v270, %v307
      %v310 = vmul.f32 %v271, %v307
      %v311 = vmul.f32 %v272, %v307
      %v312 = vmul.f32 %v273, %v307
      %v313 = vmul.f32 %v274, %v307
      %v314 = vmul.f32 %v275, %v307
      %v315 = vmul.f32 %v276, %v307
      %v316 = vmul.f32 %v277, %v307
      %v317 = vmul.f32 %v278, %v307
      %v318 = vmul.f32 %v279, %v307
      %v319 = vmul.f32 %v280, %v307
      %v320 = vmul.f32 %v281, %v307
      %v321 = vmul.f32 %v282, %v307
      %v322 = vmul.f32 %v283, %v307
      %v323 = vmul.f32 %v284, %v307
      %v324 = vmul.f32 %v285, %v307
      %v325 = vmul.f32 %v286, %v307
      %v326 = vmul.f32 %v287, %v307
      %v327 = vmul.f32 %v288, %v307
      %v328 = vmul.f32 %v289, %v307
      %v329 = vmul.f32 %v290, %v307
      %v330 = vmul.f32 %v291, %v307
      %v331 = vmul.f32 %v292, %v307
      %v332 = vmul.f32 %v293, %v307
      %v333 = vmul.f32 %v294, %v307
      %v334 = vmul.f32 %v295, %v307
      %v335 = vmul.f32 %v296, %v307
      %v336 = vmul.f32 %v297, %v307
      %v337 = vmul.f32 %v298, %v307
      %v338 = vmul.f32 %v299, %v307
      %v339 = vmul.f32 %v300, %v307
      %v340 = vmul.f32 %v301, %v307
      %v341 = vld [vmem:[%s227] sm:$0x1]
      %v343 = vlaneseq
      %v344 = vshrl.u32 %v343, 7
      %v345 = vsub.s32 0, %v344
      %v346 = vrot.slane %v341, %v345
      %v348 = vadd.f32 %v309, %v346
      %v349 = vadd.f32 %v310, %v346
      %v350 = vadd.f32 %v311, %v346
      %v351 = vadd.f32 %v312, %v346
      %v352 = vadd.f32 %v313, %v346
      %v353 = vadd.f32 %v314, %v346
      %v354 = vadd.f32 %v315, %v346
      %v355 = vadd.f32 %v316, %v346
      %v356 = vadd.f32 %v317, %v346
      %v357 = vadd.f32 %v318, %v346
      %v358 = vadd.f32 %v319, %v346
      %v359 = vadd.f32 %v320, %v346
      %v360 = vadd.f32 %v321, %v346
      %v361 = vadd.f32 %v322, %v346
      %v362 = vadd.f32 %v323, %v346
      %v363 = vadd.f32 %v324, %v346
      %v364 = vadd.f32 %v325, %v346
      %v365 = vadd.f32 %v326, %v346
      %v366 = vadd.f32 %v327, %v346
      %v367 = vadd.f32 %v328, %v346
      %v368 = vadd.f32 %v329, %v346
      %v369 = vadd.f32 %v330, %v346
      %v370 = vadd.f32 %v331, %v346
      %v371 = vadd.f32 %v332, %v346
      %v372 = vadd.f32 %v333, %v346
      %v373 = vadd.f32 %v334, %v346
      %v374 = vadd.f32 %v335, %v346
      %v375 = vadd.f32 %v336, %v346
      %v376 = vadd.f32 %v337, %v346
      %v377 = vadd.f32 %v338, %v346
      %v378 = vadd.f32 %v339, %v346
      %v379 = vadd.f32 %v340, %v346
      %vm380 = vcmp.ge.f32.partialorder %v348, 0.0
      %vm381 = vcmp.ge.f32.partialorder %v349, 0.0
      %vm382 = vcmp.ge.f32.partialorder %v350, 0.0
      %vm383 = vcmp.ge.f32.partialorder %v351, 0.0
      %vm384 = vcmp.ge.f32.partialorder %v352, 0.0
      %vm385 = vcmp.ge.f32.partialorder %v353, 0.0
      %vm386 = vcmp.ge.f32.partialorder %v354, 0.0
      %vm387 = vcmp.ge.f32.partialorder %v355, 0.0
      %vm388 = vcmp.ge.f32.partialorder %v356, 0.0
      %vm389 = vcmp.ge.f32.partialorder %v357, 0.0
      %vm390 = vcmp.ge.f32.partialorder %v358, 0.0
      %vm391 = vcmp.ge.f32.partialorder %v359, 0.0
      %vm392 = vcmp.ge.f32.partialorder %v360, 0.0
      %vm393 = vcmp.ge.f32.partialorder %v361, 0.0
      %vm394 = vcmp.ge.f32.partialorder %v362, 0.0
      %vm395 = vcmp.ge.f32.partialorder %v363, 0.0
      %vm396 = vcmp.ge.f32.partialorder %v364, 0.0
      %vm397 = vcmp.ge.f32.partialorder %v365, 0.0
      %vm398 = vcmp.ge.f32.partialorder %v366, 0.0
      %vm399 = vcmp.ge.f32.partialorder %v367, 0.0
      %vm400 = vcmp.ge.f32.partialorder %v368, 0.0
      %vm401 = vcmp.ge.f32.partialorder %v369, 0.0
      %vm402 = vcmp.ge.f32.partialorder %v370, 0.0
      %vm403 = vcmp.ge.f32.partialorder %v371, 0.0
      %vm404 = vcmp.ge.f32.partialorder %v372, 0.0
      %vm405 = vcmp.ge.f32.partialorder %v373, 0.0
      %vm406 = vcmp.ge.f32.partialorder %v374, 0.0
      %vm407 = vcmp.ge.f32.partialorder %v375, 0.0
      %vm408 = vcmp.ge.f32.partialorder %v376, 0.0
      %vm409 = vcmp.ge.f32.partialorder %v377, 0.0
      %vm410 = vcmp.ge.f32.partialorder %v378, 0.0
      %vm411 = vcmp.ge.f32.partialorder %v379, 0.0
      %v412 = vmul.f32 %v348, 0.2
      %v413 = vmul.f32 %v349, 0.2
      %v414 = vmul.f32 %v350, 0.2
      %v415 = vmul.f32 %v351, 0.2
      %v416 = vmul.f32 %v352, 0.2
      %v417 = vmul.f32 %v353, 0.2
      %v418 = vmul.f32 %v354, 0.2
      %v419 = vmul.f32 %v355, 0.2
      %v420 = vmul.f32 %v356, 0.2
      %v421 = vmul.f32 %v357, 0.2
      %v422 = vmul.f32 %v358, 0.2
      %v423 = vmul.f32 %v359, 0.2
      %v424 = vmul.f32 %v360, 0.2
      %v425 = vmul.f32 %v361, 0.2
      %v426 = vmul.f32 %v362, 0.2
      %v427 = vmul.f32 %v363, 0.2
      %v428 = vmul.f32 %v364, 0.2
      %v429 = vmul.f32 %v365, 0.2
      %v430 = vmul.f32 %v366, 0.2
      %v431 = vmul.f32 %v367, 0.2
      %v432 = vmul.f32 %v368, 0.2
      %v433 = vmul.f32 %v369, 0.2
      %v434 = vmul.f32 %v370, 0.2
      %v435 = vmul.f32 %v371, 0.2
      %v436 = vmul.f32 %v372, 0.2
      %v437 = vmul.f32 %v373, 0.2
      %v438 = vmul.f32 %v374, 0.2
      %v439 = vmul.f32 %v375, 0.2
      %v440 = vmul.f32 %v376, 0.2
      %v441 = vmul.f32 %v377, 0.2
      %v442 = vmul.f32 %v378, 0.2
      %v443 = vmul.f32 %v379, 0.2
      %v444 = vsel %vm380, %v348, %v412
      %v445 = vsel %vm381, %v349, %v413
      %v446 = vsel %vm382, %v350, %v414
      %v447 = vsel %vm383, %v351, %v415
      %v448 = vsel %vm384, %v352, %v416
      %v449 = vsel %vm385, %v353, %v417
      %v450 = vsel %vm386, %v354, %v418
      %v451 = vsel %vm387, %v355, %v419
      %v452 = vsel %vm388, %v356, %v420
      %v453 = vsel %vm389, %v357, %v421
      %v454 = vsel %vm390, %v358, %v422
      %v455 = vsel %vm391, %v359, %v423
      %v456 = vsel %vm392, %v360, %v424
      %v457 = vsel %vm393, %v361, %v425
      %v458 = vsel %vm394, %v362, %v426
      %v459 = vsel %vm395, %v363, %v427
      %v460 = vsel %vm396, %v364, %v428
      %v461 = vsel %vm397, %v365, %v429
      %v462 = vsel %vm398, %v366, %v430
      %v463 = vsel %vm399, %v367, %v431
      %v464 = vsel %vm400, %v368, %v432
      %v465 = vsel %vm401, %v369, %v433
      %v466 = vsel %vm402, %v370, %v434
      %v467 = vsel %vm403, %v371, %v435
      %v468 = vsel %vm404, %v372, %v436
      %v469 = vsel %vm405, %v373, %v437
      %v470 = vsel %vm406, %v374, %v438
      %v471 = vsel %vm407, %v375, %v439
      %v472 = vsel %vm408, %v376, %v440
      %v473 = vsel %vm409, %v377, %v441
      %v474 = vsel %vm410, %v378, %v442
      %v475 = vsel %vm411, %v379, %v443
      %v476 = vpack.c.bf16 %v445, %v444
      %v477 = vpack.c.bf16 %v447, %v446
      %v478 = vpack.c.bf16 %v449, %v448
      %v479 = vpack.c.bf16 %v451, %v450
      %v480 = vpack.c.bf16 %v453, %v452
      %v481 = vpack.c.bf16 %v455, %v454
      %v482 = vpack.c.bf16 %v457, %v456
      %v483 = vpack.c.bf16 %v459, %v458
      %v484 = vpack.c.bf16 %v461, %v460
      %v485 = vpack.c.bf16 %v463, %v462
      %v486 = vpack.c.bf16 %v465, %v464
      %v487 = vpack.c.bf16 %v467, %v466
      %v488 = vpack.c.bf16 %v469, %v468
      %v489 = vpack.c.bf16 %v471, %v470
      %v490 = vpack.c.bf16 %v473, %v472
      %v491 = vpack.c.bf16 %v475, %v474
      %v508 = vunpack.c.l.b16 %v476
      %v509 = vunpack.c.h.b16 %v476
      %v510 = vunpack.c.l.b16 %v477
      %v511 = vunpack.c.h.b16 %v477
      %v512 = vunpack.c.l.b16 %v478
      %v513 = vunpack.c.h.b16 %v478
      %v514 = vunpack.c.l.b16 %v479
      %v515 = vunpack.c.h.b16 %v479
      %v516 = vunpack.c.l.b16 %v480
      %v517 = vunpack.c.h.b16 %v480
      %v518 = vunpack.c.l.b16 %v481
      %v519 = vunpack.c.h.b16 %v481
      %v520 = vunpack.c.l.b16 %v482
      %v521 = vunpack.c.h.b16 %v482
      %v522 = vunpack.c.l.b16 %v483
      %v523 = vunpack.c.h.b16 %v483
      %v524 = vunpack.c.l.b16 %v484
      %v525 = vunpack.c.h.b16 %v484
      %v526 = vunpack.c.l.b16 %v485
      %v527 = vunpack.c.h.b16 %v485
      %v528 = vunpack.c.l.b16 %v486
      %v529 = vunpack.c.h.b16 %v486
      %v530 = vunpack.c.l.b16 %v487
      %v531 = vunpack.c.h.b16 %v487
      %v532 = vunpack.c.l.b16 %v488
      %v533 = vunpack.c.h.b16 %v488
      %v534 = vunpack.c.l.b16 %v489
      %v535 = vunpack.c.h.b16 %v489
      %v536 = vunpack.c.l.b16 %v490
      %v537 = vunpack.c.h.b16 %v490
      %v538 = vunpack.c.l.b16 %v491
      %v539 = vunpack.c.h.b16 %v491
      %v540 = vpack.c.b16 %v508, %v508
      %v541 = vpack.c.b16 %v509, %v509
      %v542 = vpack.c.b16 %v510, %v510
      %v543 = vpack.c.b16 %v511, %v511
      %v544 = vpack.c.b16 %v512, %v512
      %v545 = vpack.c.b16 %v513, %v513
      %v546 = vpack.c.b16 %v514, %v514
      %v547 = vpack.c.b16 %v515, %v515
      %v548 = vpack.c.b16 %v516, %v516
      %v549 = vpack.c.b16 %v517, %v517
      %v550 = vpack.c.b16 %v518, %v518
      %v551 = vpack.c.b16 %v519, %v519
      %v552 = vpack.c.b16 %v520, %v520
      %v553 = vpack.c.b16 %v521, %v521
      %v554 = vpack.c.b16 %v522, %v522
      %v555 = vpack.c.b16 %v523, %v523
      %v556 = vpack.c.b16 %v524, %v524
      %v557 = vpack.c.b16 %v525, %v525
      %v558 = vpack.c.b16 %v526, %v526
      %v559 = vpack.c.b16 %v527, %v527
      %v560 = vpack.c.b16 %v528, %v528
      %v561 = vpack.c.b16 %v529, %v529
      %v562 = vpack.c.b16 %v530, %v530
      %v563 = vpack.c.b16 %v531, %v531
      %v564 = vpack.c.b16 %v532, %v532
      %v565 = vpack.c.b16 %v533, %v533
      %v566 = vpack.c.b16 %v534, %v534
      %v567 = vpack.c.b16 %v535, %v535
      %v568 = vpack.c.b16 %v536, %v536
      %v569 = vpack.c.b16 %v537, %v537
      %v570 = vpack.c.b16 %v538, %v538
      %v571 = vpack.c.b16 %v539, %v539
      %604 = vst [vmem:[%s236] sm:$0xf] %v540
      %605 = vst [vmem:[%s236 + $0x4] sm:$0xf] %v541
      %606 = vst [vmem:[%s236 + $0x8] sm:$0xf] %v542
      %607 = vst [vmem:[%s236 + $0xc] sm:$0xf] %v543
      %608 = vst [vmem:[%s236 + $0x10] sm:$0xf] %v544
      %609 = vst [vmem:[%s236 + $0x14] sm:$0xf] %v545
      %610 = vst [vmem:[%s236 + $0x18] sm:$0xf] %v546
      %611 = vst [vmem:[%s236 + $0x1c] sm:$0xf] %v547
      %612 = vst [vmem:[%s236 + $0x20] sm:$0xf] %v548
      %613 = vst [vmem:[%s236 + $0x24] sm:$0xf] %v549
      %614 = vst [vmem:[%s236 + $0x28] sm:$0xf] %v550
      %615 = vst [vmem:[%s236 + $0x2c] sm:$0xf] %v551
      %616 = vst [vmem:[%s236 + $0x30] sm:$0xf] %v552
      %617 = vst [vmem:[%s236 + $0x34] sm:$0xf] %v553
      %618 = vst [vmem:[%s236 + $0x38] sm:$0xf] %v554
      %619 = vst [vmem:[%s236 + $0x3c] sm:$0xf] %v555
      %620 = vst [vmem:[%s236 + $0x40] sm:$0xf] %v556
      %621 = vst [vmem:[%s236 + $0x44] sm:$0xf] %v557
      %622 = vst [vmem:[%s236 + $0x48] sm:$0xf] %v558
      %623 = vst [vmem:[%s236 + $0x4c] sm:$0xf] %v559
      %624 = vst [vmem:[%s236 + $0x50] sm:$0xf] %v560
      %625 = vst [vmem:[%s236 + $0x54] sm:$0xf] %v561
      %626 = vst [vmem:[%s236 + $0x58] sm:$0xf] %v562
      %627 = vst [vmem:[%s236 + $0x5c] sm:$0xf] %v563
      %628 = vst [vmem:[%s236 + $0x60] sm:$0xf] %v564
      %629 = vst [vmem:[%s236 + $0x64] sm:$0xf] %v565
      %630 = vst [vmem:[%s236 + $0x68] sm:$0xf] %v566
      %631 = vst [vmem:[%s236 + $0x6c] sm:$0xf] %v567
      %632 = vst [vmem:[%s236 + $0x70] sm:$0xf] %v568
      %633 = vst [vmem:[%s236 + $0x74] sm:$0xf] %v569
      %634 = vst [vmem:[%s236 + $0x78] sm:$0xf] %v570
      %635 = vst [vmem:[%s236 + $0x7c] sm:$0xf] %v571
      %s636 = smul.u32 32, %s19
      %p637 = scmp.lt.s32.totalorder %s18, 1
      %s638 = scalar_select %p637, %s18, 1
      %p639 = scmp.lt.s32.totalorder %s636, 31
      %s640 = scalar_select %p639, %s636, 31
      %s641 = smul.addr %s638, 32
      %s642 = sadd.s32 %s640, %s641
      %s643 = smul.addr %s642, 4
      %s644 = scalar_lea.vmem %s3, %s643
      // Predicated region
      $region33: #{_lambda_.12} parent=31 // pred_check
        %p645 = pneg %p126
      $region34: #{_lambda_.12} parent=31 // pred_check_branch
        %647 = sbr.rel (%p645) target = $region36
      $region35: #{_lambda_.12} parent=31 // pred_region
        %s648 = smul.u32 32, %s19
      $region36: #{_lambda_.12} parent=31 // pred_fallthru
        _
    $region32: #{_lambda_.12} parent=5 // pred_fallthru
      _
    %p649 = scmp.le.s32.totalorder 2, %s9
    // Predicated region
    $region37: #{_lambda_.12} parent=5 // pred_check
      %p650 = pneg %p649
    $region38: #{_lambda_.12} parent=5 // pred_check_branch
      %652 = sbr.rel (%p650) target = $region40
    $region39: #{_lambda_.12} parent=5 // pred_region
      %s653 = ssub.s32 %s9, 2
      // Predicated region
      $region41: #{_lambda_.12} parent=39 // pred_check
        %p654 = pneg %p132
      $region42: #{_lambda_.12} parent=39 // pred_check_branch
        %656 = sbr.rel (%p654) target = $region44
      $region43: #{_lambda_.12} parent=39 // pred_region
        %s657 = smul.u32 32, %s21
        %p658 = scmp.lt.s32.totalorder %s20, 1
        %s659 = scalar_select %p658, %s20, 1
        %p660 = scmp.lt.s32.totalorder %s657, 31
        %s661 = scalar_select %p660, %s657, 31
        %s662 = smul.addr %s659, 32
        %s663 = sadd.s32 %s661, %s662
        %s664 = smul.addr %s663, 4
        %s665 = scalar_lea.vmem %s3, %s664
      $region44: #{_lambda_.12} parent=39 // pred_fallthru
        _
    $region40: #{_lambda_.12} parent=5 // pred_fallthru
      _
  $region6: #{_lambda_.12} parent=0 // loop_footer
    %s13 = sadd.s32 1, %s9
  $region7: #{_lambda_.12} parent=0 // loop_footer_branch
    %8 = sbr.rel target = $region3
  $region8: #{_lambda_.12} parent=0 // loop_exit
    _

// kernel: _lambda_.10
$region0: #{_lambda_.10}
  #allocation0 [shape = 'u32[]', space=smem, size = 0x4, offset = 0x4, fixed_abs, tag = 'smem constant byte address 0x4 - core index']
  #allocation1 [shape = 'u32[144,128]{1,0:T(1,128)}', space=vmem, size = 0x12000, scoped, tag = 'internal scratch']
  %s0 = inlined_call_operand.vmem [shape: bf16[16,512], index: 0, kind: input, shape index: {}]
  %s1 = inlined_call_operand.vmem [shape: bf16[512,128], index: 1, kind: input, shape index: {}]
  %s2 = inlined_call_operand.vmem [shape: f32[1,128], index: 2, kind: input, shape index: {}]
  %s3 = inlined_call_operand.vmem [shape: f32[1,128], index: 3, kind: input, shape index: {}]
  %s4 = inlined_call_operand.vmem [shape: f32[16,128], index: 4, kind: output, shape index: {0}]
  %s5 = inlined_call_operand.hbm [shape: f32[1,128], index: 5, kind: output, shape index: {1}]
  %s6 = inlined_call_operand.hbm [shape: f32[1,128], index: 6, kind: output, shape index: {2}]
  %7 = xla_tuple %s4, %s5, %s6
  %s8 = sld [smem:[#allocation0]]
  $region50: #{_lambda_.10} parent=0
    _
  %s10 = ssub.s32 1, %s8
  %s11 = scalar_select 0, %s10, %s8
  $region1: #{_lambda_.10} parent=0
    #allocation2 [shape = 'u8[512]{0}', space=vmem, size = 0x400, scoped, tag = 'output window, operand 1, single buffered']
    #allocation3 [shape = 's32[1]{0}', space=sflag, size = 0x4, scoped, tag = 'scoped memory for _lambda_.10']
    #allocation4 [shape = 'u8[512]{0}', space=vmem, size = 0x400, scoped, tag = 'output window, operand 2, single buffered']
    #allocation5 [shape = 's32[1]{0}', space=sflag, size = 0x4, scoped, tag = 'scoped memory for _lambda_.10']
    %12 = vsyncpa [#allocation3], 0
    %13 = vsyncpa [#allocation5], 0
    // Predicated region
    $region2: #{_lambda_.10} parent=1 // pred_check
      _
    $region3: #{_lambda_.10} parent=1 // pred_check_branch
      %15 = sbr.rel (0) target = $region5
    $region4: #{_lambda_.10} parent=1 // pred_region
      _
    $region5: #{_lambda_.10} parent=1 // pred_fallthru
      _
    // Predicated region
    $region6: #{_lambda_.10} parent=1 // pred_check
      _
    $region7: #{_lambda_.10} parent=1 // pred_check_branch
      %17 = sbr.rel (0) target = $region9
    $region8: #{_lambda_.10} parent=1 // pred_region
      _
    $region9: #{_lambda_.10} parent=1 // pred_fallthru
      _
    // Predicated region
    $region10: #{_lambda_.10} parent=1 // pred_check
      _
    $region11: #{_lambda_.10} parent=1 // pred_check_branch
      %19 = sbr.rel (0) target = $region13
    $region12: #{_lambda_.10} parent=1 // pred_region
      _
    $region13: #{_lambda_.10} parent=1 // pred_fallthru
      _
    // Predicated region
    $region14: #{_lambda_.10} parent=1 // pred_check
      _
    $region15: #{_lambda_.10} parent=1 // pred_check_branch
      %21 = sbr.rel (0) target = $region17
    $region16: #{_lambda_.10} parent=1 // pred_region
      _
    $region17: #{_lambda_.10} parent=1 // pred_fallthru
      _
    %v23 = vld [vmem:[%s0] sm:$0xff]
    %v24 = vld [vmem:[%s0 + $0x8] sm:$0xff]
    %v25 = vld [vmem:[%s0 + $0x10] sm:$0xff]
    %v26 = vld [vmem:[%s0 + $0x18] sm:$0xff]
    %v27 = vld [vmem:[%s1] sm:$0xf]
    %v28 = vld [vmem:[%s1 + $0x4] sm:$0xf]
    %v29 = vld [vmem:[%s1 + $0x8] sm:$0xf]
    %v30 = vld [vmem:[%s1 + $0xc] sm:$0xf]
    %v31 = vld [vmem:[%s1 + $0x10] sm:$0xf]
    %v32 = vld [vmem:[%s1 + $0x14] sm:$0xf]
    %v33 = vld [vmem:[%s1 + $0x18] sm:$0xf]
    %v34 = vld [vmem:[%s1 + $0x1c] sm:$0xf]
    %v35 = vld [vmem:[%s1 + $0x20] sm:$0xf]
    %v36 = vld [vmem:[%s1 + $0x24] sm:$0xf]
    %v37 = vld [vmem:[%s1 + $0x28] sm:$0xf]
    %v38 = vld [vmem:[%s1 + $0x2c] sm:$0xf]
    %v39 = vld [vmem:[%s1 + $0x30] sm:$0xf]
    %v40 = vld [vmem:[%s1 + $0x34] sm:$0xf]
    %v41 = vld [vmem:[%s1 + $0x38] sm:$0xf]
    %v42 = vld [vmem:[%s1 + $0x3c] sm:$0xf]
    %v43 = vld [vmem:[%s1 + $0x40] sm:$0xf]
    %v44 = vld [vmem:[%s1 + $0x44] sm:$0xf]
    %v45 = vld [vmem:[%s1 + $0x48] sm:$0xf]
    %v46 = vld [vmem:[%s1 + $0x4c] sm:$0xf]
    %v47 = vld [vmem:[%s1 + $0x50] sm:$0xf]
    %v48 = vld [vmem:[%s1 + $0x54] sm:$0xf]
    %v49 = vld [vmem:[%s1 + $0x58] sm:$0xf]
    %v50 = vld [vmem:[%s1 + $0x5c] sm:$0xf]
    %v51 = vld [vmem:[%s1 + $0x60] sm:$0xf]
    %v52 = vld [vmem:[%s1 + $0x64] sm:$0xf]
    %v53 = vld [vmem:[%s1 + $0x68] sm:$0xf]
    %v54 = vld [vmem:[%s1 + $0x6c] sm:$0xf]
    %v55 = vld [vmem:[%s1 + $0x70] sm:$0xf]
    %v56 = vld [vmem:[%s1 + $0x74] sm:$0xf]
    %v57 = vld [vmem:[%s1 + $0x78] sm:$0xf]
    %v58 = vld [vmem:[%s1 + $0x7c] sm:$0xf]
    %v59 = vld [vmem:[%s1 + $0x80] sm:$0xf]
    %v60 = vld [vmem:[%s1 + $0x84] sm:$0xf]
    %v61 = vld [vmem:[%s1 + $0x88] sm:$0xf]
    %v62 = vld [vmem:[%s1 + $0x8c] sm:$0xf]
    %v63 = vld [vmem:[%s1 + $0x90] sm:$0xf]
    %v64 = vld [vmem:[%s1 + $0x94] sm:$0xf]
    %v65 = vld [vmem:[%s1 + $0x98] sm:$0xf]
    %v66 = vld [vmem:[%s1 + $0x9c] sm:$0xf]
    %v67 = vld [vmem:[%s1 + $0xa0] sm:$0xf]
    %v68 = vld [vmem:[%s1 + $0xa4] sm:$0xf]
    %v69 = vld [vmem:[%s1 + $0xa8] sm:$0xf]
    %v70 = vld [vmem:[%s1 + $0xac] sm:$0xf]
    %v71 = vld [vmem:[%s1 + $0xb0] sm:$0xf]
    %v72 = vld [vmem:[%s1 + $0xb4] sm:$0xf]
    %v73 = vld [vmem:[%s1 + $0xb8] sm:$0xf]
    %v74 = vld [vmem:[%s1 + $0xbc] sm:$0xf]
    %v75 = vld [vmem:[%s1 + $0xc0] sm:$0xf]
    %v76 = vld [vmem:[%s1 + $0xc4] sm:$0xf]
    %v77 = vld [vmem:[%s1 + $0xc8] sm:$0xf]
    %v78 = vld [vmem:[%s1 + $0xcc] sm:$0xf]
    %v79 = vld [vmem:[%s1 + $0xd0] sm:$0xf]
    %v80 = vld [vmem:[%s1 + $0xd4] sm:$0xf]
    %v81 = vld [vmem:[%s1 + $0xd8] sm:$0xf]
    %v82 = vld [vmem:[%s1 + $0xdc] sm:$0xf]
    %v83 = vld [vmem:[%s1 + $0xe0] sm:$0xf]
    %v84 = vld [vmem:[%s1 + $0xe4] sm:$0xf]
    %v85 = vld [vmem:[%s1 + $0xe8] sm:$0xf]
    %v86 = vld [vmem:[%s1 + $0xec] sm:$0xf]
    %v87 = vld [vmem:[%s1 + $0xf0] sm:$0xf]
    %v88 = vld [vmem:[%s1 + $0xf4] sm:$0xf]
    %v89 = vld [vmem:[%s1 + $0xf8] sm:$0xf]
    %v90 = vld [vmem:[%s1 + $0xfc] sm:$0xf]
    %v95 = vunpack.c.l.b16 %v23
    %v96 = vunpack.c.h.b16 %v23
    %v97 = vunpack.c.l.b16 %v24
    %v98 = vunpack.c.h.b16 %v24
    %v99 = vunpack.c.l.b16 %v25
    %v100 = vunpack.c.h.b16 %v25
    %v101 = vunpack.c.l.b16 %v26
    %v102 = vunpack.c.h.b16 %v26
    %v103 = vpack.c.b16 %v99, %v95
    %v104 = vpack.c.b16 %v100, %v96
    %v105 = vpack.c.b16 %v101, %v97
    %v106 = vpack.c.b16 %v102, %v98
    %v175 = vunpack.c.l.b16 %v27
    %v176 = vunpack.c.l.b16 %v28
    %v177 = vunpack.c.l.b16 %v29
    %v178 = vunpack.c.l.b16 %v30
    %v179 = vunpack.c.l.b16 %v31
    %v180 = vunpack.c.l.b16 %v32
    %v181 = vunpack.c.l.b16 %v33
    %v182 = vunpack.c.l.b16 %v34
    %v183 = vunpack.c.l.b16 %v35
    %v184 = vunpack.c.l.b16 %v36
    %v185 = vunpack.c.l.b16 %v37
    %v186 = vunpack.c.l.b16 %v38
    %v187 = vunpack.c.l.b16 %v39
    %v188 = vunpack.c.l.b16 %v40
    %v189 = vunpack.c.l.b16 %v41
    %v190 = vunpack.c.l.b16 %v42
    %v191 = vunpack.c.l.b16 %v43
    %v192 = vunpack.c.l.b16 %v44
    %v193 = vunpack.c.l.b16 %v45
    %v194 = vunpack.c.l.b16 %v46
    %v195 = vunpack.c.l.b16 %v47
    %v196 = vunpack.c.l.b16 %v48
    %v197 = vunpack.c.l.b16 %v49
    %v198 = vunpack.c.l.b16 %v50
    %v199 = vunpack.c.l.b16 %v51
    %v200 = vunpack.c.l.b16 %v52
    %v201 = vunpack.c.l.b16 %v53
    %v202 = vunpack.c.l.b16 %v54
    %v203 = vunpack.c.l.b16 %v55
    %v204 = vunpack.c.l.b16 %v56
    %v205 = vunpack.c.l.b16 %v57
    %v206 = vunpack.c.l.b16 %v58
    %v207 = vunpack.c.l.b16 %v59
    %v208 = vunpack.c.l.b16 %v60
    %v209 = vunpack.c.l.b16 %v61
    %v210 = vunpack.c.l.b16 %v62
    %v211 = vunpack.c.l.b16 %v63
    %v212 = vunpack.c.l.b16 %v64
    %v213 = vunpack.c.l.b16 %v65
    %v214 = vunpack.c.l.b16 %v66
    %v215 = vunpack.c.l.b16 %v67
    %v216 = vunpack.c.l.b16 %v68
    %v217 = vunpack.c.l.b16 %v69
    %v218 = vunpack.c.l.b16 %v70
    %v219 = vunpack.c.l.b16 %v71
    %v220 = vunpack.c.l.b16 %v72
    %v221 = vunpack.c.l.b16 %v73
    %v222 = vunpack.c.l.b16 %v74
    %v223 = vunpack.c.l.b16 %v75
    %v224 = vunpack.c.l.b16 %v76
    %v225 = vunpack.c.l.b16 %v77
    %v226 = vunpack.c.l.b16 %v78
    %v227 = vunpack.c.l.b16 %v79
    %v228 = vunpack.c.l.b16 %v80
    %v229 = vunpack.c.l.b16 %v81
    %v230 = vunpack.c.l.b16 %v82
    %v231 = vunpack.c.l.b16 %v83
    %v232 = vunpack.c.l.b16 %v84
    %v233 = vunpack.c.l.b16 %v85
    %v234 = vunpack.c.l.b16 %v86
    %v235 = vunpack.c.l.b16 %v87
    %v236 = vunpack.c.l.b16 %v88
    %v237 = vunpack.c.l.b16 %v89
    %v238 = vunpack.c.l.b16 %v90
    %v239 = vpack.c.b16 %v176, %v175
    %v240 = vpack.c.b16 %v178, %v177
    %v241 = vpack.c.b16 %v180, %v179
    %v242 = vpack.c.b16 %v182, %v181
    %v243 = vpack.c.b16 %v184, %v183
    %v244 = vpack.c.b16 %v186, %v185
    %v245 = vpack.c.b16 %v188, %v187
    %v246 = vpack.c.b16 %v190, %v189
    %v247 = vpack.c.b16 %v192, %v191
    %v248 = vpack.c.b16 %v194, %v193
    %v249 = vpack.c.b16 %v196, %v195
    %v250 = vpack.c.b16 %v198, %v197
    %v251 = vpack.c.b16 %v200, %v199
    %v252 = vpack.c.b16 %v202, %v201
    %v253 = vpack.c.b16 %v204, %v203
    %v254 = vpack.c.b16 %v206, %v205
    %v255 = vpack.c.b16 %v208, %v207
    %v256 = vpack.c.b16 %v210, %v209
    %v257 = vpack.c.b16 %v212, %v211
    %v258 = vpack.c.b16 %v214, %v213
    %v259 = vpack.c.b16 %v216, %v215
    %v260 = vpack.c.b16 %v218, %v217
    %v261 = vpack.c.b16 %v220, %v219
    %v262 = vpack.c.b16 %v222, %v221
    %v263 = vpack.c.b16 %v224, %v223
    %v264 = vpack.c.b16 %v226, %v225
    %v265 = vpack.c.b16 %v228, %v227
    %v266 = vpack.c.b16 %v230, %v229
    %v267 = vpack.c.b16 %v232, %v231
    %v268 = vpack.c.b16 %v234, %v233
    %v269 = vpack.c.b16 %v236, %v235
    %v270 = vpack.c.b16 %v238, %v237
    %303 = vmatprep.subr.bf16.mxu0 0
    %304 = vmatpush1.bf16.msra.mxu0 %v239
    %305 = vmatprep.subr.bf16.mxu0 0
    %306 = vmatpush1.bf16.msra.mxu0 %v240
    %307 = vmatprep.subr.bf16.mxu0 0
    %308 = vmatpush1.bf16.msra.mxu0 %v241
    %309 = vmatprep.subr.bf16.mxu0 0
    %310 = vmatpush1.bf16.msra.mxu0 %v242
    %311 = vmatprep.subr.bf16.mxu0 0
    %312 = vmatpush1.bf16.msra.mxu0 %v243
    %313 = vmatprep.subr.bf16.mxu0 0
    %314 = vmatpush1.bf16.msra.mxu0 %v244
    %315 = vmatprep.subr.bf16.mxu0 0
    %316 = vmatpush1.bf16.msra.mxu0 %v245
    %317 = vmatprep.subr.bf16.mxu0 0
    %318 = vmatpush1.bf16.msra.mxu0 %v246
    %319 = vmatprep.subr.bf16.mxu0 0
    %320 = vmatpush1.bf16.msra.mxu0 %v247
    %321 = vmatprep.subr.bf16.mxu0 0
    %322 = vmatpush1.bf16.msra.mxu0 %v248
    %323 = vmatprep.subr.bf16.mxu0 0
    %324 = vmatpush1.bf16.msra.mxu0 %v249
    %325 = vmatprep.subr.bf16.mxu0 0
    %326 = vmatpush1.bf16.msra.mxu0 %v250
    %327 = vmatprep.subr.bf16.mxu0 0
    %328 = vmatpush1.bf16.msra.mxu0 %v251
    %329 = vmatprep.subr.bf16.mxu0 0
    %330 = vmatpush1.bf16.msra.mxu0 %v252
    %331 = vmatprep.subr.bf16.mxu0 0
    %332 = vmatpush1.bf16.msra.mxu0 %v253
    %333 = vmatprep.subr.bf16.mxu0 0
    %334 = vmatpush1.bf16.msra.mxu0 %v254
    %335 = vmatprep.mubr.bf16.mxu0 %v104
    %336 = vmatmul.mubr.bf16.gmra.mrb[0].mxu0 %v103
    %v337 = vpop.f32.mrb[0].mxu0
    %v338 = vadd.f32 0.0, %v337
    %v339 = vpop.f32.mrb[0].mxu0
    %v340 = vpop.f32.mrb[0].mxu0
    %v341 = vadd.f32 0.0, %v340
    %v342 = vpop.f32.mrb[0].mxu0
    %343 = vdwg.mxu0
    %344 = vmatprep.subr.bf16.mxu0 0
    %345 = vmatpush1.bf16.msra.mxu0 %v255
    %346 = vmatprep.subr.bf16.mxu0 0
    %347 = vmatpush1.bf16.msra.mxu0 %v256
    %348 = vmatprep.subr.bf16.mxu0 0
    %349 = vmatpush1.bf16.msra.mxu0 %v257
    %350 = vmatprep.subr.bf16.mxu0 0
    %351 = vmatpush1.bf16.msra.mxu0 %v258
    %352 = vmatprep.subr.bf16.mxu0 0
    %353 = vmatpush1.bf16.msra.mxu0 %v259
    %354 = vmatprep.subr.bf16.mxu0 0
    %355 = vmatpush1.bf16.msra.mxu0 %v260
    %356 = vmatprep.subr.bf16.mxu0 0
    %357 = vmatpush1.bf16.msra.mxu0 %v261
    %358 = vmatprep.subr.bf16.mxu0 0
    %359 = vmatpush1.bf16.msra.mxu0 %v262
    %360 = vmatprep.subr.bf16.mxu0 0
    %361 = vmatpush1.bf16.msra.mxu0 %v263
    %362 = vmatprep.subr.bf16.mxu0 0
    %363 = vmatpush1.bf16.msra.mxu0 %v264
    %364 = vmatprep.subr.bf16.mxu0 0
    %365 = vmatpush1.bf16.msra.mxu0 %v265
    %366 = vmatprep.subr.bf16.mxu0 0
    %367 = vmatpush1.bf16.msra.mxu0 %v266
    %368 = vmatprep.subr.bf16.mxu0 0
    %369 = vmatpush1.bf16.msra.mxu0 %v267
    %370 = vmatprep.subr.bf16.mxu0 0
    %371 = vmatpush1.bf16.msra.mxu0 %v268
    %372 = vmatprep.subr.bf16.mxu0 0
    %373 = vmatpush1.bf16.msra.mxu0 %v269
    %374 = vmatprep.subr.bf16.mxu0 0
    %375 = vmatpush1.bf16.msra.mxu0 %v270
    %376 = vmatprep.mubr.bf16.mxu0 %v106
    %377 = vmatmul.mubr.bf16.gmra.mrb[0].mxu0 %v105
    %v378 = vpop.f32.mrb[0].mxu0
    %v379 = vadd.f32 %v338, %v378
    %v380 = vpop.f32.mrb[0].mxu0
    %v381 = vpop.f32.mrb[0].mxu0
    %v382 = vadd.f32 %v341, %v381
    %v383 = vpop.f32.mrb[0].mxu0
    %384 = vdwg.mxu0
    %v385 = vld [vmem:[%s2] sm:$0x1]
    %v387 = vlaneseq
    %v388 = vshrl.u32 %v387, 7
    %v389 = vsub.s32 0, %v388
    %v390 = vrot.slane %v385, %v389
    %v392 = vmul.f32 %v379, %v390
    %v393 = vmul.f32 %v382, %v390
    %v394 = vld [vmem:[%s3] sm:$0x1]
    %v396 = vlaneseq
    %v397 = vshrl.u32 %v396, 7
    %v398 = vsub.s32 0, %v397
    %v399 = vrot.slane %v394, %v398
    %v401 = vadd.f32 %v392, %v399
    %v402 = vadd.f32 %v393, %v399
    %403 = vst [vmem:[%s4] sm:$0xff] %v401
    %404 = vst [vmem:[%s4 + $0x8] sm:$0xff] %v402
    %v405 = vadd.f32 %v401, %v402
    %v406 = vrot.slane %v405, 4
    %v407 = vadd.f32 %v405, %v406
    %v408 = vrot.slane %v407, 2
    %v409 = vadd.f32 %v407, %v408
    %v410 = vrot.slane %v409, 1
    %v411 = vadd.f32 %v409, %v410
    %v412 = vmul.f32 %v401, %v401
    %v413 = vmul.f32 %v402, %v402
    %v414 = vadd.f32 %v412, %v413
    %v415 = vrot.slane %v414, 4
    %v416 = vadd.f32 %v414, %v415
    %v417 = vrot.slane %v416, 2
    %v418 = vadd.f32 %v416, %v417
    %v419 = vrot.slane %v418, 1
    %v420 = vadd.f32 %v418, %v419
    %p421 = scmp.eq.s32.totalorder 0, 0
    // Predicated region
    $region18: #{_lambda_.10} parent=1 // pred_check
      %p422 = pneg %p421
    $region19: #{_lambda_.10} parent=1 // pred_check_branch
      %424 = sbr.rel (%p422) target = $region21
    $region20: #{_lambda_.10} parent=1 // pred_region
      %425 = vst [vmem:[#allocation2] sm:$0x1] %v411
      %426 = vst [vmem:[#allocation4] sm:$0x1] %v420
    $region21: #{_lambda_.10} parent=1 // pred_fallthru
      _
    %p427 = scmp.gt.s32.totalorder 0, 0
    // Predicated region
    $region22: #{_lambda_.10} parent=1 // pred_check
      %p428 = pneg %p427
    $region23: #{_lambda_.10} parent=1 // pred_check_branch
      %430 = sbr.rel (%p428) target = $region25
    $region24: #{_lambda_.10} parent=1 // pred_region
      %v431 = vld [vmem:[#allocation2] sm:$0x1]
      %v432 = vadd.f32 %v431, %v411
      %433 = vst [vmem:[#allocation2] sm:$0x1] %v432
      %v434 = vld [vmem:[#allocation4] sm:$0x1]
      %v435 = vadd.f32 %v434, %v420
      %436 = vst [vmem:[#allocation4] sm:$0x1] %v435
    $region25: #{_lambda_.10} parent=1 // pred_fallthru
      _
    // Predicated region
    $region26: #{_lambda_.10} parent=1 // pred_check
      _
    $region27: #{_lambda_.10} parent=1 // pred_check_branch
      %438 = sbr.rel (0) target = $region29
    $region28: #{_lambda_.10} parent=1 // pred_region
      _
    $region29: #{_lambda_.10} parent=1 // pred_fallthru
      _
    // Predicated region
    $region30: #{_lambda_.10} parent=1 // pred_check
      _
    $region31: #{_lambda_.10} parent=1 // pred_check_branch
      %440 = sbr.rel (0) target = $region33
    $region32: #{_lambda_.10} parent=1 // pred_region
      %s442 = ssub.s32 16, 16
      %443 = vsyncadd [#allocation3], %s442
      %s445 = sshll.u32 [#allocation2], 4
      %s446 = int_to_ptr.vmem [resolvable:$true] %s445
      %448 = dma.vmem_to_hbm [thread:$0]  %s446, 16, %s5, [#allocation3]
    $region33: #{_lambda_.10} parent=1 // pred_fallthru
      _
    // Predicated region
    $region34: #{_lambda_.10} parent=1 // pred_check
      _
    $region35: #{_lambda_.10} parent=1 // pred_check_branch
      %450 = sbr.rel (0) target = $region37
    $region36: #{_lambda_.10} parent=1 // pred_region
      %s452 = ssub.s32 16, 16
      %453 = vsyncadd [#allocation5], %s452
      %s455 = sshll.u32 [#allocation4], 4
      %s456 = int_to_ptr.vmem [resolvable:$true] %s455
      %458 = dma.vmem_to_hbm [thread:$0]  %s456, 16, %s6, [#allocation5]
    $region37: #{_lambda_.10} parent=1 // pred_fallthru
      _
    // Predicated region
    $region38: #{_lambda_.10} parent=1 // pred_check
      _
    $region39: #{_lambda_.10} parent=1 // pred_check_branch
      %460 = sbr.rel (0) target = $region41
    $region40: #{_lambda_.10} parent=1 // pred_region
      _
    $region41: #{_lambda_.10} parent=1 // pred_fallthru
      _
    // Predicated region
    $region42: #{_lambda_.10} parent=1 // pred_check
      _
    $region43: #{_lambda_.10} parent=1 // pred_check_branch
      %462 = sbr.rel (0) target = $region45
    $region44: #{_lambda_.10} parent=1 // pred_region
      %463 = dma.done [#allocation3], 16
    $region45: #{_lambda_.10} parent=1 // pred_fallthru
      _
    // Predicated region
    $region46: #{_lambda_.10} parent=1 // pred_check
      _
    $region47: #{_lambda_.10} parent=1 // pred_check_branch
      %465 = sbr.rel (0) target = $region49
    $region48: #{_lambda_.10} parent=1 // pred_region
      %466 = dma.done [#allocation5], 16
    $region49: #{_lambda_.10} parent=1 // pred_fallthru
      _
    %467 = vsyncpa [#allocation3], 1
    %468 = vsyncpa [#allocation5], 1

// kernel: _lambda_.11
$region0: #{_lambda_.11}
  #allocation0 [shape = 'u32[]', space=smem, size = 0x4, offset = 0x4, fixed_abs, tag = 'smem constant byte address 0x4 - core index']
  #allocation1 [shape = 'u32[144,128]{1,0:T(1,128)}', space=vmem, size = 0x12000, scoped, tag = 'internal scratch']
  %s0 = inlined_call_operand.vmem [shape: bf16[512,128], index: 0, kind: input, shape index: {}]
  %s1 = inlined_call_operand.vmem [shape: bf16[128,128], index: 1, kind: input, shape index: {}]
  %s2 = inlined_call_operand.vmem [shape: f32[1,128], index: 2, kind: input, shape index: {}]
  %s3 = inlined_call_operand.vmem [shape: f32[1,128], index: 3, kind: input, shape index: {}]
  %s4 = inlined_call_operand.vmem [shape: bf16[512,128], index: 4, kind: output, shape index: {0}]
  %s5 = inlined_call_operand.vmem [shape: f32[1,128], index: 5, kind: output, shape index: {1}]
  %s6 = inlined_call_operand.vmem [shape: f32[1,128], index: 6, kind: output, shape index: {2}]
  %7 = xla_tuple %s4, %s5, %s6
  %s8 = sld [smem:[#allocation0]]
  $region73: #{_lambda_.11} parent=0
    _
  %s10 = ssub.s32 1, %s8
  %s11 = scalar_select 0, %s10, %s8
  loop: start=0, step=1, limit=4
  $region2: #{_lambda_.11} parent=0 // loop_pre_header
    _
  $region3: #{_lambda_.11} parent=0 // loop_header
    %s13 = sphi 0, %s17
    %p14 = scmp.ge.s32.totalorder %s13, 4
    %s20 = sphi 0, %s32
    %s21 = sphi 0, %s28
    %s22 = sphi 0, %s20
    %s23 = sphi 0, %s21
    %s24 = sphi 0, %s22
    %s25 = sphi 0, %s23
    %s35 = sphi 0, %s37
    %s38 = sphi 0, %s35
    %s39 = sphi 0, %s38
    %s55 = sphi 0, %s39
    %s61 = sphi 0, %s63
    %s64 = sphi 0, %s61
    %s65 = sphi 0, %s64
    %s81 = sphi 0, %s65
    %s87 = sphi 0, %s89
    %s90 = sphi 0, %s87
    %s91 = sphi 0, %s90
    %s107 = sphi 0, %s91
    %s113 = sphi 0, %s115
    %s116 = sphi 0, %s113
    %s117 = sphi 0, %s116
    %s133 = sphi 0, %s117
    %s141 = sphi 0, %s143
    %s144 = sphi 0, %s141
    %s145 = sphi 0, %s144
    %s161 = sphi 0, %s145
    %s167 = sphi 0, %s169
    %s170 = sphi 0, %s167
    %s171 = sphi 0, %s170
    %s187 = sphi 0, %s171
    %s193 = sphi 0, %s195
    %s196 = sphi 0, %s193
    %s197 = sphi 0, %s196
    %s213 = sphi 0, %s197
  $region4: #{_lambda_.11} parent=0 // loop_header_branch
    %16 = sbr.rel (%p14) target = $region8
  $region5: #{_lambda_.11} parent=0 // loop_body
    %s18 = ssub.s32 %s13, 1
    %s19 = ssub.s32 %s13, 2
    %s26 = sadd.s32 1, %s21
    %p27 = scmp.ge.s32.totalorder %s26, 2
    %s28 = scalar_select %p27, 0, %s26
    %s29 = sadd.s32 1, %s20
    %s30 = scalar_select %p27, %s29, %s20
    %p31 = scmp.ge.s32.totalorder %s30, 1
    %s32 = scalar_select %p31, 0, %s30
    %s33 = ssub.s32 %s21, %s28
    %p34 = scmp.eq.s32.totalorder %s33, 0
    %s36 = sadd.s32 %s35, 1
    %s37 = scalar_select %p34, %s35, %s36
    %p40 = pneg %p34
    %p41 = scmp.eq.s32.totalorder %s13, 1
    %p42 = por %p40, %p41
    %p43 = scmp.ne.s32.totalorder %s35, %s38
    %p44 = scmp.eq.s32.totalorder %s13, 0
    %p45 = por %p43, %p44
    %p46 = scmp.ne.s32.totalorder %s35, %s38
    %p47 = scmp.eq.s32.totalorder %s18, 1
    %p48 = por %p46, %p47
    %p49 = scmp.ne.s32.totalorder %s38, %s39
    %p50 = scmp.eq.s32.totalorder %s18, 0
    %p51 = por %p49, %p50
    %p52 = scmp.ne.s32.totalorder %s38, %s39
    %p53 = scmp.eq.s32.totalorder %s19, 1
    %p54 = por %p52, %p53
    %p56 = scmp.ne.s32.totalorder %s39, %s55
    %p57 = scmp.eq.s32.totalorder %s19, 0
    %p58 = por %p56, %p57
    %s59 = ssub.s32 %s20, %s32
    %p60 = scmp.eq.s32.totalorder %s59, 0
    %s62 = sadd.s32 %s61, 1
    %s63 = scalar_select %p60, %s61, %s62
    %p66 = pneg %p60
    %p67 = scmp.eq.s32.totalorder %s13, 1
    %p68 = por %p66, %p67
    %p69 = scmp.ne.s32.totalorder %s61, %s64
    %p70 = scmp.eq.s32.totalorder %s13, 0
    %p71 = por %p69, %p70
    %p72 = scmp.ne.s32.totalorder %s61, %s64
    %p73 = scmp.eq.s32.totalorder %s18, 1
    %p74 = por %p72, %p73
    %p75 = scmp.ne.s32.totalorder %s64, %s65
    %p76 = scmp.eq.s32.totalorder %s18, 0
    %p77 = por %p75, %p76
    %p78 = scmp.ne.s32.totalorder %s64, %s65
    %p79 = scmp.eq.s32.totalorder %s19, 1
    %p80 = por %p78, %p79
    %p82 = scmp.ne.s32.totalorder %s65, %s81
    %p83 = scmp.eq.s32.totalorder %s19, 0
    %p84 = por %p82, %p83
    %s85 = ssub.s32 %s20, %s32
    %p86 = scmp.eq.s32.totalorder %s85, 0
    %s88 = sadd.s32 %s87, 1
    %s89 = scalar_select %p86, %s87, %s88
    %p92 = pneg %p86
    %p93 = scmp.eq.s32.totalorder %s13, 1
    %p94 = por %p92, %p93
    %p95 = scmp.ne.s32.totalorder %s87, %s90
    %p96 = scmp.eq.s32.totalorder %s13, 0
    %p97 = por %p95, %p96
    %p98 = scmp.ne.s32.totalorder %s87, %s90
    %p99 = scmp.eq.s32.totalorder %s18, 1
    %p100 = por %p98, %p99
    %p101 = scmp.ne.s32.totalorder %s90, %s91
    %p102 = scmp.eq.s32.totalorder %s18, 0
    %p103 = por %p101, %p102
    %p104 = scmp.ne.s32.totalorder %s90, %s91
    %p105 = scmp.eq.s32.totalorder %s19, 1
    %p106 = por %p104, %p105
    %p108 = scmp.ne.s32.totalorder %s91, %s107
    %p109 = scmp.eq.s32.totalorder %s19, 0
    %p110 = por %p108, %p109
    %s111 = ssub.s32 %s20, %s32
    %p112 = scmp.eq.s32.totalorder %s111, 0
    %s114 = sadd.s32 %s113, 1
    %s115 = scalar_select %p112, %s113, %s114
    %p118 = pneg %p112
    %p119 = scmp.eq.s32.totalorder %s13, 1
    %p120 = por %p118, %p119
    %p121 = scmp.ne.s32.totalorder %s113, %s116
    %p122 = scmp.eq.s32.totalorder %s13, 0
    %p123 = por %p121, %p122
    %p124 = scmp.ne.s32.totalorder %s113, %s116
    %p125 = scmp.eq.s32.totalorder %s18, 1
    %p126 = por %p124, %p125
    %p127 = scmp.ne.s32.totalorder %s116, %s117
    %p128 = scmp.eq.s32.totalorder %s18, 0
    %p129 = por %p127, %p128
    %p130 = scmp.ne.s32.totalorder %s116, %s117
    %p131 = scmp.eq.s32.totalorder %s19, 1
    %p132 = por %p130, %p131
    %p134 = scmp.ne.s32.totalorder %s117, %s133
    %p135 = scmp.eq.s32.totalorder %s19, 0
    %p136 = por %p134, %p135
    %s137 = ssub.s32 %s21, %s28
    %s138 = ssub.s32 %s20, %s32
    %s139 = sor.u32 %s137, %s138
    %p140 = scmp.eq.s32.totalorder %s139, 0
    %s142 = sadd.s32 %s141, 1
    %s143 = scalar_select %p140, %s141, %s142
    %p146 = pneg %p140
    %p147 = scmp.eq.s32.totalorder %s13, 1
    %p148 = por %p146, %p147
    %p149 = scmp.ne.s32.totalorder %s141, %s144
    %p150 = scmp.eq.s32.totalorder %s13, 0
    %p151 = por %p149, %p150
    %p152 = scmp.ne.s32.totalorder %s141, %s144
    %p153 = scmp.eq.s32.totalorder %s18, 1
    %p154 = por %p152, %p153
    %p155 = scmp.ne.s32.totalorder %s144, %s145
    %p156 = scmp.eq.s32.totalorder %s18, 0
    %p157 = por %p155, %p156
    %p158 = scmp.ne.s32.totalorder %s144, %s145
    %p159 = scmp.eq.s32.totalorder %s19, 1
    %p160 = por %p158, %p159
    %p162 = scmp.ne.s32.totalorder %s145, %s161
    %p163 = scmp.eq.s32.totalorder %s19, 0
    %p164 = por %p162, %p163
    %s165 = ssub.s32 %s20, %s32
    %p166 = scmp.eq.s32.totalorder %s165, 0
    %s168 = sadd.s32 %s167, 1
    %s169 = scalar_select %p166, %s167, %s168
    %p172 = pneg %p166
    %p173 = scmp.eq.s32.totalorder %s13, 1
    %p174 = por %p172, %p173
    %p175 = scmp.ne.s32.totalorder %s167, %s170
    %p176 = scmp.eq.s32.totalorder %s13, 0
    %p177 = por %p175, %p176
    %p178 = scmp.ne.s32.totalorder %s167, %s170
    %p179 = scmp.eq.s32.totalorder %s18, 1
    %p180 = por %p178, %p179
    %p181 = scmp.ne.s32.totalorder %s170, %s171
    %p182 = scmp.eq.s32.totalorder %s18, 0
    %p183 = por %p181, %p182
    %p184 = scmp.ne.s32.totalorder %s170, %s171
    %p185 = scmp.eq.s32.totalorder %s19, 1
    %p186 = por %p184, %p185
    %p188 = scmp.ne.s32.totalorder %s171, %s187
    %p189 = scmp.eq.s32.totalorder %s19, 0
    %p190 = por %p188, %p189
    %s191 = ssub.s32 %s20, %s32
    %p192 = scmp.eq.s32.totalorder %s191, 0
    %s194 = sadd.s32 %s193, 1
    %s195 = scalar_select %p192, %s193, %s194
    %p198 = pneg %p192
    %p199 = scmp.eq.s32.totalorder %s13, 1
    %p200 = por %p198, %p199
    %p201 = scmp.ne.s32.totalorder %s193, %s196
    %p202 = scmp.eq.s32.totalorder %s13, 0
    %p203 = por %p201, %p202
    %p204 = scmp.ne.s32.totalorder %s193, %s196
    %p205 = scmp.eq.s32.totalorder %s18, 1
    %p206 = por %p204, %p205
    %p207 = scmp.ne.s32.totalorder %s196, %s197
    %p208 = scmp.eq.s32.totalorder %s18, 0
    %p209 = por %p207, %p208
    %p210 = scmp.ne.s32.totalorder %s196, %s197
    %p211 = scmp.eq.s32.totalorder %s19, 1
    %p212 = por %p210, %p211
    %p214 = scmp.ne.s32.totalorder %s197, %s213
    %p215 = scmp.eq.s32.totalorder %s19, 0
    %p216 = por %p214, %p215
    %p217 = scmp.le.s32.totalorder 1, %s13
    %p218 = scmp.lt.s32.totalorder %s13, 3
    %p219 = pnand %p217, %p218
    %p220 = pneg %p219
    // Predicated region
    $region9: #{_lambda_.11} parent=5 // pred_check
      _
    $region10: #{_lambda_.11} parent=5 // pred_check_branch
      %222 = sbr.rel (%p219) target = $region12
    $region11: #{_lambda_.11} parent=5 // pred_region
      %s223 = ssub.s32 %s13, 1
      // Predicated region
      $region13: #{_lambda_.11} parent=11 // pred_check
        %p224 = pneg %p77
      $region14: #{_lambda_.11} parent=11 // pred_check_branch
        %226 = sbr.rel (%p224) target = $region16
      $region15: #{_lambda_.11} parent=11 // pred_region
        %p227 = scmp.lt.s32.totalorder %s22, 0
        %s228 = scalar_select %p227, %s22, 0
        %s229 = smul.addr %s228, 4
        %s230 = scalar_lea.vmem %s1, %s229
      $region16: #{_lambda_.11} parent=11 // pred_fallthru
        _
      // Predicated region
      $region17: #{_lambda_.11} parent=11 // pred_check
        %p231 = pneg %p103
      $region18: #{_lambda_.11} parent=11 // pred_check_branch
        %233 = sbr.rel (%p231) target = $region20
      $region19: #{_lambda_.11} parent=11 // pred_region
        %p234 = scmp.lt.s32.totalorder %s22, 0
        %s235 = scalar_select %p234, %s22, 0
        %s236 = scalar_lea.vmem %s2, %s235
      $region20: #{_lambda_.11} parent=11 // pred_fallthru
        _
      // Predicated region
      $region21: #{_lambda_.11} parent=11 // pred_check
        %p237 = pneg %p129
      $region22: #{_lambda_.11} parent=11 // pred_check_branch
        %239 = sbr.rel (%p237) target = $region24
      $region23: #{_lambda_.11} parent=11 // pred_region
        %p240 = scmp.lt.s32.totalorder %s22, 0
        %s241 = scalar_select %p240, %s22, 0
        %s242 = scalar_lea.vmem %s3, %s241
      $region24: #{_lambda_.11} parent=11 // pred_fallthru
        _
    $region12: #{_lambda_.11} parent=5 // pred_fallthru
      _
    %p243 = scmp.lt.s32.totalorder %s13, 2
    // Predicated region
    $region25: #{_lambda_.11} parent=5 // pred_check
      %p244 = pneg %p243
    $region26: #{_lambda_.11} parent=5 // pred_check_branch
      %246 = sbr.rel (%p244) target = $region28
    $region27: #{_lambda_.11} parent=5 // pred_region
      // Predicated region
      $region29: #{_lambda_.11} parent=27 // pred_check
        %p247 = pneg %p45
      $region30: #{_lambda_.11} parent=27 // pred_check_branch
        %249 = sbr.rel (%p247) target = $region32
      $region31: #{_lambda_.11} parent=27 // pred_region
        %s250 = smul.u32 32, %s21
        %p251 = scmp.lt.s32.totalorder %s250, 63
        %s252 = scalar_select %p251, %s250, 63
        %s253 = smul.addr %s252, 4
        %s254 = scalar_lea.vmem %s0, %s253
        %s255 = smul.u32 32, %s21
      $region32: #{_lambda_.11} parent=27 // pred_fallthru
        _
    $region28: #{_lambda_.11} parent=5 // pred_fallthru
      _
    %p256 = scmp.le.s32.totalorder 1, %s13
    %p257 = scmp.lt.s32.totalorder %s13, 3
    %p258 = pnand %p256, %p257
    %p259 = pneg %p258
    // Predicated region
    $region33: #{_lambda_.11} parent=5 // pred_check
      _
    $region34: #{_lambda_.11} parent=5 // pred_check_branch
      %261 = sbr.rel (%p258) target = $region36
    $region35: #{_lambda_.11} parent=5 // pred_region
      %s262 = ssub.s32 %s13, 1
      %s263 = smul.u32 32, %s23
      %p264 = scmp.lt.s32.totalorder %s263, 63
      %s265 = scalar_select %p264, %s263, 63
      %s266 = smul.addr %s265, 4
      %s267 = scalar_lea.vmem %s0, %s266
      %p268 = pneg %p51
      %p269 = pneg %p48
      %p270 = scmp.lt.s32.totalorder %s22, 0
      %s271 = scalar_select %p270, %s22, 0
      %s272 = smul.addr %s271, 4
      %s273 = scalar_lea.vmem %s1, %s272
      %p274 = pneg %p77
      %p275 = pneg %p74
      %p276 = scmp.lt.s32.totalorder %s22, 0
      %s277 = scalar_select %p276, %s22, 0
      %s278 = scalar_lea.vmem %s2, %s277
      %p279 = pneg %p103
      %p280 = pneg %p100
      %p281 = scmp.lt.s32.totalorder %s22, 0
      %s282 = scalar_select %p281, %s22, 0
      %s283 = scalar_lea.vmem %s3, %s282
      %p284 = pneg %p129
      %p285 = pneg %p126
      %p286 = pneg %p157
      %p287 = pneg %p154
      %s288 = smul.u32 32, %s23
      %p289 = scmp.lt.s32.totalorder %s288, 63
      %s290 = scalar_select %p289, %s288, 63
      %p291 = scmp.lt.s32.totalorder %s22, 0
      %s292 = scalar_select %p291, %s22, 0
      %s293 = sadd.s32 %s292, %s290
      %s294 = smul.addr %s293, 4
      %s295 = scalar_lea.vmem %s4, %s294
      %p296 = pneg %p183
      %p297 = pneg %p180
      %p298 = scmp.lt.s32.totalorder %s22, 0
      %s299 = scalar_select %p298, %s22, 0
      %s300 = scalar_lea.vmem %s5, %s299
      %p301 = pneg %p209
      %p302 = pneg %p206
      %p303 = scmp.lt.s32.totalorder %s22, 0
      %s304 = scalar_select %p303, %s22, 0
      %s305 = scalar_lea.vmem %s6, %s304
      %s306 = smul.u32 32, %s23
      %p307 = scmp.lt.s32.totalorder %s306, 63
      %s308 = scalar_select %p307, %s306, 63
      %s309 = smul.addr %s308, 4
      %s310 = scalar_lea.vmem %s0, %s309
      %s311 = smul.u32 32, %s23
      %p312 = scmp.lt.s32.totalorder %s22, 0
      %s313 = scalar_select %p312, %s22, 0
      %s314 = smul.addr %s313, 4
      %s315 = scalar_lea.vmem %s1, %s314
      %p316 = scmp.lt.s32.totalorder %s22, 0
      %s317 = scalar_select %p316, %s22, 0
      %s318 = scalar_lea.vmem %s2, %s317
      %p319 = scmp.lt.s32.totalorder %s22, 0
      %s320 = scalar_select %p319, %s22, 0
      %s321 = scalar_lea.vmem %s3, %s320
      %s322 = smul.u32 32, %s23
      %p323 = scmp.lt.s32.totalorder %s322, 63
      %s324 = scalar_select %p323, %s322, 63
      %p325 = scmp.lt.s32.totalorder %s22, 0
      %s326 = scalar_select %p325, %s22, 0
      %s327 = sadd.s32 %s326, %s324
      %s328 = smul.addr %s327, 4
      %s329 = scalar_lea.vmem %s4, %s328
      %s330 = smul.u32 32, %s23
      %p331 = scmp.lt.s32.totalorder %s22, 0
      %s332 = scalar_select %p331, %s22, 0
      %s333 = scalar_lea.vmem %s5, %s332
      %p334 = scmp.lt.s32.totalorder %s22, 0
      %s335 = scalar_select %p334, %s22, 0
      %s336 = scalar_lea.vmem %s6, %s335
      %v338 = vld [vmem:[%s310] sm:$0xf]
      %v339 = vld [vmem:[%s310 + $0x4] sm:$0xf]
      %v340 = vld [vmem:[%s310 + $0x8] sm:$0xf]
      %v341 = vld [vmem:[%s310 + $0xc] sm:$0xf]
      %v342 = vld [vmem:[%s310 + $0x10] sm:$0xf]
      %v343 = vld [vmem:[%s310 + $0x14] sm:$0xf]
      %v344 = vld [vmem:[%s310 + $0x18] sm:$0xf]
      %v345 = vld [vmem:[%s310 + $0x1c] sm:$0xf]
      %v346 = vld [vmem:[%s310 + $0x20] sm:$0xf]
      %v347 = vld [vmem:[%s310 + $0x24] sm:$0xf]
      %v348 = vld [vmem:[%s310 + $0x28] sm:$0xf]
      %v349 = vld [vmem:[%s310 + $0x2c] sm:$0xf]
      %v350 = vld [vmem:[%s310 + $0x30] sm:$0xf]
      %v351 = vld [vmem:[%s310 + $0x34] sm:$0xf]
      %v352 = vld [vmem:[%s310 + $0x38] sm:$0xf]
      %v353 = vld [vmem:[%s310 + $0x3c] sm:$0xf]
      %v354 = vld [vmem:[%s310 + $0x40] sm:$0xf]
      %v355 = vld [vmem:[%s310 + $0x44] sm:$0xf]
      %v356 = vld [vmem:[%s310 + $0x48] sm:$0xf]
      %v357 = vld [vmem:[%s310 + $0x4c] sm:$0xf]
      %v358 = vld [vmem:[%s310 + $0x50] sm:$0xf]
      %v359 = vld [vmem:[%s310 + $0x54] sm:$0xf]
      %v360 = vld [vmem:[%s310 + $0x58] sm:$0xf]
      %v361 = vld [vmem:[%s310 + $0x5c] sm:$0xf]
      %v362 = vld [vmem:[%s310 + $0x60] sm:$0xf]
      %v363 = vld [vmem:[%s310 + $0x64] sm:$0xf]
      %v364 = vld [vmem:[%s310 + $0x68] sm:$0xf]
      %v365 = vld [vmem:[%s310 + $0x6c] sm:$0xf]
      %v366 = vld [vmem:[%s310 + $0x70] sm:$0xf]
      %v367 = vld [vmem:[%s310 + $0x74] sm:$0xf]
      %v368 = vld [vmem:[%s310 + $0x78] sm:$0xf]
      %v369 = vld [vmem:[%s310 + $0x7c] sm:$0xf]
      %v370 = vld [vmem:[%s315] sm:$0xf]
      %v371 = vld [vmem:[%s315 + $0x4] sm:$0xf]
      %v372 = vld [vmem:[%s315 + $0x8] sm:$0xf]
      %v373 = vld [vmem:[%s315 + $0xc] sm:$0xf]
      %v374 = vld [vmem:[%s315 + $0x10] sm:$0xf]
      %v375 = vld [vmem:[%s315 + $0x14] sm:$0xf]
      %v376 = vld [vmem:[%s315 + $0x18] sm:$0xf]
      %v377 = vld [vmem:[%s315 + $0x1c] sm:$0xf]
      %v378 = vld [vmem:[%s315 + $0x20] sm:$0xf]
      %v379 = vld [vmem:[%s315 + $0x24] sm:$0xf]
      %v380 = vld [vmem:[%s315 + $0x28] sm:$0xf]
      %v381 = vld [vmem:[%s315 + $0x2c] sm:$0xf]
      %v382 = vld [vmem:[%s315 + $0x30] sm:$0xf]
      %v383 = vld [vmem:[%s315 + $0x34] sm:$0xf]
      %v384 = vld [vmem:[%s315 + $0x38] sm:$0xf]
      %v385 = vld [vmem:[%s315 + $0x3c] sm:$0xf]
      %v418 = vunpack.c.l.b16 %v338
      %v419 = vunpack.c.l.b16 %v339
      %v420 = vunpack.c.l.b16 %v340
      %v421 = vunpack.c.l.b16 %v341
      %v422 = vunpack.c.l.b16 %v342
      %v423 = vunpack.c.l.b16 %v343
      %v424 = vunpack.c.l.b16 %v344
      %v425 = vunpack.c.l.b16 %v345
      %v426 = vunpack.c.l.b16 %v346
      %v427 = vunpack.c.l.b16 %v347
      %v428 = vunpack.c.l.b16 %v348
      %v429 = vunpack.c.l.b16 %v349
      %v430 = vunpack.c.l.b16 %v350
      %v431 = vunpack.c.l.b16 %v351
      %v432 = vunpack.c.l.b16 %v352
      %v433 = vunpack.c.l.b16 %v353
      %v434 = vunpack.c.l.b16 %v354
      %v435 = vunpack.c.l.b16 %v355
      %v436 = vunpack.c.l.b16 %v356
      %v437 = vunpack.c.l.b16 %v357
      %v438 = vunpack.c.l.b16 %v358
      %v439 = vunpack.c.l.b16 %v359
      %v440 = vunpack.c.l.b16 %v360
      %v441 = vunpack.c.l.b16 %v361
      %v442 = vunpack.c.l.b16 %v362
      %v443 = vunpack.c.l.b16 %v363
      %v444 = vunpack.c.l.b16 %v364
      %v445 = vunpack.c.l.b16 %v365
      %v446 = vunpack.c.l.b16 %v366
      %v447 = vunpack.c.l.b16 %v367
      %v448 = vunpack.c.l.b16 %v368
      %v449 = vunpack.c.l.b16 %v369
      %v450 = vpack.c.b16 %v419, %v418
      %v451 = vpack.c.b16 %v421, %v420
      %v452 = vpack.c.b16 %v423, %v422
      %v453 = vpack.c.b16 %v425, %v424
      %v454 = vpack.c.b16 %v427, %v426
      %v455 = vpack.c.b16 %v429, %v428
      %v456 = vpack.c.b16 %v431, %v430
      %v457 = vpack.c.b16 %v433, %v432
      %v458 = vpack.c.b16 %v435, %v434
      %v459 = vpack.c.b16 %v437, %v436
      %v460 = vpack.c.b16 %v439, %v438
      %v461 = vpack.c.b16 %v441, %v440
      %v462 = vpack.c.b16 %v443, %v442
      %v463 = vpack.c.b16 %v445, %v444
      %v464 = vpack.c.b16 %v447, %v446
      %v465 = vpack.c.b16 %v449, %v448
      %v498 = vunpack.c.l.b16 %v370
      %v499 = vunpack.c.l.b16 %v371
      %v500 = vunpack.c.l.b16 %v372
      %v501 = vunpack.c.l.b16 %v373
      %v502 = vunpack.c.l.b16 %v374
      %v503 = vunpack.c.l.b16 %v375
      %v504 = vunpack.c.l.b16 %v376
      %v505 = vunpack.c.l.b16 %v377
      %v506 = vunpack.c.l.b16 %v378
      %v507 = vunpack.c.l.b16 %v379
      %v508 = vunpack.c.l.b16 %v380
      %v509 = vunpack.c.l.b16 %v381
      %v510 = vunpack.c.l.b16 %v382
      %v511 = vunpack.c.l.b16 %v383
      %v512 = vunpack.c.l.b16 %v384
      %v513 = vunpack.c.l.b16 %v385
      %v514 = vpack.c.b16 %v499, %v498
      %v515 = vpack.c.b16 %v501, %v500
      %v516 = vpack.c.b16 %v503, %v502
      %v517 = vpack.c.b16 %v505, %v504
      %v518 = vpack.c.b16 %v507, %v506
      %v519 = vpack.c.b16 %v509, %v508
      %v520 = vpack.c.b16 %v511, %v510
      %v521 = vpack.c.b16 %v513, %v512
      %530 = vmatprep.subr.bf16.mxu0 0
      %531 = vmatpush1.bf16.msra.mxu0 %v514
      %532 = vmatprep.subr.bf16.mxu0 0
      %533 = vmatpush1.bf16.msra.mxu0 %v515
      %534 = vmatprep.subr.bf16.mxu0 0
      %535 = vmatpush1.bf16.msra.mxu0 %v516
      %536 = vmatprep.subr.bf16.mxu0 0
      %537 = vmatpush1.bf16.msra.mxu0 %v517
      %538 = vmatprep.subr.bf16.mxu0 0
      %539 = vmatpush1.bf16.msra.mxu0 %v518
      %540 = vmatprep.subr.bf16.mxu0 0
      %541 = vmatpush1.bf16.msra.mxu0 %v519
      %542 = vmatprep.subr.bf16.mxu0 0
      %543 = vmatpush1.bf16.msra.mxu0 %v520
      %544 = vmatprep.subr.bf16.mxu0 0
      %545 = vmatpush1.bf16.msra.mxu0 %v521
      %546 = vmatprep.subr.bf16.mxu0 0
      %547 = vmatpush1.bf16.msra.mxu0 0
      %548 = vmatprep.subr.bf16.mxu0 0
      %549 = vmatpush1.bf16.msra.mxu0 0
      %550 = vmatprep.subr.bf16.mxu0 0
      %551 = vmatpush1.bf16.msra.mxu0 0
      %552 = vmatprep.subr.bf16.mxu0 0
      %553 = vmatpush1.bf16.msra.mxu0 0
      %554 = vmatprep.subr.bf16.mxu0 0
      %555 = vmatpush1.bf16.msra.mxu0 0
      %556 = vmatprep.subr.bf16.mxu0 0
      %557 = vmatpush1.bf16.msra.mxu0 0
      %558 = vmatprep.subr.bf16.mxu0 0
      %559 = vmatpush1.bf16.msra.mxu0 0
      %560 = vmatprep.subr.bf16.mxu0 0
      %561 = vmatpush1.bf16.msra.mxu0 0
      %562 = vmatprep.mubr.bf16.mxu0 0
      %563 = vmatmul.mubr.bf16.gmra.mrb[0].mxu0 %v450
      %v564 = vpop.f32.mrb[0].mxu0
      %v565 = vadd.f32 0.0, %v564
      %v566 = vpop.f32.mrb[0].mxu0
      %v567 = vpop.f32.mrb[0].mxu0
      %v568 = vadd.f32 0.0, %v567
      %v569 = vpop.f32.mrb[0].mxu0
      %570 = vmatprep.mubr.bf16.mxu0 0
      %571 = vmatmul.mubr.bf16.gmra.mrb[0].mxu0 %v451
      %v572 = vpop.f32.mrb[0].mxu0
      %v573 = vadd.f32 0.0, %v572
      %v574 = vpop.f32.mrb[0].mxu0
      %v575 = vpop.f32.mrb[0].mxu0
      %v576 = vadd.f32 0.0, %v575
      %v577 = vpop.f32.mrb[0].mxu0
      %578 = vmatprep.mubr.bf16.mxu0 0
      %579 = vmatmul.mubr.bf16.gmra.mrb[0].mxu0 %v452
      %v580 = vpop.f32.mrb[0].mxu0
      %v581 = vadd.f32 0.0, %v580
      %v582 = vpop.f32.mrb[0].mxu0
      %v583 = vpop.f32.mrb[0].mxu0
      %v584 = vadd.f32 0.0, %v583
      %v585 = vpop.f32.mrb[0].mxu0
      %586 = vmatprep.mubr.bf16.mxu0 0
      %587 = vmatmul.mubr.bf16.gmra.mrb[0].mxu0 %v453
      %v588 = vpop.f32.mrb[0].mxu0
      %v589 = vadd.f32 0.0, %v588
      %v590 = vpop.f32.mrb[0].mxu0
      %v591 = vpop.f32.mrb[0].mxu0
      %v592 = vadd.f32 0.0, %v591
      %v593 = vpop.f32.mrb[0].mxu0
      %594 = vmatprep.mubr.bf16.mxu0 0
      %595 = vmatmul.mubr.bf16.gmra.mrb[0].mxu0 %v454
      %v596 = vpop.f32.mrb[0].mxu0
      %v597 = vadd.f32 0.0, %v596
      %v598 = vpop.f32.mrb[0].mxu0
      %v599 = vpop.f32.mrb[0].mxu0
      %v600 = vadd.f32 0.0, %v599
      %v601 = vpop.f32.mrb[0].mxu0
      %602 = vmatprep.mubr.bf16.mxu0 0
      %603 = vmatmul.mubr.bf16.gmra.mrb[0].mxu0 %v455
      %v604 = vpop.f32.mrb[0].mxu0
      %v605 = vadd.f32 0.0, %v604
      %v606 = vpop.f32.mrb[0].mxu0
      %v607 = vpop.f32.mrb[0].mxu0
      %v608 = vadd.f32 0.0, %v607
      %v609 = vpop.f32.mrb[0].mxu0
      %610 = vmatprep.mubr.bf16.mxu0 0
      %611 = vmatmul.mubr.bf16.gmra.mrb[0].mxu0 %v456
      %v612 = vpop.f32.mrb[0].mxu0
      %v613 = vadd.f32 0.0, %v612
      %v614 = vpop.f32.mrb[0].mxu0
      %v615 = vpop.f32.mrb[0].mxu0
      %v616 = vadd.f32 0.0, %v615
      %v617 = vpop.f32.mrb[0].mxu0
      %618 = vmatprep.mubr.bf16.mxu0 0
      %619 = vmatmul.mubr.bf16.gmra.mrb[0].mxu0 %v457
      %v620 = vpop.f32.mrb[0].mxu0
      %v621 = vadd.f32 0.0, %v620
      %v622 = vpop.f32.mrb[0].mxu0
      %v623 = vpop.f32.mrb[0].mxu0
      %v624 = vadd.f32 0.0, %v623
      %v625 = vpop.f32.mrb[0].mxu0
      %626 = vmatprep.mubr.bf16.mxu0 0
      %627 = vmatmul.mubr.bf16.gmra.mrb[0].mxu0 %v458
      %v628 = vpop.f32.mrb[0].mxu0
      %v629 = vadd.f32 0.0, %v628
      %v630 = vpop.f32.mrb[0].mxu0
      %v631 = vpop.f32.mrb[0].mxu0
      %v632 = vadd.f32 0.0, %v631
      %v633 = vpop.f32.mrb[0].mxu0
      %634 = vmatprep.mubr.bf16.mxu0 0
      %635 = vmatmul.mubr.bf16.gmra.mrb[0].mxu0 %v459
      %v636 = vpop.f32.mrb[0].mxu0
      %v637 = vadd.f32 0.0, %v636
      %v638 = vpop.f32.mrb[0].mxu0
      %v639 = vpop.f32.mrb[0].mxu0
      %v640 = vadd.f32 0.0, %v639
      %v641 = vpop.f32.mrb[0].mxu0
      %642 = vmatprep.mubr.bf16.mxu0 0
      %643 = vmatmul.mubr.bf16.gmra.mrb[0].mxu0 %v460
      %v644 = vpop.f32.mrb[0].mxu0
      %v645 = vadd.f32 0.0, %v644
      %v646 = vpop.f32.mrb[0].mxu0
      %v647 = vpop.f32.mrb[0].mxu0
      %v648 = vadd.f32 0.0, %v647
      %v649 = vpop.f32.mrb[0].mxu0
      %650 = vmatprep.mubr.bf16.mxu0 0
      %651 = vmatmul.mubr.bf16.gmra.mrb[0].mxu0 %v461
      %v652 = vpop.f32.mrb[0].mxu0
      %v653 = vadd.f32 0.0, %v652
      %v654 = vpop.f32.mrb[0].mxu0
      %v655 = vpop.f32.mrb[0].mxu0
      %v656 = vadd.f32 0.0, %v655
      %v657 = vpop.f32.mrb[0].mxu0
      %658 = vmatprep.mubr.bf16.mxu0 0
      %659 = vmatmul.mubr.bf16.gmra.mrb[0].mxu0 %v462
      %v660 = vpop.f32.mrb[0].mxu0
      %v661 = vadd.f32 0.0, %v660
      %v662 = vpop.f32.mrb[0].mxu0
      %v663 = vpop.f32.mrb[0].mxu0
      %v664 = vadd.f32 0.0, %v663
      %v665 = vpop.f32.mrb[0].mxu0
      %666 = vmatprep.mubr.bf16.mxu0 0
      %667 = vmatmul.mubr.bf16.gmra.mrb[0].mxu0 %v463
      %v668 = vpop.f32.mrb[0].mxu0
      %v669 = vadd.f32 0.0, %v668
      %v670 = vpop.f32.mrb[0].mxu0
      %v671 = vpop.f32.mrb[0].mxu0
      %v672 = vadd.f32 0.0, %v671
      %v673 = vpop.f32.mrb[0].mxu0
      %674 = vmatprep.mubr.bf16.mxu0 0
      %675 = vmatmul.mubr.bf16.gmra.mrb[0].mxu0 %v464
      %v676 = vpop.f32.mrb[0].mxu0
      %v677 = vadd.f32 0.0, %v676
      %v678 = vpop.f32.mrb[0].mxu0
      %v679 = vpop.f32.mrb[0].mxu0
      %v680 = vadd.f32 0.0, %v679
      %v681 = vpop.f32.mrb[0].mxu0
      %682 = vmatprep.mubr.bf16.mxu0 0
      %683 = vmatmul.mubr.bf16.gmra.mrb[0].mxu0 %v465
      %v684 = vpop.f32.mrb[0].mxu0
      %v685 = vadd.f32 0.0, %v684
      %v686 = vpop.f32.mrb[0].mxu0
      %v687 = vpop.f32.mrb[0].mxu0
      %v688 = vadd.f32 0.0, %v687
      %v689 = vpop.f32.mrb[0].mxu0
      %690 = vdwg.mxu0
      %v691 = vld [vmem:[%s318] sm:$0x1]
      %v693 = vlaneseq
      %v694 = vshrl.u32 %v693, 7
      %v695 = vsub.s32 0, %v694
      %v696 = vrot.slane %v691, %v695
      %v698 = vmul.f32 %v565, %v696
      %v699 = vmul.f32 %v568, %v696
      %v700 = vmul.f32 %v573, %v696
      %v701 = vmul.f32 %v576, %v696
      %v702 = vmul.f32 %v581, %v696
      %v703 = vmul.f32 %v584, %v696
      %v704 = vmul.f32 %v589, %v696
      %v705 = vmul.f32 %v592, %v696
      %v706 = vmul.f32 %v597, %v696
      %v707 = vmul.f32 %v600, %v696
      %v708 = vmul.f32 %v605, %v696
      %v709 = vmul.f32 %v608, %v696
      %v710 = vmul.f32 %v613, %v696
      %v711 = vmul.f32 %v616, %v696
      %v712 = vmul.f32 %v621, %v696
      %v713 = vmul.f32 %v624, %v696
      %v714 = vmul.f32 %v629, %v696
      %v715 = vmul.f32 %v632, %v696
      %v716 = vmul.f32 %v637, %v696
      %v717 = vmul.f32 %v640, %v696
      %v718 = vmul.f32 %v645, %v696
      %v719 = vmul.f32 %v648, %v696
      %v720 = vmul.f32 %v653, %v696
      %v721 = vmul.f32 %v656, %v696
      %v722 = vmul.f32 %v661, %v696
      %v723 = vmul.f32 %v664, %v696
      %v724 = vmul.f32 %v669, %v696
      %v725 = vmul.f32 %v672, %v696
      %v726 = vmul.f32 %v677, %v696
      %v727 = vmul.f32 %v680, %v696
      %v728 = vmul.f32 %v685, %v696
      %v729 = vmul.f32 %v688, %v696
      %v730 = vld [vmem:[%s321] sm:$0x1]
      %v732 = vlaneseq
      %v733 = vshrl.u32 %v732, 7
      %v734 = vsub.s32 0, %v733
      %v735 = vrot.slane %v730, %v734
      %v737 = vadd.f32 %v698, %v735
      %v738 = vadd.f32 %v699, %v735
      %v739 = vadd.f32 %v700, %v735
      %v740 = vadd.f32 %v701, %v735
      %v741 = vadd.f32 %v702, %v735
      %v742 = vadd.f32 %v703, %v735
      %v743 = vadd.f32 %v704, %v735
      %v744 = vadd.f32 %v705, %v735
      %v745 = vadd.f32 %v706, %v735
      %v746 = vadd.f32 %v707, %v735
      %v747 = vadd.f32 %v708, %v735
      %v748 = vadd.f32 %v709, %v735
      %v749 = vadd.f32 %v710, %v735
      %v750 = vadd.f32 %v711, %v735
      %v751 = vadd.f32 %v712, %v735
      %v752 = vadd.f32 %v713, %v735
      %v753 = vadd.f32 %v714, %v735
      %v754 = vadd.f32 %v715, %v735
      %v755 = vadd.f32 %v716, %v735
      %v756 = vadd.f32 %v717, %v735
      %v757 = vadd.f32 %v718, %v735
      %v758 = vadd.f32 %v719, %v735
      %v759 = vadd.f32 %v720, %v735
      %v760 = vadd.f32 %v721, %v735
      %v761 = vadd.f32 %v722, %v735
      %v762 = vadd.f32 %v723, %v735
      %v763 = vadd.f32 %v724, %v735
      %v764 = vadd.f32 %v725, %v735
      %v765 = vadd.f32 %v726, %v735
      %v766 = vadd.f32 %v727, %v735
      %v767 = vadd.f32 %v728, %v735
      %v768 = vadd.f32 %v729, %v735
      %v769 = vpack.c.bf16 %v738, %v737
      %v770 = vpack.c.bf16 %v740, %v739
      %v771 = vpack.c.bf16 %v742, %v741
      %v772 = vpack.c.bf16 %v744, %v743
      %v773 = vpack.c.bf16 %v746, %v745
      %v774 = vpack.c.bf16 %v748, %v747
      %v775 = vpack.c.bf16 %v750, %v749
      %v776 = vpack.c.bf16 %v752, %v751
      %v777 = vpack.c.bf16 %v754, %v753
      %v778 = vpack.c.bf16 %v756, %v755
      %v779 = vpack.c.bf16 %v758, %v757
      %v780 = vpack.c.bf16 %v760, %v759
      %v781 = vpack.c.bf16 %v762, %v761
      %v782 = vpack.c.bf16 %v764, %v763
      %v783 = vpack.c.bf16 %v766, %v765
      %v784 = vpack.c.bf16 %v768, %v767
      %v801 = vunpack.c.l.b16 %v769
      %v802 = vunpack.c.h.b16 %v769
      %v803 = vunpack.c.l.b16 %v770
      %v804 = vunpack.c.h.b16 %v770
      %v805 = vunpack.c.l.b16 %v771
      %v806 = vunpack.c.h.b16 %v771
      %v807 = vunpack.c.l.b16 %v772
      %v808 = vunpack.c.h.b16 %v772
      %v809 = vunpack.c.l.b16 %v773
      %v810 = vunpack.c.h.b16 %v773
      %v811 = vunpack.c.l.b16 %v774
      %v812 = vunpack.c.h.b16 %v774
      %v813 = vunpack.c.l.b16 %v775
      %v814 = vunpack.c.h.b16 %v775
      %v815 = vunpack.c.l.b16 %v776
      %v816 = vunpack.c.h.b16 %v776
      %v817 = vunpack.c.l.b16 %v777
      %v818 = vunpack.c.h.b16 %v777
      %v819 = vunpack.c.l.b16 %v778
      %v820 = vunpack.c.h.b16 %v778
      %v821 = vunpack.c.l.b16 %v779
      %v822 = vunpack.c.h.b16 %v779
      %v823 = vunpack.c.l.b16 %v780
      %v824 = vunpack.c.h.b16 %v780
      %v825 = vunpack.c.l.b16 %v781
      %v826 = vunpack.c.h.b16 %v781
      %v827 = vunpack.c.l.b16 %v782
      %v828 = vunpack.c.h.b16 %v782
      %v829 = vunpack.c.l.b16 %v783
      %v830 = vunpack.c.h.b16 %v783
      %v831 = vunpack.c.l.b16 %v784
      %v832 = vunpack.c.h.b16 %v784
      %v833 = vpack.c.b16 %v801, %v801
      %v834 = vpack.c.b16 %v802, %v802
      %v835 = vpack.c.b16 %v803, %v803
      %v836 = vpack.c.b16 %v804, %v804
      %v837 = vpack.c.b16 %v805, %v805
      %v838 = vpack.c.b16 %v806, %v806
      %v839 = vpack.c.b16 %v807, %v807
      %v840 = vpack.c.b16 %v808, %v808
      %v841 = vpack.c.b16 %v809, %v809
      %v842 = vpack.c.b16 %v810, %v810
      %v843 = vpack.c.b16 %v811, %v811
      %v844 = vpack.c.b16 %v812, %v812
      %v845 = vpack.c.b16 %v813, %v813
      %v846 = vpack.c.b16 %v814, %v814
      %v847 = vpack.c.b16 %v815, %v815
      %v848 = vpack.c.b16 %v816, %v816
      %v849 = vpack.c.b16 %v817, %v817
      %v850 = vpack.c.b16 %v818, %v818
      %v851 = vpack.c.b16 %v819, %v819
      %v852 = vpack.c.b16 %v820, %v820
      %v853 = vpack.c.b16 %v821, %v821
      %v854 = vpack.c.b16 %v822, %v822
      %v855 = vpack.c.b16 %v823, %v823
      %v856 = vpack.c.b16 %v824, %v824
      %v857 = vpack.c.b16 %v825, %v825
      %v858 = vpack.c.b16 %v826, %v826
      %v859 = vpack.c.b16 %v827, %v827
      %v860 = vpack.c.b16 %v828, %v828
      %v861 = vpack.c.b16 %v829, %v829
      %v862 = vpack.c.b16 %v830, %v830
      %v863 = vpack.c.b16 %v831, %v831
      %v864 = vpack.c.b16 %v832, %v832
      %897 = vst [vmem:[%s329] sm:$0xf] %v833
      %898 = vst [vmem:[%s329 + $0x4] sm:$0xf] %v834
      %899 = vst [vmem:[%s329 + $0x8] sm:$0xf] %v835
      %900 = vst [vmem:[%s329 + $0xc] sm:$0xf] %v836
      %901 = vst [vmem:[%s329 + $0x10] sm:$0xf] %v837
      %902 = vst [vmem:[%s329 + $0x14] sm:$0xf] %v838
      %903 = vst [vmem:[%s329 + $0x18] sm:$0xf] %v839
      %904 = vst [vmem:[%s329 + $0x1c] sm:$0xf] %v840
      %905 = vst [vmem:[%s329 + $0x20] sm:$0xf] %v841
      %906 = vst [vmem:[%s329 + $0x24] sm:$0xf] %v842
      %907 = vst [vmem:[%s329 + $0x28] sm:$0xf] %v843
      %908 = vst [vmem:[%s329 + $0x2c] sm:$0xf] %v844
      %909 = vst [vmem:[%s329 + $0x30] sm:$0xf] %v845
      %910 = vst [vmem:[%s329 + $0x34] sm:$0xf] %v846
      %911 = vst [vmem:[%s329 + $0x38] sm:$0xf] %v847
      %912 = vst [vmem:[%s329 + $0x3c] sm:$0xf] %v848
      %913 = vst [vmem:[%s329 + $0x40] sm:$0xf] %v849
      %914 = vst [vmem:[%s329 + $0x44] sm:$0xf] %v850
      %915 = vst [vmem:[%s329 + $0x48] sm:$0xf] %v851
      %916 = vst [vmem:[%s329 + $0x4c] sm:$0xf] %v852
      %917 = vst [vmem:[%s329 + $0x50] sm:$0xf] %v853
      %918 = vst [vmem:[%s329 + $0x54] sm:$0xf] %v854
      %919 = vst [vmem:[%s329 + $0x58] sm:$0xf] %v855
      %920 = vst [vmem:[%s329 + $0x5c] sm:$0xf] %v856
      %921 = vst [vmem:[%s329 + $0x60] sm:$0xf] %v857
      %922 = vst [vmem:[%s329 + $0x64] sm:$0xf] %v858
      %923 = vst [vmem:[%s329 + $0x68] sm:$0xf] %v859
      %924 = vst [vmem:[%s329 + $0x6c] sm:$0xf] %v860
      %925 = vst [vmem:[%s329 + $0x70] sm:$0xf] %v861
      %926 = vst [vmem:[%s329 + $0x74] sm:$0xf] %v862
      %927 = vst [vmem:[%s329 + $0x78] sm:$0xf] %v863
      %928 = vst [vmem:[%s329 + $0x7c] sm:$0xf] %v864
      %v929 = vadd.f32 %v737, %v738
      %v930 = vadd.f32 %v929, %v739
      %v931 = vadd.f32 %v930, %v740
      %v932 = vadd.f32 %v931, %v741
      %v933 = vadd.f32 %v932, %v742
      %v934 = vadd.f32 %v933, %v743
      %v935 = vadd.f32 %v934, %v744
      %v936 = vadd.f32 %v935, %v745
      %v937 = vadd.f32 %v936, %v746
      %v938 = vadd.f32 %v937, %v747
      %v939 = vadd.f32 %v938, %v748
      %v940 = vadd.f32 %v939, %v749
      %v941 = vadd.f32 %v940, %v750
      %v942 = vadd.f32 %v941, %v751
      %v943 = vadd.f32 %v942, %v752
      %v944 = vadd.f32 %v943, %v753
      %v945 = vadd.f32 %v944, %v754
      %v946 = vadd.f32 %v945, %v755
      %v947 = vadd.f32 %v946, %v756
      %v948 = vadd.f32 %v947, %v757
      %v949 = vadd.f32 %v948, %v758
      %v950 = vadd.f32 %v949, %v759
      %v951 = vadd.f32 %v950, %v760
      %v952 = vadd.f32 %v951, %v761
      %v953 = vadd.f32 %v952, %v762
      %v954 = vadd.f32 %v953, %v763
      %v955 = vadd.f32 %v954, %v764
      %v956 = vadd.f32 %v955, %v765
      %v957 = vadd.f32 %v956, %v766
      %v958 = vadd.f32 %v957, %v767
      %v959 = vadd.f32 %v958, %v768
      %v960 = vrot.slane %v959, 4
      %v961 = vadd.f32 %v959, %v960
      %v962 = vrot.slane %v961, 2
      %v963 = vadd.f32 %v961, %v962
      %v964 = vrot.slane %v963, 1
      %v965 = vadd.f32 %v963, %v964
      %v966 = vmul.f32 %v737, %v737
      %v967 = vmul.f32 %v738, %v738
      %v968 = vmul.f32 %v739, %v739
      %v969 = vmul.f32 %v740, %v740
      %v970 = vmul.f32 %v741, %v741
      %v971 = vmul.f32 %v742, %v742
      %v972 = vmul.f32 %v743, %v743
      %v973 = vmul.f32 %v744, %v744
      %v974 = vmul.f32 %v745, %v745
      %v975 = vmul.f32 %v746, %v746
      %v976 = vmul.f32 %v747, %v747
      %v977 = vmul.f32 %v748, %v748
      %v978 = vmul.f32 %v749, %v749
      %v979 = vmul.f32 %v750, %v750
      %v980 = vmul.f32 %v751, %v751
      %v981 = vmul.f32 %v752, %v752
      %v982 = vmul.f32 %v753, %v753
      %v983 = vmul.f32 %v754, %v754
      %v984 = vmul.f32 %v755, %v755
      %v985 = vmul.f32 %v756, %v756
      %v986 = vmul.f32 %v757, %v757
      %v987 = vmul.f32 %v758, %v758
      %v988 = vmul.f32 %v759, %v759
      %v989 = vmul.f32 %v760, %v760
      %v990 = vmul.f32 %v761, %v761
      %v991 = vmul.f32 %v762, %v762
      %v992 = vmul.f32 %v763, %v763
      %v993 = vmul.f32 %v764, %v764
      %v994 = vmul.f32 %v765, %v765
      %v995 = vmul.f32 %v766, %v766
      %v996 = vmul.f32 %v767, %v767
      %v997 = vmul.f32 %v768, %v768
      %v998 = vadd.f32 %v966, %v967
      %v999 = vadd.f32 %v998, %v968
      %v1000 = vadd.f32 %v999, %v969
      %v1001 = vadd.f32 %v1000, %v970
      %v1002 = vadd.f32 %v1001, %v971
      %v1003 = vadd.f32 %v1002, %v972
      %v1004 = vadd.f32 %v1003, %v973
      %v1005 = vadd.f32 %v1004, %v974
      %v1006 = vadd.f32 %v1005, %v975
      %v1007 = vadd.f32 %v1006, %v976
      %v1008 = vadd.f32 %v1007, %v977
      %v1009 = vadd.f32 %v1008, %v978
      %v1010 = vadd.f32 %v1009, %v979
      %v1011 = vadd.f32 %v1010, %v980
      %v1012 = vadd.f32 %v1011, %v981
      %v1013 = vadd.f32 %v1012, %v982
      %v1014 = vadd.f32 %v1013, %v983
      %v1015 = vadd.f32 %v1014, %v984
      %v1016 = vadd.f32 %v1015, %v985
      %v1017 = vadd.f32 %v1016, %v986
      %v1018 = vadd.f32 %v1017, %v987
      %v1019 = vadd.f32 %v1018, %v988
      %v1020 = vadd.f32 %v1019, %v989
      %v1021 = vadd.f32 %v1020, %v990
      %v1022 = vadd.f32 %v1021, %v991
      %v1023 = vadd.f32 %v1022, %v992
      %v1024 = vadd.f32 %v1023, %v993
      %v1025 = vadd.f32 %v1024, %v994
      %v1026 = vadd.f32 %v1025, %v995
      %v1027 = vadd.f32 %v1026, %v996
      %v1028 = vadd.f32 %v1027, %v997
      %v1029 = vrot.slane %v1028, 4
      %v1030 = vadd.f32 %v1028, %v1029
      %v1031 = vrot.slane %v1030, 2
      %v1032 = vadd.f32 %v1030, %v1031
      %v1033 = vrot.slane %v1032, 1
      %v1034 = vadd.f32 %v1032, %v1033
      %p1035 = scmp.eq.s32.totalorder %s23, 0
      // Predicated region
      $region37: #{_lambda_.11} parent=35 // pred_check
        %p1036 = pneg %p1035
      $region38: #{_lambda_.11} parent=35 // pred_check_branch
        %1038 = sbr.rel (%p1036) target = $region40
      $region39: #{_lambda_.11} parent=35 // pred_region
        %1039 = vst [vmem:[%s333] sm:$0x1] %v965
        %1040 = vst [vmem:[%s336] sm:$0x1] %v1034
      $region40: #{_lambda_.11} parent=35 // pred_fallthru
        _
      %p1041 = scmp.gt.s32.totalorder %s23, 0
      // Predicated region
      $region41: #{_lambda_.11} parent=35 // pred_check
        %p1042 = pneg %p1041
      $region42: #{_lambda_.11} parent=35 // pred_check_branch
        %1044 = sbr.rel (%p1042) target = $region44
      $region43: #{_lambda_.11} parent=35 // pred_region
        %v1045 = vld [vmem:[%s333] sm:$0x1]
        %v1046 = vadd.f32 %v1045, %v965
        %1047 = vst [vmem:[%s333] sm:$0x1] %v1046
        %v1048 = vld [vmem:[%s336] sm:$0x1]
        %v1049 = vadd.f32 %v1048, %v1034
        %1050 = vst [vmem:[%s336] sm:$0x1] %v1049
      $region44: #{_lambda_.11} parent=35 // pred_fallthru
        _
      %s1051 = smul.u32 32, %s23
      %p1052 = scmp.lt.s32.totalorder %s1051, 63
      %s1053 = scalar_select %p1052, %s1051, 63
      %p1054 = scmp.lt.s32.totalorder %s22, 0
      %s1055 = scalar_select %p1054, %s22, 0
      %s1056 = sadd.s32 %s1055, %s1053
      %s1057 = smul.addr %s1056, 4
      %s1058 = scalar_lea.vmem %s4, %s1057
      %p1059 = scmp.lt.s32.totalorder %s22, 0
      %s1060 = scalar_select %p1059, %s22, 0
      %s1061 = scalar_lea.vmem %s5, %s1060
      %p1062 = scmp.lt.s32.totalorder %s22, 0
      %s1063 = scalar_select %p1062, %s22, 0
      %s1064 = scalar_lea.vmem %s6, %s1063
      // Predicated region
      $region45: #{_lambda_.11} parent=35 // pred_check
        %p1065 = pneg %p154
      $region46: #{_lambda_.11} parent=35 // pred_check_branch
        %1067 = sbr.rel (%p1065) target = $region48
      $region47: #{_lambda_.11} parent=35 // pred_region
        %s1068 = smul.u32 32, %s23
      $region48: #{_lambda_.11} parent=35 // pred_fallthru
        _
      // Predicated region
      $region49: #{_lambda_.11} parent=35 // pred_check
        %p1069 = pneg %p180
      $region50: #{_lambda_.11} parent=35 // pred_check_branch
        %1071 = sbr.rel (%p1069) target = $region52
      $region51: #{_lambda_.11} parent=35 // pred_region
        _
      $region52: #{_lambda_.11} parent=35 // pred_fallthru
        _
      // Predicated region
      $region53: #{_lambda_.11} parent=35 // pred_check
        %p1072 = pneg %p206
      $region54: #{_lambda_.11} parent=35 // pred_check_branch
        %1074 = sbr.rel (%p1072) target = $region56
      $region55: #{_lambda_.11} parent=35 // pred_region
        _
      $region56: #{_lambda_.11} parent=35 // pred_fallthru
        _
      // Predicated region
      $region57: #{_lambda_.11} parent=35 // pred_check
        %p1075 = pneg %p180
      $region58: #{_lambda_.11} parent=35 // pred_check_branch
        %1077 = sbr.rel (%p1075) target = $region60
      $region59: #{_lambda_.11} parent=35 // pred_region
        %p1078 = scmp.lt.s32.totalorder %s22, 0
        %s1079 = scalar_select %p1078, %s22, 0
        %s1080 = scalar_lea.vmem %s5, %s1079
      $region60: #{_lambda_.11} parent=35 // pred_fallthru
        _
      // Predicated region
      $region61: #{_lambda_.11} parent=35 // pred_check
        %p1081 = pneg %p206
      $region62: #{_lambda_.11} parent=35 // pred_check_branch
        %1083 = sbr.rel (%p1081) target = $region64
      $region63: #{_lambda_.11} parent=35 // pred_region
        %p1084 = scmp.lt.s32.totalorder %s22, 0
        %s1085 = scalar_select %p1084, %s22, 0
        %s1086 = scalar_lea.vmem %s6, %s1085
      $region64: #{_lambda_.11} parent=35 // pred_fallthru
        _
    $region36: #{_lambda_.11} parent=5 // pred_fallthru
      _
    %p1087 = scmp.le.s32.totalorder 2, %s13
    // Predicated region
    $region65: #{_lambda_.11} parent=5 // pred_check
      %p1088 = pneg %p1087
    $region66: #{_lambda_.11} parent=5 // pred_check_branch
      %1090 = sbr.rel (%p1088) target = $region68
    $region67: #{_lambda_.11} parent=5 // pred_region
      %s1091 = ssub.s32 %s13, 2
      // Predicated region
      $region69: #{_lambda_.11} parent=67 // pred_check
        %p1092 = pneg %p160
      $region70: #{_lambda_.11} parent=67 // pred_check_branch
        %1094 = sbr.rel (%p1092) target = $region72
      $region71: #{_lambda_.11} parent=67 // pred_region
        %s1095 = smul.u32 32, %s25
        %p1096 = scmp.lt.s32.totalorder %s1095, 63
        %s1097 = scalar_select %p1096, %s1095, 63
        %p1098 = scmp.lt.s32.totalorder %s24, 0
        %s1099 = scalar_select %p1098, %s24, 0
        %s1100 = sadd.s32 %s1099, %s1097
        %s1101 = smul.addr %s1100, 4
        %s1102 = scalar_lea.vmem %s4, %s1101
      $region72: #{_lambda_.11} parent=67 // pred_fallthru
        _
    $region68: #{_lambda_.11} parent=5 // pred_fallthru
      _
  $region6: #{_lambda_.11} parent=0 // loop_footer
    %s17 = sadd.s32 1, %s13
  $region7: #{_lambda_.11} parent=0 // loop_footer_branch
    %12 = sbr.rel target = $region3
  $region8: #{_lambda_.11} parent=0 // loop_exit
    _

// kernel: _lambda_.14
$region0: #{_lambda_.14}
  #allocation0 [shape = 'u32[]', space=smem, size = 0x4, offset = 0x4, fixed_abs, tag = 'smem constant byte address 0x4 - core index']
  #allocation1 [shape = 'u32[144,128]{1,0:T(1,128)}', space=vmem, size = 0x12000, scoped, tag = 'internal scratch']
  %s0 = inlined_call_operand.vmem [shape: bf16[2,64,128], index: 0, kind: input, shape index: {}]
  %s1 = inlined_call_operand.vmem [shape: f32[2,1,128], index: 1, kind: input, shape index: {}]
  %s2 = inlined_call_operand.vmem [shape: f32[2,1,128], index: 2, kind: input, shape index: {}]
  %s3 = inlined_call_operand.vmem [shape: bf16[2,64,128], index: 3, kind: output, shape index: {}]
  %s4 = sld [smem:[#allocation0]]
  $region45: #{_lambda_.14} parent=0
    _
  %s6 = ssub.s32 1, %s4
  %s7 = scalar_select 0, %s6, %s4
  loop: start=0, step=1, limit=4
  $region2: #{_lambda_.14} parent=0 // loop_pre_header
    _
  $region3: #{_lambda_.14} parent=0 // loop_header
    %s9 = sphi 0, %s13
    %p10 = scmp.ge.s32.totalorder %s9, 4
    %s16 = sphi 0, %s28
    %s17 = sphi 0, %s24
    %s18 = sphi 0, %s16
    %s19 = sphi 0, %s17
    %s20 = sphi 0, %s18
    %s21 = sphi 0, %s19
    %s33 = sphi 0, %s35
    %s36 = sphi 0, %s33
    %s37 = sphi 0, %s36
    %s53 = sphi 0, %s37
    %s59 = sphi 0, %s61
    %s62 = sphi 0, %s59
    %s63 = sphi 0, %s62
    %s79 = sphi 0, %s63
    %s85 = sphi 0, %s87
    %s88 = sphi 0, %s85
    %s89 = sphi 0, %s88
    %s105 = sphi 0, %s89
    %s113 = sphi 0, %s115
    %s116 = sphi 0, %s113
    %s117 = sphi 0, %s116
    %s133 = sphi 0, %s117
  $region4: #{_lambda_.14} parent=0 // loop_header_branch
    %12 = sbr.rel (%p10) target = $region8
  $region5: #{_lambda_.14} parent=0 // loop_body
    %s14 = ssub.s32 %s9, 1
    %s15 = ssub.s32 %s9, 2
    %s22 = sadd.s32 1, %s17
    %p23 = scmp.ge.s32.totalorder %s22, 1
    %s24 = scalar_select %p23, 0, %s22
    %s25 = sadd.s32 1, %s16
    %s26 = scalar_select %p23, %s25, %s16
    %p27 = scmp.ge.s32.totalorder %s26, 2
    %s28 = scalar_select %p27, 0, %s26
    %s29 = ssub.s32 %s16, %s28
    %s30 = ssub.s32 %s17, %s24
    %s31 = sor.u32 %s29, %s30
    %p32 = scmp.eq.s32.totalorder %s31, 0
    %s34 = sadd.s32 %s33, 1
    %s35 = scalar_select %p32, %s33, %s34
    %p38 = pneg %p32
    %p39 = scmp.eq.s32.totalorder %s9, 1
    %p40 = por %p38, %p39
    %p41 = scmp.ne.s32.totalorder %s33, %s36
    %p42 = scmp.eq.s32.totalorder %s9, 0
    %p43 = por %p41, %p42
    %p44 = scmp.ne.s32.totalorder %s33, %s36
    %p45 = scmp.eq.s32.totalorder %s14, 1
    %p46 = por %p44, %p45
    %p47 = scmp.ne.s32.totalorder %s36, %s37
    %p48 = scmp.eq.s32.totalorder %s14, 0
    %p49 = por %p47, %p48
    %p50 = scmp.ne.s32.totalorder %s36, %s37
    %p51 = scmp.eq.s32.totalorder %s15, 1
    %p52 = por %p50, %p51
    %p54 = scmp.ne.s32.totalorder %s37, %s53
    %p55 = scmp.eq.s32.totalorder %s15, 0
    %p56 = por %p54, %p55
    %s57 = ssub.s32 %s16, %s28
    %p58 = scmp.eq.s32.totalorder %s57, 0
    %s60 = sadd.s32 %s59, 1
    %s61 = scalar_select %p58, %s59, %s60
    %p64 = pneg %p58
    %p65 = scmp.eq.s32.totalorder %s9, 1
    %p66 = por %p64, %p65
    %p67 = scmp.ne.s32.totalorder %s59, %s62
    %p68 = scmp.eq.s32.totalorder %s9, 0
    %p69 = por %p67, %p68
    %p70 = scmp.ne.s32.totalorder %s59, %s62
    %p71 = scmp.eq.s32.totalorder %s14, 1
    %p72 = por %p70, %p71
    %p73 = scmp.ne.s32.totalorder %s62, %s63
    %p74 = scmp.eq.s32.totalorder %s14, 0
    %p75 = por %p73, %p74
    %p76 = scmp.ne.s32.totalorder %s62, %s63
    %p77 = scmp.eq.s32.totalorder %s15, 1
    %p78 = por %p76, %p77
    %p80 = scmp.ne.s32.totalorder %s63, %s79
    %p81 = scmp.eq.s32.totalorder %s15, 0
    %p82 = por %p80, %p81
    %s83 = ssub.s32 %s16, %s28
    %p84 = scmp.eq.s32.totalorder %s83, 0
    %s86 = sadd.s32 %s85, 1
    %s87 = scalar_select %p84, %s85, %s86
    %p90 = pneg %p84
    %p91 = scmp.eq.s32.totalorder %s9, 1
    %p92 = por %p90, %p91
    %p93 = scmp.ne.s32.totalorder %s85, %s88
    %p94 = scmp.eq.s32.totalorder %s9, 0
    %p95 = por %p93, %p94
    %p96 = scmp.ne.s32.totalorder %s85, %s88
    %p97 = scmp.eq.s32.totalorder %s14, 1
    %p98 = por %p96, %p97
    %p99 = scmp.ne.s32.totalorder %s88, %s89
    %p100 = scmp.eq.s32.totalorder %s14, 0
    %p101 = por %p99, %p100
    %p102 = scmp.ne.s32.totalorder %s88, %s89
    %p103 = scmp.eq.s32.totalorder %s15, 1
    %p104 = por %p102, %p103
    %p106 = scmp.ne.s32.totalorder %s89, %s105
    %p107 = scmp.eq.s32.totalorder %s15, 0
    %p108 = por %p106, %p107
    %s109 = ssub.s32 %s16, %s28
    %s110 = ssub.s32 %s17, %s24
    %s111 = sor.u32 %s109, %s110
    %p112 = scmp.eq.s32.totalorder %s111, 0
    %s114 = sadd.s32 %s113, 1
    %s115 = scalar_select %p112, %s113, %s114
    %p118 = pneg %p112
    %p119 = scmp.eq.s32.totalorder %s9, 1
    %p120 = por %p118, %p119
    %p121 = scmp.ne.s32.totalorder %s113, %s116
    %p122 = scmp.eq.s32.totalorder %s9, 0
    %p123 = por %p121, %p122
    %p124 = scmp.ne.s32.totalorder %s113, %s116
    %p125 = scmp.eq.s32.totalorder %s14, 1
    %p126 = por %p124, %p125
    %p127 = scmp.ne.s32.totalorder %s116, %s117
    %p128 = scmp.eq.s32.totalorder %s14, 0
    %p129 = por %p127, %p128
    %p130 = scmp.ne.s32.totalorder %s116, %s117
    %p131 = scmp.eq.s32.totalorder %s15, 1
    %p132 = por %p130, %p131
    %p134 = scmp.ne.s32.totalorder %s117, %s133
    %p135 = scmp.eq.s32.totalorder %s15, 0
    %p136 = por %p134, %p135
    %p137 = scmp.le.s32.totalorder 1, %s9
    %p138 = scmp.lt.s32.totalorder %s9, 3
    %p139 = pnand %p137, %p138
    %p140 = pneg %p139
    // Predicated region
    $region9: #{_lambda_.14} parent=5 // pred_check
      _
    $region10: #{_lambda_.14} parent=5 // pred_check_branch
      %142 = sbr.rel (%p139) target = $region12
    $region11: #{_lambda_.14} parent=5 // pred_region
      %s143 = ssub.s32 %s9, 1
    $region12: #{_lambda_.14} parent=5 // pred_fallthru
      _
    %p144 = scmp.lt.s32.totalorder %s9, 2
    // Predicated region
    $region13: #{_lambda_.14} parent=5 // pred_check
      %p145 = pneg %p144
    $region14: #{_lambda_.14} parent=5 // pred_check_branch
      %147 = sbr.rel (%p145) target = $region16
    $region15: #{_lambda_.14} parent=5 // pred_region
      // Predicated region
      $region17: #{_lambda_.14} parent=15 // pred_check
        %p148 = pneg %p43
      $region18: #{_lambda_.14} parent=15 // pred_check_branch
        %150 = sbr.rel (%p148) target = $region20
      $region19: #{_lambda_.14} parent=15 // pred_region
        %s151 = smul.u32 8, %s17
        %p152 = scmp.lt.s32.totalorder %s16, 1
        %s153 = scalar_select %p152, %s16, 1
        %p154 = scmp.lt.s32.totalorder %s151, 7
        %s155 = scalar_select %p154, %s151, 7
        %s156 = smul.addr %s153, 8
        %s157 = sadd.s32 %s155, %s156
        %s158 = smul.addr %s157, 4
        %s159 = scalar_lea.vmem %s0, %s158
        %s160 = smul.u32 8, %s17
      $region20: #{_lambda_.14} parent=15 // pred_fallthru
        _
      // Predicated region
      $region21: #{_lambda_.14} parent=15 // pred_check
        %p161 = pneg %p69
      $region22: #{_lambda_.14} parent=15 // pred_check_branch
        %163 = sbr.rel (%p161) target = $region24
      $region23: #{_lambda_.14} parent=15 // pred_region
        %p164 = scmp.lt.s32.totalorder %s16, 1
        %s165 = scalar_select %p164, %s16, 1
        %s166 = scalar_lea.vmem %s1, %s165
      $region24: #{_lambda_.14} parent=15 // pred_fallthru
        _
      // Predicated region
      $region25: #{_lambda_.14} parent=15 // pred_check
        %p167 = pneg %p95
      $region26: #{_lambda_.14} parent=15 // pred_check_branch
        %169 = sbr.rel (%p167) target = $region28
      $region27: #{_lambda_.14} parent=15 // pred_region
        %p170 = scmp.lt.s32.totalorder %s16, 1
        %s171 = scalar_select %p170, %s16, 1
        %s172 = scalar_lea.vmem %s2, %s171
      $region28: #{_lambda_.14} parent=15 // pred_fallthru
        _
    $region16: #{_lambda_.14} parent=5 // pred_fallthru
      _
    %p173 = scmp.le.s32.totalorder 1, %s9
    %p174 = scmp.lt.s32.totalorder %s9, 3
    %p175 = pnand %p173, %p174
    %p176 = pneg %p175
    // Predicated region
    $region29: #{_lambda_.14} parent=5 // pred_check
      _
    $region30: #{_lambda_.14} parent=5 // pred_check_branch
      %178 = sbr.rel (%p175) target = $region32
    $region31: #{_lambda_.14} parent=5 // pred_region
      %s179 = ssub.s32 %s9, 1
      %s180 = smul.u32 8, %s19
      %p181 = scmp.lt.s32.totalorder %s18, 1
      %s182 = scalar_select %p181, %s18, 1
      %p183 = scmp.lt.s32.totalorder %s180, 7
      %s184 = scalar_select %p183, %s180, 7
      %s185 = smul.addr %s182, 8
      %s186 = sadd.s32 %s184, %s185
      %s187 = smul.addr %s186, 4
      %s188 = scalar_lea.vmem %s0, %s187
      %p189 = pneg %p49
      %p190 = pneg %p46
      %p191 = scmp.lt.s32.totalorder %s18, 1
      %s192 = scalar_select %p191, %s18, 1
      %s193 = scalar_lea.vmem %s1, %s192
      %p194 = pneg %p75
      %p195 = pneg %p72
      %p196 = scmp.lt.s32.totalorder %s18, 1
      %s197 = scalar_select %p196, %s18, 1
      %s198 = scalar_lea.vmem %s2, %s197
      %p199 = pneg %p101
      %p200 = pneg %p98
      %p201 = pneg %p129
      %p202 = pneg %p126
      %s203 = smul.u32 8, %s19
      %p204 = scmp.lt.s32.totalorder %s18, 1
      %s205 = scalar_select %p204, %s18, 1
      %p206 = scmp.lt.s32.totalorder %s203, 7
      %s207 = scalar_select %p206, %s203, 7
      %s208 = smul.addr %s205, 8
      %s209 = sadd.s32 %s207, %s208
      %s210 = smul.addr %s209, 4
      %s211 = scalar_lea.vmem %s3, %s210
      %s212 = smul.u32 8, %s19
      %p213 = scmp.lt.s32.totalorder %s18, 1
      %s214 = scalar_select %p213, %s18, 1
      %p215 = scmp.lt.s32.totalorder %s212, 7
      %s216 = scalar_select %p215, %s212, 7
      %s217 = smul.addr %s214, 8
      %s218 = sadd.s32 %s216, %s217
      %s219 = smul.addr %s218, 4
      %s220 = scalar_lea.vmem %s0, %s219
      %s221 = smul.u32 8, %s19
      %p222 = scmp.lt.s32.totalorder %s18, 1
      %s223 = scalar_select %p222, %s18, 1
      %s224 = scalar_lea.vmem %s1, %s223
      %p225 = scmp.lt.s32.totalorder %s18, 1
      %s226 = scalar_select %p225, %s18, 1
      %s227 = scalar_lea.vmem %s2, %s226
      %s228 = smul.u32 8, %s19
      %p229 = scmp.lt.s32.totalorder %s18, 1
      %s230 = scalar_select %p229, %s18, 1
      %p231 = scmp.lt.s32.totalorder %s228, 7
      %s232 = scalar_select %p231, %s228, 7
      %s233 = smul.addr %s230, 8
      %s234 = sadd.s32 %s232, %s233
      %s235 = smul.addr %s234, 4
      %s236 = scalar_lea.vmem %s3, %s235
      %s237 = smul.u32 8, %s19
      %v238 = vld [vmem:[%s220] sm:$0xf]
      %v239 = vld [vmem:[%s220 + $0x4] sm:$0xf]
      %v240 = vld [vmem:[%s220 + $0x8] sm:$0xf]
      %v241 = vld [vmem:[%s220 + $0xc] sm:$0xf]
      %v242 = vld [vmem:[%s220 + $0x10] sm:$0xf]
      %v243 = vld [vmem:[%s220 + $0x14] sm:$0xf]
      %v244 = vld [vmem:[%s220 + $0x18] sm:$0xf]
      %v245 = vld [vmem:[%s220 + $0x1c] sm:$0xf]
      %v246 = vunpack.c.l.bf16 %v238
      %v247 = vunpack.c.l.bf16 %v239
      %v248 = vunpack.c.l.bf16 %v240
      %v249 = vunpack.c.l.bf16 %v241
      %v250 = vunpack.c.l.bf16 %v242
      %v251 = vunpack.c.l.bf16 %v243
      %v252 = vunpack.c.l.bf16 %v244
      %v253 = vunpack.c.l.bf16 %v245
      %v254 = vld [vmem:[%s224] sm:$0x1]
      %v256 = vlaneseq
      %v257 = vshrl.u32 %v256, 7
      %v258 = vsub.s32 0, %v257
      %v259 = vrot.slane %v254, %v258
      %v261 = vmul.f32 %v246, %v259
      %v262 = vmul.f32 %v247, %v259
      %v263 = vmul.f32 %v248, %v259
      %v264 = vmul.f32 %v249, %v259
      %v265 = vmul.f32 %v250, %v259
      %v266 = vmul.f32 %v251, %v259
      %v267 = vmul.f32 %v252, %v259
      %v268 = vmul.f32 %v253, %v259
      %v269 = vld [vmem:[%s227] sm:$0x1]
      %v271 = vlaneseq
      %v272 = vshrl.u32 %v271, 7
      %v273 = vsub.s32 0, %v272
      %v274 = vrot.slane %v269, %v273
      %v276 = vadd.f32 %v261, %v274
      %v277 = vadd.f32 %v262, %v274
      %v278 = vadd.f32 %v263, %v274
      %v279 = vadd.f32 %v264, %v274
      %v280 = vadd.f32 %v265, %v274
      %v281 = vadd.f32 %v266, %v274
      %v282 = vadd.f32 %v267, %v274
      %v283 = vadd.f32 %v268, %v274
      %vm284 = vcmp.ge.f32.partialorder %v276, 0.0
      %vm285 = vcmp.ge.f32.partialorder %v277, 0.0
      %vm286 = vcmp.ge.f32.partialorder %v278, 0.0
      %vm287 = vcmp.ge.f32.partialorder %v279, 0.0
      %vm288 = vcmp.ge.f32.partialorder %v280, 0.0
      %vm289 = vcmp.ge.f32.partialorder %v281, 0.0
      %vm290 = vcmp.ge.f32.partialorder %v282, 0.0
      %vm291 = vcmp.ge.f32.partialorder %v283, 0.0
      %v292 = vmul.f32 %v276, 0.2
      %v293 = vmul.f32 %v277, 0.2
      %v294 = vmul.f32 %v278, 0.2
      %v295 = vmul.f32 %v279, 0.2
      %v296 = vmul.f32 %v280, 0.2
      %v297 = vmul.f32 %v281, 0.2
      %v298 = vmul.f32 %v282, 0.2
      %v299 = vmul.f32 %v283, 0.2
      %v300 = vsel %vm284, %v276, %v292
      %v301 = vsel %vm285, %v277, %v293
      %v302 = vsel %vm286, %v278, %v294
      %v303 = vsel %vm287, %v279, %v295
      %v304 = vsel %vm288, %v280, %v296
      %v305 = vsel %vm289, %v281, %v297
      %v306 = vsel %vm290, %v282, %v298
      %v307 = vsel %vm291, %v283, %v299
      %v308 = vpack.c.bf16 %v301, %v300
      %v309 = vpack.c.bf16 %v303, %v302
      %v310 = vpack.c.bf16 %v305, %v304
      %v311 = vpack.c.bf16 %v307, %v306
      %v316 = vunpack.c.l.b16 %v308
      %v317 = vunpack.c.h.b16 %v308
      %v318 = vunpack.c.l.b16 %v309
      %v319 = vunpack.c.h.b16 %v309
      %v320 = vunpack.c.l.b16 %v310
      %v321 = vunpack.c.h.b16 %v310
      %v322 = vunpack.c.l.b16 %v311
      %v323 = vunpack.c.h.b16 %v311
      %v324 = vpack.c.b16 %v316, %v316
      %v325 = vpack.c.b16 %v317, %v317
      %v326 = vpack.c.b16 %v318, %v318
      %v327 = vpack.c.b16 %v319, %v319
      %v328 = vpack.c.b16 %v320, %v320
      %v329 = vpack.c.b16 %v321, %v321
      %v330 = vpack.c.b16 %v322, %v322
      %v331 = vpack.c.b16 %v323, %v323
      %340 = vst [vmem:[%s236] sm:$0xf] %v324
      %341 = vst [vmem:[%s236 + $0x4] sm:$0xf] %v325
      %342 = vst [vmem:[%s236 + $0x8] sm:$0xf] %v326
      %343 = vst [vmem:[%s236 + $0xc] sm:$0xf] %v327
      %344 = vst [vmem:[%s236 + $0x10] sm:$0xf] %v328
      %345 = vst [vmem:[%s236 + $0x14] sm:$0xf] %v329
      %346 = vst [vmem:[%s236 + $0x18] sm:$0xf] %v330
      %347 = vst [vmem:[%s236 + $0x1c] sm:$0xf] %v331
      %s348 = smul.u32 8, %s19
      %p349 = scmp.lt.s32.totalorder %s18, 1
      %s350 = scalar_select %p349, %s18, 1
      %p351 = scmp.lt.s32.totalorder %s348, 7
      %s352 = scalar_select %p351, %s348, 7
      %s353 = smul.addr %s350, 8
      %s354 = sadd.s32 %s352, %s353
      %s355 = smul.addr %s354, 4
      %s356 = scalar_lea.vmem %s3, %s355
      // Predicated region
      $region33: #{_lambda_.14} parent=31 // pred_check
        %p357 = pneg %p126
      $region34: #{_lambda_.14} parent=31 // pred_check_branch
        %359 = sbr.rel (%p357) target = $region36
      $region35: #{_lambda_.14} parent=31 // pred_region
        %s360 = smul.u32 8, %s19
      $region36: #{_lambda_.14} parent=31 // pred_fallthru
        _
    $region32: #{_lambda_.14} parent=5 // pred_fallthru
      _
    %p361 = scmp.le.s32.totalorder 2, %s9
    // Predicated region
    $region37: #{_lambda_.14} parent=5 // pred_check
      %p362 = pneg %p361
    $region38: #{_lambda_.14} parent=5 // pred_check_branch
      %364 = sbr.rel (%p362) target = $region40
    $region39: #{_lambda_.14} parent=5 // pred_region
      %s365 = ssub.s32 %s9, 2
      // Predicated region
      $region41: #{_lambda_.14} parent=39 // pred_check
        %p366 = pneg %p132
      $region42: #{_lambda_.14} parent=39 // pred_check_branch
        %368 = sbr.rel (%p366) target = $region44
      $region43: #{_lambda_.14} parent=39 // pred_region
        %s369 = smul.u32 8, %s21
        %p370 = scmp.lt.s32.totalorder %s20, 1
        %s371 = scalar_select %p370, %s20, 1
        %p372 = scmp.lt.s32.totalorder %s369, 7
        %s373 = scalar_select %p372, %s369, 7
        %s374 = smul.addr %s371, 8
        %s375 = sadd.s32 %s373, %s374
        %s376 = smul.addr %s375, 4
        %s377 = scalar_lea.vmem %s3, %s376
      $region44: #{_lambda_.14} parent=39 // pred_fallthru
        _
    $region40: #{_lambda_.14} parent=5 // pred_fallthru
      _
  $region6: #{_lambda_.14} parent=0 // loop_footer
    %s13 = sadd.s32 1, %s9
  $region7: #{_lambda_.14} parent=0 // loop_footer_branch
    %8 = sbr.rel target = $region3
  $region8: #{_lambda_.14} parent=0 // loop_exit
    _

// kernel: _lambda_.13
$region0: #{_lambda_.13}
  #allocation0 [shape = 'u32[]', space=smem, size = 0x4, offset = 0x4, fixed_abs, tag = 'smem constant byte address 0x4 - core index']
  #allocation1 [shape = 'u32[144,128]{1,0:T(1,128)}', space=vmem, size = 0x12000, scoped, tag = 'internal scratch']
  %s0 = inlined_call_operand.vmem [shape: bf16[128,512], index: 0, kind: input, shape index: {}]
  %s1 = inlined_call_operand.vmem [shape: bf16[512,128], index: 1, kind: input, shape index: {}]
  %s2 = inlined_call_operand.vmem [shape: f32[1,128], index: 2, kind: input, shape index: {}]
  %s3 = inlined_call_operand.vmem [shape: f32[1,128], index: 3, kind: input, shape index: {}]
  %s4 = inlined_call_operand.vmem [shape: bf16[128,128], index: 4, kind: output, shape index: {0}]
  %s5 = inlined_call_operand.vmem [shape: f32[1,128], index: 5, kind: output, shape index: {1}]
  %s6 = inlined_call_operand.vmem [shape: f32[1,128], index: 6, kind: output, shape index: {2}]
  %7 = xla_tuple %s4, %s5, %s6
  %s8 = sld [smem:[#allocation0]]
  $region50: #{_lambda_.13} parent=0
    _
  %s10 = ssub.s32 1, %s8
  %s11 = scalar_select 0, %s10, %s8
  // Predicated region
  $region2: #{_lambda_.13} parent=0 // pred_check
    _
  $region3: #{_lambda_.13} parent=0 // pred_check_branch
    %13 = sbr.rel (0) target = $region5
  $region4: #{_lambda_.13} parent=0 // pred_region
    _
  $region5: #{_lambda_.13} parent=0 // pred_fallthru
    _
  // Predicated region
  $region6: #{_lambda_.13} parent=0 // pred_check
    _
  $region7: #{_lambda_.13} parent=0 // pred_check_branch
    %15 = sbr.rel (0) target = $region9
  $region8: #{_lambda_.13} parent=0 // pred_region
    _
  $region9: #{_lambda_.13} parent=0 // pred_fallthru
    _
  // Predicated region
  $region10: #{_lambda_.13} parent=0 // pred_check
    _
  $region11: #{_lambda_.13} parent=0 // pred_check_branch
    %17 = sbr.rel (0) target = $region13
  $region12: #{_lambda_.13} parent=0 // pred_region
    _
  $region13: #{_lambda_.13} parent=0 // pred_fallthru
    _
  // Predicated region
  $region14: #{_lambda_.13} parent=0 // pred_check
    _
  $region15: #{_lambda_.13} parent=0 // pred_check_branch
    %19 = sbr.rel (0) target = $region17
  $region16: #{_lambda_.13} parent=0 // pred_region
    _
  $region17: #{_lambda_.13} parent=0 // pred_fallthru
    _
  %v21 = vld [vmem:[%s0] sm:$0xff]
  %v22 = vld [vmem:[%s0 + $0x8] sm:$0xff]
  %v23 = vld [vmem:[%s0 + $0x10] sm:$0xff]
  %v24 = vld [vmem:[%s0 + $0x18] sm:$0xff]
  %v25 = vld [vmem:[%s0 + $0x20] sm:$0xff]
  %v26 = vld [vmem:[%s0 + $0x28] sm:$0xff]
  %v27 = vld [vmem:[%s0 + $0x30] sm:$0xff]
  %v28 = vld [vmem:[%s0 + $0x38] sm:$0xff]
  %v29 = vld [vmem:[%s0 + $0x40] sm:$0xff]
  %v30 = vld [vmem:[%s0 + $0x48] sm:$0xff]
  %v31 = vld [vmem:[%s0 + $0x50] sm:$0xff]
  %v32 = vld [vmem:[%s0 + $0x58] sm:$0xff]
  %v33 = vld [vmem:[%s0 + $0x60] sm:$0xff]
  %v34 = vld [vmem:[%s0 + $0x68] sm:$0xff]
  %v35 = vld [vmem:[%s0 + $0x70] sm:$0xff]
  %v36 = vld [vmem:[%s0 + $0x78] sm:$0xff]
  %v37 = vld [vmem:[%s0 + $0x80] sm:$0xff]
  %v38 = vld [vmem:[%s0 + $0x88] sm:$0xff]
  %v39 = vld [vmem:[%s0 + $0x90] sm:$0xff]
  %v40 = vld [vmem:[%s0 + $0x98] sm:$0xff]
  %v41 = vld [vmem:[%s0 + $0xa0] sm:$0xff]
  %v42 = vld [vmem:[%s0 + $0xa8] sm:$0xff]
  %v43 = vld [vmem:[%s0 + $0xb0] sm:$0xff]
  %v44 = vld [vmem:[%s0 + $0xb8] sm:$0xff]
  %v45 = vld [vmem:[%s0 + $0xc0] sm:$0xff]
  %v46 = vld [vmem:[%s0 + $0xc8] sm:$0xff]
  %v47 = vld [vmem:[%s0 + $0xd0] sm:$0xff]
  %v48 = vld [vmem:[%s0 + $0xd8] sm:$0xff]
  %v49 = vld [vmem:[%s0 + $0xe0] sm:$0xff]
  %v50 = vld [vmem:[%s0 + $0xe8] sm:$0xff]
  %v51 = vld [vmem:[%s0 + $0xf0] sm:$0xff]
  %v52 = vld [vmem:[%s0 + $0xf8] sm:$0xff]
  %v53 = vld [vmem:[%s1] sm:$0xf]
  %v54 = vld [vmem:[%s1 + $0x4] sm:$0xf]
  %v55 = vld [vmem:[%s1 + $0x8] sm:$0xf]
  %v56 = vld [vmem:[%s1 + $0xc] sm:$0xf]
  %v57 = vld [vmem:[%s1 + $0x10] sm:$0xf]
  %v58 = vld [vmem:[%s1 + $0x14] sm:$0xf]
  %v59 = vld [vmem:[%s1 + $0x18] sm:$0xf]
  %v60 = vld [vmem:[%s1 + $0x1c] sm:$0xf]
  %v61 = vld [vmem:[%s1 + $0x20] sm:$0xf]
  %v62 = vld [vmem:[%s1 + $0x24] sm:$0xf]
  %v63 = vld [vmem:[%s1 + $0x28] sm:$0xf]
  %v64 = vld [vmem:[%s1 + $0x2c] sm:$0xf]
  %v65 = vld [vmem:[%s1 + $0x30] sm:$0xf]
  %v66 = vld [vmem:[%s1 + $0x34] sm:$0xf]
  %v67 = vld [vmem:[%s1 + $0x38] sm:$0xf]
  %v68 = vld [vmem:[%s1 + $0x3c] sm:$0xf]
  %v69 = vld [vmem:[%s1 + $0x40] sm:$0xf]
  %v70 = vld [vmem:[%s1 + $0x44] sm:$0xf]
  %v71 = vld [vmem:[%s1 + $0x48] sm:$0xf]
  %v72 = vld [vmem:[%s1 + $0x4c] sm:$0xf]
  %v73 = vld [vmem:[%s1 + $0x50] sm:$0xf]
  %v74 = vld [vmem:[%s1 + $0x54] sm:$0xf]
  %v75 = vld [vmem:[%s1 + $0x58] sm:$0xf]
  %v76 = vld [vmem:[%s1 + $0x5c] sm:$0xf]
  %v77 = vld [vmem:[%s1 + $0x60] sm:$0xf]
  %v78 = vld [vmem:[%s1 + $0x64] sm:$0xf]
  %v79 = vld [vmem:[%s1 + $0x68] sm:$0xf]
  %v80 = vld [vmem:[%s1 + $0x6c] sm:$0xf]
  %v81 = vld [vmem:[%s1 + $0x70] sm:$0xf]
  %v82 = vld [vmem:[%s1 + $0x74] sm:$0xf]
  %v83 = vld [vmem:[%s1 + $0x78] sm:$0xf]
  %v84 = vld [vmem:[%s1 + $0x7c] sm:$0xf]
  %v85 = vld [vmem:[%s1 + $0x80] sm:$0xf]
  %v86 = vld [vmem:[%s1 + $0x84] sm:$0xf]
  %v87 = vld [vmem:[%s1 + $0x88] sm:$0xf]
  %v88 = vld [vmem:[%s1 + $0x8c] sm:$0xf]
  %v89 = vld [vmem:[%s1 + $0x90] sm:$0xf]
  %v90 = vld [vmem:[%s1 + $0x94] sm:$0xf]
  %v91 = vld [vmem:[%s1 + $0x98] sm:$0xf]
  %v92 = vld [vmem:[%s1 + $0x9c] sm:$0xf]
  %v93 = vld [vmem:[%s1 + $0xa0] sm:$0xf]
  %v94 = vld [vmem:[%s1 + $0xa4] sm:$0xf]
  %v95 = vld [vmem:[%s1 + $0xa8] sm:$0xf]
  %v96 = vld [vmem:[%s1 + $0xac] sm:$0xf]
  %v97 = vld [vmem:[%s1 + $0xb0] sm:$0xf]
  %v98 = vld [vmem:[%s1 + $0xb4] sm:$0xf]
  %v99 = vld [vmem:[%s1 + $0xb8] sm:$0xf]
  %v100 = vld [vmem:[%s1 + $0xbc] sm:$0xf]
  %v101 = vld [vmem:[%s1 + $0xc0] sm:$0xf]
  %v102 = vld [vmem:[%s1 + $0xc4] sm:$0xf]
  %v103 = vld [vmem:[%s1 + $0xc8] sm:$0xf]
  %v104 = vld [vmem:[%s1 + $0xcc] sm:$0xf]
  %v105 = vld [vmem:[%s1 + $0xd0] sm:$0xf]
  %v106 = vld [vmem:[%s1 + $0xd4] sm:$0xf]
  %v107 = vld [vmem:[%s1 + $0xd8] sm:$0xf]
  %v108 = vld [vmem:[%s1 + $0xdc] sm:$0xf]
  %v109 = vld [vmem:[%s1 + $0xe0] sm:$0xf]
  %v110 = vld [vmem:[%s1 + $0xe4] sm:$0xf]
  %v111 = vld [vmem:[%s1 + $0xe8] sm:$0xf]
  %v112 = vld [vmem:[%s1 + $0xec] sm:$0xf]
  %v113 = vld [vmem:[%s1 + $0xf0] sm:$0xf]
  %v114 = vld [vmem:[%s1 + $0xf4] sm:$0xf]
  %v115 = vld [vmem:[%s1 + $0xf8] sm:$0xf]
  %v116 = vld [vmem:[%s1 + $0xfc] sm:$0xf]
  %v149 = vunpack.c.l.b16 %v21
  %v150 = vunpack.c.h.b16 %v21
  %v151 = vunpack.c.l.b16 %v22
  %v152 = vunpack.c.h.b16 %v22
  %v153 = vunpack.c.l.b16 %v23
  %v154 = vunpack.c.h.b16 %v23
  %v155 = vunpack.c.l.b16 %v24
  %v156 = vunpack.c.h.b16 %v24
  %v157 = vunpack.c.l.b16 %v25
  %v158 = vunpack.c.h.b16 %v25
  %v159 = vunpack.c.l.b16 %v26
  %v160 = vunpack.c.h.b16 %v26
  %v161 = vunpack.c.l.b16 %v27
  %v162 = vunpack.c.h.b16 %v27
  %v163 = vunpack.c.l.b16 %v28
  %v164 = vunpack.c.h.b16 %v28
  %v165 = vunpack.c.l.b16 %v29
  %v166 = vunpack.c.h.b16 %v29
  %v167 = vunpack.c.l.b16 %v30
  %v168 = vunpack.c.h.b16 %v30
  %v169 = vunpack.c.l.b16 %v31
  %v170 = vunpack.c.h.b16 %v31
  %v171 = vunpack.c.l.b16 %v32
  %v172 = vunpack.c.h.b16 %v32
  %v173 = vunpack.c.l.b16 %v33
  %v174 = vunpack.c.h.b16 %v33
  %v175 = vunpack.c.l.b16 %v34
  %v176 = vunpack.c.h.b16 %v34
  %v177 = vunpack.c.l.b16 %v35
  %v178 = vunpack.c.h.b16 %v35
  %v179 = vunpack.c.l.b16 %v36
  %v180 = vunpack.c.h.b16 %v36
  %v181 = vunpack.c.l.b16 %v37
  %v182 = vunpack.c.h.b16 %v37
  %v183 = vunpack.c.l.b16 %v38
  %v184 = vunpack.c.h.b16 %v38
  %v185 = vunpack.c.l.b16 %v39
  %v186 = vunpack.c.h.b16 %v39
  %v187 = vunpack.c.l.b16 %v40
  %v188 = vunpack.c.h.b16 %v40
  %v189 = vunpack.c.l.b16 %v41
  %v190 = vunpack.c.h.b16 %v41
  %v191 = vunpack.c.l.b16 %v42
  %v192 = vunpack.c.h.b16 %v42
  %v193 = vunpack.c.l.b16 %v43
  %v194 = vunpack.c.h.b16 %v43
  %v195 = vunpack.c.l.b16 %v44
  %v196 = vunpack.c.h.b16 %v44
  %v197 = vunpack.c.l.b16 %v45
  %v198 = vunpack.c.h.b16 %v45
  %v199 = vunpack.c.l.b16 %v46
  %v200 = vunpack.c.h.b16 %v46
  %v201 = vunpack.c.l.b16 %v47
  %v202 = vunpack.c.h.b16 %v47
  %v203 = vunpack.c.l.b16 %v48
  %v204 = vunpack.c.h.b16 %v48
  %v205 = vunpack.c.l.b16 %v49
  %v206 = vunpack.c.h.b16 %v49
  %v207 = vunpack.c.l.b16 %v50
  %v208 = vunpack.c.h.b16 %v50
  %v209 = vunpack.c.l.b16 %v51
  %v210 = vunpack.c.h.b16 %v51
  %v211 = vunpack.c.l.b16 %v52
  %v212 = vunpack.c.h.b16 %v52
  %v213 = vpack.c.b16 %v153, %v149
  %v214 = vpack.c.b16 %v154, %v150
  %v215 = vpack.c.b16 %v155, %v151
  %v216 = vpack.c.b16 %v156, %v152
  %v217 = vpack.c.b16 %v161, %v157
  %v218 = vpack.c.b16 %v162, %v158
  %v219 = vpack.c.b16 %v163, %v159
  %v220 = vpack.c.b16 %v164, %v160
  %v221 = vpack.c.b16 %v169, %v165
  %v222 = vpack.c.b16 %v170, %v166
  %v223 = vpack.c.b16 %v171, %v167
  %v224 = vpack.c.b16 %v172, %v168
  %v225 = vpack.c.b16 %v177, %v173
  %v226 = vpack.c.b16 %v178, %v174
  %v227 = vpack.c.b16 %v179, %v175
  %v228 = vpack.c.b16 %v180, %v176
  %v229 = vpack.c.b16 %v185, %v181
  %v230 = vpack.c.b16 %v186, %v182
  %v231 = vpack.c.b16 %v187, %v183
  %v232 = vpack.c.b16 %v188, %v184
  %v233 = vpack.c.b16 %v193, %v189
  %v234 = vpack.c.b16 %v194, %v190
  %v235 = vpack.c.b16 %v195, %v191
  %v236 = vpack.c.b16 %v196, %v192
  %v237 = vpack.c.b16 %v201, %v197
  %v238 = vpack.c.b16 %v202, %v198
  %v239 = vpack.c.b16 %v203, %v199
  %v240 = vpack.c.b16 %v204, %v200
  %v241 = vpack.c.b16 %v209, %v205
  %v242 = vpack.c.b16 %v210, %v206
  %v243 = vpack.c.b16 %v211, %v207
  %v244 = vpack.c.b16 %v212, %v208
  %v341 = vunpack.c.l.b16 %v53
  %v342 = vunpack.c.l.b16 %v54
  %v343 = vunpack.c.l.b16 %v55
  %v344 = vunpack.c.l.b16 %v56
  %v345 = vunpack.c.l.b16 %v57
  %v346 = vunpack.c.l.b16 %v58
  %v347 = vunpack.c.l.b16 %v59
  %v348 = vunpack.c.l.b16 %v60
  %v349 = vunpack.c.l.b16 %v61
  %v350 = vunpack.c.l.b16 %v62
  %v351 = vunpack.c.l.b16 %v63
  %v352 = vunpack.c.l.b16 %v64
  %v353 = vunpack.c.l.b16 %v65
  %v354 = vunpack.c.l.b16 %v66
  %v355 = vunpack.c.l.b16 %v67
  %v356 = vunpack.c.l.b16 %v68
  %v357 = vunpack.c.l.b16 %v69
  %v358 = vunpack.c.l.b16 %v70
  %v359 = vunpack.c.l.b16 %v71
  %v360 = vunpack.c.l.b16 %v72
  %v361 = vunpack.c.l.b16 %v73
  %v362 = vunpack.c.l.b16 %v74
  %v363 = vunpack.c.l.b16 %v75
  %v364 = vunpack.c.l.b16 %v76
  %v365 = vunpack.c.l.b16 %v77
  %v366 = vunpack.c.l.b16 %v78
  %v367 = vunpack.c.l.b16 %v79
  %v368 = vunpack.c.l.b16 %v80
  %v369 = vunpack.c.l.b16 %v81
  %v370 = vunpack.c.l.b16 %v82
  %v371 = vunpack.c.l.b16 %v83
  %v372 = vunpack.c.l.b16 %v84
  %v373 = vunpack.c.l.b16 %v85
  %v374 = vunpack.c.l.b16 %v86
  %v375 = vunpack.c.l.b16 %v87
  %v376 = vunpack.c.l.b16 %v88
  %v377 = vunpack.c.l.b16 %v89
  %v378 = vunpack.c.l.b16 %v90
  %v379 = vunpack.c.l.b16 %v91
  %v380 = vunpack.c.l.b16 %v92
  %v381 = vunpack.c.l.b16 %v93
  %v382 = vunpack.c.l.b16 %v94
  %v383 = vunpack.c.l.b16 %v95
  %v384 = vunpack.c.l.b16 %v96
  %v385 = vunpack.c.l.b16 %v97
  %v386 = vunpack.c.l.b16 %v98
  %v387 = vunpack.c.l.b16 %v99
  %v388 = vunpack.c.l.b16 %v100
  %v389 = vunpack.c.l.b16 %v101
  %v390 = vunpack.c.l.b16 %v102
  %v391 = vunpack.c.l.b16 %v103
  %v392 = vunpack.c.l.b16 %v104
  %v393 = vunpack.c.l.b16 %v105
  %v394 = vunpack.c.l.b16 %v106
  %v395 = vunpack.c.l.b16 %v107
  %v396 = vunpack.c.l.b16 %v108
  %v397 = vunpack.c.l.b16 %v109
  %v398 = vunpack.c.l.b16 %v110
  %v399 = vunpack.c.l.b16 %v111
  %v400 = vunpack.c.l.b16 %v112
  %v401 = vunpack.c.l.b16 %v113
  %v402 = vunpack.c.l.b16 %v114
  %v403 = vunpack.c.l.b16 %v115
  %v404 = vunpack.c.l.b16 %v116
  %v405 = vpack.c.b16 %v342, %v341
  %v406 = vpack.c.b16 %v344, %v343
  %v407 = vpack.c.b16 %v346, %v345
  %v408 = vpack.c.b16 %v348, %v347
  %v409 = vpack.c.b16 %v350, %v349
  %v410 = vpack.c.b16 %v352, %v351
  %v411 = vpack.c.b16 %v354, %v353
  %v412 = vpack.c.b16 %v356, %v355
  %v413 = vpack.c.b16 %v358, %v357
  %v414 = vpack.c.b16 %v360, %v359
  %v415 = vpack.c.b16 %v362, %v361
  %v416 = vpack.c.b16 %v364, %v363
  %v417 = vpack.c.b16 %v366, %v365
  %v418 = vpack.c.b16 %v368, %v367
  %v419 = vpack.c.b16 %v370, %v369
  %v420 = vpack.c.b16 %v372, %v371
  %v421 = vpack.c.b16 %v374, %v373
  %v422 = vpack.c.b16 %v376, %v375
  %v423 = vpack.c.b16 %v378, %v377
  %v424 = vpack.c.b16 %v380, %v379
  %v425 = vpack.c.b16 %v382, %v381
  %v426 = vpack.c.b16 %v384, %v383
  %v427 = vpack.c.b16 %v386, %v385
  %v428 = vpack.c.b16 %v388, %v387
  %v429 = vpack.c.b16 %v390, %v389
  %v430 = vpack.c.b16 %v392, %v391
  %v431 = vpack.c.b16 %v394, %v393
  %v432 = vpack.c.b16 %v396, %v395
  %v433 = vpack.c.b16 %v398, %v397
  %v434 = vpack.c.b16 %v400, %v399
  %v435 = vpack.c.b16 %v402, %v401
  %v436 = vpack.c.b16 %v404, %v403
  %469 = vmatprep.subr.bf16.mxu0 0
  %470 = vmatpush1.bf16.msra.mxu0 %v405
  %471 = vmatprep.subr.bf16.mxu0 0
  %472 = vmatpush1.bf16.msra.mxu0 %v406
  %473 = vmatprep.subr.bf16.mxu0 0
  %474 = vmatpush1.bf16.msra.mxu0 %v407
  %475 = vmatprep.subr.bf16.mxu0 0
  %476 = vmatpush1.bf16.msra.mxu0 %v408
  %477 = vmatprep.subr.bf16.mxu0 0
  %478 = vmatpush1.bf16.msra.mxu0 %v409
  %479 = vmatprep.subr.bf16.mxu0 0
  %480 = vmatpush1.bf16.msra.mxu0 %v410
  %481 = vmatprep.subr.bf16.mxu0 0
  %482 = vmatpush1.bf16.msra.mxu0 %v411
  %483 = vmatprep.subr.bf16.mxu0 0
  %484 = vmatpush1.bf16.msra.mxu0 %v412
  %485 = vmatprep.subr.bf16.mxu0 0
  %486 = vmatpush1.bf16.msra.mxu0 %v413
  %487 = vmatprep.subr.bf16.mxu0 0
  %488 = vmatpush1.bf16.msra.mxu0 %v414
  %489 = vmatprep.subr.bf16.mxu0 0
  %490 = vmatpush1.bf16.msra.mxu0 %v415
  %491 = vmatprep.subr.bf16.mxu0 0
  %492 = vmatpush1.bf16.msra.mxu0 %v416
  %493 = vmatprep.subr.bf16.mxu0 0
  %494 = vmatpush1.bf16.msra.mxu0 %v417
  %495 = vmatprep.subr.bf16.mxu0 0
  %496 = vmatpush1.bf16.msra.mxu0 %v418
  %497 = vmatprep.subr.bf16.mxu0 0
  %498 = vmatpush1.bf16.msra.mxu0 %v419
  %499 = vmatprep.subr.bf16.mxu0 0
  %500 = vmatpush1.bf16.msra.mxu0 %v420
  %501 = vmatprep.mubr.bf16.mxu0 %v214
  %502 = vmatmul.mubr.bf16.gmra.mrb[0].mxu0 %v213
  %v503 = vpop.f32.mrb[0].mxu0
  %v504 = vadd.f32 0.0, %v503
  %v505 = vpop.f32.mrb[0].mxu0
  %v506 = vpop.f32.mrb[0].mxu0
  %v507 = vadd.f32 0.0, %v506
  %v508 = vpop.f32.mrb[0].mxu0
  %509 = vmatprep.mubr.bf16.mxu0 %v218
  %510 = vmatmul.mubr.bf16.gmra.mrb[0].mxu0 %v217
  %v511 = vpop.f32.mrb[0].mxu0
  %v512 = vadd.f32 0.0, %v511
  %v513 = vpop.f32.mrb[0].mxu0
  %v514 = vpop.f32.mrb[0].mxu0
  %v515 = vadd.f32 0.0, %v514
  %v516 = vpop.f32.mrb[0].mxu0
  %517 = vmatprep.mubr.bf16.mxu0 %v222
  %518 = vmatmul.mubr.bf16.gmra.mrb[0].mxu0 %v221
  %v519 = vpop.f32.mrb[0].mxu0
  %v520 = vadd.f32 0.0, %v519
  %v521 = vpop.f32.mrb[0].mxu0
  %v522 = vpop.f32.mrb[0].mxu0
  %v523 = vadd.f32 0.0, %v522
  %v524 = vpop.f32.mrb[0].mxu0
  %525 = vmatprep.mubr.bf16.mxu0 %v226
  %526 = vmatmul.mubr.bf16.gmra.mrb[0].mxu0 %v225
  %v527 = vpop.f32.mrb[0].mxu0
  %v528 = vadd.f32 0.0, %v527
  %v529 = vpop.f32.mrb[0].mxu0
  %v530 = vpop.f32.mrb[0].mxu0
  %v531 = vadd.f32 0.0, %v530
  %v532 = vpop.f32.mrb[0].mxu0
  %533 = vmatprep.mubr.bf16.mxu0 %v230
  %534 = vmatmul.mubr.bf16.gmra.mrb[0].mxu0 %v229
  %v535 = vpop.f32.mrb[0].mxu0
  %v536 = vadd.f32 0.0, %v535
  %v537 = vpop.f32.mrb[0].mxu0
  %v538 = vpop.f32.mrb[0].mxu0
  %v539 = vadd.f32 0.0, %v538
  %v540 = vpop.f32.mrb[0].mxu0
  %541 = vmatprep.mubr.bf16.mxu0 %v234
  %542 = vmatmul.mubr.bf16.gmra.mrb[0].mxu0 %v233
  %v543 = vpop.f32.mrb[0].mxu0
  %v544 = vadd.f32 0.0, %v543
  %v545 = vpop.f32.mrb[0].mxu0
  %v546 = vpop.f32.mrb[0].mxu0
  %v547 = vadd.f32 0.0, %v546
  %v548 = vpop.f32.mrb[0].mxu0
  %549 = vmatprep.mubr.bf16.mxu0 %v238
  %550 = vmatmul.mubr.bf16.gmra.mrb[0].mxu0 %v237
  %v551 = vpop.f32.mrb[0].mxu0
  %v552 = vadd.f32 0.0, %v551
  %v553 = vpop.f32.mrb[0].mxu0
  %v554 = vpop.f32.mrb[0].mxu0
  %v555 = vadd.f32 0.0, %v554
  %v556 = vpop.f32.mrb[0].mxu0
  %557 = vmatprep.mubr.bf16.mxu0 %v242
  %558 = vmatmul.mubr.bf16.gmra.mrb[0].mxu0 %v241
  %v559 = vpop.f32.mrb[0].mxu0
  %v560 = vadd.f32 0.0, %v559
  %v561 = vpop.f32.mrb[0].mxu0
  %v562 = vpop.f32.mrb[0].mxu0
  %v563 = vadd.f32 0.0, %v562
  %v564 = vpop.f32.mrb[0].mxu0
  %565 = vdwg.mxu0
  %566 = vmatprep.subr.bf16.mxu0 0
  %567 = vmatpush1.bf16.msra.mxu0 %v421
  %568 = vmatprep.subr.bf16.mxu0 0
  %569 = vmatpush1.bf16.msra.mxu0 %v422
  %570 = vmatprep.subr.bf16.mxu0 0
  %571 = vmatpush1.bf16.msra.mxu0 %v423
  %572 = vmatprep.subr.bf16.mxu0 0
  %573 = vmatpush1.bf16.msra.mxu0 %v424
  %574 = vmatprep.subr.bf16.mxu0 0
  %575 = vmatpush1.bf16.msra.mxu0 %v425
  %576 = vmatprep.subr.bf16.mxu0 0
  %577 = vmatpush1.bf16.msra.mxu0 %v426
  %578 = vmatprep.subr.bf16.mxu0 0
  %579 = vmatpush1.bf16.msra.mxu0 %v427
  %580 = vmatprep.subr.bf16.mxu0 0
  %581 = vmatpush1.bf16.msra.mxu0 %v428
  %582 = vmatprep.subr.bf16.mxu0 0
  %583 = vmatpush1.bf16.msra.mxu0 %v429
  %584 = vmatprep.subr.bf16.mxu0 0
  %585 = vmatpush1.bf16.msra.mxu0 %v430
  %586 = vmatprep.subr.bf16.mxu0 0
  %587 = vmatpush1.bf16.msra.mxu0 %v431
  %588 = vmatprep.subr.bf16.mxu0 0
  %589 = vmatpush1.bf16.msra.mxu0 %v432
  %590 = vmatprep.subr.bf16.mxu0 0
  %591 = vmatpush1.bf16.msra.mxu0 %v433
  %592 = vmatprep.subr.bf16.mxu0 0
  %593 = vmatpush1.bf16.msra.mxu0 %v434
  %594 = vmatprep.subr.bf16.mxu0 0
  %595 = vmatpush1.bf16.msra.mxu0 %v435
  %596 = vmatprep.subr.bf16.mxu0 0
  %597 = vmatpush1.bf16.msra.mxu0 %v436
  %598 = vmatprep.mubr.bf16.mxu0 %v216
  %599 = vmatmul.mubr.bf16.gmra.mrb[0].mxu0 %v215
  %v600 = vpop.f32.mrb[0].mxu0
  %v601 = vadd.f32 %v504, %v600
  %v602 = vpop.f32.mrb[0].mxu0
  %v603 = vpop.f32.mrb[0].mxu0
  %v604 = vadd.f32 %v507, %v603
  %v605 = vpop.f32.mrb[0].mxu0
  %606 = vmatprep.mubr.bf16.mxu0 %v220
  %607 = vmatmul.mubr.bf16.gmra.mrb[0].mxu0 %v219
  %v608 = vpop.f32.mrb[0].mxu0
  %v609 = vadd.f32 %v512, %v608
  %v610 = vpop.f32.mrb[0].mxu0
  %v611 = vpop.f32.mrb[0].mxu0
  %v612 = vadd.f32 %v515, %v611
  %v613 = vpop.f32.mrb[0].mxu0
  %614 = vmatprep.mubr.bf16.mxu0 %v224
  %615 = vmatmul.mubr.bf16.gmra.mrb[0].mxu0 %v223
  %v616 = vpop.f32.mrb[0].mxu0
  %v617 = vadd.f32 %v520, %v616
  %v618 = vpop.f32.mrb[0].mxu0
  %v619 = vpop.f32.mrb[0].mxu0
  %v620 = vadd.f32 %v523, %v619
  %v621 = vpop.f32.mrb[0].mxu0
  %622 = vmatprep.mubr.bf16.mxu0 %v228
  %623 = vmatmul.mubr.bf16.gmra.mrb[0].mxu0 %v227
  %v624 = vpop.f32.mrb[0].mxu0
  %v625 = vadd.f32 %v528, %v624
  %v626 = vpop.f32.mrb[0].mxu0
  %v627 = vpop.f32.mrb[0].mxu0
  %v628 = vadd.f32 %v531, %v627
  %v629 = vpop.f32.mrb[0].mxu0
  %630 = vmatprep.mubr.bf16.mxu0 %v232
  %631 = vmatmul.mubr.bf16.gmra.mrb[0].mxu0 %v231
  %v632 = vpop.f32.mrb[0].mxu0
  %v633 = vadd.f32 %v536, %v632
  %v634 = vpop.f32.mrb[0].mxu0
  %v635 = vpop.f32.mrb[0].mxu0
  %v636 = vadd.f32 %v539, %v635
  %v637 = vpop.f32.mrb[0].mxu0
  %638 = vmatprep.mubr.bf16.mxu0 %v236
  %639 = vmatmul.mubr.bf16.gmra.mrb[0].mxu0 %v235
  %v640 = vpop.f32.mrb[0].mxu0
  %v641 = vadd.f32 %v544, %v640
  %v642 = vpop.f32.mrb[0].mxu0
  %v643 = vpop.f32.mrb[0].mxu0
  %v644 = vadd.f32 %v547, %v643
  %v645 = vpop.f32.mrb[0].mxu0
  %646 = vmatprep.mubr.bf16.mxu0 %v240
  %647 = vmatmul.mubr.bf16.gmra.mrb[0].mxu0 %v239
  %v648 = vpop.f32.mrb[0].mxu0
  %v649 = vadd.f32 %v552, %v648
  %v650 = vpop.f32.mrb[0].mxu0
  %v651 = vpop.f32.mrb[0].mxu0
  %v652 = vadd.f32 %v555, %v651
  %v653 = vpop.f32.mrb[0].mxu0
  %654 = vmatprep.mubr.bf16.mxu0 %v244
  %655 = vmatmul.mubr.bf16.gmra.mrb[0].mxu0 %v243
  %v656 = vpop.f32.mrb[0].mxu0
  %v657 = vadd.f32 %v560, %v656
  %v658 = vpop.f32.mrb[0].mxu0
  %v659 = vpop.f32.mrb[0].mxu0
  %v660 = vadd.f32 %v563, %v659
  %v661 = vpop.f32.mrb[0].mxu0
  %662 = vdwg.mxu0
  %v663 = vld [vmem:[%s2] sm:$0x1]
  %v665 = vlaneseq
  %v666 = vshrl.u32 %v665, 7
  %v667 = vsub.s32 0, %v666
  %v668 = vrot.slane %v663, %v667
  %v670 = vmul.f32 %v601, %v668
  %v671 = vmul.f32 %v604, %v668
  %v672 = vmul.f32 %v609, %v668
  %v673 = vmul.f32 %v612, %v668
  %v674 = vmul.f32 %v617, %v668
  %v675 = vmul.f32 %v620, %v668
  %v676 = vmul.f32 %v625, %v668
  %v677 = vmul.f32 %v628, %v668
  %v678 = vmul.f32 %v633, %v668
  %v679 = vmul.f32 %v636, %v668
  %v680 = vmul.f32 %v641, %v668
  %v681 = vmul.f32 %v644, %v668
  %v682 = vmul.f32 %v649, %v668
  %v683 = vmul.f32 %v652, %v668
  %v684 = vmul.f32 %v657, %v668
  %v685 = vmul.f32 %v660, %v668
  %v686 = vld [vmem:[%s3] sm:$0x1]
  %v688 = vlaneseq
  %v689 = vshrl.u32 %v688, 7
  %v690 = vsub.s32 0, %v689
  %v691 = vrot.slane %v686, %v690
  %v693 = vadd.f32 %v670, %v691
  %v694 = vadd.f32 %v671, %v691
  %v695 = vadd.f32 %v672, %v691
  %v696 = vadd.f32 %v673, %v691
  %v697 = vadd.f32 %v674, %v691
  %v698 = vadd.f32 %v675, %v691
  %v699 = vadd.f32 %v676, %v691
  %v700 = vadd.f32 %v677, %v691
  %v701 = vadd.f32 %v678, %v691
  %v702 = vadd.f32 %v679, %v691
  %v703 = vadd.f32 %v680, %v691
  %v704 = vadd.f32 %v681, %v691
  %v705 = vadd.f32 %v682, %v691
  %v706 = vadd.f32 %v683, %v691
  %v707 = vadd.f32 %v684, %v691
  %v708 = vadd.f32 %v685, %v691
  %v709 = vpack.c.bf16 %v694, %v693
  %v710 = vpack.c.bf16 %v696, %v695
  %v711 = vpack.c.bf16 %v698, %v697
  %v712 = vpack.c.bf16 %v700, %v699
  %v713 = vpack.c.bf16 %v702, %v701
  %v714 = vpack.c.bf16 %v704, %v703
  %v715 = vpack.c.bf16 %v706, %v705
  %v716 = vpack.c.bf16 %v708, %v707
  %v725 = vunpack.c.l.b16 %v709
  %v726 = vunpack.c.h.b16 %v709
  %v727 = vunpack.c.l.b16 %v710
  %v728 = vunpack.c.h.b16 %v710
  %v729 = vunpack.c.l.b16 %v711
  %v730 = vunpack.c.h.b16 %v711
  %v731 = vunpack.c.l.b16 %v712
  %v732 = vunpack.c.h.b16 %v712
  %v733 = vunpack.c.l.b16 %v713
  %v734 = vunpack.c.h.b16 %v713
  %v735 = vunpack.c.l.b16 %v714
  %v736 = vunpack.c.h.b16 %v714
  %v737 = vunpack.c.l.b16 %v715
  %v738 = vunpack.c.h.b16 %v715
  %v739 = vunpack.c.l.b16 %v716
  %v740 = vunpack.c.h.b16 %v716
  %v741 = vpack.c.b16 %v725, %v725
  %v742 = vpack.c.b16 %v726, %v726
  %v743 = vpack.c.b16 %v727, %v727
  %v744 = vpack.c.b16 %v728, %v728
  %v745 = vpack.c.b16 %v729, %v729
  %v746 = vpack.c.b16 %v730, %v730
  %v747 = vpack.c.b16 %v731, %v731
  %v748 = vpack.c.b16 %v732, %v732
  %v749 = vpack.c.b16 %v733, %v733
  %v750 = vpack.c.b16 %v734, %v734
  %v751 = vpack.c.b16 %v735, %v735
  %v752 = vpack.c.b16 %v736, %v736
  %v753 = vpack.c.b16 %v737, %v737
  %v754 = vpack.c.b16 %v738, %v738
  %v755 = vpack.c.b16 %v739, %v739
  %v756 = vpack.c.b16 %v740, %v740
  %773 = vst [vmem:[%s4] sm:$0xf] %v741
  %774 = vst [vmem:[%s4 + $0x4] sm:$0xf] %v742
  %775 = vst [vmem:[%s4 + $0x8] sm:$0xf] %v743
  %776 = vst [vmem:[%s4 + $0xc] sm:$0xf] %v744
  %777 = vst [vmem:[%s4 + $0x10] sm:$0xf] %v745
  %778 = vst [vmem:[%s4 + $0x14] sm:$0xf] %v746
  %779 = vst [vmem:[%s4 + $0x18] sm:$0xf] %v747
  %780 = vst [vmem:[%s4 + $0x1c] sm:$0xf] %v748
  %781 = vst [vmem:[%s4 + $0x20] sm:$0xf] %v749
  %782 = vst [vmem:[%s4 + $0x24] sm:$0xf] %v750
  %783 = vst [vmem:[%s4 + $0x28] sm:$0xf] %v751
  %784 = vst [vmem:[%s4 + $0x2c] sm:$0xf] %v752
  %785 = vst [vmem:[%s4 + $0x30] sm:$0xf] %v753
  %786 = vst [vmem:[%s4 + $0x34] sm:$0xf] %v754
  %787 = vst [vmem:[%s4 + $0x38] sm:$0xf] %v755
  %788 = vst [vmem:[%s4 + $0x3c] sm:$0xf] %v756
  %v789 = vadd.f32 %v693, %v694
  %v790 = vadd.f32 %v789, %v695
  %v791 = vadd.f32 %v790, %v696
  %v792 = vadd.f32 %v791, %v697
  %v793 = vadd.f32 %v792, %v698
  %v794 = vadd.f32 %v793, %v699
  %v795 = vadd.f32 %v794, %v700
  %v796 = vadd.f32 %v795, %v701
  %v797 = vadd.f32 %v796, %v702
  %v798 = vadd.f32 %v797, %v703
  %v799 = vadd.f32 %v798, %v704
  %v800 = vadd.f32 %v799, %v705
  %v801 = vadd.f32 %v800, %v706
  %v802 = vadd.f32 %v801, %v707
  %v803 = vadd.f32 %v802, %v708
  %v804 = vrot.slane %v803, 4
  %v805 = vadd.f32 %v803, %v804
  %v806 = vrot.slane %v805, 2
  %v807 = vadd.f32 %v805, %v806
  %v808 = vrot.slane %v807, 1
  %v809 = vadd.f32 %v807, %v808
  %v810 = vmul.f32 %v693, %v693
  %v811 = vmul.f32 %v694, %v694
  %v812 = vmul.f32 %v695, %v695
  %v813 = vmul.f32 %v696, %v696
  %v814 = vmul.f32 %v697, %v697
  %v815 = vmul.f32 %v698, %v698
  %v816 = vmul.f32 %v699, %v699
  %v817 = vmul.f32 %v700, %v700
  %v818 = vmul.f32 %v701, %v701
  %v819 = vmul.f32 %v702, %v702
  %v820 = vmul.f32 %v703, %v703
  %v821 = vmul.f32 %v704, %v704
  %v822 = vmul.f32 %v705, %v705
  %v823 = vmul.f32 %v706, %v706
  %v824 = vmul.f32 %v707, %v707
  %v825 = vmul.f32 %v708, %v708
  %v826 = vadd.f32 %v810, %v811
  %v827 = vadd.f32 %v826, %v812
  %v828 = vadd.f32 %v827, %v813
  %v829 = vadd.f32 %v828, %v814
  %v830 = vadd.f32 %v829, %v815
  %v831 = vadd.f32 %v830, %v816
  %v832 = vadd.f32 %v831, %v817
  %v833 = vadd.f32 %v832, %v818
  %v834 = vadd.f32 %v833, %v819
  %v835 = vadd.f32 %v834, %v820
  %v836 = vadd.f32 %v835, %v821
  %v837 = vadd.f32 %v836, %v822
  %v838 = vadd.f32 %v837, %v823
  %v839 = vadd.f32 %v838, %v824
  %v840 = vadd.f32 %v839, %v825
  %v841 = vrot.slane %v840, 4
  %v842 = vadd.f32 %v840, %v841
  %v843 = vrot.slane %v842, 2
  %v844 = vadd.f32 %v842, %v843
  %v845 = vrot.slane %v844, 1
  %v846 = vadd.f32 %v844, %v845
  %p847 = scmp.eq.s32.totalorder 0, 0
  // Predicated region
  $region18: #{_lambda_.13} parent=0 // pred_check
    %p848 = pneg %p847
  $region19: #{_lambda_.13} parent=0 // pred_check_branch
    %850 = sbr.rel (%p848) target = $region21
  $region20: #{_lambda_.13} parent=0 // pred_region
    %851 = vst [vmem:[%s5] sm:$0x1] %v809
    %852 = vst [vmem:[%s6] sm:$0x1] %v846
  $region21: #{_lambda_.13} parent=0 // pred_fallthru
    _
  %p853 = scmp.gt.s32.totalorder 0, 0
  // Predicated region
  $region22: #{_lambda_.13} parent=0 // pred_check
    %p854 = pneg %p853
  $region23: #{_lambda_.13} parent=0 // pred_check_branch
    %856 = sbr.rel (%p854) target = $region25
  $region24: #{_lambda_.13} parent=0 // pred_region
    %v857 = vld [vmem:[%s5] sm:$0x1]
    %v858 = vadd.f32 %v857, %v809
    %859 = vst [vmem:[%s5] sm:$0x1] %v858
    %v860 = vld [vmem:[%s6] sm:$0x1]
    %v861 = vadd.f32 %v860, %v846
    %862 = vst [vmem:[%s6] sm:$0x1] %v861
  $region25: #{_lambda_.13} parent=0 // pred_fallthru
    _
  // Predicated region
  $region26: #{_lambda_.13} parent=0 // pred_check
    _
  $region27: #{_lambda_.13} parent=0 // pred_check_branch
    %864 = sbr.rel (0) target = $region29
  $region28: #{_lambda_.13} parent=0 // pred_region
    _
  $region29: #{_lambda_.13} parent=0 // pred_fallthru
    _
  // Predicated region
  $region30: #{_lambda_.13} parent=0 // pred_check
    _
  $region31: #{_lambda_.13} parent=0 // pred_check_branch
    %866 = sbr.rel (0) target = $region33
  $region32: #{_lambda_.13} parent=0 // pred_region
    _
  $region33: #{_lambda_.13} parent=0 // pred_fallthru
    _
  // Predicated region
  $region34: #{_lambda_.13} parent=0 // pred_check
    _
  $region35: #{_lambda_.13} parent=0 // pred_check_branch
    %868 = sbr.rel (0) target = $region37
  $region36: #{_lambda_.13} parent=0 // pred_region
    _
  $region37: #{_lambda_.13} parent=0 // pred_fallthru
    _
  // Predicated region
  $region38: #{_lambda_.13} parent=0 // pred_check
    _
  $region39: #{_lambda_.13} parent=0 // pred_check_branch
    %870 = sbr.rel (0) target = $region41
  $region40: #{_lambda_.13} parent=0 // pred_region
    _
  $region41: #{_lambda_.13} parent=0 // pred_fallthru
    _
  // Predicated region
  $region42: #{_lambda_.13} parent=0 // pred_check
    _
  $region43: #{_lambda_.13} parent=0 // pred_check_branch
    %872 = sbr.rel (0) target = $region45
  $region44: #{_lambda_.13} parent=0 // pred_region
    _
  $region45: #{_lambda_.13} parent=0 // pred_fallthru
    _
  // Predicated region
  $region46: #{_lambda_.13} parent=0 // pred_check
    _
  $region47: #{_lambda_.13} parent=0 // pred_check_branch
    %874 = sbr.rel (0) target = $region49
  $region48: #{_lambda_.13} parent=0 // pred_region
    _
  $region49: #{_lambda_.13} parent=0 // pred_fallthru
    _

// kernel: _lambda_.16
$region0: #{_lambda_.16}
  #allocation0 [shape = 'u32[]', space=smem, size = 0x4, offset = 0x4, fixed_abs, tag = 'smem constant byte address 0x4 - core index']
  #allocation1 [shape = 'u32[144,128]{1,0:T(1,128)}', space=vmem, size = 0x12000, scoped, tag = 'internal scratch']
  %s0 = inlined_call_operand.vmem [shape: bf16[2,16,128], index: 0, kind: input, shape index: {}]
  %s1 = inlined_call_operand.vmem [shape: f32[2,1,128], index: 1, kind: input, shape index: {}]
  %s2 = inlined_call_operand.vmem [shape: f32[2,1,128], index: 2, kind: input, shape index: {}]
  %s3 = inlined_call_operand.vmem [shape: bf16[2,16,128], index: 3, kind: output, shape index: {}]
  %s4 = sld [smem:[#allocation0]]
  $region45: #{_lambda_.16} parent=0
    _
  %s6 = ssub.s32 1, %s4
  %s7 = scalar_select 0, %s6, %s4
  loop: start=0, step=1, limit=4
  $region2: #{_lambda_.16} parent=0 // loop_pre_header
    _
  $region3: #{_lambda_.16} parent=0 // loop_header
    %s9 = sphi 0, %s13
    %p10 = scmp.ge.s32.totalorder %s9, 4
    %s16 = sphi 0, %s28
    %s17 = sphi 0, %s24
    %s18 = sphi 0, %s16
    %s19 = sphi 0, %s17
    %s20 = sphi 0, %s18
    %s21 = sphi 0, %s19
    %s33 = sphi 0, %s35
    %s36 = sphi 0, %s33
    %s37 = sphi 0, %s36
    %s53 = sphi 0, %s37
    %s59 = sphi 0, %s61
    %s62 = sphi 0, %s59
    %s63 = sphi 0, %s62
    %s79 = sphi 0, %s63
    %s85 = sphi 0, %s87
    %s88 = sphi 0, %s85
    %s89 = sphi 0, %s88
    %s105 = sphi 0, %s89
    %s113 = sphi 0, %s115
    %s116 = sphi 0, %s113
    %s117 = sphi 0, %s116
    %s133 = sphi 0, %s117
  $region4: #{_lambda_.16} parent=0 // loop_header_branch
    %12 = sbr.rel (%p10) target = $region8
  $region5: #{_lambda_.16} parent=0 // loop_body
    %s14 = ssub.s32 %s9, 1
    %s15 = ssub.s32 %s9, 2
    %s22 = sadd.s32 1, %s17
    %p23 = scmp.ge.s32.totalorder %s22, 1
    %s24 = scalar_select %p23, 0, %s22
    %s25 = sadd.s32 1, %s16
    %s26 = scalar_select %p23, %s25, %s16
    %p27 = scmp.ge.s32.totalorder %s26, 2
    %s28 = scalar_select %p27, 0, %s26
    %s29 = ssub.s32 %s16, %s28
    %s30 = ssub.s32 %s17, %s24
    %s31 = sor.u32 %s29, %s30
    %p32 = scmp.eq.s32.totalorder %s31, 0
    %s34 = sadd.s32 %s33, 1
    %s35 = scalar_select %p32, %s33, %s34
    %p38 = pneg %p32
    %p39 = scmp.eq.s32.totalorder %s9, 1
    %p40 = por %p38, %p39
    %p41 = scmp.ne.s32.totalorder %s33, %s36
    %p42 = scmp.eq.s32.totalorder %s9, 0
    %p43 = por %p41, %p42
    %p44 = scmp.ne.s32.totalorder %s33, %s36
    %p45 = scmp.eq.s32.totalorder %s14, 1
    %p46 = por %p44, %p45
    %p47 = scmp.ne.s32.totalorder %s36, %s37
    %p48 = scmp.eq.s32.totalorder %s14, 0
    %p49 = por %p47, %p48
    %p50 = scmp.ne.s32.totalorder %s36, %s37
    %p51 = scmp.eq.s32.totalorder %s15, 1
    %p52 = por %p50, %p51
    %p54 = scmp.ne.s32.totalorder %s37, %s53
    %p55 = scmp.eq.s32.totalorder %s15, 0
    %p56 = por %p54, %p55
    %s57 = ssub.s32 %s16, %s28
    %p58 = scmp.eq.s32.totalorder %s57, 0
    %s60 = sadd.s32 %s59, 1
    %s61 = scalar_select %p58, %s59, %s60
    %p64 = pneg %p58
    %p65 = scmp.eq.s32.totalorder %s9, 1
    %p66 = por %p64, %p65
    %p67 = scmp.ne.s32.totalorder %s59, %s62
    %p68 = scmp.eq.s32.totalorder %s9, 0
    %p69 = por %p67, %p68
    %p70 = scmp.ne.s32.totalorder %s59, %s62
    %p71 = scmp.eq.s32.totalorder %s14, 1
    %p72 = por %p70, %p71
    %p73 = scmp.ne.s32.totalorder %s62, %s63
    %p74 = scmp.eq.s32.totalorder %s14, 0
    %p75 = por %p73, %p74
    %p76 = scmp.ne.s32.totalorder %s62, %s63
    %p77 = scmp.eq.s32.totalorder %s15, 1
    %p78 = por %p76, %p77
    %p80 = scmp.ne.s32.totalorder %s63, %s79
    %p81 = scmp.eq.s32.totalorder %s15, 0
    %p82 = por %p80, %p81
    %s83 = ssub.s32 %s16, %s28
    %p84 = scmp.eq.s32.totalorder %s83, 0
    %s86 = sadd.s32 %s85, 1
    %s87 = scalar_select %p84, %s85, %s86
    %p90 = pneg %p84
    %p91 = scmp.eq.s32.totalorder %s9, 1
    %p92 = por %p90, %p91
    %p93 = scmp.ne.s32.totalorder %s85, %s88
    %p94 = scmp.eq.s32.totalorder %s9, 0
    %p95 = por %p93, %p94
    %p96 = scmp.ne.s32.totalorder %s85, %s88
    %p97 = scmp.eq.s32.totalorder %s14, 1
    %p98 = por %p96, %p97
    %p99 = scmp.ne.s32.totalorder %s88, %s89
    %p100 = scmp.eq.s32.totalorder %s14, 0
    %p101 = por %p99, %p100
    %p102 = scmp.ne.s32.totalorder %s88, %s89
    %p103 = scmp.eq.s32.totalorder %s15, 1
    %p104 = por %p102, %p103
    %p106 = scmp.ne.s32.totalorder %s89, %s105
    %p107 = scmp.eq.s32.totalorder %s15, 0
    %p108 = por %p106, %p107
    %s109 = ssub.s32 %s16, %s28
    %s110 = ssub.s32 %s17, %s24
    %s111 = sor.u32 %s109, %s110
    %p112 = scmp.eq.s32.totalorder %s111, 0
    %s114 = sadd.s32 %s113, 1
    %s115 = scalar_select %p112, %s113, %s114
    %p118 = pneg %p112
    %p119 = scmp.eq.s32.totalorder %s9, 1
    %p120 = por %p118, %p119
    %p121 = scmp.ne.s32.totalorder %s113, %s116
    %p122 = scmp.eq.s32.totalorder %s9, 0
    %p123 = por %p121, %p122
    %p124 = scmp.ne.s32.totalorder %s113, %s116
    %p125 = scmp.eq.s32.totalorder %s14, 1
    %p126 = por %p124, %p125
    %p127 = scmp.ne.s32.totalorder %s116, %s117
    %p128 = scmp.eq.s32.totalorder %s14, 0
    %p129 = por %p127, %p128
    %p130 = scmp.ne.s32.totalorder %s116, %s117
    %p131 = scmp.eq.s32.totalorder %s15, 1
    %p132 = por %p130, %p131
    %p134 = scmp.ne.s32.totalorder %s117, %s133
    %p135 = scmp.eq.s32.totalorder %s15, 0
    %p136 = por %p134, %p135
    %p137 = scmp.le.s32.totalorder 1, %s9
    %p138 = scmp.lt.s32.totalorder %s9, 3
    %p139 = pnand %p137, %p138
    %p140 = pneg %p139
    // Predicated region
    $region9: #{_lambda_.16} parent=5 // pred_check
      _
    $region10: #{_lambda_.16} parent=5 // pred_check_branch
      %142 = sbr.rel (%p139) target = $region12
    $region11: #{_lambda_.16} parent=5 // pred_region
      %s143 = ssub.s32 %s9, 1
    $region12: #{_lambda_.16} parent=5 // pred_fallthru
      _
    %p144 = scmp.lt.s32.totalorder %s9, 2
    // Predicated region
    $region13: #{_lambda_.16} parent=5 // pred_check
      %p145 = pneg %p144
    $region14: #{_lambda_.16} parent=5 // pred_check_branch
      %147 = sbr.rel (%p145) target = $region16
    $region15: #{_lambda_.16} parent=5 // pred_region
      // Predicated region
      $region17: #{_lambda_.16} parent=15 // pred_check
        %p148 = pneg %p43
      $region18: #{_lambda_.16} parent=15 // pred_check_branch
        %150 = sbr.rel (%p148) target = $region20
      $region19: #{_lambda_.16} parent=15 // pred_region
        %s151 = smul.u32 2, %s17
        %p152 = scmp.lt.s32.totalorder %s16, 1
        %s153 = scalar_select %p152, %s16, 1
        %p154 = scmp.lt.s32.totalorder %s151, 1
        %s155 = scalar_select %p154, %s151, 1
        %s156 = smul.addr %s153, 2
        %s157 = sadd.s32 %s155, %s156
        %s158 = smul.addr %s157, 4
        %s159 = scalar_lea.vmem %s0, %s158
        %s160 = smul.u32 2, %s17
      $region20: #{_lambda_.16} parent=15 // pred_fallthru
        _
      // Predicated region
      $region21: #{_lambda_.16} parent=15 // pred_check
        %p161 = pneg %p69
      $region22: #{_lambda_.16} parent=15 // pred_check_branch
        %163 = sbr.rel (%p161) target = $region24
      $region23: #{_lambda_.16} parent=15 // pred_region
        %p164 = scmp.lt.s32.totalorder %s16, 1
        %s165 = scalar_select %p164, %s16, 1
        %s166 = scalar_lea.vmem %s1, %s165
      $region24: #{_lambda_.16} parent=15 // pred_fallthru
        _
      // Predicated region
      $region25: #{_lambda_.16} parent=15 // pred_check
        %p167 = pneg %p95
      $region26: #{_lambda_.16} parent=15 // pred_check_branch
        %169 = sbr.rel (%p167) target = $region28
      $region27: #{_lambda_.16} parent=15 // pred_region
        %p170 = scmp.lt.s32.totalorder %s16, 1
        %s171 = scalar_select %p170, %s16, 1
        %s172 = scalar_lea.vmem %s2, %s171
      $region28: #{_lambda_.16} parent=15 // pred_fallthru
        _
    $region16: #{_lambda_.16} parent=5 // pred_fallthru
      _
    %p173 = scmp.le.s32.totalorder 1, %s9
    %p174 = scmp.lt.s32.totalorder %s9, 3
    %p175 = pnand %p173, %p174
    %p176 = pneg %p175
    // Predicated region
    $region29: #{_lambda_.16} parent=5 // pred_check
      _
    $region30: #{_lambda_.16} parent=5 // pred_check_branch
      %178 = sbr.rel (%p175) target = $region32
    $region31: #{_lambda_.16} parent=5 // pred_region
      %s179 = ssub.s32 %s9, 1
      %s180 = smul.u32 2, %s19
      %p181 = scmp.lt.s32.totalorder %s18, 1
      %s182 = scalar_select %p181, %s18, 1
      %p183 = scmp.lt.s32.totalorder %s180, 1
      %s184 = scalar_select %p183, %s180, 1
      %s185 = smul.addr %s182, 2
      %s186 = sadd.s32 %s184, %s185
      %s187 = smul.addr %s186, 4
      %s188 = scalar_lea.vmem %s0, %s187
      %p189 = pneg %p49
      %p190 = pneg %p46
      %p191 = scmp.lt.s32.totalorder %s18, 1
      %s192 = scalar_select %p191, %s18, 1
      %s193 = scalar_lea.vmem %s1, %s192
      %p194 = pneg %p75
      %p195 = pneg %p72
      %p196 = scmp.lt.s32.totalorder %s18, 1
      %s197 = scalar_select %p196, %s18, 1
      %s198 = scalar_lea.vmem %s2, %s197
      %p199 = pneg %p101
      %p200 = pneg %p98
      %p201 = pneg %p129
      %p202 = pneg %p126
      %s203 = smul.u32 2, %s19
      %p204 = scmp.lt.s32.totalorder %s18, 1
      %s205 = scalar_select %p204, %s18, 1
      %p206 = scmp.lt.s32.totalorder %s203, 1
      %s207 = scalar_select %p206, %s203, 1
      %s208 = smul.addr %s205, 2
      %s209 = sadd.s32 %s207, %s208
      %s210 = smul.addr %s209, 4
      %s211 = scalar_lea.vmem %s3, %s210
      %s212 = smul.u32 2, %s19
      %p213 = scmp.lt.s32.totalorder %s18, 1
      %s214 = scalar_select %p213, %s18, 1
      %p215 = scmp.lt.s32.totalorder %s212, 1
      %s216 = scalar_select %p215, %s212, 1
      %s217 = smul.addr %s214, 2
      %s218 = sadd.s32 %s216, %s217
      %s219 = smul.addr %s218, 4
      %s220 = scalar_lea.vmem %s0, %s219
      %s221 = smul.u32 2, %s19
      %p222 = scmp.lt.s32.totalorder %s18, 1
      %s223 = scalar_select %p222, %s18, 1
      %s224 = scalar_lea.vmem %s1, %s223
      %p225 = scmp.lt.s32.totalorder %s18, 1
      %s226 = scalar_select %p225, %s18, 1
      %s227 = scalar_lea.vmem %s2, %s226
      %s228 = smul.u32 2, %s19
      %p229 = scmp.lt.s32.totalorder %s18, 1
      %s230 = scalar_select %p229, %s18, 1
      %p231 = scmp.lt.s32.totalorder %s228, 1
      %s232 = scalar_select %p231, %s228, 1
      %s233 = smul.addr %s230, 2
      %s234 = sadd.s32 %s232, %s233
      %s235 = smul.addr %s234, 4
      %s236 = scalar_lea.vmem %s3, %s235
      %s237 = smul.u32 2, %s19
      %v238 = vld [vmem:[%s220] sm:$0xf]
      %v239 = vld [vmem:[%s220 + $0x4] sm:$0xf]
      %v240 = vunpack.c.l.bf16 %v238
      %v241 = vunpack.c.l.bf16 %v239
      %v242 = vld [vmem:[%s224] sm:$0x1]
      %v244 = vlaneseq
      %v245 = vshrl.u32 %v244, 7
      %v246 = vsub.s32 0, %v245
      %v247 = vrot.slane %v242, %v246
      %v249 = vmul.f32 %v240, %v247
      %v250 = vmul.f32 %v241, %v247
      %v251 = vld [vmem:[%s227] sm:$0x1]
      %v253 = vlaneseq
      %v254 = vshrl.u32 %v253, 7
      %v255 = vsub.s32 0, %v254
      %v256 = vrot.slane %v251, %v255
      %v258 = vadd.f32 %v249, %v256
      %v259 = vadd.f32 %v250, %v256
      %vm260 = vcmp.ge.f32.partialorder %v258, 0.0
      %vm261 = vcmp.ge.f32.partialorder %v259, 0.0
      %v262 = vmul.f32 %v258, 0.2
      %v263 = vmul.f32 %v259, 0.2
      %v264 = vsel %vm260, %v258, %v262
      %v265 = vsel %vm261, %v259, %v263
      %v266 = vpack.c.bf16 %v265, %v264
      %v268 = vunpack.c.l.b16 %v266
      %v269 = vunpack.c.h.b16 %v266
      %v270 = vpack.c.b16 %v268, %v268
      %v271 = vpack.c.b16 %v269, %v269
      %274 = vst [vmem:[%s236] sm:$0xf] %v270
      %275 = vst [vmem:[%s236 + $0x4] sm:$0xf] %v271
      %s276 = smul.u32 2, %s19
      %p277 = scmp.lt.s32.totalorder %s18, 1
      %s278 = scalar_select %p277, %s18, 1
      %p279 = scmp.lt.s32.totalorder %s276, 1
      %s280 = scalar_select %p279, %s276, 1
      %s281 = smul.addr %s278, 2
      %s282 = sadd.s32 %s280, %s281
      %s283 = smul.addr %s282, 4
      %s284 = scalar_lea.vmem %s3, %s283
      // Predicated region
      $region33: #{_lambda_.16} parent=31 // pred_check
        %p285 = pneg %p126
      $region34: #{_lambda_.16} parent=31 // pred_check_branch
        %287 = sbr.rel (%p285) target = $region36
      $region35: #{_lambda_.16} parent=31 // pred_region
        %s288 = smul.u32 2, %s19
      $region36: #{_lambda_.16} parent=31 // pred_fallthru
        _
    $region32: #{_lambda_.16} parent=5 // pred_fallthru
      _
    %p289 = scmp.le.s32.totalorder 2, %s9
    // Predicated region
    $region37: #{_lambda_.16} parent=5 // pred_check
      %p290 = pneg %p289
    $region38: #{_lambda_.16} parent=5 // pred_check_branch
      %292 = sbr.rel (%p290) target = $region40
    $region39: #{_lambda_.16} parent=5 // pred_region
      %s293 = ssub.s32 %s9, 2
      // Predicated region
      $region41: #{_lambda_.16} parent=39 // pred_check
        %p294 = pneg %p132
      $region42: #{_lambda_.16} parent=39 // pred_check_branch
        %296 = sbr.rel (%p294) target = $region44
      $region43: #{_lambda_.16} parent=39 // pred_region
        %s297 = smul.u32 2, %s21
        %p298 = scmp.lt.s32.totalorder %s20, 1
        %s299 = scalar_select %p298, %s20, 1
        %p300 = scmp.lt.s32.totalorder %s297, 1
        %s301 = scalar_select %p300, %s297, 1
        %s302 = smul.addr %s299, 2
        %s303 = sadd.s32 %s301, %s302
        %s304 = smul.addr %s303, 4
        %s305 = scalar_lea.vmem %s3, %s304
      $region44: #{_lambda_.16} parent=39 // pred_fallthru
        _
    $region40: #{_lambda_.16} parent=5 // pred_fallthru
      _
  $region6: #{_lambda_.16} parent=0 // loop_footer
    %s13 = sadd.s32 1, %s9
  $region7: #{_lambda_.16} parent=0 // loop_footer_branch
    %8 = sbr.rel target = $region3
  $region8: #{_lambda_.16} parent=0 // loop_exit
    _

// kernel: _lambda_.15
$region0: #{_lambda_.15}
  #allocation0 [shape = 'u32[]', space=smem, size = 0x4, offset = 0x4, fixed_abs, tag = 'smem constant byte address 0x4 - core index']
  #allocation1 [shape = 'u32[144,128]{1,0:T(1,128)}', space=vmem, size = 0x12000, scoped, tag = 'internal scratch']
  %s0 = inlined_call_operand.vmem [shape: bf16[32,1024], index: 0, kind: input, shape index: {}]
  %s1 = inlined_call_operand.vmem [shape: bf16[1024,128], index: 1, kind: input, shape index: {}]
  %s2 = inlined_call_operand.vmem [shape: f32[1,128], index: 2, kind: input, shape index: {}]
  %s3 = inlined_call_operand.vmem [shape: f32[1,128], index: 3, kind: input, shape index: {}]
  %s4 = inlined_call_operand.vmem [shape: bf16[32,128], index: 4, kind: output, shape index: {0}]
  %s5 = inlined_call_operand.vmem [shape: f32[1,128], index: 5, kind: output, shape index: {1}]
  %s6 = inlined_call_operand.vmem [shape: f32[1,128], index: 6, kind: output, shape index: {2}]
  %7 = xla_tuple %s4, %s5, %s6
  %s8 = sld [smem:[#allocation0]]
  $region50: #{_lambda_.15} parent=0
    _
  %s10 = ssub.s32 1, %s8
  %s11 = scalar_select 0, %s10, %s8
  // Predicated region
  $region2: #{_lambda_.15} parent=0 // pred_check
    _
  $region3: #{_lambda_.15} parent=0 // pred_check_branch
    %13 = sbr.rel (0) target = $region5
  $region4: #{_lambda_.15} parent=0 // pred_region
    _
  $region5: #{_lambda_.15} parent=0 // pred_fallthru
    _
  // Predicated region
  $region6: #{_lambda_.15} parent=0 // pred_check
    _
  $region7: #{_lambda_.15} parent=0 // pred_check_branch
    %15 = sbr.rel (0) target = $region9
  $region8: #{_lambda_.15} parent=0 // pred_region
    _
  $region9: #{_lambda_.15} parent=0 // pred_fallthru
    _
  // Predicated region
  $region10: #{_lambda_.15} parent=0 // pred_check
    _
  $region11: #{_lambda_.15} parent=0 // pred_check_branch
    %17 = sbr.rel (0) target = $region13
  $region12: #{_lambda_.15} parent=0 // pred_region
    _
  $region13: #{_lambda_.15} parent=0 // pred_fallthru
    _
  // Predicated region
  $region14: #{_lambda_.15} parent=0 // pred_check
    _
  $region15: #{_lambda_.15} parent=0 // pred_check_branch
    %19 = sbr.rel (0) target = $region17
  $region16: #{_lambda_.15} parent=0 // pred_region
    _
  $region17: #{_lambda_.15} parent=0 // pred_fallthru
    _
  %v21 = vld [vmem:[%s0] sm:$0xff]
  %v22 = vld [vmem:[%s0 + $0x8] sm:$0xff]
  %v23 = vld [vmem:[%s0 + $0x10] sm:$0xff]
  %v24 = vld [vmem:[%s0 + $0x18] sm:$0xff]
  %v25 = vld [vmem:[%s0 + $0x20] sm:$0xff]
  %v26 = vld [vmem:[%s0 + $0x28] sm:$0xff]
  %v27 = vld [vmem:[%s0 + $0x30] sm:$0xff]
  %v28 = vld [vmem:[%s0 + $0x38] sm:$0xff]
  %v29 = vld [vmem:[%s0 + $0x40] sm:$0xff]
  %v30 = vld [vmem:[%s0 + $0x48] sm:$0xff]
  %v31 = vld [vmem:[%s0 + $0x50] sm:$0xff]
  %v32 = vld [vmem:[%s0 + $0x58] sm:$0xff]
  %v33 = vld [vmem:[%s0 + $0x60] sm:$0xff]
  %v34 = vld [vmem:[%s0 + $0x68] sm:$0xff]
  %v35 = vld [vmem:[%s0 + $0x70] sm:$0xff]
  %v36 = vld [vmem:[%s0 + $0x78] sm:$0xff]
  %v37 = vld [vmem:[%s1] sm:$0xf]
  %v38 = vld [vmem:[%s1 + $0x4] sm:$0xf]
  %v39 = vld [vmem:[%s1 + $0x8] sm:$0xf]
  %v40 = vld [vmem:[%s1 + $0xc] sm:$0xf]
  %v41 = vld [vmem:[%s1 + $0x10] sm:$0xf]
  %v42 = vld [vmem:[%s1 + $0x14] sm:$0xf]
  %v43 = vld [vmem:[%s1 + $0x18] sm:$0xf]
  %v44 = vld [vmem:[%s1 + $0x1c] sm:$0xf]
  %v45 = vld [vmem:[%s1 + $0x20] sm:$0xf]
  %v46 = vld [vmem:[%s1 + $0x24] sm:$0xf]
  %v47 = vld [vmem:[%s1 + $0x28] sm:$0xf]
  %v48 = vld [vmem:[%s1 + $0x2c] sm:$0xf]
  %v49 = vld [vmem:[%s1 + $0x30] sm:$0xf]
  %v50 = vld [vmem:[%s1 + $0x34] sm:$0xf]
  %v51 = vld [vmem:[%s1 + $0x38] sm:$0xf]
  %v52 = vld [vmem:[%s1 + $0x3c] sm:$0xf]
  %v53 = vld [vmem:[%s1 + $0x40] sm:$0xf]
  %v54 = vld [vmem:[%s1 + $0x44] sm:$0xf]
  %v55 = vld [vmem:[%s1 + $0x48] sm:$0xf]
  %v56 = vld [vmem:[%s1 + $0x4c] sm:$0xf]
  %v57 = vld [vmem:[%s1 + $0x50] sm:$0xf]
  %v58 = vld [vmem:[%s1 + $0x54] sm:$0xf]
  %v59 = vld [vmem:[%s1 + $0x58] sm:$0xf]
  %v60 = vld [vmem:[%s1 + $0x5c] sm:$0xf]
  %v61 = vld [vmem:[%s1 + $0x60] sm:$0xf]
  %v62 = vld [vmem:[%s1 + $0x64] sm:$0xf]
  %v63 = vld [vmem:[%s1 + $0x68] sm:$0xf]
  %v64 = vld [vmem:[%s1 + $0x6c] sm:$0xf]
  %v65 = vld [vmem:[%s1 + $0x70] sm:$0xf]
  %v66 = vld [vmem:[%s1 + $0x74] sm:$0xf]
  %v67 = vld [vmem:[%s1 + $0x78] sm:$0xf]
  %v68 = vld [vmem:[%s1 + $0x7c] sm:$0xf]
  %v69 = vld [vmem:[%s1 + $0x80] sm:$0xf]
  %v70 = vld [vmem:[%s1 + $0x84] sm:$0xf]
  %v71 = vld [vmem:[%s1 + $0x88] sm:$0xf]
  %v72 = vld [vmem:[%s1 + $0x8c] sm:$0xf]
  %v73 = vld [vmem:[%s1 + $0x90] sm:$0xf]
  %v74 = vld [vmem:[%s1 + $0x94] sm:$0xf]
  %v75 = vld [vmem:[%s1 + $0x98] sm:$0xf]
  %v76 = vld [vmem:[%s1 + $0x9c] sm:$0xf]
  %v77 = vld [vmem:[%s1 + $0xa0] sm:$0xf]
  %v78 = vld [vmem:[%s1 + $0xa4] sm:$0xf]
  %v79 = vld [vmem:[%s1 + $0xa8] sm:$0xf]
  %v80 = vld [vmem:[%s1 + $0xac] sm:$0xf]
  %v81 = vld [vmem:[%s1 + $0xb0] sm:$0xf]
  %v82 = vld [vmem:[%s1 + $0xb4] sm:$0xf]
  %v83 = vld [vmem:[%s1 + $0xb8] sm:$0xf]
  %v84 = vld [vmem:[%s1 + $0xbc] sm:$0xf]
  %v85 = vld [vmem:[%s1 + $0xc0] sm:$0xf]
  %v86 = vld [vmem:[%s1 + $0xc4] sm:$0xf]
  %v87 = vld [vmem:[%s1 + $0xc8] sm:$0xf]
  %v88 = vld [vmem:[%s1 + $0xcc] sm:$0xf]
  %v89 = vld [vmem:[%s1 + $0xd0] sm:$0xf]
  %v90 = vld [vmem:[%s1 + $0xd4] sm:$0xf]
  %v91 = vld [vmem:[%s1 + $0xd8] sm:$0xf]
  %v92 = vld [vmem:[%s1 + $0xdc] sm:$0xf]
  %v93 = vld [vmem:[%s1 + $0xe0] sm:$0xf]
  %v94 = vld [vmem:[%s1 + $0xe4] sm:$0xf]
  %v95 = vld [vmem:[%s1 + $0xe8] sm:$0xf]
  %v96 = vld [vmem:[%s1 + $0xec] sm:$0xf]
  %v97 = vld [vmem:[%s1 + $0xf0] sm:$0xf]
  %v98 = vld [vmem:[%s1 + $0xf4] sm:$0xf]
  %v99 = vld [vmem:[%s1 + $0xf8] sm:$0xf]
  %v100 = vld [vmem:[%s1 + $0xfc] sm:$0xf]
  %v101 = vld [vmem:[%s1 + $0x100] sm:$0xf]
  %v102 = vld [vmem:[%s1 + $0x104] sm:$0xf]
  %v103 = vld [vmem:[%s1 + $0x108] sm:$0xf]
  %v104 = vld [vmem:[%s1 + $0x10c] sm:$0xf]
  %v105 = vld [vmem:[%s1 + $0x110] sm:$0xf]
  %v106 = vld [vmem:[%s1 + $0x114] sm:$0xf]
  %v107 = vld [vmem:[%s1 + $0x118] sm:$0xf]
  %v108 = vld [vmem:[%s1 + $0x11c] sm:$0xf]
  %v109 = vld [vmem:[%s1 + $0x120] sm:$0xf]
  %v110 = vld [vmem:[%s1 + $0x124] sm:$0xf]
  %v111 = vld [vmem:[%s1 + $0x128] sm:$0xf]
  %v112 = vld [vmem:[%s1 + $0x12c] sm:$0xf]
  %v113 = vld [vmem:[%s1 + $0x130] sm:$0xf]
  %v114 = vld [vmem:[%s1 + $0x134] sm:$0xf]
  %v115 = vld [vmem:[%s1 + $0x138] sm:$0xf]
  %v116 = vld [vmem:[%s1 + $0x13c] sm:$0xf]
  %v117 = vld [vmem:[%s1 + $0x140] sm:$0xf]
  %v118 = vld [vmem:[%s1 + $0x144] sm:$0xf]
  %v119 = vld [vmem:[%s1 + $0x148] sm:$0xf]
  %v120 = vld [vmem:[%s1 + $0x14c] sm:$0xf]
  %v121 = vld [vmem:[%s1 + $0x150] sm:$0xf]
  %v122 = vld [vmem:[%s1 + $0x154] sm:$0xf]
  %v123 = vld [vmem:[%s1 + $0x158] sm:$0xf]
  %v124 = vld [vmem:[%s1 + $0x15c] sm:$0xf]
  %v125 = vld [vmem:[%s1 + $0x160] sm:$0xf]
  %v126 = vld [vmem:[%s1 + $0x164] sm:$0xf]
  %v127 = vld [vmem:[%s1 + $0x168] sm:$0xf]
  %v128 = vld [vmem:[%s1 + $0x16c] sm:$0xf]
  %v129 = vld [vmem:[%s1 + $0x170] sm:$0xf]
  %v130 = vld [vmem:[%s1 + $0x174] sm:$0xf]
  %v131 = vld [vmem:[%s1 + $0x178] sm:$0xf]
  %v132 = vld [vmem:[%s1 + $0x17c] sm:$0xf]
  %v133 = vld [vmem:[%s1 + $0x180] sm:$0xf]
  %v134 = vld [vmem:[%s1 + $0x184] sm:$0xf]
  %v135 = vld [vmem:[%s1 + $0x188] sm:$0xf]
  %v136 = vld [vmem:[%s1 + $0x18c] sm:$0xf]
  %v137 = vld [vmem:[%s1 + $0x190] sm:$0xf]
  %v138 = vld [vmem:[%s1 + $0x194] sm:$0xf]
  %v139 = vld [vmem:[%s1 + $0x198] sm:$0xf]
  %v140 = vld [vmem:[%s1 + $0x19c] sm:$0xf]
  %v141 = vld [vmem:[%s1 + $0x1a0] sm:$0xf]
  %v142 = vld [vmem:[%s1 + $0x1a4] sm:$0xf]
  %v143 = vld [vmem:[%s1 + $0x1a8] sm:$0xf]
  %v144 = vld [vmem:[%s1 + $0x1ac] sm:$0xf]
  %v145 = vld [vmem:[%s1 + $0x1b0] sm:$0xf]
  %v146 = vld [vmem:[%s1 + $0x1b4] sm:$0xf]
  %v147 = vld [vmem:[%s1 + $0x1b8] sm:$0xf]
  %v148 = vld [vmem:[%s1 + $0x1bc] sm:$0xf]
  %v149 = vld [vmem:[%s1 + $0x1c0] sm:$0xf]
  %v150 = vld [vmem:[%s1 + $0x1c4] sm:$0xf]
  %v151 = vld [vmem:[%s1 + $0x1c8] sm:$0xf]
  %v152 = vld [vmem:[%s1 + $0x1cc] sm:$0xf]
  %v153 = vld [vmem:[%s1 + $0x1d0] sm:$0xf]
  %v154 = vld [vmem:[%s1 + $0x1d4] sm:$0xf]
  %v155 = vld [vmem:[%s1 + $0x1d8] sm:$0xf]
  %v156 = vld [vmem:[%s1 + $0x1dc] sm:$0xf]
  %v157 = vld [vmem:[%s1 + $0x1e0] sm:$0xf]
  %v158 = vld [vmem:[%s1 + $0x1e4] sm:$0xf]
  %v159 = vld [vmem:[%s1 + $0x1e8] sm:$0xf]
  %v160 = vld [vmem:[%s1 + $0x1ec] sm:$0xf]
  %v161 = vld [vmem:[%s1 + $0x1f0] sm:$0xf]
  %v162 = vld [vmem:[%s1 + $0x1f4] sm:$0xf]
  %v163 = vld [vmem:[%s1 + $0x1f8] sm:$0xf]
  %v164 = vld [vmem:[%s1 + $0x1fc] sm:$0xf]
  %v181 = vunpack.c.l.b16 %v21
  %v182 = vunpack.c.h.b16 %v21
  %v183 = vunpack.c.l.b16 %v22
  %v184 = vunpack.c.h.b16 %v22
  %v185 = vunpack.c.l.b16 %v23
  %v186 = vunpack.c.h.b16 %v23
  %v187 = vunpack.c.l.b16 %v24
  %v188 = vunpack.c.h.b16 %v24
  %v189 = vunpack.c.l.b16 %v25
  %v190 = vunpack.c.h.b16 %v25
  %v191 = vunpack.c.l.b16 %v26
  %v192 = vunpack.c.h.b16 %v26
  %v193 = vunpack.c.l.b16 %v27
  %v194 = vunpack.c.h.b16 %v27
  %v195 = vunpack.c.l.b16 %v28
  %v196 = vunpack.c.h.b16 %v28
  %v197 = vunpack.c.l.b16 %v29
  %v198 = vunpack.c.h.b16 %v29
  %v199 = vunpack.c.l.b16 %v30
  %v200 = vunpack.c.h.b16 %v30
  %v201 = vunpack.c.l.b16 %v31
  %v202 = vunpack.c.h.b16 %v31
  %v203 = vunpack.c.l.b16 %v32
  %v204 = vunpack.c.h.b16 %v32
  %v205 = vunpack.c.l.b16 %v33
  %v206 = vunpack.c.h.b16 %v33
  %v207 = vunpack.c.l.b16 %v34
  %v208 = vunpack.c.h.b16 %v34
  %v209 = vunpack.c.l.b16 %v35
  %v210 = vunpack.c.h.b16 %v35
  %v211 = vunpack.c.l.b16 %v36
  %v212 = vunpack.c.h.b16 %v36
  %v213 = vpack.c.b16 %v189, %v181
  %v214 = vpack.c.b16 %v190, %v182
  %v215 = vpack.c.b16 %v191, %v183
  %v216 = vpack.c.b16 %v192, %v184
  %v217 = vpack.c.b16 %v193, %v185
  %v218 = vpack.c.b16 %v194, %v186
  %v219 = vpack.c.b16 %v195, %v187
  %v220 = vpack.c.b16 %v196, %v188
  %v221 = vpack.c.b16 %v205, %v197
  %v222 = vpack.c.b16 %v206, %v198
  %v223 = vpack.c.b16 %v207, %v199
  %v224 = vpack.c.b16 %v208, %v200
  %v225 = vpack.c.b16 %v209, %v201
  %v226 = vpack.c.b16 %v210, %v202
  %v227 = vpack.c.b16 %v211, %v203
  %v228 = vpack.c.b16 %v212, %v204
  %v373 = vunpack.c.l.b16 %v37
  %v374 = vunpack.c.l.b16 %v38
  %v375 = vunpack.c.l.b16 %v39
  %v376 = vunpack.c.l.b16 %v40
  %v377 = vunpack.c.l.b16 %v41
  %v378 = vunpack.c.l.b16 %v42
  %v379 = vunpack.c.l.b16 %v43
  %v380 = vunpack.c.l.b16 %v44
  %v381 = vunpack.c.l.b16 %v45
  %v382 = vunpack.c.l.b16 %v46
  %v383 = vunpack.c.l.b16 %v47
  %v384 = vunpack.c.l.b16 %v48
  %v385 = vunpack.c.l.b16 %v49
  %v386 = vunpack.c.l.b16 %v50
  %v387 = vunpack.c.l.b16 %v51
  %v388 = vunpack.c.l.b16 %v52
  %v389 = vunpack.c.l.b16 %v53
  %v390 = vunpack.c.l.b16 %v54
  %v391 = vunpack.c.l.b16 %v55
  %v392 = vunpack.c.l.b16 %v56
  %v393 = vunpack.c.l.b16 %v57
  %v394 = vunpack.c.l.b16 %v58
  %v395 = vunpack.c.l.b16 %v59
  %v396 = vunpack.c.l.b16 %v60
  %v397 = vunpack.c.l.b16 %v61
  %v398 = vunpack.c.l.b16 %v62
  %v399 = vunpack.c.l.b16 %v63
  %v400 = vunpack.c.l.b16 %v64
  %v401 = vunpack.c.l.b16 %v65
  %v402 = vunpack.c.l.b16 %v66
  %v403 = vunpack.c.l.b16 %v67
  %v404 = vunpack.c.l.b16 %v68
  %v405 = vunpack.c.l.b16 %v69
  %v406 = vunpack.c.l.b16 %v70
  %v407 = vunpack.c.l.b16 %v71
  %v408 = vunpack.c.l.b16 %v72
  %v409 = vunpack.c.l.b16 %v73
  %v410 = vunpack.c.l.b16 %v74
  %v411 = vunpack.c.l.b16 %v75
  %v412 = vunpack.c.l.b16 %v76
  %v413 = vunpack.c.l.b16 %v77
  %v414 = vunpack.c.l.b16 %v78
  %v415 = vunpack.c.l.b16 %v79
  %v416 = vunpack.c.l.b16 %v80
  %v417 = vunpack.c.l.b16 %v81
  %v418 = vunpack.c.l.b16 %v82
  %v419 = vunpack.c.l.b16 %v83
  %v420 = vunpack.c.l.b16 %v84
  %v421 = vunpack.c.l.b16 %v85
  %v422 = vunpack.c.l.b16 %v86
  %v423 = vunpack.c.l.b16 %v87
  %v424 = vunpack.c.l.b16 %v88
  %v425 = vunpack.c.l.b16 %v89
  %v426 = vunpack.c.l.b16 %v90
  %v427 = vunpack.c.l.b16 %v91
  %v428 = vunpack.c.l.b16 %v92
  %v429 = vunpack.c.l.b16 %v93
  %v430 = vunpack.c.l.b16 %v94
  %v431 = vunpack.c.l.b16 %v95
  %v432 = vunpack.c.l.b16 %v96
  %v433 = vunpack.c.l.b16 %v97
  %v434 = vunpack.c.l.b16 %v98
  %v435 = vunpack.c.l.b16 %v99
  %v436 = vunpack.c.l.b16 %v100
  %v437 = vunpack.c.l.b16 %v101
  %v438 = vunpack.c.l.b16 %v102
  %v439 = vunpack.c.l.b16 %v103
  %v440 = vunpack.c.l.b16 %v104
  %v441 = vunpack.c.l.b16 %v105
  %v442 = vunpack.c.l.b16 %v106
  %v443 = vunpack.c.l.b16 %v107
  %v444 = vunpack.c.l.b16 %v108
  %v445 = vunpack.c.l.b16 %v109
  %v446 = vunpack.c.l.b16 %v110
  %v447 = vunpack.c.l.b16 %v111
  %v448 = vunpack.c.l.b16 %v112
  %v449 = vunpack.c.l.b16 %v113
  %v450 = vunpack.c.l.b16 %v114
  %v451 = vunpack.c.l.b16 %v115
  %v452 = vunpack.c.l.b16 %v116
  %v453 = vunpack.c.l.b16 %v117
  %v454 = vunpack.c.l.b16 %v118
  %v455 = vunpack.c.l.b16 %v119
  %v456 = vunpack.c.l.b16 %v120
  %v457 = vunpack.c.l.b16 %v121
  %v458 = vunpack.c.l.b16 %v122
  %v459 = vunpack.c.l.b16 %v123
  %v460 = vunpack.c.l.b16 %v124
  %v461 = vunpack.c.l.b16 %v125
  %v462 = vunpack.c.l.b16 %v126
  %v463 = vunpack.c.l.b16 %v127
  %v464 = vunpack.c.l.b16 %v128
  %v465 = vunpack.c.l.b16 %v129
  %v466 = vunpack.c.l.b16 %v130
  %v467 = vunpack.c.l.b16 %v131
  %v468 = vunpack.c.l.b16 %v132
  %v469 = vunpack.c.l.b16 %v133
  %v470 = vunpack.c.l.b16 %v134
  %v471 = vunpack.c.l.b16 %v135
  %v472 = vunpack.c.l.b16 %v136
  %v473 = vunpack.c.l.b16 %v137
  %v474 = vunpack.c.l.b16 %v138
  %v475 = vunpack.c.l.b16 %v139
  %v476 = vunpack.c.l.b16 %v140
  %v477 = vunpack.c.l.b16 %v141
  %v478 = vunpack.c.l.b16 %v142
  %v479 = vunpack.c.l.b16 %v143
  %v480 = vunpack.c.l.b16 %v144
  %v481 = vunpack.c.l.b16 %v145
  %v482 = vunpack.c.l.b16 %v146
  %v483 = vunpack.c.l.b16 %v147
  %v484 = vunpack.c.l.b16 %v148
  %v485 = vunpack.c.l.b16 %v149
  %v486 = vunpack.c.l.b16 %v150
  %v487 = vunpack.c.l.b16 %v151
  %v488 = vunpack.c.l.b16 %v152
  %v489 = vunpack.c.l.b16 %v153
  %v490 = vunpack.c.l.b16 %v154
  %v491 = vunpack.c.l.b16 %v155
  %v492 = vunpack.c.l.b16 %v156
  %v493 = vunpack.c.l.b16 %v157
  %v494 = vunpack.c.l.b16 %v158
  %v495 = vunpack.c.l.b16 %v159
  %v496 = vunpack.c.l.b16 %v160
  %v497 = vunpack.c.l.b16 %v161
  %v498 = vunpack.c.l.b16 %v162
  %v499 = vunpack.c.l.b16 %v163
  %v500 = vunpack.c.l.b16 %v164
  %v501 = vpack.c.b16 %v374, %v373
  %v502 = vpack.c.b16 %v376, %v375
  %v503 = vpack.c.b16 %v378, %v377
  %v504 = vpack.c.b16 %v380, %v379
  %v505 = vpack.c.b16 %v382, %v381
  %v506 = vpack.c.b16 %v384, %v383
  %v507 = vpack.c.b16 %v386, %v385
  %v508 = vpack.c.b16 %v388, %v387
  %v509 = vpack.c.b16 %v390, %v389
  %v510 = vpack.c.b16 %v392, %v391
  %v511 = vpack.c.b16 %v394, %v393
  %v512 = vpack.c.b16 %v396, %v395
  %v513 = vpack.c.b16 %v398, %v397
  %v514 = vpack.c.b16 %v400, %v399
  %v515 = vpack.c.b16 %v402, %v401
  %v516 = vpack.c.b16 %v404, %v403
  %v517 = vpack.c.b16 %v406, %v405
  %v518 = vpack.c.b16 %v408, %v407
  %v519 = vpack.c.b16 %v410, %v409
  %v520 = vpack.c.b16 %v412, %v411
  %v521 = vpack.c.b16 %v414, %v413
  %v522 = vpack.c.b16 %v416, %v415
  %v523 = vpack.c.b16 %v418, %v417
  %v524 = vpack.c.b16 %v420, %v419
  %v525 = vpack.c.b16 %v422, %v421
  %v526 = vpack.c.b16 %v424, %v423
  %v527 = vpack.c.b16 %v426, %v425
  %v528 = vpack.c.b16 %v428, %v427
  %v529 = vpack.c.b16 %v430, %v429
  %v530 = vpack.c.b16 %v432, %v431
  %v531 = vpack.c.b16 %v434, %v433
  %v532 = vpack.c.b16 %v436, %v435
  %v533 = vpack.c.b16 %v438, %v437
  %v534 = vpack.c.b16 %v440, %v439
  %v535 = vpack.c.b16 %v442, %v441
  %v536 = vpack.c.b16 %v444, %v443
  %v537 = vpack.c.b16 %v446, %v445
  %v538 = vpack.c.b16 %v448, %v447
  %v539 = vpack.c.b16 %v450, %v449
  %v540 = vpack.c.b16 %v452, %v451
  %v541 = vpack.c.b16 %v454, %v453
  %v542 = vpack.c.b16 %v456, %v455
  %v543 = vpack.c.b16 %v458, %v457
  %v544 = vpack.c.b16 %v460, %v459
  %v545 = vpack.c.b16 %v462, %v461
  %v546 = vpack.c.b16 %v464, %v463
  %v547 = vpack.c.b16 %v466, %v465
  %v548 = vpack.c.b16 %v468, %v467
  %v549 = vpack.c.b16 %v470, %v469
  %v550 = vpack.c.b16 %v472, %v471
  %v551 = vpack.c.b16 %v474, %v473
  %v552 = vpack.c.b16 %v476, %v475
  %v553 = vpack.c.b16 %v478, %v477
  %v554 = vpack.c.b16 %v480, %v479
  %v555 = vpack.c.b16 %v482, %v481
  %v556 = vpack.c.b16 %v484, %v483
  %v557 = vpack.c.b16 %v486, %v485
  %v558 = vpack.c.b16 %v488, %v487
  %v559 = vpack.c.b16 %v490, %v489
  %v560 = vpack.c.b16 %v492, %v491
  %v561 = vpack.c.b16 %v494, %v493
  %v562 = vpack.c.b16 %v496, %v495
  %v563 = vpack.c.b16 %v498, %v497
  %v564 = vpack.c.b16 %v500, %v499
  %629 = vmatprep.subr.bf16.mxu0 0
  %630 = vmatpush1.bf16.msra.mxu0 %v501
  %631 = vmatprep.subr.bf16.mxu0 0
  %632 = vmatpush1.bf16.msra.mxu0 %v502
  %633 = vmatprep.subr.bf16.mxu0 0
  %634 = vmatpush1.bf16.msra.mxu0 %v503
  %635 = vmatprep.subr.bf16.mxu0 0
  %636 = vmatpush1.bf16.msra.mxu0 %v504
  %637 = vmatprep.subr.bf16.mxu0 0
  %638 = vmatpush1.bf16.msra.mxu0 %v505
  %639 = vmatprep.subr.bf16.mxu0 0
  %640 = vmatpush1.bf16.msra.mxu0 %v506
  %641 = vmatprep.subr.bf16.mxu0 0
  %642 = vmatpush1.bf16.msra.mxu0 %v507
  %643 = vmatprep.subr.bf16.mxu0 0
  %644 = vmatpush1.bf16.msra.mxu0 %v508
  %645 = vmatprep.subr.bf16.mxu0 0
  %646 = vmatpush1.bf16.msra.mxu0 %v509
  %647 = vmatprep.subr.bf16.mxu0 0
  %648 = vmatpush1.bf16.msra.mxu0 %v510
  %649 = vmatprep.subr.bf16.mxu0 0
  %650 = vmatpush1.bf16.msra.mxu0 %v511
  %651 = vmatprep.subr.bf16.mxu0 0
  %652 = vmatpush1.bf16.msra.mxu0 %v512
  %653 = vmatprep.subr.bf16.mxu0 0
  %654 = vmatpush1.bf16.msra.mxu0 %v513
  %655 = vmatprep.subr.bf16.mxu0 0
  %656 = vmatpush1.bf16.msra.mxu0 %v514
  %657 = vmatprep.subr.bf16.mxu0 0
  %658 = vmatpush1.bf16.msra.mxu0 %v515
  %659 = vmatprep.subr.bf16.mxu0 0
  %660 = vmatpush1.bf16.msra.mxu0 %v516
  %661 = vmatprep.mubr.bf16.mxu0 %v214
  %662 = vmatmul.mubr.bf16.gmra.mrb[0].mxu0 %v213
  %v663 = vpop.f32.mrb[0].mxu0
  %v664 = vadd.f32 0.0, %v663
  %v665 = vpop.f32.mrb[0].mxu0
  %v666 = vpop.f32.mrb[0].mxu0
  %v667 = vadd.f32 0.0, %v666
  %v668 = vpop.f32.mrb[0].mxu0
  %669 = vmatprep.mubr.bf16.mxu0 %v222
  %670 = vmatmul.mubr.bf16.gmra.mrb[0].mxu0 %v221
  %v671 = vpop.f32.mrb[0].mxu0
  %v672 = vadd.f32 0.0, %v671
  %v673 = vpop.f32.mrb[0].mxu0
  %v674 = vpop.f32.mrb[0].mxu0
  %v675 = vadd.f32 0.0, %v674
  %v676 = vpop.f32.mrb[0].mxu0
  %677 = vdwg.mxu0
  %678 = vmatprep.subr.bf16.mxu0 0
  %679 = vmatpush1.bf16.msra.mxu0 %v517
  %680 = vmatprep.subr.bf16.mxu0 0
  %681 = vmatpush1.bf16.msra.mxu0 %v518
  %682 = vmatprep.subr.bf16.mxu0 0
  %683 = vmatpush1.bf16.msra.mxu0 %v519
  %684 = vmatprep.subr.bf16.mxu0 0
  %685 = vmatpush1.bf16.msra.mxu0 %v520
  %686 = vmatprep.subr.bf16.mxu0 0
  %687 = vmatpush1.bf16.msra.mxu0 %v521
  %688 = vmatprep.subr.bf16.mxu0 0
  %689 = vmatpush1.bf16.msra.mxu0 %v522
  %690 = vmatprep.subr.bf16.mxu0 0
  %691 = vmatpush1.bf16.msra.mxu0 %v523
  %692 = vmatprep.subr.bf16.mxu0 0
  %693 = vmatpush1.bf16.msra.mxu0 %v524
  %694 = vmatprep.subr.bf16.mxu0 0
  %695 = vmatpush1.bf16.msra.mxu0 %v525
  %696 = vmatprep.subr.bf16.mxu0 0
  %697 = vmatpush1.bf16.msra.mxu0 %v526
  %698 = vmatprep.subr.bf16.mxu0 0
  %699 = vmatpush1.bf16.msra.mxu0 %v527
  %700 = vmatprep.subr.bf16.mxu0 0
  %701 = vmatpush1.bf16.msra.mxu0 %v528
  %702 = vmatprep.subr.bf16.mxu0 0
  %703 = vmatpush1.bf16.msra.mxu0 %v529
  %704 = vmatprep.subr.bf16.mxu0 0
  %705 = vmatpush1.bf16.msra.mxu0 %v530
  %706 = vmatprep.subr.bf16.mxu0 0
  %707 = vmatpush1.bf16.msra.mxu0 %v531
  %708 = vmatprep.subr.bf16.mxu0 0
  %709 = vmatpush1.bf16.msra.mxu0 %v532
  %710 = vmatprep.mubr.bf16.mxu0 %v216
  %711 = vmatmul.mubr.bf16.gmra.mrb[0].mxu0 %v215
  %v712 = vpop.f32.mrb[0].mxu0
  %v713 = vadd.f32 %v664, %v712
  %v714 = vpop.f32.mrb[0].mxu0
  %v715 = vpop.f32.mrb[0].mxu0
  %v716 = vadd.f32 %v667, %v715
  %v717 = vpop.f32.mrb[0].mxu0
  %718 = vmatprep.mubr.bf16.mxu0 %v224
  %719 = vmatmul.mubr.bf16.gmra.mrb[0].mxu0 %v223
  %v720 = vpop.f32.mrb[0].mxu0
  %v721 = vadd.f32 %v672, %v720
  %v722 = vpop.f32.mrb[0].mxu0
  %v723 = vpop.f32.mrb[0].mxu0
  %v724 = vadd.f32 %v675, %v723
  %v725 = vpop.f32.mrb[0].mxu0
  %726 = vdwg.mxu0
  %727 = vmatprep.subr.bf16.mxu0 0
  %728 = vmatpush1.bf16.msra.mxu0 %v533
  %729 = vmatprep.subr.bf16.mxu0 0
  %730 = vmatpush1.bf16.msra.mxu0 %v534
  %731 = vmatprep.subr.bf16.mxu0 0
  %732 = vmatpush1.bf16.msra.mxu0 %v535
  %733 = vmatprep.subr.bf16.mxu0 0
  %734 = vmatpush1.bf16.msra.mxu0 %v536
  %735 = vmatprep.subr.bf16.mxu0 0
  %736 = vmatpush1.bf16.msra.mxu0 %v537
  %737 = vmatprep.subr.bf16.mxu0 0
  %738 = vmatpush1.bf16.msra.mxu0 %v538
  %739 = vmatprep.subr.bf16.mxu0 0
  %740 = vmatpush1.bf16.msra.mxu0 %v539
  %741 = vmatprep.subr.bf16.mxu0 0
  %742 = vmatpush1.bf16.msra.mxu0 %v540
  %743 = vmatprep.subr.bf16.mxu0 0
  %744 = vmatpush1.bf16.msra.mxu0 %v541
  %745 = vmatprep.subr.bf16.mxu0 0
  %746 = vmatpush1.bf16.msra.mxu0 %v542
  %747 = vmatprep.subr.bf16.mxu0 0
  %748 = vmatpush1.bf16.msra.mxu0 %v543
  %749 = vmatprep.subr.bf16.mxu0 0
  %750 = vmatpush1.bf16.msra.mxu0 %v544
  %751 = vmatprep.subr.bf16.mxu0 0
  %752 = vmatpush1.bf16.msra.mxu0 %v545
  %753 = vmatprep.subr.bf16.mxu0 0
  %754 = vmatpush1.bf16.msra.mxu0 %v546
  %755 = vmatprep.subr.bf16.mxu0 0
  %756 = vmatpush1.bf16.msra.mxu0 %v547
  %757 = vmatprep.subr.bf16.mxu0 0
  %758 = vmatpush1.bf16.msra.mxu0 %v548
  %759 = vmatprep.mubr.bf16.mxu0 %v218
  %760 = vmatmul.mubr.bf16.gmra.mrb[0].mxu0 %v217
  %v761 = vpop.f32.mrb[0].mxu0
  %v762 = vadd.f32 %v713, %v761
  %v763 = vpop.f32.mrb[0].mxu0
  %v764 = vpop.f32.mrb[0].mxu0
  %v765 = vadd.f32 %v716, %v764
  %v766 = vpop.f32.mrb[0].mxu0
  %767 = vmatprep.mubr.bf16.mxu0 %v226
  %768 = vmatmul.mubr.bf16.gmra.mrb[0].mxu0 %v225
  %v769 = vpop.f32.mrb[0].mxu0
  %v770 = vadd.f32 %v721, %v769
  %v771 = vpop.f32.mrb[0].mxu0
  %v772 = vpop.f32.mrb[0].mxu0
  %v773 = vadd.f32 %v724, %v772
  %v774 = vpop.f32.mrb[0].mxu0
  %775 = vdwg.mxu0
  %776 = vmatprep.subr.bf16.mxu0 0
  %777 = vmatpush1.bf16.msra.mxu0 %v549
  %778 = vmatprep.subr.bf16.mxu0 0
  %779 = vmatpush1.bf16.msra.mxu0 %v550
  %780 = vmatprep.subr.bf16.mxu0 0
  %781 = vmatpush1.bf16.msra.mxu0 %v551
  %782 = vmatprep.subr.bf16.mxu0 0
  %783 = vmatpush1.bf16.msra.mxu0 %v552
  %784 = vmatprep.subr.bf16.mxu0 0
  %785 = vmatpush1.bf16.msra.mxu0 %v553
  %786 = vmatprep.subr.bf16.mxu0 0
  %787 = vmatpush1.bf16.msra.mxu0 %v554
  %788 = vmatprep.subr.bf16.mxu0 0
  %789 = vmatpush1.bf16.msra.mxu0 %v555
  %790 = vmatprep.subr.bf16.mxu0 0
  %791 = vmatpush1.bf16.msra.mxu0 %v556
  %792 = vmatprep.subr.bf16.mxu0 0
  %793 = vmatpush1.bf16.msra.mxu0 %v557
  %794 = vmatprep.subr.bf16.mxu0 0
  %795 = vmatpush1.bf16.msra.mxu0 %v558
  %796 = vmatprep.subr.bf16.mxu0 0
  %797 = vmatpush1.bf16.msra.mxu0 %v559
  %798 = vmatprep.subr.bf16.mxu0 0
  %799 = vmatpush1.bf16.msra.mxu0 %v560
  %800 = vmatprep.subr.bf16.mxu0 0
  %801 = vmatpush1.bf16.msra.mxu0 %v561
  %802 = vmatprep.subr.bf16.mxu0 0
  %803 = vmatpush1.bf16.msra.mxu0 %v562
  %804 = vmatprep.subr.bf16.mxu0 0
  %805 = vmatpush1.bf16.msra.mxu0 %v563
  %806 = vmatprep.subr.bf16.mxu0 0
  %807 = vmatpush1.bf16.msra.mxu0 %v564
  %808 = vmatprep.mubr.bf16.mxu0 %v220
  %809 = vmatmul.mubr.bf16.gmra.mrb[0].mxu0 %v219
  %v810 = vpop.f32.mrb[0].mxu0
  %v811 = vadd.f32 %v762, %v810
  %v812 = vpop.f32.mrb[0].mxu0
  %v813 = vpop.f32.mrb[0].mxu0
  %v814 = vadd.f32 %v765, %v813
  %v815 = vpop.f32.mrb[0].mxu0
  %816 = vmatprep.mubr.bf16.mxu0 %v228
  %817 = vmatmul.mubr.bf16.gmra.mrb[0].mxu0 %v227
  %v818 = vpop.f32.mrb[0].mxu0
  %v819 = vadd.f32 %v770, %v818
  %v820 = vpop.f32.mrb[0].mxu0
  %v821 = vpop.f32.mrb[0].mxu0
  %v822 = vadd.f32 %v773, %v821
  %v823 = vpop.f32.mrb[0].mxu0
  %824 = vdwg.mxu0
  %v825 = vld [vmem:[%s2] sm:$0x1]
  %v827 = vlaneseq
  %v828 = vshrl.u32 %v827, 7
  %v829 = vsub.s32 0, %v828
  %v830 = vrot.slane %v825, %v829
  %v832 = vmul.f32 %v811, %v830
  %v833 = vmul.f32 %v814, %v830
  %v834 = vmul.f32 %v819, %v830
  %v835 = vmul.f32 %v822, %v830
  %v836 = vld [vmem:[%s3] sm:$0x1]
  %v838 = vlaneseq
  %v839 = vshrl.u32 %v838, 7
  %v840 = vsub.s32 0, %v839
  %v841 = vrot.slane %v836, %v840
  %v843 = vadd.f32 %v832, %v841
  %v844 = vadd.f32 %v833, %v841
  %v845 = vadd.f32 %v834, %v841
  %v846 = vadd.f32 %v835, %v841
  %v847 = vpack.c.bf16 %v844, %v843
  %v848 = vpack.c.bf16 %v846, %v845
  %v851 = vunpack.c.l.b16 %v847
  %v852 = vunpack.c.h.b16 %v847
  %v853 = vunpack.c.l.b16 %v848
  %v854 = vunpack.c.h.b16 %v848
  %v855 = vpack.c.b16 %v851, %v851
  %v856 = vpack.c.b16 %v852, %v852
  %v857 = vpack.c.b16 %v853, %v853
  %v858 = vpack.c.b16 %v854, %v854
  %863 = vst [vmem:[%s4] sm:$0xf] %v855
  %864 = vst [vmem:[%s4 + $0x4] sm:$0xf] %v856
  %865 = vst [vmem:[%s4 + $0x8] sm:$0xf] %v857
  %866 = vst [vmem:[%s4 + $0xc] sm:$0xf] %v858
  %v867 = vadd.f32 %v843, %v844
  %v868 = vadd.f32 %v867, %v845
  %v869 = vadd.f32 %v868, %v846
  %v870 = vrot.slane %v869, 4
  %v871 = vadd.f32 %v869, %v870
  %v872 = vrot.slane %v871, 2
  %v873 = vadd.f32 %v871, %v872
  %v874 = vrot.slane %v873, 1
  %v875 = vadd.f32 %v873, %v874
  %v876 = vmul.f32 %v843, %v843
  %v877 = vmul.f32 %v844, %v844
  %v878 = vmul.f32 %v845, %v845
  %v879 = vmul.f32 %v846, %v846
  %v880 = vadd.f32 %v876, %v877
  %v881 = vadd.f32 %v880, %v878
  %v882 = vadd.f32 %v881, %v879
  %v883 = vrot.slane %v882, 4
  %v884 = vadd.f32 %v882, %v883
  %v885 = vrot.slane %v884, 2
  %v886 = vadd.f32 %v884, %v885
  %v887 = vrot.slane %v886, 1
  %v888 = vadd.f32 %v886, %v887
  %p889 = scmp.eq.s32.totalorder 0, 0
  // Predicated region
  $region18: #{_lambda_.15} parent=0 // pred_check
    %p890 = pneg %p889
  $region19: #{_lambda_.15} parent=0 // pred_check_branch
    %892 = sbr.rel (%p890) target = $region21
  $region20: #{_lambda_.15} parent=0 // pred_region
    %893 = vst [vmem:[%s5] sm:$0x1] %v875
    %894 = vst [vmem:[%s6] sm:$0x1] %v888
  $region21: #{_lambda_.15} parent=0 // pred_fallthru
    _
  %p895 = scmp.gt.s32.totalorder 0, 0
  // Predicated region
  $region22: #{_lambda_.15} parent=0 // pred_check
    %p896 = pneg %p895
  $region23: #{_lambda_.15} parent=0 // pred_check_branch
    %898 = sbr.rel (%p896) target = $region25
  $region24: #{_lambda_.15} parent=0 // pred_region
    %v899 = vld [vmem:[%s5] sm:$0x1]
    %v900 = vadd.f32 %v899, %v875
    %901 = vst [vmem:[%s5] sm:$0x1] %v900
    %v902 = vld [vmem:[%s6] sm:$0x1]
    %v903 = vadd.f32 %v902, %v888
    %904 = vst [vmem:[%s6] sm:$0x1] %v903
  $region25: #{_lambda_.15} parent=0 // pred_fallthru
    _
  // Predicated region
  $region26: #{_lambda_.15} parent=0 // pred_check
    _
  $region27: #{_lambda_.15} parent=0 // pred_check_branch
    %906 = sbr.rel (0) target = $region29
  $region28: #{_lambda_.15} parent=0 // pred_region
    _
  $region29: #{_lambda_.15} parent=0 // pred_fallthru
    _
  // Predicated region
  $region30: #{_lambda_.15} parent=0 // pred_check
    _
  $region31: #{_lambda_.15} parent=0 // pred_check_branch
    %908 = sbr.rel (0) target = $region33
  $region32: #{_lambda_.15} parent=0 // pred_region
    _
  $region33: #{_lambda_.15} parent=0 // pred_fallthru
    _
  // Predicated region
  $region34: #{_lambda_.15} parent=0 // pred_check
    _
  $region35: #{_lambda_.15} parent=0 // pred_check_branch
    %910 = sbr.rel (0) target = $region37
  $region36: #{_lambda_.15} parent=0 // pred_region
    _
  $region37: #{_lambda_.15} parent=0 // pred_fallthru
    _
  // Predicated region
  $region38: #{_lambda_.15} parent=0 // pred_check
    _
  $region39: #{_lambda_.15} parent=0 // pred_check_branch
    %912 = sbr.rel (0) target = $region41
  $region40: #{_lambda_.15} parent=0 // pred_region
    _
  $region41: #{_lambda_.15} parent=0 // pred_fallthru
    _
  // Predicated region
  $region42: #{_lambda_.15} parent=0 // pred_check
    _
  $region43: #{_lambda_.15} parent=0 // pred_check_branch
    %914 = sbr.rel (0) target = $region45
  $region44: #{_lambda_.15} parent=0 // pred_region
    _
  $region45: #{_lambda_.15} parent=0 // pred_fallthru
    _
  // Predicated region
  $region46: #{_lambda_.15} parent=0 // pred_check
    _
  $region47: #{_lambda_.15} parent=0 // pred_check_branch
    %916 = sbr.rel (0) target = $region49
  $region48: #{_lambda_.15} parent=0 // pred_region
    _
  $region49: #{_lambda_.15} parent=0 // pred_fallthru
    _

// kernel: _lambda_.18
$region0: #{_lambda_.18}
  #allocation0 [shape = 'u32[]', space=smem, size = 0x4, offset = 0x4, fixed_abs, tag = 'smem constant byte address 0x4 - core index']
  #allocation1 [shape = 'u32[144,128]{1,0:T(1,128)}', space=vmem, size = 0x12000, scoped, tag = 'internal scratch']
  %s0 = inlined_call_operand.vmem [shape: bf16[2,4,256], index: 0, kind: input, shape index: {}]
  %s1 = inlined_call_operand.vmem [shape: f32[2,1,256], index: 1, kind: input, shape index: {}]
  %s2 = inlined_call_operand.vmem [shape: f32[2,1,256], index: 2, kind: input, shape index: {}]
  %s3 = inlined_call_operand.vmem [shape: bf16[2,4,256], index: 3, kind: output, shape index: {}]
  %s4 = sld [smem:[#allocation0]]
  $region45: #{_lambda_.18} parent=0
    _
  %s6 = ssub.s32 1, %s4
  %s7 = scalar_select 0, %s6, %s4
  loop: start=0, step=1, limit=4
  $region2: #{_lambda_.18} parent=0 // loop_pre_header
    _
  $region3: #{_lambda_.18} parent=0 // loop_header
    %s9 = sphi 0, %s13
    %p10 = scmp.ge.s32.totalorder %s9, 4
    %s16 = sphi 0, %s28
    %s17 = sphi 0, %s24
    %s18 = sphi 0, %s16
    %s19 = sphi 0, %s17
    %s20 = sphi 0, %s18
    %s21 = sphi 0, %s19
    %s33 = sphi 0, %s35
    %s36 = sphi 0, %s33
    %s37 = sphi 0, %s36
    %s53 = sphi 0, %s37
    %s59 = sphi 0, %s61
    %s62 = sphi 0, %s59
    %s63 = sphi 0, %s62
    %s79 = sphi 0, %s63
    %s85 = sphi 0, %s87
    %s88 = sphi 0, %s85
    %s89 = sphi 0, %s88
    %s105 = sphi 0, %s89
    %s113 = sphi 0, %s115
    %s116 = sphi 0, %s113
    %s117 = sphi 0, %s116
    %s133 = sphi 0, %s117
  $region4: #{_lambda_.18} parent=0 // loop_header_branch
    %12 = sbr.rel (%p10) target = $region8
  $region5: #{_lambda_.18} parent=0 // loop_body
    %s14 = ssub.s32 %s9, 1
    %s15 = ssub.s32 %s9, 2
    %s22 = sadd.s32 1, %s17
    %p23 = scmp.ge.s32.totalorder %s22, 1
    %s24 = scalar_select %p23, 0, %s22
    %s25 = sadd.s32 1, %s16
    %s26 = scalar_select %p23, %s25, %s16
    %p27 = scmp.ge.s32.totalorder %s26, 2
    %s28 = scalar_select %p27, 0, %s26
    %s29 = ssub.s32 %s16, %s28
    %s30 = ssub.s32 %s17, %s24
    %s31 = sor.u32 %s29, %s30
    %p32 = scmp.eq.s32.totalorder %s31, 0
    %s34 = sadd.s32 %s33, 1
    %s35 = scalar_select %p32, %s33, %s34
    %p38 = pneg %p32
    %p39 = scmp.eq.s32.totalorder %s9, 1
    %p40 = por %p38, %p39
    %p41 = scmp.ne.s32.totalorder %s33, %s36
    %p42 = scmp.eq.s32.totalorder %s9, 0
    %p43 = por %p41, %p42
    %p44 = scmp.ne.s32.totalorder %s33, %s36
    %p45 = scmp.eq.s32.totalorder %s14, 1
    %p46 = por %p44, %p45
    %p47 = scmp.ne.s32.totalorder %s36, %s37
    %p48 = scmp.eq.s32.totalorder %s14, 0
    %p49 = por %p47, %p48
    %p50 = scmp.ne.s32.totalorder %s36, %s37
    %p51 = scmp.eq.s32.totalorder %s15, 1
    %p52 = por %p50, %p51
    %p54 = scmp.ne.s32.totalorder %s37, %s53
    %p55 = scmp.eq.s32.totalorder %s15, 0
    %p56 = por %p54, %p55
    %s57 = ssub.s32 %s16, %s28
    %p58 = scmp.eq.s32.totalorder %s57, 0
    %s60 = sadd.s32 %s59, 1
    %s61 = scalar_select %p58, %s59, %s60
    %p64 = pneg %p58
    %p65 = scmp.eq.s32.totalorder %s9, 1
    %p66 = por %p64, %p65
    %p67 = scmp.ne.s32.totalorder %s59, %s62
    %p68 = scmp.eq.s32.totalorder %s9, 0
    %p69 = por %p67, %p68
    %p70 = scmp.ne.s32.totalorder %s59, %s62
    %p71 = scmp.eq.s32.totalorder %s14, 1
    %p72 = por %p70, %p71
    %p73 = scmp.ne.s32.totalorder %s62, %s63
    %p74 = scmp.eq.s32.totalorder %s14, 0
    %p75 = por %p73, %p74
    %p76 = scmp.ne.s32.totalorder %s62, %s63
    %p77 = scmp.eq.s32.totalorder %s15, 1
    %p78 = por %p76, %p77
    %p80 = scmp.ne.s32.totalorder %s63, %s79
    %p81 = scmp.eq.s32.totalorder %s15, 0
    %p82 = por %p80, %p81
    %s83 = ssub.s32 %s16, %s28
    %p84 = scmp.eq.s32.totalorder %s83, 0
    %s86 = sadd.s32 %s85, 1
    %s87 = scalar_select %p84, %s85, %s86
    %p90 = pneg %p84
    %p91 = scmp.eq.s32.totalorder %s9, 1
    %p92 = por %p90, %p91
    %p93 = scmp.ne.s32.totalorder %s85, %s88
    %p94 = scmp.eq.s32.totalorder %s9, 0
    %p95 = por %p93, %p94
    %p96 = scmp.ne.s32.totalorder %s85, %s88
    %p97 = scmp.eq.s32.totalorder %s14, 1
    %p98 = por %p96, %p97
    %p99 = scmp.ne.s32.totalorder %s88, %s89
    %p100 = scmp.eq.s32.totalorder %s14, 0
    %p101 = por %p99, %p100
    %p102 = scmp.ne.s32.totalorder %s88, %s89
    %p103 = scmp.eq.s32.totalorder %s15, 1
    %p104 = por %p102, %p103
    %p106 = scmp.ne.s32.totalorder %s89, %s105
    %p107 = scmp.eq.s32.totalorder %s15, 0
    %p108 = por %p106, %p107
    %s109 = ssub.s32 %s16, %s28
    %s110 = ssub.s32 %s17, %s24
    %s111 = sor.u32 %s109, %s110
    %p112 = scmp.eq.s32.totalorder %s111, 0
    %s114 = sadd.s32 %s113, 1
    %s115 = scalar_select %p112, %s113, %s114
    %p118 = pneg %p112
    %p119 = scmp.eq.s32.totalorder %s9, 1
    %p120 = por %p118, %p119
    %p121 = scmp.ne.s32.totalorder %s113, %s116
    %p122 = scmp.eq.s32.totalorder %s9, 0
    %p123 = por %p121, %p122
    %p124 = scmp.ne.s32.totalorder %s113, %s116
    %p125 = scmp.eq.s32.totalorder %s14, 1
    %p126 = por %p124, %p125
    %p127 = scmp.ne.s32.totalorder %s116, %s117
    %p128 = scmp.eq.s32.totalorder %s14, 0
    %p129 = por %p127, %p128
    %p130 = scmp.ne.s32.totalorder %s116, %s117
    %p131 = scmp.eq.s32.totalorder %s15, 1
    %p132 = por %p130, %p131
    %p134 = scmp.ne.s32.totalorder %s117, %s133
    %p135 = scmp.eq.s32.totalorder %s15, 0
    %p136 = por %p134, %p135
    %p137 = scmp.le.s32.totalorder 1, %s9
    %p138 = scmp.lt.s32.totalorder %s9, 3
    %p139 = pnand %p137, %p138
    %p140 = pneg %p139
    // Predicated region
    $region9: #{_lambda_.18} parent=5 // pred_check
      _
    $region10: #{_lambda_.18} parent=5 // pred_check_branch
      %142 = sbr.rel (%p139) target = $region12
    $region11: #{_lambda_.18} parent=5 // pred_region
      %s143 = ssub.s32 %s9, 1
    $region12: #{_lambda_.18} parent=5 // pred_fallthru
      _
    %p144 = scmp.lt.s32.totalorder %s9, 2
    // Predicated region
    $region13: #{_lambda_.18} parent=5 // pred_check
      %p145 = pneg %p144
    $region14: #{_lambda_.18} parent=5 // pred_check_branch
      %147 = sbr.rel (%p145) target = $region16
    $region15: #{_lambda_.18} parent=5 // pred_region
      // Predicated region
      $region17: #{_lambda_.18} parent=15 // pred_check
        %p148 = pneg %p43
      $region18: #{_lambda_.18} parent=15 // pred_check_branch
        %150 = sbr.rel (%p148) target = $region20
      $region19: #{_lambda_.18} parent=15 // pred_region
        %p151 = scmp.lt.s32.totalorder %s16, 1
        %s152 = scalar_select %p151, %s16, 1
        %p153 = scmp.lt.s32.totalorder %s17, 0
        %s154 = scalar_select %p153, %s17, 0
        %s155 = smul.addr %s154, 2
        %s156 = smul.addr %s152, 2
        %s157 = sadd.s32 %s155, %s156
        %s158 = smul.addr %s157, 2
        %s159 = scalar_lea.vmem %s0, %s158
      $region20: #{_lambda_.18} parent=15 // pred_fallthru
        _
      // Predicated region
      $region21: #{_lambda_.18} parent=15 // pred_check
        %p160 = pneg %p69
      $region22: #{_lambda_.18} parent=15 // pred_check_branch
        %162 = sbr.rel (%p160) target = $region24
      $region23: #{_lambda_.18} parent=15 // pred_region
        %p163 = scmp.lt.s32.totalorder %s16, 1
        %s164 = scalar_select %p163, %s16, 1
        %s165 = smul.addr %s164, 2
        %s166 = scalar_lea.vmem %s1, %s165
      $region24: #{_lambda_.18} parent=15 // pred_fallthru
        _
      // Predicated region
      $region25: #{_lambda_.18} parent=15 // pred_check
        %p167 = pneg %p95
      $region26: #{_lambda_.18} parent=15 // pred_check_branch
        %169 = sbr.rel (%p167) target = $region28
      $region27: #{_lambda_.18} parent=15 // pred_region
        %p170 = scmp.lt.s32.totalorder %s16, 1
        %s171 = scalar_select %p170, %s16, 1
        %s172 = smul.addr %s171, 2
        %s173 = scalar_lea.vmem %s2, %s172
      $region28: #{_lambda_.18} parent=15 // pred_fallthru
        _
    $region16: #{_lambda_.18} parent=5 // pred_fallthru
      _
    %p174 = scmp.le.s32.totalorder 1, %s9
    %p175 = scmp.lt.s32.totalorder %s9, 3
    %p176 = pnand %p174, %p175
    %p177 = pneg %p176
    // Predicated region
    $region29: #{_lambda_.18} parent=5 // pred_check
      _
    $region30: #{_lambda_.18} parent=5 // pred_check_branch
      %179 = sbr.rel (%p176) target = $region32
    $region31: #{_lambda_.18} parent=5 // pred_region
      %s180 = ssub.s32 %s9, 1
      %p181 = scmp.lt.s32.totalorder %s18, 1
      %s182 = scalar_select %p181, %s18, 1
      %p183 = scmp.lt.s32.totalorder %s19, 0
      %s184 = scalar_select %p183, %s19, 0
      %s185 = smul.addr %s184, 2
      %s186 = smul.addr %s182, 2
      %s187 = sadd.s32 %s185, %s186
      %s188 = smul.addr %s187, 2
      %s189 = scalar_lea.vmem %s0, %s188
      %p190 = pneg %p49
      %p191 = pneg %p46
      %p192 = scmp.lt.s32.totalorder %s18, 1
      %s193 = scalar_select %p192, %s18, 1
      %s194 = smul.addr %s193, 2
      %s195 = scalar_lea.vmem %s1, %s194
      %p196 = pneg %p75
      %p197 = pneg %p72
      %p198 = scmp.lt.s32.totalorder %s18, 1
      %s199 = scalar_select %p198, %s18, 1
      %s200 = smul.addr %s199, 2
      %s201 = scalar_lea.vmem %s2, %s200
      %p202 = pneg %p101
      %p203 = pneg %p98
      %p204 = pneg %p129
      %p205 = pneg %p126
      %p206 = scmp.lt.s32.totalorder %s18, 1
      %s207 = scalar_select %p206, %s18, 1
      %p208 = scmp.lt.s32.totalorder %s19, 0
      %s209 = scalar_select %p208, %s19, 0
      %s210 = smul.addr %s209, 2
      %s211 = smul.addr %s207, 2
      %s212 = sadd.s32 %s210, %s211
      %s213 = smul.addr %s212, 2
      %s214 = scalar_lea.vmem %s3, %s213
      %p215 = scmp.lt.s32.totalorder %s18, 1
      %s216 = scalar_select %p215, %s18, 1
      %p217 = scmp.lt.s32.totalorder %s19, 0
      %s218 = scalar_select %p217, %s19, 0
      %s219 = smul.addr %s218, 2
      %s220 = smul.addr %s216, 2
      %s221 = sadd.s32 %s219, %s220
      %s222 = smul.addr %s221, 2
      %s223 = scalar_lea.vmem %s0, %s222
      %p224 = scmp.lt.s32.totalorder %s18, 1
      %s225 = scalar_select %p224, %s18, 1
      %s226 = smul.addr %s225, 2
      %s227 = scalar_lea.vmem %s1, %s226
      %p228 = scmp.lt.s32.totalorder %s18, 1
      %s229 = scalar_select %p228, %s18, 1
      %s230 = smul.addr %s229, 2
      %s231 = scalar_lea.vmem %s2, %s230
      %p232 = scmp.lt.s32.totalorder %s18, 1
      %s233 = scalar_select %p232, %s18, 1
      %p234 = scmp.lt.s32.totalorder %s19, 0
      %s235 = scalar_select %p234, %s19, 0
      %s236 = smul.addr %s235, 2
      %s237 = smul.addr %s233, 2
      %s238 = sadd.s32 %s236, %s237
      %s239 = smul.addr %s238, 2
      %s240 = scalar_lea.vmem %s3, %s239
      %v241 = vld [vmem:[%s223] sm:$0xf]
      %v242 = vunpack.c.l.bf16 %v241
      %v243 = vld [vmem:[%s227] sm:$0x3]
      %v245 = vlaneseq
      %v246 = vshrl.u32 %v245, 7
      %v247 = vsub.s32 0, %v246
      %v248 = vrot.slane %v243, %v247
      %v249 = vlaneseq
      %v250 = vshrl.u32 %v249, 7
      %v251 = vsub.s32 1, %v250
      %v252 = vrot.slane %v243, %v251
      %v253 = vcombine.low %v248, %v252
      %v255 = vmul.f32 %v242, %v253
      %v256 = vld [vmem:[%s231] sm:$0x3]
      %v258 = vlaneseq
      %v259 = vshrl.u32 %v258, 7
      %v260 = vsub.s32 0, %v259
      %v261 = vrot.slane %v256, %v260
      %v262 = vlaneseq
      %v263 = vshrl.u32 %v262, 7
      %v264 = vsub.s32 1, %v263
      %v265 = vrot.slane %v256, %v264
      %v266 = vcombine.low %v261, %v265
      %v268 = vadd.f32 %v255, %v266
      %vm269 = vcmp.ge.f32.partialorder %v268, 0.0
      %v270 = vmul.f32 %v268, 0.2
      %v271 = vsel %vm269, %v268, %v270
      %v273 = vcombine.high %v271, %v271
      %v275 = vpack.c.bf16 %v271, %v271
      %v276 = vpack.c.bf16 %v273, %v273
      %v279 = vcombine.low %v275, %v276
      %v281 = vunpack.c.l.s4 1983009808
      %v282 = vunpack.c.0.s8 %v281
      %v283 = vlaneseq
      %v284 = vshrl.u32 %v283, 7
      %v285 = vsub.s32 %v282, %v284
      %v286 = vrot.slane %v279, %v285
      %288 = vst [vmem:[%s240] sm:$0xf] %v286
      %p289 = scmp.lt.s32.totalorder %s18, 1
      %s290 = scalar_select %p289, %s18, 1
      %p291 = scmp.lt.s32.totalorder %s19, 0
      %s292 = scalar_select %p291, %s19, 0
      %s293 = smul.addr %s292, 2
      %s294 = smul.addr %s290, 2
      %s295 = sadd.s32 %s293, %s294
      %s296 = smul.addr %s295, 2
      %s297 = scalar_lea.vmem %s3, %s296
      // Predicated region
      $region33: #{_lambda_.18} parent=31 // pred_check
        %p298 = pneg %p126
      $region34: #{_lambda_.18} parent=31 // pred_check_branch
        %300 = sbr.rel (%p298) target = $region36
      $region35: #{_lambda_.18} parent=31 // pred_region
        _
      $region36: #{_lambda_.18} parent=31 // pred_fallthru
        _
    $region32: #{_lambda_.18} parent=5 // pred_fallthru
      _
    %p301 = scmp.le.s32.totalorder 2, %s9
    // Predicated region
    $region37: #{_lambda_.18} parent=5 // pred_check
      %p302 = pneg %p301
    $region38: #{_lambda_.18} parent=5 // pred_check_branch
      %304 = sbr.rel (%p302) target = $region40
    $region39: #{_lambda_.18} parent=5 // pred_region
      %s305 = ssub.s32 %s9, 2
      // Predicated region
      $region41: #{_lambda_.18} parent=39 // pred_check
        %p306 = pneg %p132
      $region42: #{_lambda_.18} parent=39 // pred_check_branch
        %308 = sbr.rel (%p306) target = $region44
      $region43: #{_lambda_.18} parent=39 // pred_region
        %p309 = scmp.lt.s32.totalorder %s20, 1
        %s310 = scalar_select %p309, %s20, 1
        %p311 = scmp.lt.s32.totalorder %s21, 0
        %s312 = scalar_select %p311, %s21, 0
        %s313 = smul.addr %s312, 2
        %s314 = smul.addr %s310, 2
        %s315 = sadd.s32 %s313, %s314
        %s316 = smul.addr %s315, 2
        %s317 = scalar_lea.vmem %s3, %s316
      $region44: #{_lambda_.18} parent=39 // pred_fallthru
        _
    $region40: #{_lambda_.18} parent=5 // pred_fallthru
      _
  $region6: #{_lambda_.18} parent=0 // loop_footer
    %s13 = sadd.s32 1, %s9
  $region7: #{_lambda_.18} parent=0 // loop_footer_branch
    %8 = sbr.rel target = $region3
  $region8: #{_lambda_.18} parent=0 // loop_exit
    _

// kernel: _lambda_.17
$region0: #{_lambda_.17}
  #allocation0 [shape = 'u32[]', space=smem, size = 0x4, offset = 0x4, fixed_abs, tag = 'smem constant byte address 0x4 - core index']
  #allocation1 [shape = 'u32[144,128]{1,0:T(1,128)}', space=vmem, size = 0x12000, scoped, tag = 'internal scratch']
  %s0 = inlined_call_operand.vmem [shape: bf16[16,2048], index: 0, kind: input, shape index: {}]
  %s1 = inlined_call_operand.vmem [shape: bf16[2048,256], index: 1, kind: input, shape index: {}]
  %s2 = inlined_call_operand.vmem [shape: f32[1,256], index: 2, kind: input, shape index: {}]
  %s3 = inlined_call_operand.vmem [shape: f32[1,256], index: 3, kind: input, shape index: {}]
  %s4 = inlined_call_operand.vmem [shape: bf16[16,256], index: 4, kind: output, shape index: {0}]
  %s5 = inlined_call_operand.vmem [shape: f32[1,256], index: 5, kind: output, shape index: {1}]
  %s6 = inlined_call_operand.vmem [shape: f32[1,256], index: 6, kind: output, shape index: {2}]
  %7 = xla_tuple %s4, %s5, %s6
  %s8 = sld [smem:[#allocation0]]
  $region151: #{_lambda_.17} parent=0
    _
  %s10 = ssub.s32 1, %s8
  %s11 = scalar_select 0, %s10, %s8
  $region1: #{_lambda_.17} parent=0
    #allocation2 [shape = 'u8[1048576]{0}', space=vmem, size = 0x100000, scoped, tag = 'input window, operand 1']
    #allocation3 [shape = 'u8[8192]{0}', space=vmem, size = 0x2000, scoped, tag = 'output window, operand 0']
    loop: start=0, step=1, limit=4
    $region2: #{_lambda_.17} parent=1 // loop_pre_header
      _
    $region3: #{_lambda_.17} parent=1 // loop_header
      %s13 = sphi 0, %s17
      %p14 = scmp.ge.s32.totalorder %s13, 4
      %s20 = sphi 0, %s32
      %s21 = sphi 0, %s28
      %s22 = sphi 0, %s20
      %s23 = sphi 0, %s21
      %s24 = sphi 0, %s22
      %s25 = sphi 0, %s23
      %s35 = sphi 0, %s37
      %s38 = sphi 0, %s35
      %s39 = sphi 0, %s38
      %s55 = sphi 0, %s39
      %s61 = sphi 0, %s63
      %s64 = sphi 0, %s61
      %s65 = sphi 0, %s64
      %s81 = sphi 0, %s65
      %s87 = sphi 0, %s89
      %s90 = sphi 0, %s87
      %s91 = sphi 0, %s90
      %s107 = sphi 0, %s91
      %s113 = sphi 0, %s115
      %s116 = sphi 0, %s113
      %s117 = sphi 0, %s116
      %s133 = sphi 0, %s117
      %s141 = sphi 0, %s143
      %s144 = sphi 0, %s141
      %s145 = sphi 0, %s144
      %s161 = sphi 0, %s145
      %s167 = sphi 0, %s169
      %s170 = sphi 0, %s167
      %s171 = sphi 0, %s170
      %s187 = sphi 0, %s171
      %s193 = sphi 0, %s195
      %s196 = sphi 0, %s193
      %s197 = sphi 0, %s196
      %s213 = sphi 0, %s197
    $region4: #{_lambda_.17} parent=1 // loop_header_branch
      %16 = sbr.rel (%p14) target = $region8
    $region5: #{_lambda_.17} parent=1 // loop_body
      %s18 = ssub.s32 %s13, 1
      %s19 = ssub.s32 %s13, 2
      %s26 = sadd.s32 1, %s21
      %p27 = scmp.ge.s32.totalorder %s26, 1
      %s28 = scalar_select %p27, 0, %s26
      %s29 = sadd.s32 1, %s20
      %s30 = scalar_select %p27, %s29, %s20
      %p31 = scmp.ge.s32.totalorder %s30, 2
      %s32 = scalar_select %p31, 0, %s30
      %s33 = ssub.s32 %s21, %s28
      %p34 = scmp.eq.s32.totalorder %s33, 0
      %s36 = sadd.s32 %s35, 1
      %s37 = scalar_select %p34, %s35, %s36
      %p40 = pneg %p34
      %p41 = scmp.eq.s32.totalorder %s13, 1
      %p42 = por %p40, %p41
      %p43 = scmp.ne.s32.totalorder %s35, %s38
      %p44 = scmp.eq.s32.totalorder %s13, 0
      %p45 = por %p43, %p44
      %p46 = scmp.ne.s32.totalorder %s35, %s38
      %p47 = scmp.eq.s32.totalorder %s18, 1
      %p48 = por %p46, %p47
      %p49 = scmp.ne.s32.totalorder %s38, %s39
      %p50 = scmp.eq.s32.totalorder %s18, 0
      %p51 = por %p49, %p50
      %p52 = scmp.ne.s32.totalorder %s38, %s39
      %p53 = scmp.eq.s32.totalorder %s19, 1
      %p54 = por %p52, %p53
      %p56 = scmp.ne.s32.totalorder %s39, %s55
      %p57 = scmp.eq.s32.totalorder %s19, 0
      %p58 = por %p56, %p57
      %s59 = ssub.s32 %s20, %s32
      %p60 = scmp.eq.s32.totalorder %s59, 0
      %s62 = sadd.s32 %s61, 1
      %s63 = scalar_select %p60, %s61, %s62
      %p66 = pneg %p60
      %p67 = scmp.eq.s32.totalorder %s13, 1
      %p68 = por %p66, %p67
      %p69 = scmp.ne.s32.totalorder %s61, %s64
      %p70 = scmp.eq.s32.totalorder %s13, 0
      %p71 = por %p69, %p70
      %p72 = scmp.ne.s32.totalorder %s61, %s64
      %p73 = scmp.eq.s32.totalorder %s18, 1
      %p74 = por %p72, %p73
      %p75 = scmp.ne.s32.totalorder %s64, %s65
      %p76 = scmp.eq.s32.totalorder %s18, 0
      %p77 = por %p75, %p76
      %p78 = scmp.ne.s32.totalorder %s64, %s65
      %p79 = scmp.eq.s32.totalorder %s19, 1
      %p80 = por %p78, %p79
      %p82 = scmp.ne.s32.totalorder %s65, %s81
      %p83 = scmp.eq.s32.totalorder %s19, 0
      %p84 = por %p82, %p83
      %s85 = ssub.s32 %s20, %s32
      %p86 = scmp.eq.s32.totalorder %s85, 0
      %s88 = sadd.s32 %s87, 1
      %s89 = scalar_select %p86, %s87, %s88
      %p92 = pneg %p86
      %p93 = scmp.eq.s32.totalorder %s13, 1
      %p94 = por %p92, %p93
      %p95 = scmp.ne.s32.totalorder %s87, %s90
      %p96 = scmp.eq.s32.totalorder %s13, 0
      %p97 = por %p95, %p96
      %p98 = scmp.ne.s32.totalorder %s87, %s90
      %p99 = scmp.eq.s32.totalorder %s18, 1
      %p100 = por %p98, %p99
      %p101 = scmp.ne.s32.totalorder %s90, %s91
      %p102 = scmp.eq.s32.totalorder %s18, 0
      %p103 = por %p101, %p102
      %p104 = scmp.ne.s32.totalorder %s90, %s91
      %p105 = scmp.eq.s32.totalorder %s19, 1
      %p106 = por %p104, %p105
      %p108 = scmp.ne.s32.totalorder %s91, %s107
      %p109 = scmp.eq.s32.totalorder %s19, 0
      %p110 = por %p108, %p109
      %s111 = ssub.s32 %s20, %s32
      %p112 = scmp.eq.s32.totalorder %s111, 0
      %s114 = sadd.s32 %s113, 1
      %s115 = scalar_select %p112, %s113, %s114
      %p118 = pneg %p112
      %p119 = scmp.eq.s32.totalorder %s13, 1
      %p120 = por %p118, %p119
      %p121 = scmp.ne.s32.totalorder %s113, %s116
      %p122 = scmp.eq.s32.totalorder %s13, 0
      %p123 = por %p121, %p122
      %p124 = scmp.ne.s32.totalorder %s113, %s116
      %p125 = scmp.eq.s32.totalorder %s18, 1
      %p126 = por %p124, %p125
      %p127 = scmp.ne.s32.totalorder %s116, %s117
      %p128 = scmp.eq.s32.totalorder %s18, 0
      %p129 = por %p127, %p128
      %p130 = scmp.ne.s32.totalorder %s116, %s117
      %p131 = scmp.eq.s32.totalorder %s19, 1
      %p132 = por %p130, %p131
      %p134 = scmp.ne.s32.totalorder %s117, %s133
      %p135 = scmp.eq.s32.totalorder %s19, 0
      %p136 = por %p134, %p135
      %s137 = ssub.s32 %s21, %s28
      %s138 = ssub.s32 %s20, %s32
      %s139 = sor.u32 %s137, %s138
      %p140 = scmp.eq.s32.totalorder %s139, 0
      %s142 = sadd.s32 %s141, 1
      %s143 = scalar_select %p140, %s141, %s142
      %p146 = pneg %p140
      %p147 = scmp.eq.s32.totalorder %s13, 1
      %p148 = por %p146, %p147
      %p149 = scmp.ne.s32.totalorder %s141, %s144
      %p150 = scmp.eq.s32.totalorder %s13, 0
      %p151 = por %p149, %p150
      %p152 = scmp.ne.s32.totalorder %s141, %s144
      %p153 = scmp.eq.s32.totalorder %s18, 1
      %p154 = por %p152, %p153
      %p155 = scmp.ne.s32.totalorder %s144, %s145
      %p156 = scmp.eq.s32.totalorder %s18, 0
      %p157 = por %p155, %p156
      %p158 = scmp.ne.s32.totalorder %s144, %s145
      %p159 = scmp.eq.s32.totalorder %s19, 1
      %p160 = por %p158, %p159
      %p162 = scmp.ne.s32.totalorder %s145, %s161
      %p163 = scmp.eq.s32.totalorder %s19, 0
      %p164 = por %p162, %p163
      %s165 = ssub.s32 %s20, %s32
      %p166 = scmp.eq.s32.totalorder %s165, 0
      %s168 = sadd.s32 %s167, 1
      %s169 = scalar_select %p166, %s167, %s168
      %p172 = pneg %p166
      %p173 = scmp.eq.s32.totalorder %s13, 1
      %p174 = por %p172, %p173
      %p175 = scmp.ne.s32.totalorder %s167, %s170
      %p176 = scmp.eq.s32.totalorder %s13, 0
      %p177 = por %p175, %p176
      %p178 = scmp.ne.s32.totalorder %s167, %s170
      %p179 = scmp.eq.s32.totalorder %s18, 1
      %p180 = por %p178, %p179
      %p181 = scmp.ne.s32.totalorder %s170, %s171
      %p182 = scmp.eq.s32.totalorder %s18, 0
      %p183 = por %p181, %p182
      %p184 = scmp.ne.s32.totalorder %s170, %s171
      %p185 = scmp.eq.s32.totalorder %s19, 1
      %p186 = por %p184, %p185
      %p188 = scmp.ne.s32.totalorder %s171, %s187
      %p189 = scmp.eq.s32.totalorder %s19, 0
      %p190 = por %p188, %p189
      %s191 = ssub.s32 %s20, %s32
      %p192 = scmp.eq.s32.totalorder %s191, 0
      %s194 = sadd.s32 %s193, 1
      %s195 = scalar_select %p192, %s193, %s194
      %p198 = pneg %p192
      %p199 = scmp.eq.s32.totalorder %s13, 1
      %p200 = por %p198, %p199
      %p201 = scmp.ne.s32.totalorder %s193, %s196
      %p202 = scmp.eq.s32.totalorder %s13, 0
      %p203 = por %p201, %p202
      %p204 = scmp.ne.s32.totalorder %s193, %s196
      %p205 = scmp.eq.s32.totalorder %s18, 1
      %p206 = por %p204, %p205
      %p207 = scmp.ne.s32.totalorder %s196, %s197
      %p208 = scmp.eq.s32.totalorder %s18, 0
      %p209 = por %p207, %p208
      %p210 = scmp.ne.s32.totalorder %s196, %s197
      %p211 = scmp.eq.s32.totalorder %s19, 1
      %p212 = por %p210, %p211
      %p214 = scmp.ne.s32.totalorder %s197, %s213
      %p215 = scmp.eq.s32.totalorder %s19, 0
      %p216 = por %p214, %p215
      %p217 = scmp.le.s32.totalorder 1, %s13
      %p218 = scmp.lt.s32.totalorder %s13, 3
      %p219 = pnand %p217, %p218
      %p220 = pneg %p219
      // Predicated region
      $region9: #{_lambda_.17} parent=5 // pred_check
        _
      $region10: #{_lambda_.17} parent=5 // pred_check_branch
        %222 = sbr.rel (%p219) target = $region12
      $region11: #{_lambda_.17} parent=5 // pred_region
        %s223 = ssub.s32 %s13, 1
        // Predicated region
        $region13: #{_lambda_.17} parent=11 // pred_check
          %p224 = pneg %p51
        $region14: #{_lambda_.17} parent=11 // pred_check_branch
          %226 = sbr.rel (%p224) target = $region16
        $region15: #{_lambda_.17} parent=11 // pred_region
          %s227 = smul.u32 2, %s23
          %p228 = scmp.lt.s32.totalorder %s227, 1
          %s229 = scalar_select %p228, %s227, 1
          %s230 = smul.addr %s229, 16
          %s231 = smul.addr %s230, 4
          %s232 = scalar_lea.vmem %s0, %s231
          %s233 = smul.u32 2, %s23
        $region16: #{_lambda_.17} parent=11 // pred_fallthru
          _
      $region12: #{_lambda_.17} parent=5 // pred_fallthru
        _
      %p234 = scmp.lt.s32.totalorder %s13, 2
      // Predicated region
      $region17: #{_lambda_.17} parent=5 // pred_check
        %p235 = pneg %p234
      $region18: #{_lambda_.17} parent=5 // pred_check_branch
        %237 = sbr.rel (%p235) target = $region20
      $region19: #{_lambda_.17} parent=5 // pred_region
        // Predicated region
        $region21: #{_lambda_.17} parent=19 // pred_check
          %p238 = pneg %p71
        $region22: #{_lambda_.17} parent=19 // pred_check_branch
          %240 = sbr.rel (%p238) target = $region24
        $region23: #{_lambda_.17} parent=19 // pred_region
          %s241 = sand.u32 %s61, 1
          %s242 = sand.u32 %s61, 1
          %s243 = smul.addr %s242, 1024
          %s244 = scalar_lea.vmem [#allocation2], %s243
          %s245 = smul.addr %s20, 4
          %s246 = scalar_lea.vmem %s1, %s245
          // Predicated region
          $region25: #{_lambda_.17} parent=23 // pred_check
            _
          $region26: #{_lambda_.17} parent=23 // pred_check_branch
            %248 = sbr.rel (0) target = $region28
          $region27: #{_lambda_.17} parent=23 // pred_region
            // Predicated region
            $region29: #{_lambda_.17} parent=27 // pred_check
              _
            $region30: #{_lambda_.17} parent=27 // pred_check_branch
              %250 = sbr.rel target = $region32
            $region31: #{_lambda_.17} parent=27 // pred_region
              // Predicated region
              $region44: #{_lambda_.17} parent=31 // pred_check
                _
              $region45: #{_lambda_.17} parent=31 // pred_check_branch
                %775 = sbr.rel (0) target = $region47
              $region46: #{_lambda_.17} parent=31 // pred_region
                loop: start=0, step=1, limit=1
                $region48: #{_lambda_.17} parent=46 // loop_pre_header
                  _
                $region49: #{_lambda_.17} parent=46 // loop_header
                  %s777 = sphi 0, %s781
                  %p778 = scmp.ge.s32.totalorder %s777, 1
                  %s782 = sphi %s246, %s246
                  %s783 = sphi %s244, %s244
                $region50: #{_lambda_.17} parent=46 // loop_header_branch
                  %780 = sbr.rel (%p778) target = $region54
                $region51: #{_lambda_.17} parent=46 // loop_body
                  _
                $region52: #{_lambda_.17} parent=46 // loop_footer
                  %s781 = sadd.s32 1, %s777
                $region53: #{_lambda_.17} parent=46 // loop_footer_branch
                  %776 = sbr.rel target = $region49
                $region54: #{_lambda_.17} parent=46 // loop_exit
                  _
                loop: start=0, step=1, limit=1
                $region55: #{_lambda_.17} parent=46 // loop_pre_header
                  _
                $region56: #{_lambda_.17} parent=46 // loop_header
                  %s786 = sphi 0, %s790
                  %p787 = scmp.ge.s32.totalorder %s786, 1
                  %s791 = sphi %s246, %s246
                  %s792 = sphi %s244, %s244
                $region57: #{_lambda_.17} parent=46 // loop_header_branch
                  %789 = sbr.rel (%p787) target = $region61
                $region58: #{_lambda_.17} parent=46 // loop_body
                  %v793 = vld [vmem:[%s791] sm:$0xf]
                  %794 = vst [vmem:[%s792] sm:$0xf] %v793
                  %v795 = vld [vmem:[%s791 + $0x8] sm:$0xf]
                  %796 = vst [vmem:[%s792 + $0x4] sm:$0xf] %v795
                  %v797 = vld [vmem:[%s791 + $0x10] sm:$0xf]
                  %798 = vst [vmem:[%s792 + $0x8] sm:$0xf] %v797
                  %v799 = vld [vmem:[%s791 + $0x18] sm:$0xf]
                  %800 = vst [vmem:[%s792 + $0xc] sm:$0xf] %v799
                  %v801 = vld [vmem:[%s791 + $0x20] sm:$0xf]
                  %802 = vst [vmem:[%s792 + $0x10] sm:$0xf] %v801
                  %v803 = vld [vmem:[%s791 + $0x28] sm:$0xf]
                  %804 = vst [vmem:[%s792 + $0x14] sm:$0xf] %v803
                  %v805 = vld [vmem:[%s791 + $0x30] sm:$0xf]
                  %806 = vst [vmem:[%s792 + $0x18] sm:$0xf] %v805
                  %v807 = vld [vmem:[%s791 + $0x38] sm:$0xf]
                  %808 = vst [vmem:[%s792 + $0x1c] sm:$0xf] %v807
                  %v809 = vld [vmem:[%s791 + $0x40] sm:$0xf]
                  %810 = vst [vmem:[%s792 + $0x20] sm:$0xf] %v809
                  %v811 = vld [vmem:[%s791 + $0x48] sm:$0xf]
                  %812 = vst [vmem:[%s792 + $0x24] sm:$0xf] %v811
                  %v813 = vld [vmem:[%s791 + $0x50] sm:$0xf]
                  %814 = vst [vmem:[%s792 + $0x28] sm:$0xf] %v813
                  %v815 = vld [vmem:[%s791 + $0x58] sm:$0xf]
                  %816 = vst [vmem:[%s792 + $0x2c] sm:$0xf] %v815
                  %v817 = vld [vmem:[%s791 + $0x60] sm:$0xf]
                  %818 = vst [vmem:[%s792 + $0x30] sm:$0xf] %v817
                  %v819 = vld [vmem:[%s791 + $0x68] sm:$0xf]
                  %820 = vst [vmem:[%s792 + $0x34] sm:$0xf] %v819
                  %v821 = vld [vmem:[%s791 + $0x70] sm:$0xf]
                  %822 = vst [vmem:[%s792 + $0x38] sm:$0xf] %v821
                  %v823 = vld [vmem:[%s791 + $0x78] sm:$0xf]
                  %824 = vst [vmem:[%s792 + $0x3c] sm:$0xf] %v823
                  %v825 = vld [vmem:[%s791 + $0x80] sm:$0xf]
                  %826 = vst [vmem:[%s792 + $0x40] sm:$0xf] %v825
                  %v827 = vld [vmem:[%s791 + $0x88] sm:$0xf]
                  %828 = vst [vmem:[%s792 + $0x44] sm:$0xf] %v827
                  %v829 = vld [vmem:[%s791 + $0x90] sm:$0xf]
                  %830 = vst [vmem:[%s792 + $0x48] sm:$0xf] %v829
                  %v831 = vld [vmem:[%s791 + $0x98] sm:$0xf]
                  %832 = vst [vmem:[%s792 + $0x4c] sm:$0xf] %v831
                  %v833 = vld [vmem:[%s791 + $0xa0] sm:$0xf]
                  %834 = vst [vmem:[%s792 + $0x50] sm:$0xf] %v833
                  %v835 = vld [vmem:[%s791 + $0xa8] sm:$0xf]
                  %836 = vst [vmem:[%s792 + $0x54] sm:$0xf] %v835
                  %v837 = vld [vmem:[%s791 + $0xb0] sm:$0xf]
                  %838 = vst [vmem:[%s792 + $0x58] sm:$0xf] %v837
                  %v839 = vld [vmem:[%s791 + $0xb8] sm:$0xf]
                  %840 = vst [vmem:[%s792 + $0x5c] sm:$0xf] %v839
                  %v841 = vld [vmem:[%s791 + $0xc0] sm:$0xf]
                  %842 = vst [vmem:[%s792 + $0x60] sm:$0xf] %v841
                  %v843 = vld [vmem:[%s791 + $0xc8] sm:$0xf]
                  %844 = vst [vmem:[%s792 + $0x64] sm:$0xf] %v843
                  %v845 = vld [vmem:[%s791 + $0xd0] sm:$0xf]
                  %846 = vst [vmem:[%s792 + $0x68] sm:$0xf] %v845
                  %v847 = vld [vmem:[%s791 + $0xd8] sm:$0xf]
                  %848 = vst [vmem:[%s792 + $0x6c] sm:$0xf] %v847
                  %v849 = vld [vmem:[%s791 + $0xe0] sm:$0xf]
                  %850 = vst [vmem:[%s792 + $0x70] sm:$0xf] %v849
                  %v851 = vld [vmem:[%s791 + $0xe8] sm:$0xf]
                  %852 = vst [vmem:[%s792 + $0x74] sm:$0xf] %v851
                  %v853 = vld [vmem:[%s791 + $0xf0] sm:$0xf]
                  %854 = vst [vmem:[%s792 + $0x78] sm:$0xf] %v853
                  %v855 = vld [vmem:[%s791 + $0xf8] sm:$0xf]
                  %856 = vst [vmem:[%s792 + $0x7c] sm:$0xf] %v855
                  %v857 = vld [vmem:[%s791 + $0x100] sm:$0xf]
                  %858 = vst [vmem:[%s792 + $0x80] sm:$0xf] %v857
                  %v859 = vld [vmem:[%s791 + $0x108] sm:$0xf]
                  %860 = vst [vmem:[%s792 + $0x84] sm:$0xf] %v859
                  %v861 = vld [vmem:[%s791 + $0x110] sm:$0xf]
                  %862 = vst [vmem:[%s792 + $0x88] sm:$0xf] %v861
                  %v863 = vld [vmem:[%s791 + $0x118] sm:$0xf]
                  %864 = vst [vmem:[%s792 + $0x8c] sm:$0xf] %v863
                  %v865 = vld [vmem:[%s791 + $0x120] sm:$0xf]
                  %866 = vst [vmem:[%s792 + $0x90] sm:$0xf] %v865
                  %v867 = vld [vmem:[%s791 + $0x128] sm:$0xf]
                  %868 = vst [vmem:[%s792 + $0x94] sm:$0xf] %v867
                  %v869 = vld [vmem:[%s791 + $0x130] sm:$0xf]
                  %870 = vst [vmem:[%s792 + $0x98] sm:$0xf] %v869
                  %v871 = vld [vmem:[%s791 + $0x138] sm:$0xf]
                  %872 = vst [vmem:[%s792 + $0x9c] sm:$0xf] %v871
                  %v873 = vld [vmem:[%s791 + $0x140] sm:$0xf]
                  %874 = vst [vmem:[%s792 + $0xa0] sm:$0xf] %v873
                  %v875 = vld [vmem:[%s791 + $0x148] sm:$0xf]
                  %876 = vst [vmem:[%s792 + $0xa4] sm:$0xf] %v875
                  %v877 = vld [vmem:[%s791 + $0x150] sm:$0xf]
                  %878 = vst [vmem:[%s792 + $0xa8] sm:$0xf] %v877
                  %v879 = vld [vmem:[%s791 + $0x158] sm:$0xf]
                  %880 = vst [vmem:[%s792 + $0xac] sm:$0xf] %v879
                  %v881 = vld [vmem:[%s791 + $0x160] sm:$0xf]
                  %882 = vst [vmem:[%s792 + $0xb0] sm:$0xf] %v881
                  %v883 = vld [vmem:[%s791 + $0x168] sm:$0xf]
                  %884 = vst [vmem:[%s792 + $0xb4] sm:$0xf] %v883
                  %v885 = vld [vmem:[%s791 + $0x170] sm:$0xf]
                  %886 = vst [vmem:[%s792 + $0xb8] sm:$0xf] %v885
                  %v887 = vld [vmem:[%s791 + $0x178] sm:$0xf]
                  %888 = vst [vmem:[%s792 + $0xbc] sm:$0xf] %v887
                  %v889 = vld [vmem:[%s791 + $0x180] sm:$0xf]
                  %890 = vst [vmem:[%s792 + $0xc0] sm:$0xf] %v889
                  %v891 = vld [vmem:[%s791 + $0x188] sm:$0xf]
                  %892 = vst [vmem:[%s792 + $0xc4] sm:$0xf] %v891
                  %v893 = vld [vmem:[%s791 + $0x190] sm:$0xf]
                  %894 = vst [vmem:[%s792 + $0xc8] sm:$0xf] %v893
                  %v895 = vld [vmem:[%s791 + $0x198] sm:$0xf]
                  %896 = vst [vmem:[%s792 + $0xcc] sm:$0xf] %v895
                  %v897 = vld [vmem:[%s791 + $0x1a0] sm:$0xf]
                  %898 = vst [vmem:[%s792 + $0xd0] sm:$0xf] %v897
                  %v899 = vld [vmem:[%s791 + $0x1a8] sm:$0xf]
                  %900 = vst [vmem:[%s792 + $0xd4] sm:$0xf] %v899
                  %v901 = vld [vmem:[%s791 + $0x1b0] sm:$0xf]
                  %902 = vst [vmem:[%s792 + $0xd8] sm:$0xf] %v901
                  %v903 = vld [vmem:[%s791 + $0x1b8] sm:$0xf]
                  %904 = vst [vmem:[%s792 + $0xdc] sm:$0xf] %v903
                  %v905 = vld [vmem:[%s791 + $0x1c0] sm:$0xf]
                  %906 = vst [vmem:[%s792 + $0xe0] sm:$0xf] %v905
                  %v907 = vld [vmem:[%s791 + $0x1c8] sm:$0xf]
                  %908 = vst [vmem:[%s792 + $0xe4] sm:$0xf] %v907
                  %v909 = vld [vmem:[%s791 + $0x1d0] sm:$0xf]
                  %910 = vst [vmem:[%s792 + $0xe8] sm:$0xf] %v909
                  %v911 = vld [vmem:[%s791 + $0x1d8] sm:$0xf]
                  %912 = vst [vmem:[%s792 + $0xec] sm:$0xf] %v911
                  %v913 = vld [vmem:[%s791 + $0x1e0] sm:$0xf]
                  %914 = vst [vmem:[%s792 + $0xf0] sm:$0xf] %v913
                  %v915 = vld [vmem:[%s791 + $0x1e8] sm:$0xf]
                  %916 = vst [vmem:[%s792 + $0xf4] sm:$0xf] %v915
                  %v917 = vld [vmem:[%s791 + $0x1f0] sm:$0xf]
                  %918 = vst [vmem:[%s792 + $0xf8] sm:$0xf] %v917
                  %v919 = vld [vmem:[%s791 + $0x1f8] sm:$0xf]
                  %920 = vst [vmem:[%s792 + $0xfc] sm:$0xf] %v919
                  %v921 = vld [vmem:[%s791 + $0x200] sm:$0xf]
                  %922 = vst [vmem:[%s792 + $0x100] sm:$0xf] %v921
                  %v923 = vld [vmem:[%s791 + $0x208] sm:$0xf]
                  %924 = vst [vmem:[%s792 + $0x104] sm:$0xf] %v923
                  %v925 = vld [vmem:[%s791 + $0x210] sm:$0xf]
                  %926 = vst [vmem:[%s792 + $0x108] sm:$0xf] %v925
                  %v927 = vld [vmem:[%s791 + $0x218] sm:$0xf]
                  %928 = vst [vmem:[%s792 + $0x10c] sm:$0xf] %v927
                  %v929 = vld [vmem:[%s791 + $0x220] sm:$0xf]
                  %930 = vst [vmem:[%s792 + $0x110] sm:$0xf] %v929
                  %v931 = vld [vmem:[%s791 + $0x228] sm:$0xf]
                  %932 = vst [vmem:[%s792 + $0x114] sm:$0xf] %v931
                  %v933 = vld [vmem:[%s791 + $0x230] sm:$0xf]
                  %934 = vst [vmem:[%s792 + $0x118] sm:$0xf] %v933
                  %v935 = vld [vmem:[%s791 + $0x238] sm:$0xf]
                  %936 = vst [vmem:[%s792 + $0x11c] sm:$0xf] %v935
                  %v937 = vld [vmem:[%s791 + $0x240] sm:$0xf]
                  %938 = vst [vmem:[%s792 + $0x120] sm:$0xf] %v937
                  %v939 = vld [vmem:[%s791 + $0x248] sm:$0xf]
                  %940 = vst [vmem:[%s792 + $0x124] sm:$0xf] %v939
                  %v941 = vld [vmem:[%s791 + $0x250] sm:$0xf]
                  %942 = vst [vmem:[%s792 + $0x128] sm:$0xf] %v941
                  %v943 = vld [vmem:[%s791 + $0x258] sm:$0xf]
                  %944 = vst [vmem:[%s792 + $0x12c] sm:$0xf] %v943
                  %v945 = vld [vmem:[%s791 + $0x260] sm:$0xf]
                  %946 = vst [vmem:[%s792 + $0x130] sm:$0xf] %v945
                  %v947 = vld [vmem:[%s791 + $0x268] sm:$0xf]
                  %948 = vst [vmem:[%s792 + $0x134] sm:$0xf] %v947
                  %v949 = vld [vmem:[%s791 + $0x270] sm:$0xf]
                  %950 = vst [vmem:[%s792 + $0x138] sm:$0xf] %v949
                  %v951 = vld [vmem:[%s791 + $0x278] sm:$0xf]
                  %952 = vst [vmem:[%s792 + $0x13c] sm:$0xf] %v951
                  %v953 = vld [vmem:[%s791 + $0x280] sm:$0xf]
                  %954 = vst [vmem:[%s792 + $0x140] sm:$0xf] %v953
                  %v955 = vld [vmem:[%s791 + $0x288] sm:$0xf]
                  %956 = vst [vmem:[%s792 + $0x144] sm:$0xf] %v955
                  %v957 = vld [vmem:[%s791 + $0x290] sm:$0xf]
                  %958 = vst [vmem:[%s792 + $0x148] sm:$0xf] %v957
                  %v959 = vld [vmem:[%s791 + $0x298] sm:$0xf]
                  %960 = vst [vmem:[%s792 + $0x14c] sm:$0xf] %v959
                  %v961 = vld [vmem:[%s791 + $0x2a0] sm:$0xf]
                  %962 = vst [vmem:[%s792 + $0x150] sm:$0xf] %v961
                  %v963 = vld [vmem:[%s791 + $0x2a8] sm:$0xf]
                  %964 = vst [vmem:[%s792 + $0x154] sm:$0xf] %v963
                  %v965 = vld [vmem:[%s791 + $0x2b0] sm:$0xf]
                  %966 = vst [vmem:[%s792 + $0x158] sm:$0xf] %v965
                  %v967 = vld [vmem:[%s791 + $0x2b8] sm:$0xf]
                  %968 = vst [vmem:[%s792 + $0x15c] sm:$0xf] %v967
                  %v969 = vld [vmem:[%s791 + $0x2c0] sm:$0xf]
                  %970 = vst [vmem:[%s792 + $0x160] sm:$0xf] %v969
                  %v971 = vld [vmem:[%s791 + $0x2c8] sm:$0xf]
                  %972 = vst [vmem:[%s792 + $0x164] sm:$0xf] %v971
                  %v973 = vld [vmem:[%s791 + $0x2d0] sm:$0xf]
                  %974 = vst [vmem:[%s792 + $0x168] sm:$0xf] %v973
                  %v975 = vld [vmem:[%s791 + $0x2d8] sm:$0xf]
                  %976 = vst [vmem:[%s792 + $0x16c] sm:$0xf] %v975
                  %v977 = vld [vmem:[%s791 + $0x2e0] sm:$0xf]
                  %978 = vst [vmem:[%s792 + $0x170] sm:$0xf] %v977
                  %v979 = vld [vmem:[%s791 + $0x2e8] sm:$0xf]
                  %980 = vst [vmem:[%s792 + $0x174] sm:$0xf] %v979
                  %v981 = vld [vmem:[%s791 + $0x2f0] sm:$0xf]
                  %982 = vst [vmem:[%s792 + $0x178] sm:$0xf] %v981
                  %v983 = vld [vmem:[%s791 + $0x2f8] sm:$0xf]
                  %984 = vst [vmem:[%s792 + $0x17c] sm:$0xf] %v983
                  %v985 = vld [vmem:[%s791 + $0x300] sm:$0xf]
                  %986 = vst [vmem:[%s792 + $0x180] sm:$0xf] %v985
                  %v987 = vld [vmem:[%s791 + $0x308] sm:$0xf]
                  %988 = vst [vmem:[%s792 + $0x184] sm:$0xf] %v987
                  %v989 = vld [vmem:[%s791 + $0x310] sm:$0xf]
                  %990 = vst [vmem:[%s792 + $0x188] sm:$0xf] %v989
                  %v991 = vld [vmem:[%s791 + $0x318] sm:$0xf]
                  %992 = vst [vmem:[%s792 + $0x18c] sm:$0xf] %v991
                  %v993 = vld [vmem:[%s791 + $0x320] sm:$0xf]
                  %994 = vst [vmem:[%s792 + $0x190] sm:$0xf] %v993
                  %v995 = vld [vmem:[%s791 + $0x328] sm:$0xf]
                  %996 = vst [vmem:[%s792 + $0x194] sm:$0xf] %v995
                  %v997 = vld [vmem:[%s791 + $0x330] sm:$0xf]
                  %998 = vst [vmem:[%s792 + $0x198] sm:$0xf] %v997
                  %v999 = vld [vmem:[%s791 + $0x338] sm:$0xf]
                  %1000 = vst [vmem:[%s792 + $0x19c] sm:$0xf] %v999
                  %v1001 = vld [vmem:[%s791 + $0x340] sm:$0xf]
                  %1002 = vst [vmem:[%s792 + $0x1a0] sm:$0xf] %v1001
                  %v1003 = vld [vmem:[%s791 + $0x348] sm:$0xf]
                  %1004 = vst [vmem:[%s792 + $0x1a4] sm:$0xf] %v1003
                  %v1005 = vld [vmem:[%s791 + $0x350] sm:$0xf]
                  %1006 = vst [vmem:[%s792 + $0x1a8] sm:$0xf] %v1005
                  %v1007 = vld [vmem:[%s791 + $0x358] sm:$0xf]
                  %1008 = vst [vmem:[%s792 + $0x1ac] sm:$0xf] %v1007
                  %v1009 = vld [vmem:[%s791 + $0x360] sm:$0xf]
                  %1010 = vst [vmem:[%s792 + $0x1b0] sm:$0xf] %v1009
                  %v1011 = vld [vmem:[%s791 + $0x368] sm:$0xf]
                  %1012 = vst [vmem:[%s792 + $0x1b4] sm:$0xf] %v1011
                  %v1013 = vld [vmem:[%s791 + $0x370] sm:$0xf]
                  %1014 = vst [vmem:[%s792 + $0x1b8] sm:$0xf] %v1013
                  %v1015 = vld [vmem:[%s791 + $0x378] sm:$0xf]
                  %1016 = vst [vmem:[%s792 + $0x1bc] sm:$0xf] %v1015
                  %v1017 = vld [vmem:[%s791 + $0x380] sm:$0xf]
                  %1018 = vst [vmem:[%s792 + $0x1c0] sm:$0xf] %v1017
                  %v1019 = vld [vmem:[%s791 + $0x388] sm:$0xf]
                  %1020 = vst [vmem:[%s792 + $0x1c4] sm:$0xf] %v1019
                  %v1021 = vld [vmem:[%s791 + $0x390] sm:$0xf]
                  %1022 = vst [vmem:[%s792 + $0x1c8] sm:$0xf] %v1021
                  %v1023 = vld [vmem:[%s791 + $0x398] sm:$0xf]
                  %1024 = vst [vmem:[%s792 + $0x1cc] sm:$0xf] %v1023
                  %v1025 = vld [vmem:[%s791 + $0x3a0] sm:$0xf]
                  %1026 = vst [vmem:[%s792 + $0x1d0] sm:$0xf] %v1025
                  %v1027 = vld [vmem:[%s791 + $0x3a8] sm:$0xf]
                  %1028 = vst [vmem:[%s792 + $0x1d4] sm:$0xf] %v1027
                  %v1029 = vld [vmem:[%s791 + $0x3b0] sm:$0xf]
                  %1030 = vst [vmem:[%s792 + $0x1d8] sm:$0xf] %v1029
                  %v1031 = vld [vmem:[%s791 + $0x3b8] sm:$0xf]
                  %1032 = vst [vmem:[%s792 + $0x1dc] sm:$0xf] %v1031
                  %v1033 = vld [vmem:[%s791 + $0x3c0] sm:$0xf]
                  %1034 = vst [vmem:[%s792 + $0x1e0] sm:$0xf] %v1033
                  %v1035 = vld [vmem:[%s791 + $0x3c8] sm:$0xf]
                  %1036 = vst [vmem:[%s792 + $0x1e4] sm:$0xf] %v1035
                  %v1037 = vld [vmem:[%s791 + $0x3d0] sm:$0xf]
                  %1038 = vst [vmem:[%s792 + $0x1e8] sm:$0xf] %v1037
                  %v1039 = vld [vmem:[%s791 + $0x3d8] sm:$0xf]
                  %1040 = vst [vmem:[%s792 + $0x1ec] sm:$0xf] %v1039
                  %v1041 = vld [vmem:[%s791 + $0x3e0] sm:$0xf]
                  %1042 = vst [vmem:[%s792 + $0x1f0] sm:$0xf] %v1041
                  %v1043 = vld [vmem:[%s791 + $0x3e8] sm:$0xf]
                  %1044 = vst [vmem:[%s792 + $0x1f4] sm:$0xf] %v1043
                  %v1045 = vld [vmem:[%s791 + $0x3f0] sm:$0xf]
                  %1046 = vst [vmem:[%s792 + $0x1f8] sm:$0xf] %v1045
                  %v1047 = vld [vmem:[%s791 + $0x3f8] sm:$0xf]
                  %1048 = vst [vmem:[%s792 + $0x1fc] sm:$0xf] %v1047
                  %v1049 = vld [vmem:[%s791 + $0x400] sm:$0xf]
                  %1050 = vst [vmem:[%s792 + $0x200] sm:$0xf] %v1049
                  %v1051 = vld [vmem:[%s791 + $0x408] sm:$0xf]
                  %1052 = vst [vmem:[%s792 + $0x204] sm:$0xf] %v1051
                  %v1053 = vld [vmem:[%s791 + $0x410] sm:$0xf]
                  %1054 = vst [vmem:[%s792 + $0x208] sm:$0xf] %v1053
                  %v1055 = vld [vmem:[%s791 + $0x418] sm:$0xf]
                  %1056 = vst [vmem:[%s792 + $0x20c] sm:$0xf] %v1055
                  %v1057 = vld [vmem:[%s791 + $0x420] sm:$0xf]
                  %1058 = vst [vmem:[%s792 + $0x210] sm:$0xf] %v1057
                  %v1059 = vld [vmem:[%s791 + $0x428] sm:$0xf]
                  %1060 = vst [vmem:[%s792 + $0x214] sm:$0xf] %v1059
                  %v1061 = vld [vmem:[%s791 + $0x430] sm:$0xf]
                  %1062 = vst [vmem:[%s792 + $0x218] sm:$0xf] %v1061
                  %v1063 = vld [vmem:[%s791 + $0x438] sm:$0xf]
                  %1064 = vst [vmem:[%s792 + $0x21c] sm:$0xf] %v1063
                  %v1065 = vld [vmem:[%s791 + $0x440] sm:$0xf]
                  %1066 = vst [vmem:[%s792 + $0x220] sm:$0xf] %v1065
                  %v1067 = vld [vmem:[%s791 + $0x448] sm:$0xf]
                  %1068 = vst [vmem:[%s792 + $0x224] sm:$0xf] %v1067
                  %v1069 = vld [vmem:[%s791 + $0x450] sm:$0xf]
                  %1070 = vst [vmem:[%s792 + $0x228] sm:$0xf] %v1069
                  %v1071 = vld [vmem:[%s791 + $0x458] sm:$0xf]
                  %1072 = vst [vmem:[%s792 + $0x22c] sm:$0xf] %v1071
                  %v1073 = vld [vmem:[%s791 + $0x460] sm:$0xf]
                  %1074 = vst [vmem:[%s792 + $0x230] sm:$0xf] %v1073
                  %v1075 = vld [vmem:[%s791 + $0x468] sm:$0xf]
                  %1076 = vst [vmem:[%s792 + $0x234] sm:$0xf] %v1075
                  %v1077 = vld [vmem:[%s791 + $0x470] sm:$0xf]
                  %1078 = vst [vmem:[%s792 + $0x238] sm:$0xf] %v1077
                  %v1079 = vld [vmem:[%s791 + $0x478] sm:$0xf]
                  %1080 = vst [vmem:[%s792 + $0x23c] sm:$0xf] %v1079
                  %v1081 = vld [vmem:[%s791 + $0x480] sm:$0xf]
                  %1082 = vst [vmem:[%s792 + $0x240] sm:$0xf] %v1081
                  %v1083 = vld [vmem:[%s791 + $0x488] sm:$0xf]
                  %1084 = vst [vmem:[%s792 + $0x244] sm:$0xf] %v1083
                  %v1085 = vld [vmem:[%s791 + $0x490] sm:$0xf]
                  %1086 = vst [vmem:[%s792 + $0x248] sm:$0xf] %v1085
                  %v1087 = vld [vmem:[%s791 + $0x498] sm:$0xf]
                  %1088 = vst [vmem:[%s792 + $0x24c] sm:$0xf] %v1087
                  %v1089 = vld [vmem:[%s791 + $0x4a0] sm:$0xf]
                  %1090 = vst [vmem:[%s792 + $0x250] sm:$0xf] %v1089
                  %v1091 = vld [vmem:[%s791 + $0x4a8] sm:$0xf]
                  %1092 = vst [vmem:[%s792 + $0x254] sm:$0xf] %v1091
                  %v1093 = vld [vmem:[%s791 + $0x4b0] sm:$0xf]
                  %1094 = vst [vmem:[%s792 + $0x258] sm:$0xf] %v1093
                  %v1095 = vld [vmem:[%s791 + $0x4b8] sm:$0xf]
                  %1096 = vst [vmem:[%s792 + $0x25c] sm:$0xf] %v1095
                  %v1097 = vld [vmem:[%s791 + $0x4c0] sm:$0xf]
                  %1098 = vst [vmem:[%s792 + $0x260] sm:$0xf] %v1097
                  %v1099 = vld [vmem:[%s791 + $0x4c8] sm:$0xf]
                  %1100 = vst [vmem:[%s792 + $0x264] sm:$0xf] %v1099
                  %v1101 = vld [vmem:[%s791 + $0x4d0] sm:$0xf]
                  %1102 = vst [vmem:[%s792 + $0x268] sm:$0xf] %v1101
                  %v1103 = vld [vmem:[%s791 + $0x4d8] sm:$0xf]
                  %1104 = vst [vmem:[%s792 + $0x26c] sm:$0xf] %v1103
                  %v1105 = vld [vmem:[%s791 + $0x4e0] sm:$0xf]
                  %1106 = vst [vmem:[%s792 + $0x270] sm:$0xf] %v1105
                  %v1107 = vld [vmem:[%s791 + $0x4e8] sm:$0xf]
                  %1108 = vst [vmem:[%s792 + $0x274] sm:$0xf] %v1107
                  %v1109 = vld [vmem:[%s791 + $0x4f0] sm:$0xf]
                  %1110 = vst [vmem:[%s792 + $0x278] sm:$0xf] %v1109
                  %v1111 = vld [vmem:[%s791 + $0x4f8] sm:$0xf]
                  %1112 = vst [vmem:[%s792 + $0x27c] sm:$0xf] %v1111
                  %v1113 = vld [vmem:[%s791 + $0x500] sm:$0xf]
                  %1114 = vst [vmem:[%s792 + $0x280] sm:$0xf] %v1113
                  %v1115 = vld [vmem:[%s791 + $0x508] sm:$0xf]
                  %1116 = vst [vmem:[%s792 + $0x284] sm:$0xf] %v1115
                  %v1117 = vld [vmem:[%s791 + $0x510] sm:$0xf]
                  %1118 = vst [vmem:[%s792 + $0x288] sm:$0xf] %v1117
                  %v1119 = vld [vmem:[%s791 + $0x518] sm:$0xf]
                  %1120 = vst [vmem:[%s792 + $0x28c] sm:$0xf] %v1119
                  %v1121 = vld [vmem:[%s791 + $0x520] sm:$0xf]
                  %1122 = vst [vmem:[%s792 + $0x290] sm:$0xf] %v1121
                  %v1123 = vld [vmem:[%s791 + $0x528] sm:$0xf]
                  %1124 = vst [vmem:[%s792 + $0x294] sm:$0xf] %v1123
                  %v1125 = vld [vmem:[%s791 + $0x530] sm:$0xf]
                  %1126 = vst [vmem:[%s792 + $0x298] sm:$0xf] %v1125
                  %v1127 = vld [vmem:[%s791 + $0x538] sm:$0xf]
                  %1128 = vst [vmem:[%s792 + $0x29c] sm:$0xf] %v1127
                  %v1129 = vld [vmem:[%s791 + $0x540] sm:$0xf]
                  %1130 = vst [vmem:[%s792 + $0x2a0] sm:$0xf] %v1129
                  %v1131 = vld [vmem:[%s791 + $0x548] sm:$0xf]
                  %1132 = vst [vmem:[%s792 + $0x2a4] sm:$0xf] %v1131
                  %v1133 = vld [vmem:[%s791 + $0x550] sm:$0xf]
                  %1134 = vst [vmem:[%s792 + $0x2a8] sm:$0xf] %v1133
                  %v1135 = vld [vmem:[%s791 + $0x558] sm:$0xf]
                  %1136 = vst [vmem:[%s792 + $0x2ac] sm:$0xf] %v1135
                  %v1137 = vld [vmem:[%s791 + $0x560] sm:$0xf]
                  %1138 = vst [vmem:[%s792 + $0x2b0] sm:$0xf] %v1137
                  %v1139 = vld [vmem:[%s791 + $0x568] sm:$0xf]
                  %1140 = vst [vmem:[%s792 + $0x2b4] sm:$0xf] %v1139
                  %v1141 = vld [vmem:[%s791 + $0x570] sm:$0xf]
                  %1142 = vst [vmem:[%s792 + $0x2b8] sm:$0xf] %v1141
                  %v1143 = vld [vmem:[%s791 + $0x578] sm:$0xf]
                  %1144 = vst [vmem:[%s792 + $0x2bc] sm:$0xf] %v1143
                  %v1145 = vld [vmem:[%s791 + $0x580] sm:$0xf]
                  %1146 = vst [vmem:[%s792 + $0x2c0] sm:$0xf] %v1145
                  %v1147 = vld [vmem:[%s791 + $0x588] sm:$0xf]
                  %1148 = vst [vmem:[%s792 + $0x2c4] sm:$0xf] %v1147
                  %v1149 = vld [vmem:[%s791 + $0x590] sm:$0xf]
                  %1150 = vst [vmem:[%s792 + $0x2c8] sm:$0xf] %v1149
                  %v1151 = vld [vmem:[%s791 + $0x598] sm:$0xf]
                  %1152 = vst [vmem:[%s792 + $0x2cc] sm:$0xf] %v1151
                  %v1153 = vld [vmem:[%s791 + $0x5a0] sm:$0xf]
                  %1154 = vst [vmem:[%s792 + $0x2d0] sm:$0xf] %v1153
                  %v1155 = vld [vmem:[%s791 + $0x5a8] sm:$0xf]
                  %1156 = vst [vmem:[%s792 + $0x2d4] sm:$0xf] %v1155
                  %v1157 = vld [vmem:[%s791 + $0x5b0] sm:$0xf]
                  %1158 = vst [vmem:[%s792 + $0x2d8] sm:$0xf] %v1157
                  %v1159 = vld [vmem:[%s791 + $0x5b8] sm:$0xf]
                  %1160 = vst [vmem:[%s792 + $0x2dc] sm:$0xf] %v1159
                  %v1161 = vld [vmem:[%s791 + $0x5c0] sm:$0xf]
                  %1162 = vst [vmem:[%s792 + $0x2e0] sm:$0xf] %v1161
                  %v1163 = vld [vmem:[%s791 + $0x5c8] sm:$0xf]
                  %1164 = vst [vmem:[%s792 + $0x2e4] sm:$0xf] %v1163
                  %v1165 = vld [vmem:[%s791 + $0x5d0] sm:$0xf]
                  %1166 = vst [vmem:[%s792 + $0x2e8] sm:$0xf] %v1165
                  %v1167 = vld [vmem:[%s791 + $0x5d8] sm:$0xf]
                  %1168 = vst [vmem:[%s792 + $0x2ec] sm:$0xf] %v1167
                  %v1169 = vld [vmem:[%s791 + $0x5e0] sm:$0xf]
                  %1170 = vst [vmem:[%s792 + $0x2f0] sm:$0xf] %v1169
                  %v1171 = vld [vmem:[%s791 + $0x5e8] sm:$0xf]
                  %1172 = vst [vmem:[%s792 + $0x2f4] sm:$0xf] %v1171
                  %v1173 = vld [vmem:[%s791 + $0x5f0] sm:$0xf]
                  %1174 = vst [vmem:[%s792 + $0x2f8] sm:$0xf] %v1173
                  %v1175 = vld [vmem:[%s791 + $0x5f8] sm:$0xf]
                  %1176 = vst [vmem:[%s792 + $0x2fc] sm:$0xf] %v1175
                  %v1177 = vld [vmem:[%s791 + $0x600] sm:$0xf]
                  %1178 = vst [vmem:[%s792 + $0x300] sm:$0xf] %v1177
                  %v1179 = vld [vmem:[%s791 + $0x608] sm:$0xf]
                  %1180 = vst [vmem:[%s792 + $0x304] sm:$0xf] %v1179
                  %v1181 = vld [vmem:[%s791 + $0x610] sm:$0xf]
                  %1182 = vst [vmem:[%s792 + $0x308] sm:$0xf] %v1181
                  %v1183 = vld [vmem:[%s791 + $0x618] sm:$0xf]
                  %1184 = vst [vmem:[%s792 + $0x30c] sm:$0xf] %v1183
                  %v1185 = vld [vmem:[%s791 + $0x620] sm:$0xf]
                  %1186 = vst [vmem:[%s792 + $0x310] sm:$0xf] %v1185
                  %v1187 = vld [vmem:[%s791 + $0x628] sm:$0xf]
                  %1188 = vst [vmem:[%s792 + $0x314] sm:$0xf] %v1187
                  %v1189 = vld [vmem:[%s791 + $0x630] sm:$0xf]
                  %1190 = vst [vmem:[%s792 + $0x318] sm:$0xf] %v1189
                  %v1191 = vld [vmem:[%s791 + $0x638] sm:$0xf]
                  %1192 = vst [vmem:[%s792 + $0x31c] sm:$0xf] %v1191
                  %v1193 = vld [vmem:[%s791 + $0x640] sm:$0xf]
                  %1194 = vst [vmem:[%s792 + $0x320] sm:$0xf] %v1193
                  %v1195 = vld [vmem:[%s791 + $0x648] sm:$0xf]
                  %1196 = vst [vmem:[%s792 + $0x324] sm:$0xf] %v1195
                  %v1197 = vld [vmem:[%s791 + $0x650] sm:$0xf]
                  %1198 = vst [vmem:[%s792 + $0x328] sm:$0xf] %v1197
                  %v1199 = vld [vmem:[%s791 + $0x658] sm:$0xf]
                  %1200 = vst [vmem:[%s792 + $0x32c] sm:$0xf] %v1199
                  %v1201 = vld [vmem:[%s791 + $0x660] sm:$0xf]
                  %1202 = vst [vmem:[%s792 + $0x330] sm:$0xf] %v1201
                  %v1203 = vld [vmem:[%s791 + $0x668] sm:$0xf]
                  %1204 = vst [vmem:[%s792 + $0x334] sm:$0xf] %v1203
                  %v1205 = vld [vmem:[%s791 + $0x670] sm:$0xf]
                  %1206 = vst [vmem:[%s792 + $0x338] sm:$0xf] %v1205
                  %v1207 = vld [vmem:[%s791 + $0x678] sm:$0xf]
                  %1208 = vst [vmem:[%s792 + $0x33c] sm:$0xf] %v1207
                  %v1209 = vld [vmem:[%s791 + $0x680] sm:$0xf]
                  %1210 = vst [vmem:[%s792 + $0x340] sm:$0xf] %v1209
                  %v1211 = vld [vmem:[%s791 + $0x688] sm:$0xf]
                  %1212 = vst [vmem:[%s792 + $0x344] sm:$0xf] %v1211
                  %v1213 = vld [vmem:[%s791 + $0x690] sm:$0xf]
                  %1214 = vst [vmem:[%s792 + $0x348] sm:$0xf] %v1213
                  %v1215 = vld [vmem:[%s791 + $0x698] sm:$0xf]
                  %1216 = vst [vmem:[%s792 + $0x34c] sm:$0xf] %v1215
                  %v1217 = vld [vmem:[%s791 + $0x6a0] sm:$0xf]
                  %1218 = vst [vmem:[%s792 + $0x350] sm:$0xf] %v1217
                  %v1219 = vld [vmem:[%s791 + $0x6a8] sm:$0xf]
                  %1220 = vst [vmem:[%s792 + $0x354] sm:$0xf] %v1219
                  %v1221 = vld [vmem:[%s791 + $0x6b0] sm:$0xf]
                  %1222 = vst [vmem:[%s792 + $0x358] sm:$0xf] %v1221
                  %v1223 = vld [vmem:[%s791 + $0x6b8] sm:$0xf]
                  %1224 = vst [vmem:[%s792 + $0x35c] sm:$0xf] %v1223
                  %v1225 = vld [vmem:[%s791 + $0x6c0] sm:$0xf]
                  %1226 = vst [vmem:[%s792 + $0x360] sm:$0xf] %v1225
                  %v1227 = vld [vmem:[%s791 + $0x6c8] sm:$0xf]
                  %1228 = vst [vmem:[%s792 + $0x364] sm:$0xf] %v1227
                  %v1229 = vld [vmem:[%s791 + $0x6d0] sm:$0xf]
                  %1230 = vst [vmem:[%s792 + $0x368] sm:$0xf] %v1229
                  %v1231 = vld [vmem:[%s791 + $0x6d8] sm:$0xf]
                  %1232 = vst [vmem:[%s792 + $0x36c] sm:$0xf] %v1231
                  %v1233 = vld [vmem:[%s791 + $0x6e0] sm:$0xf]
                  %1234 = vst [vmem:[%s792 + $0x370] sm:$0xf] %v1233
                  %v1235 = vld [vmem:[%s791 + $0x6e8] sm:$0xf]
                  %1236 = vst [vmem:[%s792 + $0x374] sm:$0xf] %v1235
                  %v1237 = vld [vmem:[%s791 + $0x6f0] sm:$0xf]
                  %1238 = vst [vmem:[%s792 + $0x378] sm:$0xf] %v1237
                  %v1239 = vld [vmem:[%s791 + $0x6f8] sm:$0xf]
                  %1240 = vst [vmem:[%s792 + $0x37c] sm:$0xf] %v1239
                  %v1241 = vld [vmem:[%s791 + $0x700] sm:$0xf]
                  %1242 = vst [vmem:[%s792 + $0x380] sm:$0xf] %v1241
                  %v1243 = vld [vmem:[%s791 + $0x708] sm:$0xf]
                  %1244 = vst [vmem:[%s792 + $0x384] sm:$0xf] %v1243
                  %v1245 = vld [vmem:[%s791 + $0x710] sm:$0xf]
                  %1246 = vst [vmem:[%s792 + $0x388] sm:$0xf] %v1245
                  %v1247 = vld [vmem:[%s791 + $0x718] sm:$0xf]
                  %1248 = vst [vmem:[%s792 + $0x38c] sm:$0xf] %v1247
                  %v1249 = vld [vmem:[%s791 + $0x720] sm:$0xf]
                  %1250 = vst [vmem:[%s792 + $0x390] sm:$0xf] %v1249
                  %v1251 = vld [vmem:[%s791 + $0x728] sm:$0xf]
                  %1252 = vst [vmem:[%s792 + $0x394] sm:$0xf] %v1251
                  %v1253 = vld [vmem:[%s791 + $0x730] sm:$0xf]
                  %1254 = vst [vmem:[%s792 + $0x398] sm:$0xf] %v1253
                  %v1255 = vld [vmem:[%s791 + $0x738] sm:$0xf]
                  %1256 = vst [vmem:[%s792 + $0x39c] sm:$0xf] %v1255
                  %v1257 = vld [vmem:[%s791 + $0x740] sm:$0xf]
                  %1258 = vst [vmem:[%s792 + $0x3a0] sm:$0xf] %v1257
                  %v1259 = vld [vmem:[%s791 + $0x748] sm:$0xf]
                  %1260 = vst [vmem:[%s792 + $0x3a4] sm:$0xf] %v1259
                  %v1261 = vld [vmem:[%s791 + $0x750] sm:$0xf]
                  %1262 = vst [vmem:[%s792 + $0x3a8] sm:$0xf] %v1261
                  %v1263 = vld [vmem:[%s791 + $0x758] sm:$0xf]
                  %1264 = vst [vmem:[%s792 + $0x3ac] sm:$0xf] %v1263
                  %v1265 = vld [vmem:[%s791 + $0x760] sm:$0xf]
                  %1266 = vst [vmem:[%s792 + $0x3b0] sm:$0xf] %v1265
                  %v1267 = vld [vmem:[%s791 + $0x768] sm:$0xf]
                  %1268 = vst [vmem:[%s792 + $0x3b4] sm:$0xf] %v1267
                  %v1269 = vld [vmem:[%s791 + $0x770] sm:$0xf]
                  %1270 = vst [vmem:[%s792 + $0x3b8] sm:$0xf] %v1269
                  %v1271 = vld [vmem:[%s791 + $0x778] sm:$0xf]
                  %1272 = vst [vmem:[%s792 + $0x3bc] sm:$0xf] %v1271
                  %v1273 = vld [vmem:[%s791 + $0x780] sm:$0xf]
                  %1274 = vst [vmem:[%s792 + $0x3c0] sm:$0xf] %v1273
                  %v1275 = vld [vmem:[%s791 + $0x788] sm:$0xf]
                  %1276 = vst [vmem:[%s792 + $0x3c4] sm:$0xf] %v1275
                  %v1277 = vld [vmem:[%s791 + $0x790] sm:$0xf]
                  %1278 = vst [vmem:[%s792 + $0x3c8] sm:$0xf] %v1277
                  %v1279 = vld [vmem:[%s791 + $0x798] sm:$0xf]
                  %1280 = vst [vmem:[%s792 + $0x3cc] sm:$0xf] %v1279
                  %v1281 = vld [vmem:[%s791 + $0x7a0] sm:$0xf]
                  %1282 = vst [vmem:[%s792 + $0x3d0] sm:$0xf] %v1281
                  %v1283 = vld [vmem:[%s791 + $0x7a8] sm:$0xf]
                  %1284 = vst [vmem:[%s792 + $0x3d4] sm:$0xf] %v1283
                  %v1285 = vld [vmem:[%s791 + $0x7b0] sm:$0xf]
                  %1286 = vst [vmem:[%s792 + $0x3d8] sm:$0xf] %v1285
                  %v1287 = vld [vmem:[%s791 + $0x7b8] sm:$0xf]
                  %1288 = vst [vmem:[%s792 + $0x3dc] sm:$0xf] %v1287
                  %v1289 = vld [vmem:[%s791 + $0x7c0] sm:$0xf]
                  %1290 = vst [vmem:[%s792 + $0x3e0] sm:$0xf] %v1289
                  %v1291 = vld [vmem:[%s791 + $0x7c8] sm:$0xf]
                  %1292 = vst [vmem:[%s792 + $0x3e4] sm:$0xf] %v1291
                  %v1293 = vld [vmem:[%s791 + $0x7d0] sm:$0xf]
                  %1294 = vst [vmem:[%s792 + $0x3e8] sm:$0xf] %v1293
                  %v1295 = vld [vmem:[%s791 + $0x7d8] sm:$0xf]
                  %1296 = vst [vmem:[%s792 + $0x3ec] sm:$0xf] %v1295
                  %v1297 = vld [vmem:[%s791 + $0x7e0] sm:$0xf]
                  %1298 = vst [vmem:[%s792 + $0x3f0] sm:$0xf] %v1297
                  %v1299 = vld [vmem:[%s791 + $0x7e8] sm:$0xf]
                  %1300 = vst [vmem:[%s792 + $0x3f4] sm:$0xf] %v1299
                  %v1301 = vld [vmem:[%s791 + $0x7f0] sm:$0xf]
                  %1302 = vst [vmem:[%s792 + $0x3f8] sm:$0xf] %v1301
                  %v1303 = vld [vmem:[%s791 + $0x7f8] sm:$0xf]
                  %1304 = vst [vmem:[%s792 + $0x3fc] sm:$0xf] %v1303
                $region59: #{_lambda_.17} parent=46 // loop_footer
                  %s790 = sadd.s32 1, %s786
                $region60: #{_lambda_.17} parent=46 // loop_footer_branch
                  %785 = sbr.rel target = $region56
                $region61: #{_lambda_.17} parent=46 // loop_exit
                  _
              $region47: #{_lambda_.17} parent=31 // pred_fallthru
                _
            $region32: #{_lambda_.17} parent=27 // pred_fallthru
              _
            // Predicated region
            $region33: #{_lambda_.17} parent=27 // pred_check
              _
            $region34: #{_lambda_.17} parent=27 // pred_check_branch
              %252 = sbr.rel (0) target = $region36
            $region35: #{_lambda_.17} parent=27 // pred_region
              loop: start=0, step=1, limit=1
              $region37: #{_lambda_.17} parent=35 // loop_pre_header
                _
              $region38: #{_lambda_.17} parent=35 // loop_header
                %s255 = sphi 0, %s259
                %p256 = scmp.ge.s32.totalorder %s255, 1
                %s260 = sphi %s246, %s246
                %s261 = sphi %s244, %s244
              $region39: #{_lambda_.17} parent=35 // loop_header_branch
                %258 = sbr.rel (%p256) target = $region43
              $region40: #{_lambda_.17} parent=35 // loop_body
                %v262 = vld [vmem:[%s260] sm:$0xf]
                %263 = vst [vmem:[%s261] sm:$0xf] %v262
                %v264 = vld [vmem:[%s260 + $0x8] sm:$0xf]
                %265 = vst [vmem:[%s261 + $0x4] sm:$0xf] %v264
                %v266 = vld [vmem:[%s260 + $0x10] sm:$0xf]
                %267 = vst [vmem:[%s261 + $0x8] sm:$0xf] %v266
                %v268 = vld [vmem:[%s260 + $0x18] sm:$0xf]
                %269 = vst [vmem:[%s261 + $0xc] sm:$0xf] %v268
                %v270 = vld [vmem:[%s260 + $0x20] sm:$0xf]
                %271 = vst [vmem:[%s261 + $0x10] sm:$0xf] %v270
                %v272 = vld [vmem:[%s260 + $0x28] sm:$0xf]
                %273 = vst [vmem:[%s261 + $0x14] sm:$0xf] %v272
                %v274 = vld [vmem:[%s260 + $0x30] sm:$0xf]
                %275 = vst [vmem:[%s261 + $0x18] sm:$0xf] %v274
                %v276 = vld [vmem:[%s260 + $0x38] sm:$0xf]
                %277 = vst [vmem:[%s261 + $0x1c] sm:$0xf] %v276
                %v278 = vld [vmem:[%s260 + $0x40] sm:$0xf]
                %279 = vst [vmem:[%s261 + $0x20] sm:$0xf] %v278
                %v280 = vld [vmem:[%s260 + $0x48] sm:$0xf]
                %281 = vst [vmem:[%s261 + $0x24] sm:$0xf] %v280
                %v282 = vld [vmem:[%s260 + $0x50] sm:$0xf]
                %283 = vst [vmem:[%s261 + $0x28] sm:$0xf] %v282
                %v284 = vld [vmem:[%s260 + $0x58] sm:$0xf]
                %285 = vst [vmem:[%s261 + $0x2c] sm:$0xf] %v284
                %v286 = vld [vmem:[%s260 + $0x60] sm:$0xf]
                %287 = vst [vmem:[%s261 + $0x30] sm:$0xf] %v286
                %v288 = vld [vmem:[%s260 + $0x68] sm:$0xf]
                %289 = vst [vmem:[%s261 + $0x34] sm:$0xf] %v288
                %v290 = vld [vmem:[%s260 + $0x70] sm:$0xf]
                %291 = vst [vmem:[%s261 + $0x38] sm:$0xf] %v290
                %v292 = vld [vmem:[%s260 + $0x78] sm:$0xf]
                %293 = vst [vmem:[%s261 + $0x3c] sm:$0xf] %v292
                %v294 = vld [vmem:[%s260 + $0x80] sm:$0xf]
                %295 = vst [vmem:[%s261 + $0x40] sm:$0xf] %v294
                %v296 = vld [vmem:[%s260 + $0x88] sm:$0xf]
                %297 = vst [vmem:[%s261 + $0x44] sm:$0xf] %v296
                %v298 = vld [vmem:[%s260 + $0x90] sm:$0xf]
                %299 = vst [vmem:[%s261 + $0x48] sm:$0xf] %v298
                %v300 = vld [vmem:[%s260 + $0x98] sm:$0xf]
                %301 = vst [vmem:[%s261 + $0x4c] sm:$0xf] %v300
                %v302 = vld [vmem:[%s260 + $0xa0] sm:$0xf]
                %303 = vst [vmem:[%s261 + $0x50] sm:$0xf] %v302
                %v304 = vld [vmem:[%s260 + $0xa8] sm:$0xf]
                %305 = vst [vmem:[%s261 + $0x54] sm:$0xf] %v304
                %v306 = vld [vmem:[%s260 + $0xb0] sm:$0xf]
                %307 = vst [vmem:[%s261 + $0x58] sm:$0xf] %v306
                %v308 = vld [vmem:[%s260 + $0xb8] sm:$0xf]
                %309 = vst [vmem:[%s261 + $0x5c] sm:$0xf] %v308
                %v310 = vld [vmem:[%s260 + $0xc0] sm:$0xf]
                %311 = vst [vmem:[%s261 + $0x60] sm:$0xf] %v310
                %v312 = vld [vmem:[%s260 + $0xc8] sm:$0xf]
                %313 = vst [vmem:[%s261 + $0x64] sm:$0xf] %v312
                %v314 = vld [vmem:[%s260 + $0xd0] sm:$0xf]
                %315 = vst [vmem:[%s261 + $0x68] sm:$0xf] %v314
                %v316 = vld [vmem:[%s260 + $0xd8] sm:$0xf]
                %317 = vst [vmem:[%s261 + $0x6c] sm:$0xf] %v316
                %v318 = vld [vmem:[%s260 + $0xe0] sm:$0xf]
                %319 = vst [vmem:[%s261 + $0x70] sm:$0xf] %v318
                %v320 = vld [vmem:[%s260 + $0xe8] sm:$0xf]
                %321 = vst [vmem:[%s261 + $0x74] sm:$0xf] %v320
                %v322 = vld [vmem:[%s260 + $0xf0] sm:$0xf]
                %323 = vst [vmem:[%s261 + $0x78] sm:$0xf] %v322
                %v324 = vld [vmem:[%s260 + $0xf8] sm:$0xf]
                %325 = vst [vmem:[%s261 + $0x7c] sm:$0xf] %v324
                %v326 = vld [vmem:[%s260 + $0x100] sm:$0xf]
                %327 = vst [vmem:[%s261 + $0x80] sm:$0xf] %v326
                %v328 = vld [vmem:[%s260 + $0x108] sm:$0xf]
                %329 = vst [vmem:[%s261 + $0x84] sm:$0xf] %v328
                %v330 = vld [vmem:[%s260 + $0x110] sm:$0xf]
                %331 = vst [vmem:[%s261 + $0x88] sm:$0xf] %v330
                %v332 = vld [vmem:[%s260 + $0x118] sm:$0xf]
                %333 = vst [vmem:[%s261 + $0x8c] sm:$0xf] %v332
                %v334 = vld [vmem:[%s260 + $0x120] sm:$0xf]
                %335 = vst [vmem:[%s261 + $0x90] sm:$0xf] %v334
                %v336 = vld [vmem:[%s260 + $0x128] sm:$0xf]
                %337 = vst [vmem:[%s261 + $0x94] sm:$0xf] %v336
                %v338 = vld [vmem:[%s260 + $0x130] sm:$0xf]
                %339 = vst [vmem:[%s261 + $0x98] sm:$0xf] %v338
                %v340 = vld [vmem:[%s260 + $0x138] sm:$0xf]
                %341 = vst [vmem:[%s261 + $0x9c] sm:$0xf] %v340
                %v342 = vld [vmem:[%s260 + $0x140] sm:$0xf]
                %343 = vst [vmem:[%s261 + $0xa0] sm:$0xf] %v342
                %v344 = vld [vmem:[%s260 + $0x148] sm:$0xf]
                %345 = vst [vmem:[%s261 + $0xa4] sm:$0xf] %v344
                %v346 = vld [vmem:[%s260 + $0x150] sm:$0xf]
                %347 = vst [vmem:[%s261 + $0xa8] sm:$0xf] %v346
                %v348 = vld [vmem:[%s260 + $0x158] sm:$0xf]
                %349 = vst [vmem:[%s261 + $0xac] sm:$0xf] %v348
                %v350 = vld [vmem:[%s260 + $0x160] sm:$0xf]
                %351 = vst [vmem:[%s261 + $0xb0] sm:$0xf] %v350
                %v352 = vld [vmem:[%s260 + $0x168] sm:$0xf]
                %353 = vst [vmem:[%s261 + $0xb4] sm:$0xf] %v352
                %v354 = vld [vmem:[%s260 + $0x170] sm:$0xf]
                %355 = vst [vmem:[%s261 + $0xb8] sm:$0xf] %v354
                %v356 = vld [vmem:[%s260 + $0x178] sm:$0xf]
                %357 = vst [vmem:[%s261 + $0xbc] sm:$0xf] %v356
                %v358 = vld [vmem:[%s260 + $0x180] sm:$0xf]
                %359 = vst [vmem:[%s261 + $0xc0] sm:$0xf] %v358
                %v360 = vld [vmem:[%s260 + $0x188] sm:$0xf]
                %361 = vst [vmem:[%s261 + $0xc4] sm:$0xf] %v360
                %v362 = vld [vmem:[%s260 + $0x190] sm:$0xf]
                %363 = vst [vmem:[%s261 + $0xc8] sm:$0xf] %v362
                %v364 = vld [vmem:[%s260 + $0x198] sm:$0xf]
                %365 = vst [vmem:[%s261 + $0xcc] sm:$0xf] %v364
                %v366 = vld [vmem:[%s260 + $0x1a0] sm:$0xf]
                %367 = vst [vmem:[%s261 + $0xd0] sm:$0xf] %v366
                %v368 = vld [vmem:[%s260 + $0x1a8] sm:$0xf]
                %369 = vst [vmem:[%s261 + $0xd4] sm:$0xf] %v368
                %v370 = vld [vmem:[%s260 + $0x1b0] sm:$0xf]
                %371 = vst [vmem:[%s261 + $0xd8] sm:$0xf] %v370
                %v372 = vld [vmem:[%s260 + $0x1b8] sm:$0xf]
                %373 = vst [vmem:[%s261 + $0xdc] sm:$0xf] %v372
                %v374 = vld [vmem:[%s260 + $0x1c0] sm:$0xf]
                %375 = vst [vmem:[%s261 + $0xe0] sm:$0xf] %v374
                %v376 = vld [vmem:[%s260 + $0x1c8] sm:$0xf]
                %377 = vst [vmem:[%s261 + $0xe4] sm:$0xf] %v376
                %v378 = vld [vmem:[%s260 + $0x1d0] sm:$0xf]
                %379 = vst [vmem:[%s261 + $0xe8] sm:$0xf] %v378
                %v380 = vld [vmem:[%s260 + $0x1d8] sm:$0xf]
                %381 = vst [vmem:[%s261 + $0xec] sm:$0xf] %v380
                %v382 = vld [vmem:[%s260 + $0x1e0] sm:$0xf]
                %383 = vst [vmem:[%s261 + $0xf0] sm:$0xf] %v382
                %v384 = vld [vmem:[%s260 + $0x1e8] sm:$0xf]
                %385 = vst [vmem:[%s261 + $0xf4] sm:$0xf] %v384
                %v386 = vld [vmem:[%s260 + $0x1f0] sm:$0xf]
                %387 = vst [vmem:[%s261 + $0xf8] sm:$0xf] %v386
                %v388 = vld [vmem:[%s260 + $0x1f8] sm:$0xf]
                %389 = vst [vmem:[%s261 + $0xfc] sm:$0xf] %v388
                %v390 = vld [vmem:[%s260 + $0x200] sm:$0xf]
                %391 = vst [vmem:[%s261 + $0x100] sm:$0xf] %v390
                %v392 = vld [vmem:[%s260 + $0x208] sm:$0xf]
                %393 = vst [vmem:[%s261 + $0x104] sm:$0xf] %v392
                %v394 = vld [vmem:[%s260 + $0x210] sm:$0xf]
                %395 = vst [vmem:[%s261 + $0x108] sm:$0xf] %v394
                %v396 = vld [vmem:[%s260 + $0x218] sm:$0xf]
                %397 = vst [vmem:[%s261 + $0x10c] sm:$0xf] %v396
                %v398 = vld [vmem:[%s260 + $0x220] sm:$0xf]
                %399 = vst [vmem:[%s261 + $0x110] sm:$0xf] %v398
                %v400 = vld [vmem:[%s260 + $0x228] sm:$0xf]
                %401 = vst [vmem:[%s261 + $0x114] sm:$0xf] %v400
                %v402 = vld [vmem:[%s260 + $0x230] sm:$0xf]
                %403 = vst [vmem:[%s261 + $0x118] sm:$0xf] %v402
                %v404 = vld [vmem:[%s260 + $0x238] sm:$0xf]
                %405 = vst [vmem:[%s261 + $0x11c] sm:$0xf] %v404
                %v406 = vld [vmem:[%s260 + $0x240] sm:$0xf]
                %407 = vst [vmem:[%s261 + $0x120] sm:$0xf] %v406
                %v408 = vld [vmem:[%s260 + $0x248] sm:$0xf]
                %409 = vst [vmem:[%s261 + $0x124] sm:$0xf] %v408
                %v410 = vld [vmem:[%s260 + $0x250] sm:$0xf]
                %411 = vst [vmem:[%s261 + $0x128] sm:$0xf] %v410
                %v412 = vld [vmem:[%s260 + $0x258] sm:$0xf]
                %413 = vst [vmem:[%s261 + $0x12c] sm:$0xf] %v412
                %v414 = vld [vmem:[%s260 + $0x260] sm:$0xf]
                %415 = vst [vmem:[%s261 + $0x130] sm:$0xf] %v414
                %v416 = vld [vmem:[%s260 + $0x268] sm:$0xf]
                %417 = vst [vmem:[%s261 + $0x134] sm:$0xf] %v416
                %v418 = vld [vmem:[%s260 + $0x270] sm:$0xf]
                %419 = vst [vmem:[%s261 + $0x138] sm:$0xf] %v418
                %v420 = vld [vmem:[%s260 + $0x278] sm:$0xf]
                %421 = vst [vmem:[%s261 + $0x13c] sm:$0xf] %v420
                %v422 = vld [vmem:[%s260 + $0x280] sm:$0xf]
                %423 = vst [vmem:[%s261 + $0x140] sm:$0xf] %v422
                %v424 = vld [vmem:[%s260 + $0x288] sm:$0xf]
                %425 = vst [vmem:[%s261 + $0x144] sm:$0xf] %v424
                %v426 = vld [vmem:[%s260 + $0x290] sm:$0xf]
                %427 = vst [vmem:[%s261 + $0x148] sm:$0xf] %v426
                %v428 = vld [vmem:[%s260 + $0x298] sm:$0xf]
                %429 = vst [vmem:[%s261 + $0x14c] sm:$0xf] %v428
                %v430 = vld [vmem:[%s260 + $0x2a0] sm:$0xf]
                %431 = vst [vmem:[%s261 + $0x150] sm:$0xf] %v430
                %v432 = vld [vmem:[%s260 + $0x2a8] sm:$0xf]
                %433 = vst [vmem:[%s261 + $0x154] sm:$0xf] %v432
                %v434 = vld [vmem:[%s260 + $0x2b0] sm:$0xf]
                %435 = vst [vmem:[%s261 + $0x158] sm:$0xf] %v434
                %v436 = vld [vmem:[%s260 + $0x2b8] sm:$0xf]
                %437 = vst [vmem:[%s261 + $0x15c] sm:$0xf] %v436
                %v438 = vld [vmem:[%s260 + $0x2c0] sm:$0xf]
                %439 = vst [vmem:[%s261 + $0x160] sm:$0xf] %v438
                %v440 = vld [vmem:[%s260 + $0x2c8] sm:$0xf]
                %441 = vst [vmem:[%s261 + $0x164] sm:$0xf] %v440
                %v442 = vld [vmem:[%s260 + $0x2d0] sm:$0xf]
                %443 = vst [vmem:[%s261 + $0x168] sm:$0xf] %v442
                %v444 = vld [vmem:[%s260 + $0x2d8] sm:$0xf]
                %445 = vst [vmem:[%s261 + $0x16c] sm:$0xf] %v444
                %v446 = vld [vmem:[%s260 + $0x2e0] sm:$0xf]
                %447 = vst [vmem:[%s261 + $0x170] sm:$0xf] %v446
                %v448 = vld [vmem:[%s260 + $0x2e8] sm:$0xf]
                %449 = vst [vmem:[%s261 + $0x174] sm:$0xf] %v448
                %v450 = vld [vmem:[%s260 + $0x2f0] sm:$0xf]
                %451 = vst [vmem:[%s261 + $0x178] sm:$0xf] %v450
                %v452 = vld [vmem:[%s260 + $0x2f8] sm:$0xf]
                %453 = vst [vmem:[%s261 + $0x17c] sm:$0xf] %v452
                %v454 = vld [vmem:[%s260 + $0x300] sm:$0xf]
                %455 = vst [vmem:[%s261 + $0x180] sm:$0xf] %v454
                %v456 = vld [vmem:[%s260 + $0x308] sm:$0xf]
                %457 = vst [vmem:[%s261 + $0x184] sm:$0xf] %v456
                %v458 = vld [vmem:[%s260 + $0x310] sm:$0xf]
                %459 = vst [vmem:[%s261 + $0x188] sm:$0xf] %v458
                %v460 = vld [vmem:[%s260 + $0x318] sm:$0xf]
                %461 = vst [vmem:[%s261 + $0x18c] sm:$0xf] %v460
                %v462 = vld [vmem:[%s260 + $0x320] sm:$0xf]
                %463 = vst [vmem:[%s261 + $0x190] sm:$0xf] %v462
                %v464 = vld [vmem:[%s260 + $0x328] sm:$0xf]
                %465 = vst [vmem:[%s261 + $0x194] sm:$0xf] %v464
                %v466 = vld [vmem:[%s260 + $0x330] sm:$0xf]
                %467 = vst [vmem:[%s261 + $0x198] sm:$0xf] %v466
                %v468 = vld [vmem:[%s260 + $0x338] sm:$0xf]
                %469 = vst [vmem:[%s261 + $0x19c] sm:$0xf] %v468
                %v470 = vld [vmem:[%s260 + $0x340] sm:$0xf]
                %471 = vst [vmem:[%s261 + $0x1a0] sm:$0xf] %v470
                %v472 = vld [vmem:[%s260 + $0x348] sm:$0xf]
                %473 = vst [vmem:[%s261 + $0x1a4] sm:$0xf] %v472
                %v474 = vld [vmem:[%s260 + $0x350] sm:$0xf]
                %475 = vst [vmem:[%s261 + $0x1a8] sm:$0xf] %v474
                %v476 = vld [vmem:[%s260 + $0x358] sm:$0xf]
                %477 = vst [vmem:[%s261 + $0x1ac] sm:$0xf] %v476
                %v478 = vld [vmem:[%s260 + $0x360] sm:$0xf]
                %479 = vst [vmem:[%s261 + $0x1b0] sm:$0xf] %v478
                %v480 = vld [vmem:[%s260 + $0x368] sm:$0xf]
                %481 = vst [vmem:[%s261 + $0x1b4] sm:$0xf] %v480
                %v482 = vld [vmem:[%s260 + $0x370] sm:$0xf]
                %483 = vst [vmem:[%s261 + $0x1b8] sm:$0xf] %v482
                %v484 = vld [vmem:[%s260 + $0x378] sm:$0xf]
                %485 = vst [vmem:[%s261 + $0x1bc] sm:$0xf] %v484
                %v486 = vld [vmem:[%s260 + $0x380] sm:$0xf]
                %487 = vst [vmem:[%s261 + $0x1c0] sm:$0xf] %v486
                %v488 = vld [vmem:[%s260 + $0x388] sm:$0xf]
                %489 = vst [vmem:[%s261 + $0x1c4] sm:$0xf] %v488
                %v490 = vld [vmem:[%s260 + $0x390] sm:$0xf]
                %491 = vst [vmem:[%s261 + $0x1c8] sm:$0xf] %v490
                %v492 = vld [vmem:[%s260 + $0x398] sm:$0xf]
                %493 = vst [vmem:[%s261 + $0x1cc] sm:$0xf] %v492
                %v494 = vld [vmem:[%s260 + $0x3a0] sm:$0xf]
                %495 = vst [vmem:[%s261 + $0x1d0] sm:$0xf] %v494
                %v496 = vld [vmem:[%s260 + $0x3a8] sm:$0xf]
                %497 = vst [vmem:[%s261 + $0x1d4] sm:$0xf] %v496
                %v498 = vld [vmem:[%s260 + $0x3b0] sm:$0xf]
                %499 = vst [vmem:[%s261 + $0x1d8] sm:$0xf] %v498
                %v500 = vld [vmem:[%s260 + $0x3b8] sm:$0xf]
                %501 = vst [vmem:[%s261 + $0x1dc] sm:$0xf] %v500
                %v502 = vld [vmem:[%s260 + $0x3c0] sm:$0xf]
                %503 = vst [vmem:[%s261 + $0x1e0] sm:$0xf] %v502
                %v504 = vld [vmem:[%s260 + $0x3c8] sm:$0xf]
                %505 = vst [vmem:[%s261 + $0x1e4] sm:$0xf] %v504
                %v506 = vld [vmem:[%s260 + $0x3d0] sm:$0xf]
                %507 = vst [vmem:[%s261 + $0x1e8] sm:$0xf] %v506
                %v508 = vld [vmem:[%s260 + $0x3d8] sm:$0xf]
                %509 = vst [vmem:[%s261 + $0x1ec] sm:$0xf] %v508
                %v510 = vld [vmem:[%s260 + $0x3e0] sm:$0xf]
                %511 = vst [vmem:[%s261 + $0x1f0] sm:$0xf] %v510
                %v512 = vld [vmem:[%s260 + $0x3e8] sm:$0xf]
                %513 = vst [vmem:[%s261 + $0x1f4] sm:$0xf] %v512
                %v514 = vld [vmem:[%s260 + $0x3f0] sm:$0xf]
                %515 = vst [vmem:[%s261 + $0x1f8] sm:$0xf] %v514
                %v516 = vld [vmem:[%s260 + $0x3f8] sm:$0xf]
                %517 = vst [vmem:[%s261 + $0x1fc] sm:$0xf] %v516
                %v518 = vld [vmem:[%s260 + $0x400] sm:$0xf]
                %519 = vst [vmem:[%s261 + $0x200] sm:$0xf] %v518
                %v520 = vld [vmem:[%s260 + $0x408] sm:$0xf]
                %521 = vst [vmem:[%s261 + $0x204] sm:$0xf] %v520
                %v522 = vld [vmem:[%s260 + $0x410] sm:$0xf]
                %523 = vst [vmem:[%s261 + $0x208] sm:$0xf] %v522
                %v524 = vld [vmem:[%s260 + $0x418] sm:$0xf]
                %525 = vst [vmem:[%s261 + $0x20c] sm:$0xf] %v524
                %v526 = vld [vmem:[%s260 + $0x420] sm:$0xf]
                %527 = vst [vmem:[%s261 + $0x210] sm:$0xf] %v526
                %v528 = vld [vmem:[%s260 + $0x428] sm:$0xf]
                %529 = vst [vmem:[%s261 + $0x214] sm:$0xf] %v528
                %v530 = vld [vmem:[%s260 + $0x430] sm:$0xf]
                %531 = vst [vmem:[%s261 + $0x218] sm:$0xf] %v530
                %v532 = vld [vmem:[%s260 + $0x438] sm:$0xf]
                %533 = vst [vmem:[%s261 + $0x21c] sm:$0xf] %v532
                %v534 = vld [vmem:[%s260 + $0x440] sm:$0xf]
                %535 = vst [vmem:[%s261 + $0x220] sm:$0xf] %v534
                %v536 = vld [vmem:[%s260 + $0x448] sm:$0xf]
                %537 = vst [vmem:[%s261 + $0x224] sm:$0xf] %v536
                %v538 = vld [vmem:[%s260 + $0x450] sm:$0xf]
                %539 = vst [vmem:[%s261 + $0x228] sm:$0xf] %v538
                %v540 = vld [vmem:[%s260 + $0x458] sm:$0xf]
                %541 = vst [vmem:[%s261 + $0x22c] sm:$0xf] %v540
                %v542 = vld [vmem:[%s260 + $0x460] sm:$0xf]
                %543 = vst [vmem:[%s261 + $0x230] sm:$0xf] %v542
                %v544 = vld [vmem:[%s260 + $0x468] sm:$0xf]
                %545 = vst [vmem:[%s261 + $0x234] sm:$0xf] %v544
                %v546 = vld [vmem:[%s260 + $0x470] sm:$0xf]
                %547 = vst [vmem:[%s261 + $0x238] sm:$0xf] %v546
                %v548 = vld [vmem:[%s260 + $0x478] sm:$0xf]
                %549 = vst [vmem:[%s261 + $0x23c] sm:$0xf] %v548
                %v550 = vld [vmem:[%s260 + $0x480] sm:$0xf]
                %551 = vst [vmem:[%s261 + $0x240] sm:$0xf] %v550
                %v552 = vld [vmem:[%s260 + $0x488] sm:$0xf]
                %553 = vst [vmem:[%s261 + $0x244] sm:$0xf] %v552
                %v554 = vld [vmem:[%s260 + $0x490] sm:$0xf]
                %555 = vst [vmem:[%s261 + $0x248] sm:$0xf] %v554
                %v556 = vld [vmem:[%s260 + $0x498] sm:$0xf]
                %557 = vst [vmem:[%s261 + $0x24c] sm:$0xf] %v556
                %v558 = vld [vmem:[%s260 + $0x4a0] sm:$0xf]
                %559 = vst [vmem:[%s261 + $0x250] sm:$0xf] %v558
                %v560 = vld [vmem:[%s260 + $0x4a8] sm:$0xf]
                %561 = vst [vmem:[%s261 + $0x254] sm:$0xf] %v560
                %v562 = vld [vmem:[%s260 + $0x4b0] sm:$0xf]
                %563 = vst [vmem:[%s261 + $0x258] sm:$0xf] %v562
                %v564 = vld [vmem:[%s260 + $0x4b8] sm:$0xf]
                %565 = vst [vmem:[%s261 + $0x25c] sm:$0xf] %v564
                %v566 = vld [vmem:[%s260 + $0x4c0] sm:$0xf]
                %567 = vst [vmem:[%s261 + $0x260] sm:$0xf] %v566
                %v568 = vld [vmem:[%s260 + $0x4c8] sm:$0xf]
                %569 = vst [vmem:[%s261 + $0x264] sm:$0xf] %v568
                %v570 = vld [vmem:[%s260 + $0x4d0] sm:$0xf]
                %571 = vst [vmem:[%s261 + $0x268] sm:$0xf] %v570
                %v572 = vld [vmem:[%s260 + $0x4d8] sm:$0xf]
                %573 = vst [vmem:[%s261 + $0x26c] sm:$0xf] %v572
                %v574 = vld [vmem:[%s260 + $0x4e0] sm:$0xf]
                %575 = vst [vmem:[%s261 + $0x270] sm:$0xf] %v574
                %v576 = vld [vmem:[%s260 + $0x4e8] sm:$0xf]
                %577 = vst [vmem:[%s261 + $0x274] sm:$0xf] %v576
                %v578 = vld [vmem:[%s260 + $0x4f0] sm:$0xf]
                %579 = vst [vmem:[%s261 + $0x278] sm:$0xf] %v578
                %v580 = vld [vmem:[%s260 + $0x4f8] sm:$0xf]
                %581 = vst [vmem:[%s261 + $0x27c] sm:$0xf] %v580
                %v582 = vld [vmem:[%s260 + $0x500] sm:$0xf]
                %583 = vst [vmem:[%s261 + $0x280] sm:$0xf] %v582
                %v584 = vld [vmem:[%s260 + $0x508] sm:$0xf]
                %585 = vst [vmem:[%s261 + $0x284] sm:$0xf] %v584
                %v586 = vld [vmem:[%s260 + $0x510] sm:$0xf]
                %587 = vst [vmem:[%s261 + $0x288] sm:$0xf] %v586
                %v588 = vld [vmem:[%s260 + $0x518] sm:$0xf]
                %589 = vst [vmem:[%s261 + $0x28c] sm:$0xf] %v588
                %v590 = vld [vmem:[%s260 + $0x520] sm:$0xf]
                %591 = vst [vmem:[%s261 + $0x290] sm:$0xf] %v590
                %v592 = vld [vmem:[%s260 + $0x528] sm:$0xf]
                %593 = vst [vmem:[%s261 + $0x294] sm:$0xf] %v592
                %v594 = vld [vmem:[%s260 + $0x530] sm:$0xf]
                %595 = vst [vmem:[%s261 + $0x298] sm:$0xf] %v594
                %v596 = vld [vmem:[%s260 + $0x538] sm:$0xf]
                %597 = vst [vmem:[%s261 + $0x29c] sm:$0xf] %v596
                %v598 = vld [vmem:[%s260 + $0x540] sm:$0xf]
                %599 = vst [vmem:[%s261 + $0x2a0] sm:$0xf] %v598
                %v600 = vld [vmem:[%s260 + $0x548] sm:$0xf]
                %601 = vst [vmem:[%s261 + $0x2a4] sm:$0xf] %v600
                %v602 = vld [vmem:[%s260 + $0x550] sm:$0xf]
                %603 = vst [vmem:[%s261 + $0x2a8] sm:$0xf] %v602
                %v604 = vld [vmem:[%s260 + $0x558] sm:$0xf]
                %605 = vst [vmem:[%s261 + $0x2ac] sm:$0xf] %v604
                %v606 = vld [vmem:[%s260 + $0x560] sm:$0xf]
                %607 = vst [vmem:[%s261 + $0x2b0] sm:$0xf] %v606
                %v608 = vld [vmem:[%s260 + $0x568] sm:$0xf]
                %609 = vst [vmem:[%s261 + $0x2b4] sm:$0xf] %v608
                %v610 = vld [vmem:[%s260 + $0x570] sm:$0xf]
                %611 = vst [vmem:[%s261 + $0x2b8] sm:$0xf] %v610
                %v612 = vld [vmem:[%s260 + $0x578] sm:$0xf]
                %613 = vst [vmem:[%s261 + $0x2bc] sm:$0xf] %v612
                %v614 = vld [vmem:[%s260 + $0x580] sm:$0xf]
                %615 = vst [vmem:[%s261 + $0x2c0] sm:$0xf] %v614
                %v616 = vld [vmem:[%s260 + $0x588] sm:$0xf]
                %617 = vst [vmem:[%s261 + $0x2c4] sm:$0xf] %v616
                %v618 = vld [vmem:[%s260 + $0x590] sm:$0xf]
                %619 = vst [vmem:[%s261 + $0x2c8] sm:$0xf] %v618
                %v620 = vld [vmem:[%s260 + $0x598] sm:$0xf]
                %621 = vst [vmem:[%s261 + $0x2cc] sm:$0xf] %v620
                %v622 = vld [vmem:[%s260 + $0x5a0] sm:$0xf]
                %623 = vst [vmem:[%s261 + $0x2d0] sm:$0xf] %v622
                %v624 = vld [vmem:[%s260 + $0x5a8] sm:$0xf]
                %625 = vst [vmem:[%s261 + $0x2d4] sm:$0xf] %v624
                %v626 = vld [vmem:[%s260 + $0x5b0] sm:$0xf]
                %627 = vst [vmem:[%s261 + $0x2d8] sm:$0xf] %v626
                %v628 = vld [vmem:[%s260 + $0x5b8] sm:$0xf]
                %629 = vst [vmem:[%s261 + $0x2dc] sm:$0xf] %v628
                %v630 = vld [vmem:[%s260 + $0x5c0] sm:$0xf]
                %631 = vst [vmem:[%s261 + $0x2e0] sm:$0xf] %v630
                %v632 = vld [vmem:[%s260 + $0x5c8] sm:$0xf]
                %633 = vst [vmem:[%s261 + $0x2e4] sm:$0xf] %v632
                %v634 = vld [vmem:[%s260 + $0x5d0] sm:$0xf]
                %635 = vst [vmem:[%s261 + $0x2e8] sm:$0xf] %v634
                %v636 = vld [vmem:[%s260 + $0x5d8] sm:$0xf]
                %637 = vst [vmem:[%s261 + $0x2ec] sm:$0xf] %v636
                %v638 = vld [vmem:[%s260 + $0x5e0] sm:$0xf]
                %639 = vst [vmem:[%s261 + $0x2f0] sm:$0xf] %v638
                %v640 = vld [vmem:[%s260 + $0x5e8] sm:$0xf]
                %641 = vst [vmem:[%s261 + $0x2f4] sm:$0xf] %v640
                %v642 = vld [vmem:[%s260 + $0x5f0] sm:$0xf]
                %643 = vst [vmem:[%s261 + $0x2f8] sm:$0xf] %v642
                %v644 = vld [vmem:[%s260 + $0x5f8] sm:$0xf]
                %645 = vst [vmem:[%s261 + $0x2fc] sm:$0xf] %v644
                %v646 = vld [vmem:[%s260 + $0x600] sm:$0xf]
                %647 = vst [vmem:[%s261 + $0x300] sm:$0xf] %v646
                %v648 = vld [vmem:[%s260 + $0x608] sm:$0xf]
                %649 = vst [vmem:[%s261 + $0x304] sm:$0xf] %v648
                %v650 = vld [vmem:[%s260 + $0x610] sm:$0xf]
                %651 = vst [vmem:[%s261 + $0x308] sm:$0xf] %v650
                %v652 = vld [vmem:[%s260 + $0x618] sm:$0xf]
                %653 = vst [vmem:[%s261 + $0x30c] sm:$0xf] %v652
                %v654 = vld [vmem:[%s260 + $0x620] sm:$0xf]
                %655 = vst [vmem:[%s261 + $0x310] sm:$0xf] %v654
                %v656 = vld [vmem:[%s260 + $0x628] sm:$0xf]
                %657 = vst [vmem:[%s261 + $0x314] sm:$0xf] %v656
                %v658 = vld [vmem:[%s260 + $0x630] sm:$0xf]
                %659 = vst [vmem:[%s261 + $0x318] sm:$0xf] %v658
                %v660 = vld [vmem:[%s260 + $0x638] sm:$0xf]
                %661 = vst [vmem:[%s261 + $0x31c] sm:$0xf] %v660
                %v662 = vld [vmem:[%s260 + $0x640] sm:$0xf]
                %663 = vst [vmem:[%s261 + $0x320] sm:$0xf] %v662
                %v664 = vld [vmem:[%s260 + $0x648] sm:$0xf]
                %665 = vst [vmem:[%s261 + $0x324] sm:$0xf] %v664
                %v666 = vld [vmem:[%s260 + $0x650] sm:$0xf]
                %667 = vst [vmem:[%s261 + $0x328] sm:$0xf] %v666
                %v668 = vld [vmem:[%s260 + $0x658] sm:$0xf]
                %669 = vst [vmem:[%s261 + $0x32c] sm:$0xf] %v668
                %v670 = vld [vmem:[%s260 + $0x660] sm:$0xf]
                %671 = vst [vmem:[%s261 + $0x330] sm:$0xf] %v670
                %v672 = vld [vmem:[%s260 + $0x668] sm:$0xf]
                %673 = vst [vmem:[%s261 + $0x334] sm:$0xf] %v672
                %v674 = vld [vmem:[%s260 + $0x670] sm:$0xf]
                %675 = vst [vmem:[%s261 + $0x338] sm:$0xf] %v674
                %v676 = vld [vmem:[%s260 + $0x678] sm:$0xf]
                %677 = vst [vmem:[%s261 + $0x33c] sm:$0xf] %v676
                %v678 = vld [vmem:[%s260 + $0x680] sm:$0xf]
                %679 = vst [vmem:[%s261 + $0x340] sm:$0xf] %v678
                %v680 = vld [vmem:[%s260 + $0x688] sm:$0xf]
                %681 = vst [vmem:[%s261 + $0x344] sm:$0xf] %v680
                %v682 = vld [vmem:[%s260 + $0x690] sm:$0xf]
                %683 = vst [vmem:[%s261 + $0x348] sm:$0xf] %v682
                %v684 = vld [vmem:[%s260 + $0x698] sm:$0xf]
                %685 = vst [vmem:[%s261 + $0x34c] sm:$0xf] %v684
                %v686 = vld [vmem:[%s260 + $0x6a0] sm:$0xf]
                %687 = vst [vmem:[%s261 + $0x350] sm:$0xf] %v686
                %v688 = vld [vmem:[%s260 + $0x6a8] sm:$0xf]
                %689 = vst [vmem:[%s261 + $0x354] sm:$0xf] %v688
                %v690 = vld [vmem:[%s260 + $0x6b0] sm:$0xf]
                %691 = vst [vmem:[%s261 + $0x358] sm:$0xf] %v690
                %v692 = vld [vmem:[%s260 + $0x6b8] sm:$0xf]
                %693 = vst [vmem:[%s261 + $0x35c] sm:$0xf] %v692
                %v694 = vld [vmem:[%s260 + $0x6c0] sm:$0xf]
                %695 = vst [vmem:[%s261 + $0x360] sm:$0xf] %v694
                %v696 = vld [vmem:[%s260 + $0x6c8] sm:$0xf]
                %697 = vst [vmem:[%s261 + $0x364] sm:$0xf] %v696
                %v698 = vld [vmem:[%s260 + $0x6d0] sm:$0xf]
                %699 = vst [vmem:[%s261 + $0x368] sm:$0xf] %v698
                %v700 = vld [vmem:[%s260 + $0x6d8] sm:$0xf]
                %701 = vst [vmem:[%s261 + $0x36c] sm:$0xf] %v700
                %v702 = vld [vmem:[%s260 + $0x6e0] sm:$0xf]
                %703 = vst [vmem:[%s261 + $0x370] sm:$0xf] %v702
                %v704 = vld [vmem:[%s260 + $0x6e8] sm:$0xf]
                %705 = vst [vmem:[%s261 + $0x374] sm:$0xf] %v704
                %v706 = vld [vmem:[%s260 + $0x6f0] sm:$0xf]
                %707 = vst [vmem:[%s261 + $0x378] sm:$0xf] %v706
                %v708 = vld [vmem:[%s260 + $0x6f8] sm:$0xf]
                %709 = vst [vmem:[%s261 + $0x37c] sm:$0xf] %v708
                %v710 = vld [vmem:[%s260 + $0x700] sm:$0xf]
                %711 = vst [vmem:[%s261 + $0x380] sm:$0xf] %v710
                %v712 = vld [vmem:[%s260 + $0x708] sm:$0xf]
                %713 = vst [vmem:[%s261 + $0x384] sm:$0xf] %v712
                %v714 = vld [vmem:[%s260 + $0x710] sm:$0xf]
                %715 = vst [vmem:[%s261 + $0x388] sm:$0xf] %v714
                %v716 = vld [vmem:[%s260 + $0x718] sm:$0xf]
                %717 = vst [vmem:[%s261 + $0x38c] sm:$0xf] %v716
                %v718 = vld [vmem:[%s260 + $0x720] sm:$0xf]
                %719 = vst [vmem:[%s261 + $0x390] sm:$0xf] %v718
                %v720 = vld [vmem:[%s260 + $0x728] sm:$0xf]
                %721 = vst [vmem:[%s261 + $0x394] sm:$0xf] %v720
                %v722 = vld [vmem:[%s260 + $0x730] sm:$0xf]
                %723 = vst [vmem:[%s261 + $0x398] sm:$0xf] %v722
                %v724 = vld [vmem:[%s260 + $0x738] sm:$0xf]
                %725 = vst [vmem:[%s261 + $0x39c] sm:$0xf] %v724
                %v726 = vld [vmem:[%s260 + $0x740] sm:$0xf]
                %727 = vst [vmem:[%s261 + $0x3a0] sm:$0xf] %v726
                %v728 = vld [vmem:[%s260 + $0x748] sm:$0xf]
                %729 = vst [vmem:[%s261 + $0x3a4] sm:$0xf] %v728
                %v730 = vld [vmem:[%s260 + $0x750] sm:$0xf]
                %731 = vst [vmem:[%s261 + $0x3a8] sm:$0xf] %v730
                %v732 = vld [vmem:[%s260 + $0x758] sm:$0xf]
                %733 = vst [vmem:[%s261 + $0x3ac] sm:$0xf] %v732
                %v734 = vld [vmem:[%s260 + $0x760] sm:$0xf]
                %735 = vst [vmem:[%s261 + $0x3b0] sm:$0xf] %v734
                %v736 = vld [vmem:[%s260 + $0x768] sm:$0xf]
                %737 = vst [vmem:[%s261 + $0x3b4] sm:$0xf] %v736
                %v738 = vld [vmem:[%s260 + $0x770] sm:$0xf]
                %739 = vst [vmem:[%s261 + $0x3b8] sm:$0xf] %v738
                %v740 = vld [vmem:[%s260 + $0x778] sm:$0xf]
                %741 = vst [vmem:[%s261 + $0x3bc] sm:$0xf] %v740
                %v742 = vld [vmem:[%s260 + $0x780] sm:$0xf]
                %743 = vst [vmem:[%s261 + $0x3c0] sm:$0xf] %v742
                %v744 = vld [vmem:[%s260 + $0x788] sm:$0xf]
                %745 = vst [vmem:[%s261 + $0x3c4] sm:$0xf] %v744
                %v746 = vld [vmem:[%s260 + $0x790] sm:$0xf]
                %747 = vst [vmem:[%s261 + $0x3c8] sm:$0xf] %v746
                %v748 = vld [vmem:[%s260 + $0x798] sm:$0xf]
                %749 = vst [vmem:[%s261 + $0x3cc] sm:$0xf] %v748
                %v750 = vld [vmem:[%s260 + $0x7a0] sm:$0xf]
                %751 = vst [vmem:[%s261 + $0x3d0] sm:$0xf] %v750
                %v752 = vld [vmem:[%s260 + $0x7a8] sm:$0xf]
                %753 = vst [vmem:[%s261 + $0x3d4] sm:$0xf] %v752
                %v754 = vld [vmem:[%s260 + $0x7b0] sm:$0xf]
                %755 = vst [vmem:[%s261 + $0x3d8] sm:$0xf] %v754
                %v756 = vld [vmem:[%s260 + $0x7b8] sm:$0xf]
                %757 = vst [vmem:[%s261 + $0x3dc] sm:$0xf] %v756
                %v758 = vld [vmem:[%s260 + $0x7c0] sm:$0xf]
                %759 = vst [vmem:[%s261 + $0x3e0] sm:$0xf] %v758
                %v760 = vld [vmem:[%s260 + $0x7c8] sm:$0xf]
                %761 = vst [vmem:[%s261 + $0x3e4] sm:$0xf] %v760
                %v762 = vld [vmem:[%s260 + $0x7d0] sm:$0xf]
                %763 = vst [vmem:[%s261 + $0x3e8] sm:$0xf] %v762
                %v764 = vld [vmem:[%s260 + $0x7d8] sm:$0xf]
                %765 = vst [vmem:[%s261 + $0x3ec] sm:$0xf] %v764
                %v766 = vld [vmem:[%s260 + $0x7e0] sm:$0xf]
                %767 = vst [vmem:[%s261 + $0x3f0] sm:$0xf] %v766
                %v768 = vld [vmem:[%s260 + $0x7e8] sm:$0xf]
                %769 = vst [vmem:[%s261 + $0x3f4] sm:$0xf] %v768
                %v770 = vld [vmem:[%s260 + $0x7f0] sm:$0xf]
                %771 = vst [vmem:[%s261 + $0x3f8] sm:$0xf] %v770
                %v772 = vld [vmem:[%s260 + $0x7f8] sm:$0xf]
                %773 = vst [vmem:[%s261 + $0x3fc] sm:$0xf] %v772
              $region41: #{_lambda_.17} parent=35 // loop_footer
                %s259 = sadd.s32 1, %s255
              $region42: #{_lambda_.17} parent=35 // loop_footer_branch
                %254 = sbr.rel target = $region38
              $region43: #{_lambda_.17} parent=35 // loop_exit
                _
            $region36: #{_lambda_.17} parent=27 // pred_fallthru
              _
          $region28: #{_lambda_.17} parent=23 // pred_fallthru
            _
          %1305 = vnop
        $region24: #{_lambda_.17} parent=19 // pred_fallthru
          _
        // Predicated region
        $region62: #{_lambda_.17} parent=19 // pred_check
          %p1306 = pneg %p97
        $region63: #{_lambda_.17} parent=19 // pred_check_branch
          %1308 = sbr.rel (%p1306) target = $region65
        $region64: #{_lambda_.17} parent=19 // pred_region
          %p1309 = scmp.lt.s32.totalorder %s20, 1
          %s1310 = scalar_select %p1309, %s20, 1
          %s1311 = scalar_lea.vmem %s2, %s1310
        $region65: #{_lambda_.17} parent=19 // pred_fallthru
          _
        // Predicated region
        $region66: #{_lambda_.17} parent=19 // pred_check
          %p1312 = pneg %p123
        $region67: #{_lambda_.17} parent=19 // pred_check_branch
          %1314 = sbr.rel (%p1312) target = $region69
        $region68: #{_lambda_.17} parent=19 // pred_region
          %p1315 = scmp.lt.s32.totalorder %s20, 1
          %s1316 = scalar_select %p1315, %s20, 1
          %s1317 = scalar_lea.vmem %s3, %s1316
        $region69: #{_lambda_.17} parent=19 // pred_fallthru
          _
      $region20: #{_lambda_.17} parent=5 // pred_fallthru
        _
      %p1318 = scmp.le.s32.totalorder 1, %s13
      %p1319 = scmp.lt.s32.totalorder %s13, 3
      %p1320 = pnand %p1318, %p1319
      %p1321 = pneg %p1320
      // Predicated region
      $region70: #{_lambda_.17} parent=5 // pred_check
        _
      $region71: #{_lambda_.17} parent=5 // pred_check_branch
        %1323 = sbr.rel (%p1320) target = $region73
      $region72: #{_lambda_.17} parent=5 // pred_region
        %s1324 = ssub.s32 %s13, 1
        %s1325 = sand.u32 %s64, 1
        %s1326 = sand.u32 %s64, 1
        %s1327 = smul.addr %s1326, 1024
        %s1328 = scalar_lea.vmem [#allocation2], %s1327
        // Predicated region
        $region74: #{_lambda_.17} parent=72 // pred_check
          %p1329 = pneg %p77
        $region75: #{_lambda_.17} parent=72 // pred_check_branch
          %1331 = sbr.rel (%p1329) target = $region77
        $region76: #{_lambda_.17} parent=72 // pred_region
          _
        $region77: #{_lambda_.17} parent=72 // pred_fallthru
          _
        %s1332 = smul.u32 2, %s23
        %p1333 = scmp.lt.s32.totalorder %s1332, 1
        %s1334 = scalar_select %p1333, %s1332, 1
        %s1335 = smul.addr %s1334, 16
        %s1336 = smul.addr %s1335, 4
        %s1337 = scalar_lea.vmem %s0, %s1336
        %p1338 = pneg %p51
        %p1339 = pneg %p48
        %s1340 = sand.u32 %s64, 1
        %s1341 = sand.u32 %s64, 1
        %s1342 = smul.addr %s1341, 1024
        %s1343 = scalar_lea.vmem [#allocation2], %s1342
        %p1344 = pneg %p77
        %p1345 = pneg %p74
        %p1346 = scmp.lt.s32.totalorder %s22, 1
        %s1347 = scalar_select %p1346, %s22, 1
        %s1348 = scalar_lea.vmem %s2, %s1347
        %p1349 = pneg %p103
        %p1350 = pneg %p100
        %p1351 = scmp.lt.s32.totalorder %s22, 1
        %s1352 = scalar_select %p1351, %s22, 1
        %s1353 = scalar_lea.vmem %s3, %s1352
        %p1354 = pneg %p129
        %p1355 = pneg %p126
        %p1356 = pneg %p157
        %p1357 = pneg %p154
        %s1358 = sand.u32 %s144, 1
        %s1359 = sand.u32 %s144, 1
        %s1360 = smul.addr %s1359, 8
        %s1361 = scalar_lea.vmem [#allocation3], %s1360
        %p1362 = pneg %p183
        %p1363 = pneg %p180
        %p1364 = scmp.lt.s32.totalorder %s22, 1
        %s1365 = scalar_select %p1364, %s22, 1
        %s1366 = scalar_lea.vmem %s5, %s1365
        %p1367 = pneg %p209
        %p1368 = pneg %p206
        %p1369 = scmp.lt.s32.totalorder %s22, 1
        %s1370 = scalar_select %p1369, %s22, 1
        %s1371 = scalar_lea.vmem %s6, %s1370
        %s1372 = smul.u32 2, %s23
        %p1373 = scmp.lt.s32.totalorder %s1372, 1
        %s1374 = scalar_select %p1373, %s1372, 1
        %s1375 = smul.addr %s1374, 16
        %s1376 = smul.addr %s1375, 4
        %s1377 = scalar_lea.vmem %s0, %s1376
        %s1378 = smul.u32 2, %s23
        %p1379 = scmp.lt.s32.totalorder %s22, 1
        %s1380 = scalar_select %p1379, %s22, 1
        %s1381 = scalar_lea.vmem %s2, %s1380
        %p1382 = scmp.lt.s32.totalorder %s22, 1
        %s1383 = scalar_select %p1382, %s22, 1
        %s1384 = scalar_lea.vmem %s3, %s1383
        %s1385 = smul.u32 2, %s23
        %p1386 = scmp.lt.s32.totalorder %s22, 1
        %s1387 = scalar_select %p1386, %s22, 1
        %s1388 = scalar_lea.vmem %s5, %s1387
        %p1389 = scmp.lt.s32.totalorder %s22, 1
        %s1390 = scalar_select %p1389, %s22, 1
        %s1391 = scalar_lea.vmem %s6, %s1390
        %v1393 = vld [vmem:[%s1377] sm:$0xff]
        %v1394 = vld [vmem:[%s1377 + $0x8] sm:$0xff]
        %v1395 = vld [vmem:[%s1377 + $0x10] sm:$0xff]
        %v1396 = vld [vmem:[%s1377 + $0x18] sm:$0xff]
        %v1397 = vld [vmem:[%s1377 + $0x20] sm:$0xff]
        %v1398 = vld [vmem:[%s1377 + $0x28] sm:$0xff]
        %v1399 = vld [vmem:[%s1377 + $0x30] sm:$0xff]
        %v1400 = vld [vmem:[%s1377 + $0x38] sm:$0xff]
        %v1401 = vld [vmem:[%s1377 + $0x40] sm:$0xff]
        %v1402 = vld [vmem:[%s1377 + $0x48] sm:$0xff]
        %v1403 = vld [vmem:[%s1377 + $0x50] sm:$0xff]
        %v1404 = vld [vmem:[%s1377 + $0x58] sm:$0xff]
        %v1405 = vld [vmem:[%s1377 + $0x60] sm:$0xff]
        %v1406 = vld [vmem:[%s1377 + $0x68] sm:$0xff]
        %v1407 = vld [vmem:[%s1377 + $0x70] sm:$0xff]
        %v1408 = vld [vmem:[%s1377 + $0x78] sm:$0xff]
        %v1409 = vld [vmem:[%s1328] sm:$0xf]
        %v1410 = vld [vmem:[%s1328 + $0x4] sm:$0xf]
        %v1411 = vld [vmem:[%s1328 + $0x8] sm:$0xf]
        %v1412 = vld [vmem:[%s1328 + $0xc] sm:$0xf]
        %v1413 = vld [vmem:[%s1328 + $0x10] sm:$0xf]
        %v1414 = vld [vmem:[%s1328 + $0x14] sm:$0xf]
        %v1415 = vld [vmem:[%s1328 + $0x18] sm:$0xf]
        %v1416 = vld [vmem:[%s1328 + $0x1c] sm:$0xf]
        %v1417 = vld [vmem:[%s1328 + $0x20] sm:$0xf]
        %v1418 = vld [vmem:[%s1328 + $0x24] sm:$0xf]
        %v1419 = vld [vmem:[%s1328 + $0x28] sm:$0xf]
        %v1420 = vld [vmem:[%s1328 + $0x2c] sm:$0xf]
        %v1421 = vld [vmem:[%s1328 + $0x30] sm:$0xf]
        %v1422 = vld [vmem:[%s1328 + $0x34] sm:$0xf]
        %v1423 = vld [vmem:[%s1328 + $0x38] sm:$0xf]
        %v1424 = vld [vmem:[%s1328 + $0x3c] sm:$0xf]
        %v1425 = vld [vmem:[%s1328 + $0x40] sm:$0xf]
        %v1426 = vld [vmem:[%s1328 + $0x44] sm:$0xf]
        %v1427 = vld [vmem:[%s1328 + $0x48] sm:$0xf]
        %v1428 = vld [vmem:[%s1328 + $0x4c] sm:$0xf]
        %v1429 = vld [vmem:[%s1328 + $0x50] sm:$0xf]
        %v1430 = vld [vmem:[%s1328 + $0x54] sm:$0xf]
        %v1431 = vld [vmem:[%s1328 + $0x58] sm:$0xf]
        %v1432 = vld [vmem:[%s1328 + $0x5c] sm:$0xf]
        %v1433 = vld [vmem:[%s1328 + $0x60] sm:$0xf]
        %v1434 = vld [vmem:[%s1328 + $0x64] sm:$0xf]
        %v1435 = vld [vmem:[%s1328 + $0x68] sm:$0xf]
        %v1436 = vld [vmem:[%s1328 + $0x6c] sm:$0xf]
        %v1437 = vld [vmem:[%s1328 + $0x70] sm:$0xf]
        %v1438 = vld [vmem:[%s1328 + $0x74] sm:$0xf]
        %v1439 = vld [vmem:[%s1328 + $0x78] sm:$0xf]
        %v1440 = vld [vmem:[%s1328 + $0x7c] sm:$0xf]
        %v1441 = vld [vmem:[%s1328 + $0x80] sm:$0xf]
        %v1442 = vld [vmem:[%s1328 + $0x84] sm:$0xf]
        %v1443 = vld [vmem:[%s1328 + $0x88] sm:$0xf]
        %v1444 = vld [vmem:[%s1328 + $0x8c] sm:$0xf]
        %v1445 = vld [vmem:[%s1328 + $0x90] sm:$0xf]
        %v1446 = vld [vmem:[%s1328 + $0x94] sm:$0xf]
        %v1447 = vld [vmem:[%s1328 + $0x98] sm:$0xf]
        %v1448 = vld [vmem:[%s1328 + $0x9c] sm:$0xf]
        %v1449 = vld [vmem:[%s1328 + $0xa0] sm:$0xf]
        %v1450 = vld [vmem:[%s1328 + $0xa4] sm:$0xf]
        %v1451 = vld [vmem:[%s1328 + $0xa8] sm:$0xf]
        %v1452 = vld [vmem:[%s1328 + $0xac] sm:$0xf]
        %v1453 = vld [vmem:[%s1328 + $0xb0] sm:$0xf]
        %v1454 = vld [vmem:[%s1328 + $0xb4] sm:$0xf]
        %v1455 = vld [vmem:[%s1328 + $0xb8] sm:$0xf]
        %v1456 = vld [vmem:[%s1328 + $0xbc] sm:$0xf]
        %v1457 = vld [vmem:[%s1328 + $0xc0] sm:$0xf]
        %v1458 = vld [vmem:[%s1328 + $0xc4] sm:$0xf]
        %v1459 = vld [vmem:[%s1328 + $0xc8] sm:$0xf]
        %v1460 = vld [vmem:[%s1328 + $0xcc] sm:$0xf]
        %v1461 = vld [vmem:[%s1328 + $0xd0] sm:$0xf]
        %v1462 = vld [vmem:[%s1328 + $0xd4] sm:$0xf]
        %v1463 = vld [vmem:[%s1328 + $0xd8] sm:$0xf]
        %v1464 = vld [vmem:[%s1328 + $0xdc] sm:$0xf]
        %v1465 = vld [vmem:[%s1328 + $0xe0] sm:$0xf]
        %v1466 = vld [vmem:[%s1328 + $0xe4] sm:$0xf]
        %v1467 = vld [vmem:[%s1328 + $0xe8] sm:$0xf]
        %v1468 = vld [vmem:[%s1328 + $0xec] sm:$0xf]
        %v1469 = vld [vmem:[%s1328 + $0xf0] sm:$0xf]
        %v1470 = vld [vmem:[%s1328 + $0xf4] sm:$0xf]
        %v1471 = vld [vmem:[%s1328 + $0xf8] sm:$0xf]
        %v1472 = vld [vmem:[%s1328 + $0xfc] sm:$0xf]
        %v1473 = vld [vmem:[%s1328 + $0x100] sm:$0xf]
        %v1474 = vld [vmem:[%s1328 + $0x104] sm:$0xf]
        %v1475 = vld [vmem:[%s1328 + $0x108] sm:$0xf]
        %v1476 = vld [vmem:[%s1328 + $0x10c] sm:$0xf]
        %v1477 = vld [vmem:[%s1328 + $0x110] sm:$0xf]
        %v1478 = vld [vmem:[%s1328 + $0x114] sm:$0xf]
        %v1479 = vld [vmem:[%s1328 + $0x118] sm:$0xf]
        %v1480 = vld [vmem:[%s1328 + $0x11c] sm:$0xf]
        %v1481 = vld [vmem:[%s1328 + $0x120] sm:$0xf]
        %v1482 = vld [vmem:[%s1328 + $0x124] sm:$0xf]
        %v1483 = vld [vmem:[%s1328 + $0x128] sm:$0xf]
        %v1484 = vld [vmem:[%s1328 + $0x12c] sm:$0xf]
        %v1485 = vld [vmem:[%s1328 + $0x130] sm:$0xf]
        %v1486 = vld [vmem:[%s1328 + $0x134] sm:$0xf]
        %v1487 = vld [vmem:[%s1328 + $0x138] sm:$0xf]
        %v1488 = vld [vmem:[%s1328 + $0x13c] sm:$0xf]
        %v1489 = vld [vmem:[%s1328 + $0x140] sm:$0xf]
        %v1490 = vld [vmem:[%s1328 + $0x144] sm:$0xf]
        %v1491 = vld [vmem:[%s1328 + $0x148] sm:$0xf]
        %v1492 = vld [vmem:[%s1328 + $0x14c] sm:$0xf]
        %v1493 = vld [vmem:[%s1328 + $0x150] sm:$0xf]
        %v1494 = vld [vmem:[%s1328 + $0x154] sm:$0xf]
        %v1495 = vld [vmem:[%s1328 + $0x158] sm:$0xf]
        %v1496 = vld [vmem:[%s1328 + $0x15c] sm:$0xf]
        %v1497 = vld [vmem:[%s1328 + $0x160] sm:$0xf]
        %v1498 = vld [vmem:[%s1328 + $0x164] sm:$0xf]
        %v1499 = vld [vmem:[%s1328 + $0x168] sm:$0xf]
        %v1500 = vld [vmem:[%s1328 + $0x16c] sm:$0xf]
        %v1501 = vld [vmem:[%s1328 + $0x170] sm:$0xf]
        %v1502 = vld [vmem:[%s1328 + $0x174] sm:$0xf]
        %v1503 = vld [vmem:[%s1328 + $0x178] sm:$0xf]
        %v1504 = vld [vmem:[%s1328 + $0x17c] sm:$0xf]
        %v1505 = vld [vmem:[%s1328 + $0x180] sm:$0xf]
        %v1506 = vld [vmem:[%s1328 + $0x184] sm:$0xf]
        %v1507 = vld [vmem:[%s1328 + $0x188] sm:$0xf]
        %v1508 = vld [vmem:[%s1328 + $0x18c] sm:$0xf]
        %v1509 = vld [vmem:[%s1328 + $0x190] sm:$0xf]
        %v1510 = vld [vmem:[%s1328 + $0x194] sm:$0xf]
        %v1511 = vld [vmem:[%s1328 + $0x198] sm:$0xf]
        %v1512 = vld [vmem:[%s1328 + $0x19c] sm:$0xf]
        %v1513 = vld [vmem:[%s1328 + $0x1a0] sm:$0xf]
        %v1514 = vld [vmem:[%s1328 + $0x1a4] sm:$0xf]
        %v1515 = vld [vmem:[%s1328 + $0x1a8] sm:$0xf]
        %v1516 = vld [vmem:[%s1328 + $0x1ac] sm:$0xf]
        %v1517 = vld [vmem:[%s1328 + $0x1b0] sm:$0xf]
        %v1518 = vld [vmem:[%s1328 + $0x1b4] sm:$0xf]
        %v1519 = vld [vmem:[%s1328 + $0x1b8] sm:$0xf]
        %v1520 = vld [vmem:[%s1328 + $0x1bc] sm:$0xf]
        %v1521 = vld [vmem:[%s1328 + $0x1c0] sm:$0xf]
        %v1522 = vld [vmem:[%s1328 + $0x1c4] sm:$0xf]
        %v1523 = vld [vmem:[%s1328 + $0x1c8] sm:$0xf]
        %v1524 = vld [vmem:[%s1328 + $0x1cc] sm:$0xf]
        %v1525 = vld [vmem:[%s1328 + $0x1d0] sm:$0xf]
        %v1526 = vld [vmem:[%s1328 + $0x1d4] sm:$0xf]
        %v1527 = vld [vmem:[%s1328 + $0x1d8] sm:$0xf]
        %v1528 = vld [vmem:[%s1328 + $0x1dc] sm:$0xf]
        %v1529 = vld [vmem:[%s1328 + $0x1e0] sm:$0xf]
        %v1530 = vld [vmem:[%s1328 + $0x1e4] sm:$0xf]
        %v1531 = vld [vmem:[%s1328 + $0x1e8] sm:$0xf]
        %v1532 = vld [vmem:[%s1328 + $0x1ec] sm:$0xf]
        %v1533 = vld [vmem:[%s1328 + $0x1f0] sm:$0xf]
        %v1534 = vld [vmem:[%s1328 + $0x1f4] sm:$0xf]
        %v1535 = vld [vmem:[%s1328 + $0x1f8] sm:$0xf]
        %v1536 = vld [vmem:[%s1328 + $0x1fc] sm:$0xf]
        %v1537 = vld [vmem:[%s1328 + $0x200] sm:$0xf]
        %v1538 = vld [vmem:[%s1328 + $0x204] sm:$0xf]
        %v1539 = vld [vmem:[%s1328 + $0x208] sm:$0xf]
        %v1540 = vld [vmem:[%s1328 + $0x20c] sm:$0xf]
        %v1541 = vld [vmem:[%s1328 + $0x210] sm:$0xf]
        %v1542 = vld [vmem:[%s1328 + $0x214] sm:$0xf]
        %v1543 = vld [vmem:[%s1328 + $0x218] sm:$0xf]
        %v1544 = vld [vmem:[%s1328 + $0x21c] sm:$0xf]
        %v1545 = vld [vmem:[%s1328 + $0x220] sm:$0xf]
        %v1546 = vld [vmem:[%s1328 + $0x224] sm:$0xf]
        %v1547 = vld [vmem:[%s1328 + $0x228] sm:$0xf]
        %v1548 = vld [vmem:[%s1328 + $0x22c] sm:$0xf]
        %v1549 = vld [vmem:[%s1328 + $0x230] sm:$0xf]
        %v1550 = vld [vmem:[%s1328 + $0x234] sm:$0xf]
        %v1551 = vld [vmem:[%s1328 + $0x238] sm:$0xf]
        %v1552 = vld [vmem:[%s1328 + $0x23c] sm:$0xf]
        %v1553 = vld [vmem:[%s1328 + $0x240] sm:$0xf]
        %v1554 = vld [vmem:[%s1328 + $0x244] sm:$0xf]
        %v1555 = vld [vmem:[%s1328 + $0x248] sm:$0xf]
        %v1556 = vld [vmem:[%s1328 + $0x24c] sm:$0xf]
        %v1557 = vld [vmem:[%s1328 + $0x250] sm:$0xf]
        %v1558 = vld [vmem:[%s1328 + $0x254] sm:$0xf]
        %v1559 = vld [vmem:[%s1328 + $0x258] sm:$0xf]
        %v1560 = vld [vmem:[%s1328 + $0x25c] sm:$0xf]
        %v1561 = vld [vmem:[%s1328 + $0x260] sm:$0xf]
        %v1562 = vld [vmem:[%s1328 + $0x264] sm:$0xf]
        %v1563 = vld [vmem:[%s1328 + $0x268] sm:$0xf]
        %v1564 = vld [vmem:[%s1328 + $0x26c] sm:$0xf]
        %v1565 = vld [vmem:[%s1328 + $0x270] sm:$0xf]
        %v1566 = vld [vmem:[%s1328 + $0x274] sm:$0xf]
        %v1567 = vld [vmem:[%s1328 + $0x278] sm:$0xf]
        %v1568 = vld [vmem:[%s1328 + $0x27c] sm:$0xf]
        %v1569 = vld [vmem:[%s1328 + $0x280] sm:$0xf]
        %v1570 = vld [vmem:[%s1328 + $0x284] sm:$0xf]
        %v1571 = vld [vmem:[%s1328 + $0x288] sm:$0xf]
        %v1572 = vld [vmem:[%s1328 + $0x28c] sm:$0xf]
        %v1573 = vld [vmem:[%s1328 + $0x290] sm:$0xf]
        %v1574 = vld [vmem:[%s1328 + $0x294] sm:$0xf]
        %v1575 = vld [vmem:[%s1328 + $0x298] sm:$0xf]
        %v1576 = vld [vmem:[%s1328 + $0x29c] sm:$0xf]
        %v1577 = vld [vmem:[%s1328 + $0x2a0] sm:$0xf]
        %v1578 = vld [vmem:[%s1328 + $0x2a4] sm:$0xf]
        %v1579 = vld [vmem:[%s1328 + $0x2a8] sm:$0xf]
        %v1580 = vld [vmem:[%s1328 + $0x2ac] sm:$0xf]
        %v1581 = vld [vmem:[%s1328 + $0x2b0] sm:$0xf]
        %v1582 = vld [vmem:[%s1328 + $0x2b4] sm:$0xf]
        %v1583 = vld [vmem:[%s1328 + $0x2b8] sm:$0xf]
        %v1584 = vld [vmem:[%s1328 + $0x2bc] sm:$0xf]
        %v1585 = vld [vmem:[%s1328 + $0x2c0] sm:$0xf]
        %v1586 = vld [vmem:[%s1328 + $0x2c4] sm:$0xf]
        %v1587 = vld [vmem:[%s1328 + $0x2c8] sm:$0xf]
        %v1588 = vld [vmem:[%s1328 + $0x2cc] sm:$0xf]
        %v1589 = vld [vmem:[%s1328 + $0x2d0] sm:$0xf]
        %v1590 = vld [vmem:[%s1328 + $0x2d4] sm:$0xf]
        %v1591 = vld [vmem:[%s1328 + $0x2d8] sm:$0xf]
        %v1592 = vld [vmem:[%s1328 + $0x2dc] sm:$0xf]
        %v1593 = vld [vmem:[%s1328 + $0x2e0] sm:$0xf]
        %v1594 = vld [vmem:[%s1328 + $0x2e4] sm:$0xf]
        %v1595 = vld [vmem:[%s1328 + $0x2e8] sm:$0xf]
        %v1596 = vld [vmem:[%s1328 + $0x2ec] sm:$0xf]
        %v1597 = vld [vmem:[%s1328 + $0x2f0] sm:$0xf]
        %v1598 = vld [vmem:[%s1328 + $0x2f4] sm:$0xf]
        %v1599 = vld [vmem:[%s1328 + $0x2f8] sm:$0xf]
        %v1600 = vld [vmem:[%s1328 + $0x2fc] sm:$0xf]
        %v1601 = vld [vmem:[%s1328 + $0x300] sm:$0xf]
        %v1602 = vld [vmem:[%s1328 + $0x304] sm:$0xf]
        %v1603 = vld [vmem:[%s1328 + $0x308] sm:$0xf]
        %v1604 = vld [vmem:[%s1328 + $0x30c] sm:$0xf]
        %v1605 = vld [vmem:[%s1328 + $0x310] sm:$0xf]
        %v1606 = vld [vmem:[%s1328 + $0x314] sm:$0xf]
        %v1607 = vld [vmem:[%s1328 + $0x318] sm:$0xf]
        %v1608 = vld [vmem:[%s1328 + $0x31c] sm:$0xf]
        %v1609 = vld [vmem:[%s1328 + $0x320] sm:$0xf]
        %v1610 = vld [vmem:[%s1328 + $0x324] sm:$0xf]
        %v1611 = vld [vmem:[%s1328 + $0x328] sm:$0xf]
        %v1612 = vld [vmem:[%s1328 + $0x32c] sm:$0xf]
        %v1613 = vld [vmem:[%s1328 + $0x330] sm:$0xf]
        %v1614 = vld [vmem:[%s1328 + $0x334] sm:$0xf]
        %v1615 = vld [vmem:[%s1328 + $0x338] sm:$0xf]
        %v1616 = vld [vmem:[%s1328 + $0x33c] sm:$0xf]
        %v1617 = vld [vmem:[%s1328 + $0x340] sm:$0xf]
        %v1618 = vld [vmem:[%s1328 + $0x344] sm:$0xf]
        %v1619 = vld [vmem:[%s1328 + $0x348] sm:$0xf]
        %v1620 = vld [vmem:[%s1328 + $0x34c] sm:$0xf]
        %v1621 = vld [vmem:[%s1328 + $0x350] sm:$0xf]
        %v1622 = vld [vmem:[%s1328 + $0x354] sm:$0xf]
        %v1623 = vld [vmem:[%s1328 + $0x358] sm:$0xf]
        %v1624 = vld [vmem:[%s1328 + $0x35c] sm:$0xf]
        %v1625 = vld [vmem:[%s1328 + $0x360] sm:$0xf]
        %v1626 = vld [vmem:[%s1328 + $0x364] sm:$0xf]
        %v1627 = vld [vmem:[%s1328 + $0x368] sm:$0xf]
        %v1628 = vld [vmem:[%s1328 + $0x36c] sm:$0xf]
        %v1629 = vld [vmem:[%s1328 + $0x370] sm:$0xf]
        %v1630 = vld [vmem:[%s1328 + $0x374] sm:$0xf]
        %v1631 = vld [vmem:[%s1328 + $0x378] sm:$0xf]
        %v1632 = vld [vmem:[%s1328 + $0x37c] sm:$0xf]
        %v1633 = vld [vmem:[%s1328 + $0x380] sm:$0xf]
        %v1634 = vld [vmem:[%s1328 + $0x384] sm:$0xf]
        %v1635 = vld [vmem:[%s1328 + $0x388] sm:$0xf]
        %v1636 = vld [vmem:[%s1328 + $0x38c] sm:$0xf]
        %v1637 = vld [vmem:[%s1328 + $0x390] sm:$0xf]
        %v1638 = vld [vmem:[%s1328 + $0x394] sm:$0xf]
        %v1639 = vld [vmem:[%s1328 + $0x398] sm:$0xf]
        %v1640 = vld [vmem:[%s1328 + $0x39c] sm:$0xf]
        %v1641 = vld [vmem:[%s1328 + $0x3a0] sm:$0xf]
        %v1642 = vld [vmem:[%s1328 + $0x3a4] sm:$0xf]
        %v1643 = vld [vmem:[%s1328 + $0x3a8] sm:$0xf]
        %v1644 = vld [vmem:[%s1328 + $0x3ac] sm:$0xf]
        %v1645 = vld [vmem:[%s1328 + $0x3b0] sm:$0xf]
        %v1646 = vld [vmem:[%s1328 + $0x3b4] sm:$0xf]
        %v1647 = vld [vmem:[%s1328 + $0x3b8] sm:$0xf]
        %v1648 = vld [vmem:[%s1328 + $0x3bc] sm:$0xf]
        %v1649 = vld [vmem:[%s1328 + $0x3c0] sm:$0xf]
        %v1650 = vld [vmem:[%s1328 + $0x3c4] sm:$0xf]
        %v1651 = vld [vmem:[%s1328 + $0x3c8] sm:$0xf]
        %v1652 = vld [vmem:[%s1328 + $0x3cc] sm:$0xf]
        %v1653 = vld [vmem:[%s1328 + $0x3d0] sm:$0xf]
        %v1654 = vld [vmem:[%s1328 + $0x3d4] sm:$0xf]
        %v1655 = vld [vmem:[%s1328 + $0x3d8] sm:$0xf]
        %v1656 = vld [vmem:[%s1328 + $0x3dc] sm:$0xf]
        %v1657 = vld [vmem:[%s1328 + $0x3e0] sm:$0xf]
        %v1658 = vld [vmem:[%s1328 + $0x3e4] sm:$0xf]
        %v1659 = vld [vmem:[%s1328 + $0x3e8] sm:$0xf]
        %v1660 = vld [vmem:[%s1328 + $0x3ec] sm:$0xf]
        %v1661 = vld [vmem:[%s1328 + $0x3f0] sm:$0xf]
        %v1662 = vld [vmem:[%s1328 + $0x3f4] sm:$0xf]
        %v1663 = vld [vmem:[%s1328 + $0x3f8] sm:$0xf]
        %v1664 = vld [vmem:[%s1328 + $0x3fc] sm:$0xf]
        %v1681 = vunpack.c.l.b16 %v1393
        %v1682 = vunpack.c.h.b16 %v1393
        %v1683 = vunpack.c.l.b16 %v1394
        %v1684 = vunpack.c.h.b16 %v1394
        %v1685 = vunpack.c.l.b16 %v1395
        %v1686 = vunpack.c.h.b16 %v1395
        %v1687 = vunpack.c.l.b16 %v1396
        %v1688 = vunpack.c.h.b16 %v1396
        %v1689 = vunpack.c.l.b16 %v1397
        %v1690 = vunpack.c.h.b16 %v1397
        %v1691 = vunpack.c.l.b16 %v1398
        %v1692 = vunpack.c.h.b16 %v1398
        %v1693 = vunpack.c.l.b16 %v1399
        %v1694 = vunpack.c.h.b16 %v1399
        %v1695 = vunpack.c.l.b16 %v1400
        %v1696 = vunpack.c.h.b16 %v1400
        %v1697 = vunpack.c.l.b16 %v1401
        %v1698 = vunpack.c.h.b16 %v1401
        %v1699 = vunpack.c.l.b16 %v1402
        %v1700 = vunpack.c.h.b16 %v1402
        %v1701 = vunpack.c.l.b16 %v1403
        %v1702 = vunpack.c.h.b16 %v1403
        %v1703 = vunpack.c.l.b16 %v1404
        %v1704 = vunpack.c.h.b16 %v1404
        %v1705 = vunpack.c.l.b16 %v1405
        %v1706 = vunpack.c.h.b16 %v1405
        %v1707 = vunpack.c.l.b16 %v1406
        %v1708 = vunpack.c.h.b16 %v1406
        %v1709 = vunpack.c.l.b16 %v1407
        %v1710 = vunpack.c.h.b16 %v1407
        %v1711 = vunpack.c.l.b16 %v1408
        %v1712 = vunpack.c.h.b16 %v1408
        %v1713 = vpack.c.b16 %v1697, %v1681
        %v1714 = vpack.c.b16 %v1698, %v1682
        %v1715 = vpack.c.b16 %v1699, %v1683
        %v1716 = vpack.c.b16 %v1700, %v1684
        %v1717 = vpack.c.b16 %v1701, %v1685
        %v1718 = vpack.c.b16 %v1702, %v1686
        %v1719 = vpack.c.b16 %v1703, %v1687
        %v1720 = vpack.c.b16 %v1704, %v1688
        %v1721 = vpack.c.b16 %v1705, %v1689
        %v1722 = vpack.c.b16 %v1706, %v1690
        %v1723 = vpack.c.b16 %v1707, %v1691
        %v1724 = vpack.c.b16 %v1708, %v1692
        %v1725 = vpack.c.b16 %v1709, %v1693
        %v1726 = vpack.c.b16 %v1710, %v1694
        %v1727 = vpack.c.b16 %v1711, %v1695
        %v1728 = vpack.c.b16 %v1712, %v1696
        %v2001 = vunpack.c.l.b16 %v1409
        %v2002 = vunpack.c.l.b16 %v1410
        %v2003 = vunpack.c.l.b16 %v1411
        %v2004 = vunpack.c.l.b16 %v1412
        %v2005 = vunpack.c.l.b16 %v1413
        %v2006 = vunpack.c.l.b16 %v1414
        %v2007 = vunpack.c.l.b16 %v1415
        %v2008 = vunpack.c.l.b16 %v1416
        %v2009 = vunpack.c.l.b16 %v1417
        %v2010 = vunpack.c.l.b16 %v1418
        %v2011 = vunpack.c.l.b16 %v1419
        %v2012 = vunpack.c.l.b16 %v1420
        %v2013 = vunpack.c.l.b16 %v1421
        %v2014 = vunpack.c.l.b16 %v1422
        %v2015 = vunpack.c.l.b16 %v1423
        %v2016 = vunpack.c.l.b16 %v1424
        %v2017 = vunpack.c.l.b16 %v1425
        %v2018 = vunpack.c.l.b16 %v1426
        %v2019 = vunpack.c.l.b16 %v1427
        %v2020 = vunpack.c.l.b16 %v1428
        %v2021 = vunpack.c.l.b16 %v1429
        %v2022 = vunpack.c.l.b16 %v1430
        %v2023 = vunpack.c.l.b16 %v1431
        %v2024 = vunpack.c.l.b16 %v1432
        %v2025 = vunpack.c.l.b16 %v1433
        %v2026 = vunpack.c.l.b16 %v1434
        %v2027 = vunpack.c.l.b16 %v1435
        %v2028 = vunpack.c.l.b16 %v1436
        %v2029 = vunpack.c.l.b16 %v1437
        %v2030 = vunpack.c.l.b16 %v1438
        %v2031 = vunpack.c.l.b16 %v1439
        %v2032 = vunpack.c.l.b16 %v1440
        %v2033 = vunpack.c.l.b16 %v1441
        %v2034 = vunpack.c.l.b16 %v1442
        %v2035 = vunpack.c.l.b16 %v1443
        %v2036 = vunpack.c.l.b16 %v1444
        %v2037 = vunpack.c.l.b16 %v1445
        %v2038 = vunpack.c.l.b16 %v1446
        %v2039 = vunpack.c.l.b16 %v1447
        %v2040 = vunpack.c.l.b16 %v1448
        %v2041 = vunpack.c.l.b16 %v1449
        %v2042 = vunpack.c.l.b16 %v1450
        %v2043 = vunpack.c.l.b16 %v1451
        %v2044 = vunpack.c.l.b16 %v1452
        %v2045 = vunpack.c.l.b16 %v1453
        %v2046 = vunpack.c.l.b16 %v1454
        %v2047 = vunpack.c.l.b16 %v1455
        %v2048 = vunpack.c.l.b16 %v1456
        %v2049 = vunpack.c.l.b16 %v1457
        %v2050 = vunpack.c.l.b16 %v1458
        %v2051 = vunpack.c.l.b16 %v1459
        %v2052 = vunpack.c.l.b16 %v1460
        %v2053 = vunpack.c.l.b16 %v1461
        %v2054 = vunpack.c.l.b16 %v1462
        %v2055 = vunpack.c.l.b16 %v1463
        %v2056 = vunpack.c.l.b16 %v1464
        %v2057 = vunpack.c.l.b16 %v1465
        %v2058 = vunpack.c.l.b16 %v1466
        %v2059 = vunpack.c.l.b16 %v1467
        %v2060 = vunpack.c.l.b16 %v1468
        %v2061 = vunpack.c.l.b16 %v1469
        %v2062 = vunpack.c.l.b16 %v1470
        %v2063 = vunpack.c.l.b16 %v1471
        %v2064 = vunpack.c.l.b16 %v1472
        %v2065 = vunpack.c.l.b16 %v1473
        %v2066 = vunpack.c.l.b16 %v1474
        %v2067 = vunpack.c.l.b16 %v1475
        %v2068 = vunpack.c.l.b16 %v1476
        %v2069 = vunpack.c.l.b16 %v1477
        %v2070 = vunpack.c.l.b16 %v1478
        %v2071 = vunpack.c.l.b16 %v1479
        %v2072 = vunpack.c.l.b16 %v1480
        %v2073 = vunpack.c.l.b16 %v1481
        %v2074 = vunpack.c.l.b16 %v1482
        %v2075 = vunpack.c.l.b16 %v1483
        %v2076 = vunpack.c.l.b16 %v1484
        %v2077 = vunpack.c.l.b16 %v1485
        %v2078 = vunpack.c.l.b16 %v1486
        %v2079 = vunpack.c.l.b16 %v1487
        %v2080 = vunpack.c.l.b16 %v1488
        %v2081 = vunpack.c.l.b16 %v1489
        %v2082 = vunpack.c.l.b16 %v1490
        %v2083 = vunpack.c.l.b16 %v1491
        %v2084 = vunpack.c.l.b16 %v1492
        %v2085 = vunpack.c.l.b16 %v1493
        %v2086 = vunpack.c.l.b16 %v1494
        %v2087 = vunpack.c.l.b16 %v1495
        %v2088 = vunpack.c.l.b16 %v1496
        %v2089 = vunpack.c.l.b16 %v1497
        %v2090 = vunpack.c.l.b16 %v1498
        %v2091 = vunpack.c.l.b16 %v1499
        %v2092 = vunpack.c.l.b16 %v1500
        %v2093 = vunpack.c.l.b16 %v1501
        %v2094 = vunpack.c.l.b16 %v1502
        %v2095 = vunpack.c.l.b16 %v1503
        %v2096 = vunpack.c.l.b16 %v1504
        %v2097 = vunpack.c.l.b16 %v1505
        %v2098 = vunpack.c.l.b16 %v1506
        %v2099 = vunpack.c.l.b16 %v1507
        %v2100 = vunpack.c.l.b16 %v1508
        %v2101 = vunpack.c.l.b16 %v1509
        %v2102 = vunpack.c.l.b16 %v1510
        %v2103 = vunpack.c.l.b16 %v1511
        %v2104 = vunpack.c.l.b16 %v1512
        %v2105 = vunpack.c.l.b16 %v1513
        %v2106 = vunpack.c.l.b16 %v1514
        %v2107 = vunpack.c.l.b16 %v1515
        %v2108 = vunpack.c.l.b16 %v1516
        %v2109 = vunpack.c.l.b16 %v1517
        %v2110 = vunpack.c.l.b16 %v1518
        %v2111 = vunpack.c.l.b16 %v1519
        %v2112 = vunpack.c.l.b16 %v1520
        %v2113 = vunpack.c.l.b16 %v1521
        %v2114 = vunpack.c.l.b16 %v1522
        %v2115 = vunpack.c.l.b16 %v1523
        %v2116 = vunpack.c.l.b16 %v1524
        %v2117 = vunpack.c.l.b16 %v1525
        %v2118 = vunpack.c.l.b16 %v1526
        %v2119 = vunpack.c.l.b16 %v1527
        %v2120 = vunpack.c.l.b16 %v1528
        %v2121 = vunpack.c.l.b16 %v1529
        %v2122 = vunpack.c.l.b16 %v1530
        %v2123 = vunpack.c.l.b16 %v1531
        %v2124 = vunpack.c.l.b16 %v1532
        %v2125 = vunpack.c.l.b16 %v1533
        %v2126 = vunpack.c.l.b16 %v1534
        %v2127 = vunpack.c.l.b16 %v1535
        %v2128 = vunpack.c.l.b16 %v1536
        %v2129 = vunpack.c.l.b16 %v1537
        %v2130 = vunpack.c.l.b16 %v1538
        %v2131 = vunpack.c.l.b16 %v1539
        %v2132 = vunpack.c.l.b16 %v1540
        %v2133 = vunpack.c.l.b16 %v1541
        %v2134 = vunpack.c.l.b16 %v1542
        %v2135 = vunpack.c.l.b16 %v1543
        %v2136 = vunpack.c.l.b16 %v1544
        %v2137 = vunpack.c.l.b16 %v1545
        %v2138 = vunpack.c.l.b16 %v1546
        %v2139 = vunpack.c.l.b16 %v1547
        %v2140 = vunpack.c.l.b16 %v1548
        %v2141 = vunpack.c.l.b16 %v1549
        %v2142 = vunpack.c.l.b16 %v1550
        %v2143 = vunpack.c.l.b16 %v1551
        %v2144 = vunpack.c.l.b16 %v1552
        %v2145 = vunpack.c.l.b16 %v1553
        %v2146 = vunpack.c.l.b16 %v1554
        %v2147 = vunpack.c.l.b16 %v1555
        %v2148 = vunpack.c.l.b16 %v1556
        %v2149 = vunpack.c.l.b16 %v1557
        %v2150 = vunpack.c.l.b16 %v1558
        %v2151 = vunpack.c.l.b16 %v1559
        %v2152 = vunpack.c.l.b16 %v1560
        %v2153 = vunpack.c.l.b16 %v1561
        %v2154 = vunpack.c.l.b16 %v1562
        %v2155 = vunpack.c.l.b16 %v1563
        %v2156 = vunpack.c.l.b16 %v1564
        %v2157 = vunpack.c.l.b16 %v1565
        %v2158 = vunpack.c.l.b16 %v1566
        %v2159 = vunpack.c.l.b16 %v1567
        %v2160 = vunpack.c.l.b16 %v1568
        %v2161 = vunpack.c.l.b16 %v1569
        %v2162 = vunpack.c.l.b16 %v1570
        %v2163 = vunpack.c.l.b16 %v1571
        %v2164 = vunpack.c.l.b16 %v1572
        %v2165 = vunpack.c.l.b16 %v1573
        %v2166 = vunpack.c.l.b16 %v1574
        %v2167 = vunpack.c.l.b16 %v1575
        %v2168 = vunpack.c.l.b16 %v1576
        %v2169 = vunpack.c.l.b16 %v1577
        %v2170 = vunpack.c.l.b16 %v1578
        %v2171 = vunpack.c.l.b16 %v1579
        %v2172 = vunpack.c.l.b16 %v1580
        %v2173 = vunpack.c.l.b16 %v1581
        %v2174 = vunpack.c.l.b16 %v1582
        %v2175 = vunpack.c.l.b16 %v1583
        %v2176 = vunpack.c.l.b16 %v1584
        %v2177 = vunpack.c.l.b16 %v1585
        %v2178 = vunpack.c.l.b16 %v1586
        %v2179 = vunpack.c.l.b16 %v1587
        %v2180 = vunpack.c.l.b16 %v1588
        %v2181 = vunpack.c.l.b16 %v1589
        %v2182 = vunpack.c.l.b16 %v1590
        %v2183 = vunpack.c.l.b16 %v1591
        %v2184 = vunpack.c.l.b16 %v1592
        %v2185 = vunpack.c.l.b16 %v1593
        %v2186 = vunpack.c.l.b16 %v1594
        %v2187 = vunpack.c.l.b16 %v1595
        %v2188 = vunpack.c.l.b16 %v1596
        %v2189 = vunpack.c.l.b16 %v1597
        %v2190 = vunpack.c.l.b16 %v1598
        %v2191 = vunpack.c.l.b16 %v1599
        %v2192 = vunpack.c.l.b16 %v1600
        %v2193 = vunpack.c.l.b16 %v1601
        %v2194 = vunpack.c.l.b16 %v1602
        %v2195 = vunpack.c.l.b16 %v1603
        %v2196 = vunpack.c.l.b16 %v1604
        %v2197 = vunpack.c.l.b16 %v1605
        %v2198 = vunpack.c.l.b16 %v1606
        %v2199 = vunpack.c.l.b16 %v1607
        %v2200 = vunpack.c.l.b16 %v1608
        %v2201 = vunpack.c.l.b16 %v1609
        %v2202 = vunpack.c.l.b16 %v1610
        %v2203 = vunpack.c.l.b16 %v1611
        %v2204 = vunpack.c.l.b16 %v1612
        %v2205 = vunpack.c.l.b16 %v1613
        %v2206 = vunpack.c.l.b16 %v1614
        %v2207 = vunpack.c.l.b16 %v1615
        %v2208 = vunpack.c.l.b16 %v1616
        %v2209 = vunpack.c.l.b16 %v1617
        %v2210 = vunpack.c.l.b16 %v1618
        %v2211 = vunpack.c.l.b16 %v1619
        %v2212 = vunpack.c.l.b16 %v1620
        %v2213 = vunpack.c.l.b16 %v1621
        %v2214 = vunpack.c.l.b16 %v1622
        %v2215 = vunpack.c.l.b16 %v1623
        %v2216 = vunpack.c.l.b16 %v1624
        %v2217 = vunpack.c.l.b16 %v1625
        %v2218 = vunpack.c.l.b16 %v1626
        %v2219 = vunpack.c.l.b16 %v1627
        %v2220 = vunpack.c.l.b16 %v1628
        %v2221 = vunpack.c.l.b16 %v1629
        %v2222 = vunpack.c.l.b16 %v1630
        %v2223 = vunpack.c.l.b16 %v1631
        %v2224 = vunpack.c.l.b16 %v1632
        %v2225 = vunpack.c.l.b16 %v1633
        %v2226 = vunpack.c.l.b16 %v1634
        %v2227 = vunpack.c.l.b16 %v1635
        %v2228 = vunpack.c.l.b16 %v1636
        %v2229 = vunpack.c.l.b16 %v1637
        %v2230 = vunpack.c.l.b16 %v1638
        %v2231 = vunpack.c.l.b16 %v1639
        %v2232 = vunpack.c.l.b16 %v1640
        %v2233 = vunpack.c.l.b16 %v1641
        %v2234 = vunpack.c.l.b16 %v1642
        %v2235 = vunpack.c.l.b16 %v1643
        %v2236 = vunpack.c.l.b16 %v1644
        %v2237 = vunpack.c.l.b16 %v1645
        %v2238 = vunpack.c.l.b16 %v1646
        %v2239 = vunpack.c.l.b16 %v1647
        %v2240 = vunpack.c.l.b16 %v1648
        %v2241 = vunpack.c.l.b16 %v1649
        %v2242 = vunpack.c.l.b16 %v1650
        %v2243 = vunpack.c.l.b16 %v1651
        %v2244 = vunpack.c.l.b16 %v1652
        %v2245 = vunpack.c.l.b16 %v1653
        %v2246 = vunpack.c.l.b16 %v1654
        %v2247 = vunpack.c.l.b16 %v1655
        %v2248 = vunpack.c.l.b16 %v1656
        %v2249 = vunpack.c.l.b16 %v1657
        %v2250 = vunpack.c.l.b16 %v1658
        %v2251 = vunpack.c.l.b16 %v1659
        %v2252 = vunpack.c.l.b16 %v1660
        %v2253 = vunpack.c.l.b16 %v1661
        %v2254 = vunpack.c.l.b16 %v1662
        %v2255 = vunpack.c.l.b16 %v1663
        %v2256 = vunpack.c.l.b16 %v1664
        %v2257 = vpack.c.b16 %v2002, %v2001
        %v2258 = vpack.c.b16 %v2004, %v2003
        %v2259 = vpack.c.b16 %v2006, %v2005
        %v2260 = vpack.c.b16 %v2008, %v2007
        %v2261 = vpack.c.b16 %v2010, %v2009
        %v2262 = vpack.c.b16 %v2012, %v2011
        %v2263 = vpack.c.b16 %v2014, %v2013
        %v2264 = vpack.c.b16 %v2016, %v2015
        %v2265 = vpack.c.b16 %v2018, %v2017
        %v2266 = vpack.c.b16 %v2020, %v2019
        %v2267 = vpack.c.b16 %v2022, %v2021
        %v2268 = vpack.c.b16 %v2024, %v2023
        %v2269 = vpack.c.b16 %v2026, %v2025
        %v2270 = vpack.c.b16 %v2028, %v2027
        %v2271 = vpack.c.b16 %v2030, %v2029
        %v2272 = vpack.c.b16 %v2032, %v2031
        %v2273 = vpack.c.b16 %v2034, %v2033
        %v2274 = vpack.c.b16 %v2036, %v2035
        %v2275 = vpack.c.b16 %v2038, %v2037
        %v2276 = vpack.c.b16 %v2040, %v2039
        %v2277 = vpack.c.b16 %v2042, %v2041
        %v2278 = vpack.c.b16 %v2044, %v2043
        %v2279 = vpack.c.b16 %v2046, %v2045
        %v2280 = vpack.c.b16 %v2048, %v2047
        %v2281 = vpack.c.b16 %v2050, %v2049
        %v2282 = vpack.c.b16 %v2052, %v2051
        %v2283 = vpack.c.b16 %v2054, %v2053
        %v2284 = vpack.c.b16 %v2056, %v2055
        %v2285 = vpack.c.b16 %v2058, %v2057
        %v2286 = vpack.c.b16 %v2060, %v2059
        %v2287 = vpack.c.b16 %v2062, %v2061
        %v2288 = vpack.c.b16 %v2064, %v2063
        %v2289 = vpack.c.b16 %v2066, %v2065
        %v2290 = vpack.c.b16 %v2068, %v2067
        %v2291 = vpack.c.b16 %v2070, %v2069
        %v2292 = vpack.c.b16 %v2072, %v2071
        %v2293 = vpack.c.b16 %v2074, %v2073
        %v2294 = vpack.c.b16 %v2076, %v2075
        %v2295 = vpack.c.b16 %v2078, %v2077
        %v2296 = vpack.c.b16 %v2080, %v2079
        %v2297 = vpack.c.b16 %v2082, %v2081
        %v2298 = vpack.c.b16 %v2084, %v2083
        %v2299 = vpack.c.b16 %v2086, %v2085
        %v2300 = vpack.c.b16 %v2088, %v2087
        %v2301 = vpack.c.b16 %v2090, %v2089
        %v2302 = vpack.c.b16 %v2092, %v2091
        %v2303 = vpack.c.b16 %v2094, %v2093
        %v2304 = vpack.c.b16 %v2096, %v2095
        %v2305 = vpack.c.b16 %v2098, %v2097
        %v2306 = vpack.c.b16 %v2100, %v2099
        %v2307 = vpack.c.b16 %v2102, %v2101
        %v2308 = vpack.c.b16 %v2104, %v2103
        %v2309 = vpack.c.b16 %v2106, %v2105
        %v2310 = vpack.c.b16 %v2108, %v2107
        %v2311 = vpack.c.b16 %v2110, %v2109
        %v2312 = vpack.c.b16 %v2112, %v2111
        %v2313 = vpack.c.b16 %v2114, %v2113
        %v2314 = vpack.c.b16 %v2116, %v2115
        %v2315 = vpack.c.b16 %v2118, %v2117
        %v2316 = vpack.c.b16 %v2120, %v2119
        %v2317 = vpack.c.b16 %v2122, %v2121
        %v2318 = vpack.c.b16 %v2124, %v2123
        %v2319 = vpack.c.b16 %v2126, %v2125
        %v2320 = vpack.c.b16 %v2128, %v2127
        %v2321 = vpack.c.b16 %v2130, %v2129
        %v2322 = vpack.c.b16 %v2132, %v2131
        %v2323 = vpack.c.b16 %v2134, %v2133
        %v2324 = vpack.c.b16 %v2136, %v2135
        %v2325 = vpack.c.b16 %v2138, %v2137
        %v2326 = vpack.c.b16 %v2140, %v2139
        %v2327 = vpack.c.b16 %v2142, %v2141
        %v2328 = vpack.c.b16 %v2144, %v2143
        %v2329 = vpack.c.b16 %v2146, %v2145
        %v2330 = vpack.c.b16 %v2148, %v2147
        %v2331 = vpack.c.b16 %v2150, %v2149
        %v2332 = vpack.c.b16 %v2152, %v2151
        %v2333 = vpack.c.b16 %v2154, %v2153
        %v2334 = vpack.c.b16 %v2156, %v2155
        %v2335 = vpack.c.b16 %v2158, %v2157
        %v2336 = vpack.c.b16 %v2160, %v2159
        %v2337 = vpack.c.b16 %v2162, %v2161
        %v2338 = vpack.c.b16 %v2164, %v2163
        %v2339 = vpack.c.b16 %v2166, %v2165
        %v2340 = vpack.c.b16 %v2168, %v2167
        %v2341 = vpack.c.b16 %v2170, %v2169
        %v2342 = vpack.c.b16 %v2172, %v2171
        %v2343 = vpack.c.b16 %v2174, %v2173
        %v2344 = vpack.c.b16 %v2176, %v2175
        %v2345 = vpack.c.b16 %v2178, %v2177
        %v2346 = vpack.c.b16 %v2180, %v2179
        %v2347 = vpack.c.b16 %v2182, %v2181
        %v2348 = vpack.c.b16 %v2184, %v2183
        %v2349 = vpack.c.b16 %v2186, %v2185
        %v2350 = vpack.c.b16 %v2188, %v2187
        %v2351 = vpack.c.b16 %v2190, %v2189
        %v2352 = vpack.c.b16 %v2192, %v2191
        %v2353 = vpack.c.b16 %v2194, %v2193
        %v2354 = vpack.c.b16 %v2196, %v2195
        %v2355 = vpack.c.b16 %v2198, %v2197
        %v2356 = vpack.c.b16 %v2200, %v2199
        %v2357 = vpack.c.b16 %v2202, %v2201
        %v2358 = vpack.c.b16 %v2204, %v2203
        %v2359 = vpack.c.b16 %v2206, %v2205
        %v2360 = vpack.c.b16 %v2208, %v2207
        %v2361 = vpack.c.b16 %v2210, %v2209
        %v2362 = vpack.c.b16 %v2212, %v2211
        %v2363 = vpack.c.b16 %v2214, %v2213
        %v2364 = vpack.c.b16 %v2216, %v2215
        %v2365 = vpack.c.b16 %v2218, %v2217
        %v2366 = vpack.c.b16 %v2220, %v2219
        %v2367 = vpack.c.b16 %v2222, %v2221
        %v2368 = vpack.c.b16 %v2224, %v2223
        %v2369 = vpack.c.b16 %v2226, %v2225
        %v2370 = vpack.c.b16 %v2228, %v2227
        %v2371 = vpack.c.b16 %v2230, %v2229
        %v2372 = vpack.c.b16 %v2232, %v2231
        %v2373 = vpack.c.b16 %v2234, %v2233
        %v2374 = vpack.c.b16 %v2236, %v2235
        %v2375 = vpack.c.b16 %v2238, %v2237
        %v2376 = vpack.c.b16 %v2240, %v2239
        %v2377 = vpack.c.b16 %v2242, %v2241
        %v2378 = vpack.c.b16 %v2244, %v2243
        %v2379 = vpack.c.b16 %v2246, %v2245
        %v2380 = vpack.c.b16 %v2248, %v2247
        %v2381 = vpack.c.b16 %v2250, %v2249
        %v2382 = vpack.c.b16 %v2252, %v2251
        %v2383 = vpack.c.b16 %v2254, %v2253
        %v2384 = vpack.c.b16 %v2256, %v2255
        %2513 = vmatprep.subr.bf16.mxu0 0
        %2514 = vmatpush1.bf16.msra.mxu0 %v2257
        %2515 = vmatprep.subr.bf16.mxu0 0
        %2516 = vmatpush1.bf16.msra.mxu0 %v2258
        %2517 = vmatprep.subr.bf16.mxu0 0
        %2518 = vmatpush1.bf16.msra.mxu0 %v2259
        %2519 = vmatprep.subr.bf16.mxu0 0
        %2520 = vmatpush1.bf16.msra.mxu0 %v2260
        %2521 = vmatprep.subr.bf16.mxu0 0
        %2522 = vmatpush1.bf16.msra.mxu0 %v2261
        %2523 = vmatprep.subr.bf16.mxu0 0
        %2524 = vmatpush1.bf16.msra.mxu0 %v2262
        %2525 = vmatprep.subr.bf16.mxu0 0
        %2526 = vmatpush1.bf16.msra.mxu0 %v2263
        %2527 = vmatprep.subr.bf16.mxu0 0
        %2528 = vmatpush1.bf16.msra.mxu0 %v2264
        %2529 = vmatprep.subr.bf16.mxu0 0
        %2530 = vmatpush1.bf16.msra.mxu0 %v2265
        %2531 = vmatprep.subr.bf16.mxu0 0
        %2532 = vmatpush1.bf16.msra.mxu0 %v2266
        %2533 = vmatprep.subr.bf16.mxu0 0
        %2534 = vmatpush1.bf16.msra.mxu0 %v2267
        %2535 = vmatprep.subr.bf16.mxu0 0
        %2536 = vmatpush1.bf16.msra.mxu0 %v2268
        %2537 = vmatprep.subr.bf16.mxu0 0
        %2538 = vmatpush1.bf16.msra.mxu0 %v2269
        %2539 = vmatprep.subr.bf16.mxu0 0
        %2540 = vmatpush1.bf16.msra.mxu0 %v2270
        %2541 = vmatprep.subr.bf16.mxu0 0
        %2542 = vmatpush1.bf16.msra.mxu0 %v2271
        %2543 = vmatprep.subr.bf16.mxu0 0
        %2544 = vmatpush1.bf16.msra.mxu0 %v2272
        %2545 = vmatprep.mubr.bf16.mxu0 %v1714
        %2546 = vmatmul.mubr.bf16.gmra.mrb[0].mxu0 %v1713
        %v2547 = vpop.f32.mrb[0].mxu0
        %v2548 = vadd.f32 0.0, %v2547
        %v2549 = vpop.f32.mrb[0].mxu0
        %v2550 = vpop.f32.mrb[0].mxu0
        %v2551 = vadd.f32 0.0, %v2550
        %v2552 = vpop.f32.mrb[0].mxu0
        %2553 = vdwg.mxu0
        %2554 = vmatprep.subr.bf16.mxu0 0
        %2555 = vmatpush1.bf16.msra.mxu0 %v2273
        %2556 = vmatprep.subr.bf16.mxu0 0
        %2557 = vmatpush1.bf16.msra.mxu0 %v2274
        %2558 = vmatprep.subr.bf16.mxu0 0
        %2559 = vmatpush1.bf16.msra.mxu0 %v2275
        %2560 = vmatprep.subr.bf16.mxu0 0
        %2561 = vmatpush1.bf16.msra.mxu0 %v2276
        %2562 = vmatprep.subr.bf16.mxu0 0
        %2563 = vmatpush1.bf16.msra.mxu0 %v2277
        %2564 = vmatprep.subr.bf16.mxu0 0
        %2565 = vmatpush1.bf16.msra.mxu0 %v2278
        %2566 = vmatprep.subr.bf16.mxu0 0
        %2567 = vmatpush1.bf16.msra.mxu0 %v2279
        %2568 = vmatprep.subr.bf16.mxu0 0
        %2569 = vmatpush1.bf16.msra.mxu0 %v2280
        %2570 = vmatprep.subr.bf16.mxu0 0
        %2571 = vmatpush1.bf16.msra.mxu0 %v2281
        %2572 = vmatprep.subr.bf16.mxu0 0
        %2573 = vmatpush1.bf16.msra.mxu0 %v2282
        %2574 = vmatprep.subr.bf16.mxu0 0
        %2575 = vmatpush1.bf16.msra.mxu0 %v2283
        %2576 = vmatprep.subr.bf16.mxu0 0
        %2577 = vmatpush1.bf16.msra.mxu0 %v2284
        %2578 = vmatprep.subr.bf16.mxu0 0
        %2579 = vmatpush1.bf16.msra.mxu0 %v2285
        %2580 = vmatprep.subr.bf16.mxu0 0
        %2581 = vmatpush1.bf16.msra.mxu0 %v2286
        %2582 = vmatprep.subr.bf16.mxu0 0
        %2583 = vmatpush1.bf16.msra.mxu0 %v2287
        %2584 = vmatprep.subr.bf16.mxu0 0
        %2585 = vmatpush1.bf16.msra.mxu0 %v2288
        %2586 = vmatprep.mubr.bf16.mxu0 %v1716
        %2587 = vmatmul.mubr.bf16.gmra.mrb[0].mxu0 %v1715
        %v2588 = vpop.f32.mrb[0].mxu0
        %v2589 = vadd.f32 %v2548, %v2588
        %v2590 = vpop.f32.mrb[0].mxu0
        %v2591 = vpop.f32.mrb[0].mxu0
        %v2592 = vadd.f32 %v2551, %v2591
        %v2593 = vpop.f32.mrb[0].mxu0
        %2594 = vdwg.mxu0
        %2595 = vmatprep.subr.bf16.mxu0 0
        %2596 = vmatpush1.bf16.msra.mxu0 %v2289
        %2597 = vmatprep.subr.bf16.mxu0 0
        %2598 = vmatpush1.bf16.msra.mxu0 %v2290
        %2599 = vmatprep.subr.bf16.mxu0 0
        %2600 = vmatpush1.bf16.msra.mxu0 %v2291
        %2601 = vmatprep.subr.bf16.mxu0 0
        %2602 = vmatpush1.bf16.msra.mxu0 %v2292
        %2603 = vmatprep.subr.bf16.mxu0 0
        %2604 = vmatpush1.bf16.msra.mxu0 %v2293
        %2605 = vmatprep.subr.bf16.mxu0 0
        %2606 = vmatpush1.bf16.msra.mxu0 %v2294
        %2607 = vmatprep.subr.bf16.mxu0 0
        %2608 = vmatpush1.bf16.msra.mxu0 %v2295
        %2609 = vmatprep.subr.bf16.mxu0 0
        %2610 = vmatpush1.bf16.msra.mxu0 %v2296
        %2611 = vmatprep.subr.bf16.mxu0 0
        %2612 = vmatpush1.bf16.msra.mxu0 %v2297
        %2613 = vmatprep.subr.bf16.mxu0 0
        %2614 = vmatpush1.bf16.msra.mxu0 %v2298
        %2615 = vmatprep.subr.bf16.mxu0 0
        %2616 = vmatpush1.bf16.msra.mxu0 %v2299
        %2617 = vmatprep.subr.bf16.mxu0 0
        %2618 = vmatpush1.bf16.msra.mxu0 %v2300
        %2619 = vmatprep.subr.bf16.mxu0 0
        %2620 = vmatpush1.bf16.msra.mxu0 %v2301
        %2621 = vmatprep.subr.bf16.mxu0 0
        %2622 = vmatpush1.bf16.msra.mxu0 %v2302
        %2623 = vmatprep.subr.bf16.mxu0 0
        %2624 = vmatpush1.bf16.msra.mxu0 %v2303
        %2625 = vmatprep.subr.bf16.mxu0 0
        %2626 = vmatpush1.bf16.msra.mxu0 %v2304
        %2627 = vmatprep.mubr.bf16.mxu0 %v1718
        %2628 = vmatmul.mubr.bf16.gmra.mrb[0].mxu0 %v1717
        %v2629 = vpop.f32.mrb[0].mxu0
        %v2630 = vadd.f32 %v2589, %v2629
        %v2631 = vpop.f32.mrb[0].mxu0
        %v2632 = vpop.f32.mrb[0].mxu0
        %v2633 = vadd.f32 %v2592, %v2632
        %v2634 = vpop.f32.mrb[0].mxu0
        %2635 = vdwg.mxu0
        %2636 = vmatprep.subr.bf16.mxu0 0
        %2637 = vmatpush1.bf16.msra.mxu0 %v2305
        %2638 = vmatprep.subr.bf16.mxu0 0
        %2639 = vmatpush1.bf16.msra.mxu0 %v2306
        %2640 = vmatprep.subr.bf16.mxu0 0
        %2641 = vmatpush1.bf16.msra.mxu0 %v2307
        %2642 = vmatprep.subr.bf16.mxu0 0
        %2643 = vmatpush1.bf16.msra.mxu0 %v2308
        %2644 = vmatprep.subr.bf16.mxu0 0
        %2645 = vmatpush1.bf16.msra.mxu0 %v2309
        %2646 = vmatprep.subr.bf16.mxu0 0
        %2647 = vmatpush1.bf16.msra.mxu0 %v2310
        %2648 = vmatprep.subr.bf16.mxu0 0
        %2649 = vmatpush1.bf16.msra.mxu0 %v2311
        %2650 = vmatprep.subr.bf16.mxu0 0
        %2651 = vmatpush1.bf16.msra.mxu0 %v2312
        %2652 = vmatprep.subr.bf16.mxu0 0
        %2653 = vmatpush1.bf16.msra.mxu0 %v2313
        %2654 = vmatprep.subr.bf16.mxu0 0
        %2655 = vmatpush1.bf16.msra.mxu0 %v2314
        %2656 = vmatprep.subr.bf16.mxu0 0
        %2657 = vmatpush1.bf16.msra.mxu0 %v2315
        %2658 = vmatprep.subr.bf16.mxu0 0
        %2659 = vmatpush1.bf16.msra.mxu0 %v2316
        %2660 = vmatprep.subr.bf16.mxu0 0
        %2661 = vmatpush1.bf16.msra.mxu0 %v2317
        %2662 = vmatprep.subr.bf16.mxu0 0
        %2663 = vmatpush1.bf16.msra.mxu0 %v2318
        %2664 = vmatprep.subr.bf16.mxu0 0
        %2665 = vmatpush1.bf16.msra.mxu0 %v2319
        %2666 = vmatprep.subr.bf16.mxu0 0
        %2667 = vmatpush1.bf16.msra.mxu0 %v2320
        %2668 = vmatprep.mubr.bf16.mxu0 %v1720
        %2669 = vmatmul.mubr.bf16.gmra.mrb[0].mxu0 %v1719
        %v2670 = vpop.f32.mrb[0].mxu0
        %v2671 = vadd.f32 %v2630, %v2670
        %v2672 = vpop.f32.mrb[0].mxu0
        %v2673 = vpop.f32.mrb[0].mxu0
        %v2674 = vadd.f32 %v2633, %v2673
        %v2675 = vpop.f32.mrb[0].mxu0
        %2676 = vdwg.mxu0
        %2677 = vmatprep.subr.bf16.mxu0 0
        %2678 = vmatpush1.bf16.msra.mxu0 %v2321
        %2679 = vmatprep.subr.bf16.mxu0 0
        %2680 = vmatpush1.bf16.msra.mxu0 %v2322
        %2681 = vmatprep.subr.bf16.mxu0 0
        %2682 = vmatpush1.bf16.msra.mxu0 %v2323
        %2683 = vmatprep.subr.bf16.mxu0 0
        %2684 = vmatpush1.bf16.msra.mxu0 %v2324
        %2685 = vmatprep.subr.bf16.mxu0 0
        %2686 = vmatpush1.bf16.msra.mxu0 %v2325
        %2687 = vmatprep.subr.bf16.mxu0 0
        %2688 = vmatpush1.bf16.msra.mxu0 %v2326
        %2689 = vmatprep.subr.bf16.mxu0 0
        %2690 = vmatpush1.bf16.msra.mxu0 %v2327
        %2691 = vmatprep.subr.bf16.mxu0 0
        %2692 = vmatpush1.bf16.msra.mxu0 %v2328
        %2693 = vmatprep.subr.bf16.mxu0 0
        %2694 = vmatpush1.bf16.msra.mxu0 %v2329
        %2695 = vmatprep.subr.bf16.mxu0 0
        %2696 = vmatpush1.bf16.msra.mxu0 %v2330
        %2697 = vmatprep.subr.bf16.mxu0 0
        %2698 = vmatpush1.bf16.msra.mxu0 %v2331
        %2699 = vmatprep.subr.bf16.mxu0 0
        %2700 = vmatpush1.bf16.msra.mxu0 %v2332
        %2701 = vmatprep.subr.bf16.mxu0 0
        %2702 = vmatpush1.bf16.msra.mxu0 %v2333
        %2703 = vmatprep.subr.bf16.mxu0 0
        %2704 = vmatpush1.bf16.msra.mxu0 %v2334
        %2705 = vmatprep.subr.bf16.mxu0 0
        %2706 = vmatpush1.bf16.msra.mxu0 %v2335
        %2707 = vmatprep.subr.bf16.mxu0 0
        %2708 = vmatpush1.bf16.msra.mxu0 %v2336
        %2709 = vmatprep.mubr.bf16.mxu0 %v1722
        %2710 = vmatmul.mubr.bf16.gmra.mrb[0].mxu0 %v1721
        %v2711 = vpop.f32.mrb[0].mxu0
        %v2712 = vadd.f32 %v2671, %v2711
        %v2713 = vpop.f32.mrb[0].mxu0
        %v2714 = vpop.f32.mrb[0].mxu0
        %v2715 = vadd.f32 %v2674, %v2714
        %v2716 = vpop.f32.mrb[0].mxu0
        %2717 = vdwg.mxu0
        %2718 = vmatprep.subr.bf16.mxu0 0
        %2719 = vmatpush1.bf16.msra.mxu0 %v2337
        %2720 = vmatprep.subr.bf16.mxu0 0
        %2721 = vmatpush1.bf16.msra.mxu0 %v2338
        %2722 = vmatprep.subr.bf16.mxu0 0
        %2723 = vmatpush1.bf16.msra.mxu0 %v2339
        %2724 = vmatprep.subr.bf16.mxu0 0
        %2725 = vmatpush1.bf16.msra.mxu0 %v2340
        %2726 = vmatprep.subr.bf16.mxu0 0
        %2727 = vmatpush1.bf16.msra.mxu0 %v2341
        %2728 = vmatprep.subr.bf16.mxu0 0
        %2729 = vmatpush1.bf16.msra.mxu0 %v2342
        %2730 = vmatprep.subr.bf16.mxu0 0
        %2731 = vmatpush1.bf16.msra.mxu0 %v2343
        %2732 = vmatprep.subr.bf16.mxu0 0
        %2733 = vmatpush1.bf16.msra.mxu0 %v2344
        %2734 = vmatprep.subr.bf16.mxu0 0
        %2735 = vmatpush1.bf16.msra.mxu0 %v2345
        %2736 = vmatprep.subr.bf16.mxu0 0
        %2737 = vmatpush1.bf16.msra.mxu0 %v2346
        %2738 = vmatprep.subr.bf16.mxu0 0
        %2739 = vmatpush1.bf16.msra.mxu0 %v2347
        %2740 = vmatprep.subr.bf16.mxu0 0
        %2741 = vmatpush1.bf16.msra.mxu0 %v2348
        %2742 = vmatprep.subr.bf16.mxu0 0
        %2743 = vmatpush1.bf16.msra.mxu0 %v2349
        %2744 = vmatprep.subr.bf16.mxu0 0
        %2745 = vmatpush1.bf16.msra.mxu0 %v2350
        %2746 = vmatprep.subr.bf16.mxu0 0
        %2747 = vmatpush1.bf16.msra.mxu0 %v2351
        %2748 = vmatprep.subr.bf16.mxu0 0
        %2749 = vmatpush1.bf16.msra.mxu0 %v2352
        %2750 = vmatprep.mubr.bf16.mxu0 %v1724
        %2751 = vmatmul.mubr.bf16.gmra.mrb[0].mxu0 %v1723
        %v2752 = vpop.f32.mrb[0].mxu0
        %v2753 = vadd.f32 %v2712, %v2752
        %v2754 = vpop.f32.mrb[0].mxu0
        %v2755 = vpop.f32.mrb[0].mxu0
        %v2756 = vadd.f32 %v2715, %v2755
        %v2757 = vpop.f32.mrb[0].mxu0
        %2758 = vdwg.mxu0
        %2759 = vmatprep.subr.bf16.mxu0 0
        %2760 = vmatpush1.bf16.msra.mxu0 %v2353
        %2761 = vmatprep.subr.bf16.mxu0 0
        %2762 = vmatpush1.bf16.msra.mxu0 %v2354
        %2763 = vmatprep.subr.bf16.mxu0 0
        %2764 = vmatpush1.bf16.msra.mxu0 %v2355
        %2765 = vmatprep.subr.bf16.mxu0 0
        %2766 = vmatpush1.bf16.msra.mxu0 %v2356
        %2767 = vmatprep.subr.bf16.mxu0 0
        %2768 = vmatpush1.bf16.msra.mxu0 %v2357
        %2769 = vmatprep.subr.bf16.mxu0 0
        %2770 = vmatpush1.bf16.msra.mxu0 %v2358
        %2771 = vmatprep.subr.bf16.mxu0 0
        %2772 = vmatpush1.bf16.msra.mxu0 %v2359
        %2773 = vmatprep.subr.bf16.mxu0 0
        %2774 = vmatpush1.bf16.msra.mxu0 %v2360
        %2775 = vmatprep.subr.bf16.mxu0 0
        %2776 = vmatpush1.bf16.msra.mxu0 %v2361
        %2777 = vmatprep.subr.bf16.mxu0 0
        %2778 = vmatpush1.bf16.msra.mxu0 %v2362
        %2779 = vmatprep.subr.bf16.mxu0 0
        %2780 = vmatpush1.bf16.msra.mxu0 %v2363
        %2781 = vmatprep.subr.bf16.mxu0 0
        %2782 = vmatpush1.bf16.msra.mxu0 %v2364
        %2783 = vmatprep.subr.bf16.mxu0 0
        %2784 = vmatpush1.bf16.msra.mxu0 %v2365
        %2785 = vmatprep.subr.bf16.mxu0 0
        %2786 = vmatpush1.bf16.msra.mxu0 %v2366
        %2787 = vmatprep.subr.bf16.mxu0 0
        %2788 = vmatpush1.bf16.msra.mxu0 %v2367
        %2789 = vmatprep.subr.bf16.mxu0 0
        %2790 = vmatpush1.bf16.msra.mxu0 %v2368
        %2791 = vmatprep.mubr.bf16.mxu0 %v1726
        %2792 = vmatmul.mubr.bf16.gmra.mrb[0].mxu0 %v1725
        %v2793 = vpop.f32.mrb[0].mxu0
        %v2794 = vadd.f32 %v2753, %v2793
        %v2795 = vpop.f32.mrb[0].mxu0
        %v2796 = vpop.f32.mrb[0].mxu0
        %v2797 = vadd.f32 %v2756, %v2796
        %v2798 = vpop.f32.mrb[0].mxu0
        %2799 = vdwg.mxu0
        %2800 = vmatprep.subr.bf16.mxu0 0
        %2801 = vmatpush1.bf16.msra.mxu0 %v2369
        %2802 = vmatprep.subr.bf16.mxu0 0
        %2803 = vmatpush1.bf16.msra.mxu0 %v2370
        %2804 = vmatprep.subr.bf16.mxu0 0
        %2805 = vmatpush1.bf16.msra.mxu0 %v2371
        %2806 = vmatprep.subr.bf16.mxu0 0
        %2807 = vmatpush1.bf16.msra.mxu0 %v2372
        %2808 = vmatprep.subr.bf16.mxu0 0
        %2809 = vmatpush1.bf16.msra.mxu0 %v2373
        %2810 = vmatprep.subr.bf16.mxu0 0
        %2811 = vmatpush1.bf16.msra.mxu0 %v2374
        %2812 = vmatprep.subr.bf16.mxu0 0
        %2813 = vmatpush1.bf16.msra.mxu0 %v2375
        %2814 = vmatprep.subr.bf16.mxu0 0
        %2815 = vmatpush1.bf16.msra.mxu0 %v2376
        %2816 = vmatprep.subr.bf16.mxu0 0
        %2817 = vmatpush1.bf16.msra.mxu0 %v2377
        %2818 = vmatprep.subr.bf16.mxu0 0
        %2819 = vmatpush1.bf16.msra.mxu0 %v2378
        %2820 = vmatprep.subr.bf16.mxu0 0
        %2821 = vmatpush1.bf16.msra.mxu0 %v2379
        %2822 = vmatprep.subr.bf16.mxu0 0
        %2823 = vmatpush1.bf16.msra.mxu0 %v2380
        %2824 = vmatprep.subr.bf16.mxu0 0
        %2825 = vmatpush1.bf16.msra.mxu0 %v2381
        %2826 = vmatprep.subr.bf16.mxu0 0
        %2827 = vmatpush1.bf16.msra.mxu0 %v2382
        %2828 = vmatprep.subr.bf16.mxu0 0
        %2829 = vmatpush1.bf16.msra.mxu0 %v2383
        %2830 = vmatprep.subr.bf16.mxu0 0
        %2831 = vmatpush1.bf16.msra.mxu0 %v2384
        %2832 = vmatprep.mubr.bf16.mxu0 %v1728
        %2833 = vmatmul.mubr.bf16.gmra.mrb[0].mxu0 %v1727
        %v2834 = vpop.f32.mrb[0].mxu0
        %v2835 = vadd.f32 %v2794, %v2834
        %v2836 = vpop.f32.mrb[0].mxu0
        %v2837 = vpop.f32.mrb[0].mxu0
        %v2838 = vadd.f32 %v2797, %v2837
        %v2839 = vpop.f32.mrb[0].mxu0
        %2840 = vdwg.mxu0
        %v2841 = vld [vmem:[%s1381] sm:$0x1]
        %v2843 = vlaneseq
        %v2844 = vshrl.u32 %v2843, 7
        %v2845 = vsub.s32 0, %v2844
        %v2846 = vrot.slane %v2841, %v2845
        %v2848 = vmul.f32 %v2835, %v2846
        %v2849 = vmul.f32 %v2838, %v2846
        %v2850 = vld [vmem:[%s1384] sm:$0x1]
        %v2852 = vlaneseq
        %v2853 = vshrl.u32 %v2852, 7
        %v2854 = vsub.s32 0, %v2853
        %v2855 = vrot.slane %v2850, %v2854
        %v2857 = vadd.f32 %v2848, %v2855
        %v2858 = vadd.f32 %v2849, %v2855
        %v2859 = vpack.c.bf16 %v2858, %v2857
        %v2861 = vunpack.c.l.b16 %v2859
        %v2862 = vunpack.c.h.b16 %v2859
        %v2863 = vpack.c.b16 %v2861, %v2861
        %v2864 = vpack.c.b16 %v2862, %v2862
        %2867 = vst [vmem:[%s1361] sm:$0xf] %v2863
        %2868 = vst [vmem:[%s1361 + $0x4] sm:$0xf] %v2864
        %v2869 = vadd.f32 %v2857, %v2858
        %v2870 = vrot.slane %v2869, 4
        %v2871 = vadd.f32 %v2869, %v2870
        %v2872 = vrot.slane %v2871, 2
        %v2873 = vadd.f32 %v2871, %v2872
        %v2874 = vrot.slane %v2873, 1
        %v2875 = vadd.f32 %v2873, %v2874
        %v2876 = vmul.f32 %v2857, %v2857
        %v2877 = vmul.f32 %v2858, %v2858
        %v2878 = vadd.f32 %v2876, %v2877
        %v2879 = vrot.slane %v2878, 4
        %v2880 = vadd.f32 %v2878, %v2879
        %v2881 = vrot.slane %v2880, 2
        %v2882 = vadd.f32 %v2880, %v2881
        %v2883 = vrot.slane %v2882, 1
        %v2884 = vadd.f32 %v2882, %v2883
        %p2885 = scmp.eq.s32.totalorder %s23, 0
        // Predicated region
        $region78: #{_lambda_.17} parent=72 // pred_check
          %p2886 = pneg %p2885
        $region79: #{_lambda_.17} parent=72 // pred_check_branch
          %2888 = sbr.rel (%p2886) target = $region81
        $region80: #{_lambda_.17} parent=72 // pred_region
          %2889 = vst [vmem:[%s1388] sm:$0x1] %v2875
          %2890 = vst [vmem:[%s1391] sm:$0x1] %v2884
        $region81: #{_lambda_.17} parent=72 // pred_fallthru
          _
        %p2891 = scmp.gt.s32.totalorder %s23, 0
        // Predicated region
        $region82: #{_lambda_.17} parent=72 // pred_check
          %p2892 = pneg %p2891
        $region83: #{_lambda_.17} parent=72 // pred_check_branch
          %2894 = sbr.rel (%p2892) target = $region85
        $region84: #{_lambda_.17} parent=72 // pred_region
          %v2895 = vld [vmem:[%s1388] sm:$0x1]
          %v2896 = vadd.f32 %v2895, %v2875
          %2897 = vst [vmem:[%s1388] sm:$0x1] %v2896
          %v2898 = vld [vmem:[%s1391] sm:$0x1]
          %v2899 = vadd.f32 %v2898, %v2884
          %2900 = vst [vmem:[%s1391] sm:$0x1] %v2899
        $region85: #{_lambda_.17} parent=72 // pred_fallthru
          _
        %s2901 = sand.u32 %s144, 1
        %s2902 = sand.u32 %s144, 1
        %s2903 = smul.addr %s2902, 8
        %s2904 = scalar_lea.vmem [#allocation3], %s2903
        %p2905 = scmp.lt.s32.totalorder %s22, 1
        %s2906 = scalar_select %p2905, %s22, 1
        %s2907 = scalar_lea.vmem %s5, %s2906
        %p2908 = scmp.lt.s32.totalorder %s22, 1
        %s2909 = scalar_select %p2908, %s22, 1
        %s2910 = scalar_lea.vmem %s6, %s2909
        // Predicated region
        $region86: #{_lambda_.17} parent=72 // pred_check
          %p2911 = pneg %p154
        $region87: #{_lambda_.17} parent=72 // pred_check_branch
          %2913 = sbr.rel (%p2911) target = $region89
        $region88: #{_lambda_.17} parent=72 // pred_region
          %s2914 = smul.u32 2, %s23
          %s2915 = smul.addr %s2914, 2
          %s2916 = sadd.s32 %s22, %s2915
          %s2917 = smul.addr %s2916, 4
          %s2918 = scalar_lea.vmem %s4, %s2917
          // Predicated region
          $region90: #{_lambda_.17} parent=88 // pred_check
            _
          $region91: #{_lambda_.17} parent=88 // pred_check_branch
            %2920 = sbr.rel (0) target = $region93
          $region92: #{_lambda_.17} parent=88 // pred_region
            // Predicated region
            $region94: #{_lambda_.17} parent=92 // pred_check
              _
            $region95: #{_lambda_.17} parent=92 // pred_check_branch
              %2922 = sbr.rel target = $region97
            $region96: #{_lambda_.17} parent=92 // pred_region
              // Predicated region
              $region109: #{_lambda_.17} parent=96 // pred_check
                _
              $region110: #{_lambda_.17} parent=96 // pred_check_branch
                %2939 = sbr.rel (0) target = $region112
              $region111: #{_lambda_.17} parent=96 // pred_region
                loop: start=0, step=1, limit=1
                $region113: #{_lambda_.17} parent=111 // loop_pre_header
                  _
                $region114: #{_lambda_.17} parent=111 // loop_header
                  %s2941 = sphi 0, %s2945
                  %p2942 = scmp.ge.s32.totalorder %s2941, 1
                  %s2946 = sphi %s2904, %s2904
                  %s2947 = sphi %s2918, %s2918
                $region115: #{_lambda_.17} parent=111 // loop_header_branch
                  %2944 = sbr.rel (%p2942) target = $region119
                $region116: #{_lambda_.17} parent=111 // loop_body
                  _
                $region117: #{_lambda_.17} parent=111 // loop_footer
                  %s2945 = sadd.s32 1, %s2941
                $region118: #{_lambda_.17} parent=111 // loop_footer_branch
                  %2940 = sbr.rel target = $region114
                $region119: #{_lambda_.17} parent=111 // loop_exit
                  _
                loop: start=0, step=1, limit=1
                $region120: #{_lambda_.17} parent=111 // loop_pre_header
                  _
                $region121: #{_lambda_.17} parent=111 // loop_header
                  %s2950 = sphi 0, %s2954
                  %p2951 = scmp.ge.s32.totalorder %s2950, 1
                  %s2955 = sphi %s2904, %s2904
                  %s2956 = sphi %s2918, %s2918
                $region122: #{_lambda_.17} parent=111 // loop_header_branch
                  %2953 = sbr.rel (%p2951) target = $region126
                $region123: #{_lambda_.17} parent=111 // loop_body
                  %v2957 = vld [vmem:[%s2955] sm:$0xf]
                  %2958 = vst [vmem:[%s2956] sm:$0xf] %v2957
                  %v2959 = vld [vmem:[%s2955 + $0x4] sm:$0xf]
                  %2960 = vst [vmem:[%s2956 + $0x8] sm:$0xf] %v2959
                $region124: #{_lambda_.17} parent=111 // loop_footer
                  %s2954 = sadd.s32 1, %s2950
                $region125: #{_lambda_.17} parent=111 // loop_footer_branch
                  %2949 = sbr.rel target = $region121
                $region126: #{_lambda_.17} parent=111 // loop_exit
                  _
              $region112: #{_lambda_.17} parent=96 // pred_fallthru
                _
            $region97: #{_lambda_.17} parent=92 // pred_fallthru
              _
            // Predicated region
            $region98: #{_lambda_.17} parent=92 // pred_check
              _
            $region99: #{_lambda_.17} parent=92 // pred_check_branch
              %2924 = sbr.rel (0) target = $region101
            $region100: #{_lambda_.17} parent=92 // pred_region
              loop: start=0, step=1, limit=1
              $region102: #{_lambda_.17} parent=100 // loop_pre_header
                _
              $region103: #{_lambda_.17} parent=100 // loop_header
                %s2927 = sphi 0, %s2931
                %p2928 = scmp.ge.s32.totalorder %s2927, 1
                %s2932 = sphi %s2904, %s2904
                %s2933 = sphi %s2918, %s2918
              $region104: #{_lambda_.17} parent=100 // loop_header_branch
                %2930 = sbr.rel (%p2928) target = $region108
              $region105: #{_lambda_.17} parent=100 // loop_body
                %v2934 = vld [vmem:[%s2932] sm:$0xf]
                %2935 = vst [vmem:[%s2933] sm:$0xf] %v2934
                %v2936 = vld [vmem:[%s2932 + $0x4] sm:$0xf]
                %2937 = vst [vmem:[%s2933 + $0x8] sm:$0xf] %v2936
              $region106: #{_lambda_.17} parent=100 // loop_footer
                %s2931 = sadd.s32 1, %s2927
              $region107: #{_lambda_.17} parent=100 // loop_footer_branch
                %2926 = sbr.rel target = $region103
              $region108: #{_lambda_.17} parent=100 // loop_exit
                _
            $region101: #{_lambda_.17} parent=92 // pred_fallthru
              _
          $region93: #{_lambda_.17} parent=88 // pred_fallthru
            _
          %2961 = vnop
        $region89: #{_lambda_.17} parent=72 // pred_fallthru
          _
        // Predicated region
        $region127: #{_lambda_.17} parent=72 // pred_check
          %p2962 = pneg %p180
        $region128: #{_lambda_.17} parent=72 // pred_check_branch
          %2964 = sbr.rel (%p2962) target = $region130
        $region129: #{_lambda_.17} parent=72 // pred_region
          _
        $region130: #{_lambda_.17} parent=72 // pred_fallthru
          _
        // Predicated region
        $region131: #{_lambda_.17} parent=72 // pred_check
          %p2965 = pneg %p206
        $region132: #{_lambda_.17} parent=72 // pred_check_branch
          %2967 = sbr.rel (%p2965) target = $region134
        $region133: #{_lambda_.17} parent=72 // pred_region
          _
        $region134: #{_lambda_.17} parent=72 // pred_fallthru
          _
      $region73: #{_lambda_.17} parent=5 // pred_fallthru
        _
      %p2968 = scmp.le.s32.totalorder 2, %s13
      // Predicated region
      $region135: #{_lambda_.17} parent=5 // pred_check
        %p2969 = pneg %p2968
      $region136: #{_lambda_.17} parent=5 // pred_check_branch
        %2971 = sbr.rel (%p2969) target = $region138
      $region137: #{_lambda_.17} parent=5 // pred_region
        %s2972 = ssub.s32 %s13, 2
        // Predicated region
        $region139: #{_lambda_.17} parent=137 // pred_check
          %p2973 = pneg %p160
        $region140: #{_lambda_.17} parent=137 // pred_check_branch
          %2975 = sbr.rel (%p2973) target = $region142
        $region141: #{_lambda_.17} parent=137 // pred_region
          %s2976 = sand.u32 %s145, 1
          %s2977 = sand.u32 %s145, 1
          %s2978 = smul.addr %s2977, 8
          %s2979 = scalar_lea.vmem [#allocation3], %s2978
        $region142: #{_lambda_.17} parent=137 // pred_fallthru
          _
        // Predicated region
        $region143: #{_lambda_.17} parent=137 // pred_check
          %p2980 = pneg %p186
        $region144: #{_lambda_.17} parent=137 // pred_check_branch
          %2982 = sbr.rel (%p2980) target = $region146
        $region145: #{_lambda_.17} parent=137 // pred_region
          %p2983 = scmp.lt.s32.totalorder %s24, 1
          %s2984 = scalar_select %p2983, %s24, 1
          %s2985 = scalar_lea.vmem %s5, %s2984
        $region146: #{_lambda_.17} parent=137 // pred_fallthru
          _
        // Predicated region
        $region147: #{_lambda_.17} parent=137 // pred_check
          %p2986 = pneg %p212
        $region148: #{_lambda_.17} parent=137 // pred_check_branch
          %2988 = sbr.rel (%p2986) target = $region150
        $region149: #{_lambda_.17} parent=137 // pred_region
          %p2989 = scmp.lt.s32.totalorder %s24, 1
          %s2990 = scalar_select %p2989, %s24, 1
          %s2991 = scalar_lea.vmem %s6, %s2990
        $region150: #{_lambda_.17} parent=137 // pred_fallthru
          _
      $region138: #{_lambda_.17} parent=5 // pred_fallthru
        _
    $region6: #{_lambda_.17} parent=1 // loop_footer
      %s17 = sadd.s32 1, %s13
    $region7: #{_lambda_.17} parent=1 // loop_footer_branch
      %12 = sbr.rel target = $region3
    $region8: #{_lambda_.17} parent=1 // loop_exit
      _

// kernel: _lambda_.19
$region0: #{_lambda_.19}
  #allocation0 [shape = 'u32[]', space=smem, size = 0x4, offset = 0x4, fixed_abs, tag = 'smem constant byte address 0x4 - core index']
  #allocation1 [shape = 'u32[144,128]{1,0:T(1,128)}', space=vmem, size = 0x12000, scoped, tag = 'internal scratch']
  %s0 = inlined_call_operand.vmem [shape: bf16[8,4096], index: 0, kind: input, shape index: {}]
  %s1 = inlined_call_operand.vmem [shape: f32[1,4096], index: 1, kind: input, shape index: {}]
  %s2 = inlined_call_operand.vmem [shape: f32[1,128], index: 2, kind: input, shape index: {}]
  %s3 = inlined_call_operand.vmem [shape: f32[8,128], index: 3, kind: output, shape index: {}]
  %s4 = sld [smem:[#allocation0]]
  $region22: #{_lambda_.19} parent=0
    _
  %s6 = ssub.s32 1, %s4
  %s7 = scalar_select 0, %s6, %s4
  // Predicated region
  $region2: #{_lambda_.19} parent=0 // pred_check
    _
  $region3: #{_lambda_.19} parent=0 // pred_check_branch
    %9 = sbr.rel (0) target = $region5
  $region4: #{_lambda_.19} parent=0 // pred_region
    _
  $region5: #{_lambda_.19} parent=0 // pred_fallthru
    _
  // Predicated region
  $region6: #{_lambda_.19} parent=0 // pred_check
    _
  $region7: #{_lambda_.19} parent=0 // pred_check_branch
    %11 = sbr.rel (0) target = $region9
  $region8: #{_lambda_.19} parent=0 // pred_region
    _
  $region9: #{_lambda_.19} parent=0 // pred_fallthru
    _
  // Predicated region
  $region10: #{_lambda_.19} parent=0 // pred_check
    _
  $region11: #{_lambda_.19} parent=0 // pred_check_branch
    %13 = sbr.rel (0) target = $region13
  $region12: #{_lambda_.19} parent=0 // pred_region
    _
  $region13: #{_lambda_.19} parent=0 // pred_fallthru
    _
  %v14 = vld [vmem:[%s0] sm:$0xff]
  %v15 = vld [vmem:[%s0 + $0x8] sm:$0xff]
  %v16 = vld [vmem:[%s0 + $0x10] sm:$0xff]
  %v17 = vld [vmem:[%s0 + $0x18] sm:$0xff]
  %v18 = vld [vmem:[%s0 + $0x20] sm:$0xff]
  %v19 = vld [vmem:[%s0 + $0x28] sm:$0xff]
  %v20 = vld [vmem:[%s0 + $0x30] sm:$0xff]
  %v21 = vld [vmem:[%s0 + $0x38] sm:$0xff]
  %v22 = vld [vmem:[%s0 + $0x40] sm:$0xff]
  %v23 = vld [vmem:[%s0 + $0x48] sm:$0xff]
  %v24 = vld [vmem:[%s0 + $0x50] sm:$0xff]
  %v25 = vld [vmem:[%s0 + $0x58] sm:$0xff]
  %v26 = vld [vmem:[%s0 + $0x60] sm:$0xff]
  %v27 = vld [vmem:[%s0 + $0x68] sm:$0xff]
  %v28 = vld [vmem:[%s0 + $0x70] sm:$0xff]
  %v29 = vld [vmem:[%s0 + $0x78] sm:$0xff]
  %v30 = vunpack.c.l.bf16 %v14
  %v31 = vunpack.c.h.bf16 %v14
  %v32 = vunpack.c.l.bf16 %v15
  %v33 = vunpack.c.h.bf16 %v15
  %v34 = vunpack.c.l.bf16 %v16
  %v35 = vunpack.c.h.bf16 %v16
  %v36 = vunpack.c.l.bf16 %v17
  %v37 = vunpack.c.h.bf16 %v17
  %v38 = vunpack.c.l.bf16 %v18
  %v39 = vunpack.c.h.bf16 %v18
  %v40 = vunpack.c.l.bf16 %v19
  %v41 = vunpack.c.h.bf16 %v19
  %v42 = vunpack.c.l.bf16 %v20
  %v43 = vunpack.c.h.bf16 %v20
  %v44 = vunpack.c.l.bf16 %v21
  %v45 = vunpack.c.h.bf16 %v21
  %v46 = vunpack.c.l.bf16 %v22
  %v47 = vunpack.c.h.bf16 %v22
  %v48 = vunpack.c.l.bf16 %v23
  %v49 = vunpack.c.h.bf16 %v23
  %v50 = vunpack.c.l.bf16 %v24
  %v51 = vunpack.c.h.bf16 %v24
  %v52 = vunpack.c.l.bf16 %v25
  %v53 = vunpack.c.h.bf16 %v25
  %v54 = vunpack.c.l.bf16 %v26
  %v55 = vunpack.c.h.bf16 %v26
  %v56 = vunpack.c.l.bf16 %v27
  %v57 = vunpack.c.h.bf16 %v27
  %v58 = vunpack.c.l.bf16 %v28
  %v59 = vunpack.c.h.bf16 %v28
  %v60 = vunpack.c.l.bf16 %v29
  %v61 = vunpack.c.h.bf16 %v29
  %v62 = vld [vmem:[%s1] sm:$0xff]
  %v63 = vld [vmem:[%s1 + $0x8] sm:$0xff]
  %v64 = vld [vmem:[%s1 + $0x10] sm:$0xff]
  %v65 = vld [vmem:[%s1 + $0x18] sm:$0xff]
  %v70 = vlaneseq
  %v71 = vshrl.u32 %v70, 7
  %v72 = vsub.s32 0, %v71
  %v73 = vrot.slane %v62, %v72
  %v74 = vlaneseq
  %v75 = vshrl.u32 %v74, 7
  %v76 = vsub.s32 1, %v75
  %v77 = vrot.slane %v62, %v76
  %v78 = vlaneseq
  %v79 = vshrl.u32 %v78, 7
  %v80 = vsub.s32 2, %v79
  %v81 = vrot.slane %v62, %v80
  %v82 = vlaneseq
  %v83 = vshrl.u32 %v82, 7
  %v84 = vsub.s32 3, %v83
  %v85 = vrot.slane %v62, %v84
  %v86 = vlaneseq
  %v87 = vshrl.u32 %v86, 7
  %v88 = vsub.s32 4, %v87
  %v89 = vrot.slane %v62, %v88
  %v90 = vlaneseq
  %v91 = vshrl.u32 %v90, 7
  %v92 = vsub.s32 5, %v91
  %v93 = vrot.slane %v62, %v92
  %v94 = vlaneseq
  %v95 = vshrl.u32 %v94, 7
  %v96 = vsub.s32 6, %v95
  %v97 = vrot.slane %v62, %v96
  %v98 = vlaneseq
  %v99 = vshrl.u32 %v98, 7
  %v100 = vsub.s32 7, %v99
  %v101 = vrot.slane %v62, %v100
  %v102 = vlaneseq
  %v103 = vshrl.u32 %v102, 7
  %v104 = vsub.s32 0, %v103
  %v105 = vrot.slane %v63, %v104
  %v106 = vlaneseq
  %v107 = vshrl.u32 %v106, 7
  %v108 = vsub.s32 1, %v107
  %v109 = vrot.slane %v63, %v108
  %v110 = vlaneseq
  %v111 = vshrl.u32 %v110, 7
  %v112 = vsub.s32 2, %v111
  %v113 = vrot.slane %v63, %v112
  %v114 = vlaneseq
  %v115 = vshrl.u32 %v114, 7
  %v116 = vsub.s32 3, %v115
  %v117 = vrot.slane %v63, %v116
  %v118 = vlaneseq
  %v119 = vshrl.u32 %v118, 7
  %v120 = vsub.s32 4, %v119
  %v121 = vrot.slane %v63, %v120
  %v122 = vlaneseq
  %v123 = vshrl.u32 %v122, 7
  %v124 = vsub.s32 5, %v123
  %v125 = vrot.slane %v63, %v124
  %v126 = vlaneseq
  %v127 = vshrl.u32 %v126, 7
  %v128 = vsub.s32 6, %v127
  %v129 = vrot.slane %v63, %v128
  %v130 = vlaneseq
  %v131 = vshrl.u32 %v130, 7
  %v132 = vsub.s32 7, %v131
  %v133 = vrot.slane %v63, %v132
  %v134 = vlaneseq
  %v135 = vshrl.u32 %v134, 7
  %v136 = vsub.s32 0, %v135
  %v137 = vrot.slane %v64, %v136
  %v138 = vlaneseq
  %v139 = vshrl.u32 %v138, 7
  %v140 = vsub.s32 1, %v139
  %v141 = vrot.slane %v64, %v140
  %v142 = vlaneseq
  %v143 = vshrl.u32 %v142, 7
  %v144 = vsub.s32 2, %v143
  %v145 = vrot.slane %v64, %v144
  %v146 = vlaneseq
  %v147 = vshrl.u32 %v146, 7
  %v148 = vsub.s32 3, %v147
  %v149 = vrot.slane %v64, %v148
  %v150 = vlaneseq
  %v151 = vshrl.u32 %v150, 7
  %v152 = vsub.s32 4, %v151
  %v153 = vrot.slane %v64, %v152
  %v154 = vlaneseq
  %v155 = vshrl.u32 %v154, 7
  %v156 = vsub.s32 5, %v155
  %v157 = vrot.slane %v64, %v156
  %v158 = vlaneseq
  %v159 = vshrl.u32 %v158, 7
  %v160 = vsub.s32 6, %v159
  %v161 = vrot.slane %v64, %v160
  %v162 = vlaneseq
  %v163 = vshrl.u32 %v162, 7
  %v164 = vsub.s32 7, %v163
  %v165 = vrot.slane %v64, %v164
  %v166 = vlaneseq
  %v167 = vshrl.u32 %v166, 7
  %v168 = vsub.s32 0, %v167
  %v169 = vrot.slane %v65, %v168
  %v170 = vlaneseq
  %v171 = vshrl.u32 %v170, 7
  %v172 = vsub.s32 1, %v171
  %v173 = vrot.slane %v65, %v172
  %v174 = vlaneseq
  %v175 = vshrl.u32 %v174, 7
  %v176 = vsub.s32 2, %v175
  %v177 = vrot.slane %v65, %v176
  %v178 = vlaneseq
  %v179 = vshrl.u32 %v178, 7
  %v180 = vsub.s32 3, %v179
  %v181 = vrot.slane %v65, %v180
  %v182 = vlaneseq
  %v183 = vshrl.u32 %v182, 7
  %v184 = vsub.s32 4, %v183
  %v185 = vrot.slane %v65, %v184
  %v186 = vlaneseq
  %v187 = vshrl.u32 %v186, 7
  %v188 = vsub.s32 5, %v187
  %v189 = vrot.slane %v65, %v188
  %v190 = vlaneseq
  %v191 = vshrl.u32 %v190, 7
  %v192 = vsub.s32 6, %v191
  %v193 = vrot.slane %v65, %v192
  %v194 = vlaneseq
  %v195 = vshrl.u32 %v194, 7
  %v196 = vsub.s32 7, %v195
  %v197 = vrot.slane %v65, %v196
  %v230 = vmul.f32 %v30, %v73
  %v231 = vmul.f32 %v31, %v77
  %v232 = vmul.f32 %v32, %v81
  %v233 = vmul.f32 %v33, %v85
  %v234 = vmul.f32 %v34, %v89
  %v235 = vmul.f32 %v35, %v93
  %v236 = vmul.f32 %v36, %v97
  %v237 = vmul.f32 %v37, %v101
  %v238 = vmul.f32 %v38, %v105
  %v239 = vmul.f32 %v39, %v109
  %v240 = vmul.f32 %v40, %v113
  %v241 = vmul.f32 %v41, %v117
  %v242 = vmul.f32 %v42, %v121
  %v243 = vmul.f32 %v43, %v125
  %v244 = vmul.f32 %v44, %v129
  %v245 = vmul.f32 %v45, %v133
  %v246 = vmul.f32 %v46, %v137
  %v247 = vmul.f32 %v47, %v141
  %v248 = vmul.f32 %v48, %v145
  %v249 = vmul.f32 %v49, %v149
  %v250 = vmul.f32 %v50, %v153
  %v251 = vmul.f32 %v51, %v157
  %v252 = vmul.f32 %v52, %v161
  %v253 = vmul.f32 %v53, %v165
  %v254 = vmul.f32 %v54, %v169
  %v255 = vmul.f32 %v55, %v173
  %v256 = vmul.f32 %v56, %v177
  %v257 = vmul.f32 %v57, %v181
  %v258 = vmul.f32 %v58, %v185
  %v259 = vmul.f32 %v59, %v189
  %v260 = vmul.f32 %v60, %v193
  %v261 = vmul.f32 %v61, %v197
  %v262 = vadd.f32 %v230, %v231
  %v263 = vadd.f32 %v262, %v232
  %v264 = vadd.f32 %v263, %v233
  %v265 = vadd.f32 %v264, %v234
  %v266 = vadd.f32 %v265, %v235
  %v267 = vadd.f32 %v266, %v236
  %v268 = vadd.f32 %v267, %v237
  %v269 = vadd.f32 %v268, %v238
  %v270 = vadd.f32 %v269, %v239
  %v271 = vadd.f32 %v270, %v240
  %v272 = vadd.f32 %v271, %v241
  %v273 = vadd.f32 %v272, %v242
  %v274 = vadd.f32 %v273, %v243
  %v275 = vadd.f32 %v274, %v244
  %v276 = vadd.f32 %v275, %v245
  %v277 = vadd.f32 %v276, %v246
  %v278 = vadd.f32 %v277, %v247
  %v279 = vadd.f32 %v278, %v248
  %v280 = vadd.f32 %v279, %v249
  %v281 = vadd.f32 %v280, %v250
  %v282 = vadd.f32 %v281, %v251
  %v283 = vadd.f32 %v282, %v252
  %v284 = vadd.f32 %v283, %v253
  %v285 = vadd.f32 %v284, %v254
  %v286 = vadd.f32 %v285, %v255
  %v287 = vadd.f32 %v286, %v256
  %v288 = vadd.f32 %v287, %v257
  %v289 = vadd.f32 %v288, %v258
  %v290 = vadd.f32 %v289, %v259
  %v291 = vadd.f32 %v290, %v260
  %v292 = vadd.f32 %v291, %v261
  %293 = vadd.xlane.f32.xlu0 %v292
  %v294 = vpop.xlane.xlu0 %293
  %v295 = vld [vmem:[%s2] sm:$0x1]
  %v297 = vlaneseq
  %v298 = vshrl.u32 %v297, 7
  %v299 = vsub.s32 0, %v298
  %v300 = vrot.slane %v295, %v299
  %v302 = vadd.f32 %v294, %v300
  %303 = vst [vmem:[%s3] sm:$0xff] %v302
  // Predicated region
  $region14: #{_lambda_.19} parent=0 // pred_check
    _
  $region15: #{_lambda_.19} parent=0 // pred_check_branch
    %305 = sbr.rel (0) target = $region17
  $region16: #{_lambda_.19} parent=0 // pred_region
    _
  $region17: #{_lambda_.19} parent=0 // pred_fallthru
    _
  // Predicated region
  $region18: #{_lambda_.19} parent=0 // pred_check
    _
  $region19: #{_lambda_.19} parent=0 // pred_check_branch
    %307 = sbr.rel (0) target = $region21
  $region20: #{_lambda_.19} parent=0 // pred_region
    _
  $region21: #{_lambda_.19} parent=0 // pred_fallthru
    _

</llo_original>
